<compile_context>
chip_gen: v6e
topology: v6e:2x2x1
jax: 0.10.0
libtpu: 0.0.40
codegen_flags: <defaults>
</compile_context>

<pallas_src>
import jax
import jax.numpy as jnp
import numpy as np
from jax import lax
from jax.experimental import pallas as pl
from jax.experimental.pallas import tpu as pltpu

_VMEM_LIMIT = 32 * 1024 * 1024  # bytes; safe on v5e/v6e (128 MiB) and v7x (64 MiB)


def _rows_per_step(half_h, w):
    """Pooled rows per grid step: aim for ~1024 conv rows of width w, must divide half_h."""
    target = max(1, 512 // max(w, 1))
    p = max(1, min(half_h, target))
    while half_h % p:
        p -= 1
    return p


# ---------------------------------------------------------------------------
# Fused Conv3x3 (pad=1) + bias + ReLU + MaxPool2x2 kernel
# ---------------------------------------------------------------------------
def _conv3x3_relu_pool_kernel(xa_ref, xb_ref, w_ref, b_ref, o_ref):
    # xa_ref: (1, 2P,  W+2, Cin)   padded rows [2P*i,     2P*i + 2P)
    # xb_ref: (1, 2,   W+2, Cin)   padded rows [2P*(i+1), 2P*(i+1) + 2)   (halo)
    # w_ref : (3, 3, Cin, Cout)
    # b_ref : (1, Cout)
    # o_ref : (1, P, W//2, Cout)   pooled output rows [P*i, P*i + P)
    _, P, Wh, Cout = o_ref.shape
    W = 2 * Wh
    Cin = xa_ref.shape[3]
    M = 2 * P * W                          # conv rows * width handled this step

    rows = jnp.concatenate([xa_ref[...][0], xb_ref[...][0]], axis=0)  # (2P+2, W+2, Cin)
    w = w_ref[...]                                                    # (3, 3, Cin, Cout)

    # Fused im2col: accumulate the 9 shifted taps (dy, dx) on the MXU.
    acc = jnp.zeros((M, Cout), jnp.float32)
    for dy in range(3):
        for dx in range(3):
            lhs = rows[dy:dy + 2 * P, dx:dx + W, :].reshape(M, Cin)
            acc = acc + jnp.dot(lhs, w[dy, dx],
                                preferred_element_type=jnp.float32)

    # Bias + ReLU epilogue (f32).
    y = jnp.maximum(acc + b_ref[...], 0.0)            # (2P*W, Cout), rows = (r, w)

    # Fused 2x2 max-pool: pool width, then height (contiguous reshapes + max).
    y = y.reshape(2 * P * Wh, 2, Cout)
    y = jnp.maximum(y[:, 0, :], y[:, 1, :])           # (2P*Wh, Cout), rows = (r, wh)
    y = y.reshape(P, 2, Wh, Cout)
    y = jnp.maximum(y[:, 0, :, :], y[:, 1, :, :])     # (P, Wh, Cout)

    o_ref[...] = y.reshape(o_ref.shape).astype(o_ref.dtype)


def conv3x3_relu_pool(x, w, b):
    """Fused Conv2d(k=3, pad=1) + ReLU + MaxPool2d(2).  x: NHWC, w: (3,3,Cin,Cout)."""
    B, H, W, Cin = x.shape
    Cout = w.shape[-1]
    assert H % 2 == 0 and W % 2 == 0
    Hh, Wh = H // 2, W // 2
    P = _rows_per_step(Hh, W)
    nblk = Hh // P

    xpad = jnp.pad(x, ((0, 0), (1, 1), (1, 1), (0, 0)))   # (B, H+2, W+2, Cin)

    return pl.pallas_call(
        _conv3x3_relu_pool_kernel,
        out_shape=jax.ShapeDtypeStruct((B, Hh, Wh, Cout), x.dtype),
        grid=(B, nblk),
        in_specs=[
            # main row block: padded rows [2P*i, 2P*i + 2P)
            pl.BlockSpec((1, 2 * P, W + 2, Cin), lambda bb, i: (bb, i, 0, 0)),
            # halo block: padded rows [2P*(i+1), 2P*(i+1) + 2)
            pl.BlockSpec((1, 2, W + 2, Cin), lambda bb, i: (bb, P * (i + 1), 0, 0)),
            pl.BlockSpec((3, 3, Cin, Cout), lambda bb, i: (0, 0, 0, 0)),
            pl.BlockSpec((1, Cout), lambda bb, i: (0, 0)),
        ],
        out_specs=pl.BlockSpec((1, P, Wh, Cout), lambda bb, i: (bb, i, 0, 0)),
        compiler_params=pltpu.CompilerParams(
            dimension_semantics=("parallel", "parallel"),
            vmem_limit_bytes=_VMEM_LIMIT),
    )(xpad, xpad, w, b.reshape(1, Cout))


# ---------------------------------------------------------------------------
# ConvTranspose2d(kernel=2, stride=2) kernel (interleave fused via out index_map)
# ---------------------------------------------------------------------------
def _deconv2x2_kernel(x_ref, w_ref, b_ref, o_ref):
    # x_ref: (1, H, W, Cin)
    # w_ref: (1, Cin, 2*Cout)      weight slice for this dy, columns = (dx, co)
    # b_ref: (1, 2*Cout)
    # o_ref: (1, H, 1, W, 2*Cout)  output rows 2h + dy, columns packed (dx, co)
    _, H, W, Cin = x_ref.shape
    N = w_ref.shape[2]
    x = x_ref[...].reshape(H * W, Cin)
    w = w_ref[...].reshape(Cin, N)
    y = jnp.dot(x, w, preferred_element_type=jnp.float32) + b_ref[...]
    o_ref[...] = y.reshape(o_ref.shape).astype(o_ref.dtype)


def conv_transpose2x2_s2(x, wt, b):
    """ConvTranspose2d(kernel=2, stride=2).  x: NHWC, wt: (Cin, Cout, 2, 2)."""
    B, H, W, Cin = x.shape
    Cout = wt.shape[1]
    N = 2 * Cout
    # (Cin, Cout, dy, dx) -> (dy, Cin, dx*Cout + co)
    w2 = wt.transpose(2, 0, 3, 1).reshape(2, Cin, N)
    b2 = jnp.tile(b, 2).reshape(1, N)

    # Note: for the final layer N = 2*out_channels (= 6) -> narrow lane stores;
    # acceptable for the tiny last layer.
    y = pl.pallas_call(
        _deconv2x2_kernel,
        out_shape=jax.ShapeDtypeStruct((B, H, 2, W, N), x.dtype),
        grid=(B, 2),
        in_specs=[
            pl.BlockSpec((1, H, W, Cin), lambda bb, dy: (bb, 0, 0, 0)),
            pl.BlockSpec((1, Cin, N), lambda bb, dy: (dy, 0, 0)),
            pl.BlockSpec((1, N), lambda bb, dy: (0, 0)),
        ],
        out_specs=pl.BlockSpec((1, H, 1, W, N), lambda bb, dy: (bb, 0, dy, 0, 0)),
        compiler_params=pltpu.CompilerParams(
            dimension_semantics=("parallel", "parallel"),
            vmem_limit_bytes=_VMEM_LIMIT),
    )(x, w2, b2)

    # Free row-major regroup: (B, H, 2, W, 2*Cout) is bit-identical to (B, 2H, 2W, Cout).
    return y.reshape(B, 2 * H, 2 * W, Cout)


# ---------------------------------------------------------------------------
# Full forward pass
# ---------------------------------------------------------------------------
def simple_fcn_forward(x_nchw, p):
    x = jnp.transpose(x_nchw, (0, 2, 3, 1))            # NCHW -> NHWC
    x = conv3x3_relu_pool(x, p["w1"], p["b1"])
    x = conv3x3_relu_pool(x, p["w2"], p["b2"])
    x = conv3x3_relu_pool(x, p["w3"], p["b3"])
    x = conv_transpose2x2_s2(x, p["u1w"], p["u1b"])
    x = conv_transpose2x2_s2(x, p["u2w"], p["u2b"])
    x = conv_transpose2x2_s2(x, p["u3w"], p["u3b"])
    return jnp.transpose(x, (0, 3, 1, 2))              # NHWC -> NCHW


# ---------------------------------------------------------------------------
# Pure-JAX reference (for correctness check)
# ---------------------------------------------------------------------------
def _ref_forward(x_nchw, p):
    x = jnp.transpose(x_nchw, (0, 2, 3, 1))

    def conv_relu(x, w, b):
        y = lax.conv_general_dilated(
            x, w, (1, 1), "SAME", dimension_numbers=("NHWC", "HWIO", "NHWC"))
        return jnp.maximum(y + b, 0.0)

    def pool(x):
        return lax.reduce_window(x, -jnp.inf, lax.max,
                                 (1, 2, 2, 1), (1, 2, 2, 1), "VALID")

    def up(x, wt, b):
        B, H, W, _ = x.shape
        Co = wt.shape[1]
        y = jnp.einsum("bhwi,iopq->bhpwqo", x, wt)     # (B,H,2,W,2,Co)
        return y.reshape(B, 2 * H, 2 * W, Co) + b

    x = pool(conv_relu(x, p["w1"], p["b1"]))
    x = pool(conv_relu(x, p["w2"], p["b2"]))
    x = pool(conv_relu(x, p["w3"], p["b3"]))
    x = up(x, p["u1w"], p["u1b"])
    x = up(x, p["u2w"], p["u2b"])
    x = up(x, p["u3w"], p["u3b"])
    return jnp.transpose(x, (0, 3, 1, 2))


# ---------------------------------------------------------------------------
if __name__ == "__main__":
    in_channels, out_channels = 4, 3
    B, Hs, Ws = 2, 16, 16

    key = jax.random.PRNGKey(0)
    keys = jax.random.split(key, 13)

    def init(k, shape, scale):
        return jax.random.normal(k, shape, jnp.float32) * scale

    params = {
        "w1": init(keys[0], (3, 3, in_channels, 64), 0.10), "b1": init(keys[1], (64,), 0.10),
        "w2": init(keys[2], (3, 3, 64, 128), 0.05),         "b2": init(keys[3], (128,), 0.05),
        "w3": init(keys[4], (3, 3, 128, 256), 0.05),        "b3": init(keys[5], (256,), 0.05),
        "u1w": init(keys[6], (256, 128, 2, 2), 0.05),       "u1b": init(keys[7], (128,), 0.05),
        "u2w": init(keys[8], (128, 64, 2, 2), 0.05),        "u2b": init(keys[9], (64,), 0.05),
        "u3w": init(keys[10], (64, out_channels, 2, 2), 0.05),
        "u3b": init(keys[11], (out_channels,), 0.05),
    }

    x = jax.random.normal(keys[12], (B, in_channels, Hs, Ws), jnp.float32)

    out = jax.jit(simple_fcn_forward)(x, params)
    out = jax.block_until_ready(out)
    assert out.shape == (B, out_channels, Hs, Ws), out.shape

    ref = _ref_forward(x, params)
    np.testing.assert_allclose(np.asarray(out), np.asarray(ref), rtol=5e-3, atol=5e-3)

    print("KERNEL_OK")
</pallas_src>

<mosaic_0001>
module attributes {stable_mosaic.version = 11 : i64} {
  func.func @_conv3x3_relu_pool_kernel(%arg0: i32, %arg1: i32, %arg2: memref<1x16x18x4xf32, #tpu.memory_space<vmem>>, %arg3: memref<1x2x18x4xf32, #tpu.memory_space<vmem>>, %arg4: memref<3x3x4x64xf32, #tpu.memory_space<vmem>>, %arg5: memref<1x64xf32, #tpu.memory_space<vmem>>, %arg6: memref<1x8x8x64xf32, #tpu.memory_space<vmem>>) attributes {dimension_semantics = [#tpu.dimension_semantics<parallel>, #tpu.dimension_semantics<parallel>], iteration_bounds = array<i64: 2, 1>, scalar_prefetch = 0 : i64, scratch_operands = 0 : i64, tpu.core_type = #tpu.core_type<tc>, window_params = [{transform_indices = @transform_0, window_bounds = array<i64: 1, 16, 18, 4>}, {transform_indices = @transform_1, window_bounds = array<i64: 1, 2, 18, 4>}, {pipeline_mode = #tpu.pipeline_mode<synchronous>, transform_indices = @transform_2, window_bounds = array<i64: 3, 3, 4, 64>}, {pipeline_mode = #tpu.pipeline_mode<synchronous>, transform_indices = @transform_3, window_bounds = array<i64: 1, 64>}, {transform_indices = @transform_4, window_bounds = array<i64: 1, 8, 8, 64>}]} {
    %c0 = arith.constant 0 : index
    %c0_0 = arith.constant 0 : index
    %c0_1 = arith.constant 0 : index
    %c0_2 = arith.constant 0 : index
    %0 = vector.load %arg2[%c0, %c0_0, %c0_1, %c0_2] : memref<1x16x18x4xf32, #tpu.memory_space<vmem>>, vector<1x16x18x4xf32>
    %1 = vector.shape_cast %0 : vector<1x16x18x4xf32> to vector<16x18x4xf32>
    %c0_3 = arith.constant 0 : index
    %c0_4 = arith.constant 0 : index
    %c0_5 = arith.constant 0 : index
    %c0_6 = arith.constant 0 : index
    %2 = vector.load %arg3[%c0_3, %c0_4, %c0_5, %c0_6] : memref<1x2x18x4xf32, #tpu.memory_space<vmem>>, vector<1x2x18x4xf32>
    %3 = vector.shape_cast %2 : vector<1x2x18x4xf32> to vector<2x18x4xf32>
    %4 = tpu.concatenate %1, %3 in 0 : vector<16x18x4xf32>, vector<2x18x4xf32> -> vector<18x18x4xf32>
    %c0_7 = arith.constant 0 : index
    %c0_8 = arith.constant 0 : index
    %c0_9 = arith.constant 0 : index
    %c0_10 = arith.constant 0 : index
    %5 = vector.load %arg4[%c0_7, %c0_8, %c0_9, %c0_10] : memref<3x3x4x64xf32, #tpu.memory_space<vmem>>, vector<3x3x4x64xf32>
    %cst = arith.constant 0.000000e+00 : f32
    %6 = vector.broadcast %cst : f32 to vector<256x64xf32>
    %7 = vector.extract_strided_slice %4 {offsets = [0, 0, 0], sizes = [16, 16, 4], strides = [1, 1, 1]} : vector<18x18x4xf32> to vector<16x16x4xf32>
    %8 = vector.shape_cast %7 : vector<16x16x4xf32> to vector<256x4xf32>
    %9 = vector.extract_strided_slice %5 {offsets = [0, 0, 0, 0], sizes = [1, 1, 4, 64], strides = [1, 1, 1, 1]} : vector<3x3x4x64xf32> to vector<1x1x4x64xf32>
    %10 = vector.shape_cast %9 : vector<1x1x4x64xf32> to vector<4x64xf32>
    %cst_11 = arith.constant dense<0.000000e+00> : vector<256x64xf32>
    %11 = tpu.matmul %8, %10, %cst_11 {dimension_numbers = #tpu.dot_dimension_numbers<[1], [0], [0], [1], [0, 0, 1, 1], [], []>} : vector<256x4xf32>, vector<4x64xf32>, vector<256x64xf32> -> vector<256x64xf32>
    %12 = arith.addf %6, %11 : vector<256x64xf32>
    %13 = vector.extract_strided_slice %4 {offsets = [0, 1, 0], sizes = [16, 16, 4], strides = [1, 1, 1]} : vector<18x18x4xf32> to vector<16x16x4xf32>
    %14 = vector.shape_cast %13 : vector<16x16x4xf32> to vector<256x4xf32>
    %15 = vector.extract_strided_slice %5 {offsets = [0, 1, 0, 0], sizes = [1, 1, 4, 64], strides = [1, 1, 1, 1]} : vector<3x3x4x64xf32> to vector<1x1x4x64xf32>
    %16 = vector.shape_cast %15 : vector<1x1x4x64xf32> to vector<4x64xf32>
    %cst_12 = arith.constant dense<0.000000e+00> : vector<256x64xf32>
    %17 = tpu.matmul %14, %16, %cst_12 {dimension_numbers = #tpu.dot_dimension_numbers<[1], [0], [0], [1], [0, 0, 1, 1], [], []>} : vector<256x4xf32>, vector<4x64xf32>, vector<256x64xf32> -> vector<256x64xf32>
    %18 = arith.addf %12, %17 : vector<256x64xf32>
    %19 = vector.extract_strided_slice %4 {offsets = [0, 2, 0], sizes = [16, 16, 4], strides = [1, 1, 1]} : vector<18x18x4xf32> to vector<16x16x4xf32>
    %20 = vector.shape_cast %19 : vector<16x16x4xf32> to vector<256x4xf32>
    %21 = vector.extract_strided_slice %5 {offsets = [0, 2, 0, 0], sizes = [1, 1, 4, 64], strides = [1, 1, 1, 1]} : vector<3x3x4x64xf32> to vector<1x1x4x64xf32>
    %22 = vector.shape_cast %21 : vector<1x1x4x64xf32> to vector<4x64xf32>
    %cst_13 = arith.constant dense<0.000000e+00> : vector<256x64xf32>
    %23 = tpu.matmul %20, %22, %cst_13 {dimension_numbers = #tpu.dot_dimension_numbers<[1], [0], [0], [1], [0, 0, 1, 1], [], []>} : vector<256x4xf32>, vector<4x64xf32>, vector<256x64xf32> -> vector<256x64xf32>
    %24 = arith.addf %18, %23 : vector<256x64xf32>
    %25 = vector.extract_strided_slice %4 {offsets = [1, 0, 0], sizes = [16, 16, 4], strides = [1, 1, 1]} : vector<18x18x4xf32> to vector<16x16x4xf32>
    %26 = vector.shape_cast %25 : vector<16x16x4xf32> to vector<256x4xf32>
    %27 = vector.extract_strided_slice %5 {offsets = [1, 0, 0, 0], sizes = [1, 1, 4, 64], strides = [1, 1, 1, 1]} : vector<3x3x4x64xf32> to vector<1x1x4x64xf32>
    %28 = vector.shape_cast %27 : vector<1x1x4x64xf32> to vector<4x64xf32>
    %cst_14 = arith.constant dense<0.000000e+00> : vector<256x64xf32>
    %29 = tpu.matmul %26, %28, %cst_14 {dimension_numbers = #tpu.dot_dimension_numbers<[1], [0], [0], [1], [0, 0, 1, 1], [], []>} : vector<256x4xf32>, vector<4x64xf32>, vector<256x64xf32> -> vector<256x64xf32>
    %30 = arith.addf %24, %29 : vector<256x64xf32>
    %31 = vector.extract_strided_slice %4 {offsets = [1, 1, 0], sizes = [16, 16, 4], strides = [1, 1, 1]} : vector<18x18x4xf32> to vector<16x16x4xf32>
    %32 = vector.shape_cast %31 : vector<16x16x4xf32> to vector<256x4xf32>
    %33 = vector.extract_strided_slice %5 {offsets = [1, 1, 0, 0], sizes = [1, 1, 4, 64], strides = [1, 1, 1, 1]} : vector<3x3x4x64xf32> to vector<1x1x4x64xf32>
    %34 = vector.shape_cast %33 : vector<1x1x4x64xf32> to vector<4x64xf32>
    %cst_15 = arith.constant dense<0.000000e+00> : vector<256x64xf32>
    %35 = tpu.matmul %32, %34, %cst_15 {dimension_numbers = #tpu.dot_dimension_numbers<[1], [0], [0], [1], [0, 0, 1, 1], [], []>} : vector<256x4xf32>, vector<4x64xf32>, vector<256x64xf32> -> vector<256x64xf32>
    %36 = arith.addf %30, %35 : vector<256x64xf32>
    %37 = vector.extract_strided_slice %4 {offsets = [1, 2, 0], sizes = [16, 16, 4], strides = [1, 1, 1]} : vector<18x18x4xf32> to vector<16x16x4xf32>
    %38 = vector.shape_cast %37 : vector<16x16x4xf32> to vector<256x4xf32>
    %39 = vector.extract_strided_slice %5 {offsets = [1, 2, 0, 0], sizes = [1, 1, 4, 64], strides = [1, 1, 1, 1]} : vector<3x3x4x64xf32> to vector<1x1x4x64xf32>
    %40 = vector.shape_cast %39 : vector<1x1x4x64xf32> to vector<4x64xf32>
    %cst_16 = arith.constant dense<0.000000e+00> : vector<256x64xf32>
    %41 = tpu.matmul %38, %40, %cst_16 {dimension_numbers = #tpu.dot_dimension_numbers<[1], [0], [0], [1], [0, 0, 1, 1], [], []>} : vector<256x4xf32>, vector<4x64xf32>, vector<256x64xf32> -> vector<256x64xf32>
    %42 = arith.addf %36, %41 : vector<256x64xf32>
    %43 = vector.extract_strided_slice %4 {offsets = [2, 0, 0], sizes = [16, 16, 4], strides = [1, 1, 1]} : vector<18x18x4xf32> to vector<16x16x4xf32>
    %44 = vector.shape_cast %43 : vector<16x16x4xf32> to vector<256x4xf32>
    %45 = vector.extract_strided_slice %5 {offsets = [2, 0, 0, 0], sizes = [1, 1, 4, 64], strides = [1, 1, 1, 1]} : vector<3x3x4x64xf32> to vector<1x1x4x64xf32>
    %46 = vector.shape_cast %45 : vector<1x1x4x64xf32> to vector<4x64xf32>
    %cst_17 = arith.constant dense<0.000000e+00> : vector<256x64xf32>
    %47 = tpu.matmul %44, %46, %cst_17 {dimension_numbers = #tpu.dot_dimension_numbers<[1], [0], [0], [1], [0, 0, 1, 1], [], []>} : vector<256x4xf32>, vector<4x64xf32>, vector<256x64xf32> -> vector<256x64xf32>
    %48 = arith.addf %42, %47 : vector<256x64xf32>
    %49 = vector.extract_strided_slice %4 {offsets = [2, 1, 0], sizes = [16, 16, 4], strides = [1, 1, 1]} : vector<18x18x4xf32> to vector<16x16x4xf32>
    %50 = vector.shape_cast %49 : vector<16x16x4xf32> to vector<256x4xf32>
    %51 = vector.extract_strided_slice %5 {offsets = [2, 1, 0, 0], sizes = [1, 1, 4, 64], strides = [1, 1, 1, 1]} : vector<3x3x4x64xf32> to vector<1x1x4x64xf32>
    %52 = vector.shape_cast %51 : vector<1x1x4x64xf32> to vector<4x64xf32>
    %cst_18 = arith.constant dense<0.000000e+00> : vector<256x64xf32>
    %53 = tpu.matmul %50, %52, %cst_18 {dimension_numbers = #tpu.dot_dimension_numbers<[1], [0], [0], [1], [0, 0, 1, 1], [], []>} : vector<256x4xf32>, vector<4x64xf32>, vector<256x64xf32> -> vector<256x64xf32>
    %54 = arith.addf %48, %53 : vector<256x64xf32>
    %55 = vector.extract_strided_slice %4 {offsets = [2, 2, 0], sizes = [16, 16, 4], strides = [1, 1, 1]} : vector<18x18x4xf32> to vector<16x16x4xf32>
    %56 = vector.shape_cast %55 : vector<16x16x4xf32> to vector<256x4xf32>
    %57 = vector.extract_strided_slice %5 {offsets = [2, 2, 0, 0], sizes = [1, 1, 4, 64], strides = [1, 1, 1, 1]} : vector<3x3x4x64xf32> to vector<1x1x4x64xf32>
    %58 = vector.shape_cast %57 : vector<1x1x4x64xf32> to vector<4x64xf32>
    %cst_19 = arith.constant dense<0.000000e+00> : vector<256x64xf32>
    %59 = tpu.matmul %56, %58, %cst_19 {dimension_numbers = #tpu.dot_dimension_numbers<[1], [0], [0], [1], [0, 0, 1, 1], [], []>} : vector<256x4xf32>, vector<4x64xf32>, vector<256x64xf32> -> vector<256x64xf32>
    %60 = arith.addf %54, %59 : vector<256x64xf32>
    %c0_20 = arith.constant 0 : index
    %c0_21 = arith.constant 0 : index
    %61 = vector.load %arg5[%c0_20, %c0_21] : memref<1x64xf32, #tpu.memory_space<vmem>>, vector<1x64xf32>
    %62 = vector.broadcast %61 : vector<1x64xf32> to vector<256x64xf32>
    %63 = arith.addf %60, %62 : vector<256x64xf32>
    %cst_22 = arith.constant 0.000000e+00 : f32
    %64 = vector.broadcast %cst_22 : f32 to vector<256x64xf32>
    %65 = arith.maximumf %63, %64 : vector<256x64xf32>
    %66 = vector.shape_cast %65 : vector<256x64xf32> to vector<128x2x64xf32>
    %67 = vector.extract_strided_slice %66 {offsets = [0, 0, 0], sizes = [128, 1, 64], strides = [1, 1, 1]} : vector<128x2x64xf32> to vector<128x1x64xf32>
    %68 = vector.shape_cast %67 : vector<128x1x64xf32> to vector<128x64xf32>
    %69 = vector.extract_strided_slice %66 {offsets = [0, 1, 0], sizes = [128, 1, 64], strides = [1, 1, 1]} : vector<128x2x64xf32> to vector<128x1x64xf32>
    %70 = vector.shape_cast %69 : vector<128x1x64xf32> to vector<128x64xf32>
    %71 = arith.maximumf %68, %70 : vector<128x64xf32>
    %72 = vector.shape_cast %71 : vector<128x64xf32> to vector<8x2x8x64xf32>
    %73 = vector.extract_strided_slice %72 {offsets = [0, 0, 0, 0], sizes = [8, 1, 8, 64], strides = [1, 1, 1, 1]} : vector<8x2x8x64xf32> to vector<8x1x8x64xf32>
    %74 = vector.shape_cast %73 : vector<8x1x8x64xf32> to vector<8x8x64xf32>
    %75 = vector.extract_strided_slice %72 {offsets = [0, 1, 0, 0], sizes = [8, 1, 8, 64], strides = [1, 1, 1, 1]} : vector<8x2x8x64xf32> to vector<8x1x8x64xf32>
    %76 = vector.shape_cast %75 : vector<8x1x8x64xf32> to vector<8x8x64xf32>
    %77 = arith.maximumf %74, %76 : vector<8x8x64xf32>
    %78 = vector.shape_cast %77 : vector<8x8x64xf32> to vector<1x8x8x64xf32>
    %c0_23 = arith.constant 0 : index
    %c0_24 = arith.constant 0 : index
    %c0_25 = arith.constant 0 : index
    %c0_26 = arith.constant 0 : index
    %79 = vector.load %arg6[%c0_23, %c0_24, %c0_25, %c0_26] : memref<1x8x8x64xf32, #tpu.memory_space<vmem>>, vector<1x8x8x64xf32>
    tpu.vector_store %arg6[%c0_23, %c0_24, %c0_25, %c0_26], %78 {strides = array<i32>} : memref<1x8x8x64xf32, #tpu.memory_space<vmem>>, vector<1x8x8x64xf32>,
    return
  }
  func.func @transform_0(%arg0: i32, %arg1: i32) -> (i32, i32, i32, i32) {
    %c0_i32 = arith.constant 0 : i32
    %c0_i32_0 = arith.constant 0 : i32
    %c0_i32_1 = arith.constant 0 : i32
    return %arg0, %arg1, %c0_i32, %c0_i32_0 : i32, i32, i32, i32
  }
  func.func @transform_1(%arg0: i32, %arg1: i32) -> (i32, i32, i32, i32) {
    %c1_i32 = arith.constant 1 : i32
    %0 = arith.addi %arg1, %c1_i32 : i32
    %c8_i32 = arith.constant 8 : i32
    %1 = arith.muli %c8_i32, %0 : i32
    %c0_i32 = arith.constant 0 : i32
    %c0_i32_0 = arith.constant 0 : i32
    %c0_i32_1 = arith.constant 0 : i32
    return %arg0, %1, %c0_i32, %c0_i32_0 : i32, i32, i32, i32
  }
  func.func @transform_2(%arg0: i32, %arg1: i32) -> (i32, i32, i32, i32) {
    %c0_i32 = arith.constant 0 : i32
    %c0_i32_0 = arith.constant 0 : i32
    %c0_i32_1 = arith.constant 0 : i32
    %c0_i32_2 = arith.constant 0 : i32
    %c0_i32_3 = arith.constant 0 : i32
    return %c0_i32, %c0_i32_0, %c0_i32_1, %c0_i32_2 : i32, i32, i32, i32
  }
  func.func @transform_3(%arg0: i32, %arg1: i32) -> (i32, i32) {
    %c0_i32 = arith.constant 0 : i32
    %c0_i32_0 = arith.constant 0 : i32
    %c0_i32_1 = arith.constant 0 : i32
    return %c0_i32, %c0_i32_0 : i32, i32
  }
  func.func @transform_4(%arg0: i32, %arg1: i32) -> (i32, i32, i32, i32) {
    %c0_i32 = arith.constant 0 : i32
    %c0_i32_0 = arith.constant 0 : i32
    %c0_i32_1 = arith.constant 0 : i32
    return %arg0, %arg1, %c0_i32, %c0_i32_0 : i32, i32, i32, i32
  }
}

module attributes {stable_mosaic.version = 11 : i64} {
  func.func @_conv3x3_relu_pool_kernel(%arg0: i32, %arg1: i32, %arg2: memref<1x8x10x64xf32, #tpu.memory_space<vmem>>, %arg3: memref<1x2x10x64xf32, #tpu.memory_space<vmem>>, %arg4: memref<3x3x64x128xf32, #tpu.memory_space<vmem>>, %arg5: memref<1x128xf32, #tpu.memory_space<vmem>>, %arg6: memref<1x4x4x128xf32, #tpu.memory_space<vmem>>) attributes {dimension_semantics = [#tpu.dimension_semantics<parallel>, #tpu.dimension_semantics<parallel>], iteration_bounds = array<i64: 2, 1>, scalar_prefetch = 0 : i64, scratch_operands = 0 : i64, tpu.core_type = #tpu.core_type<tc>, window_params = [{transform_indices = @transform_0, window_bounds = array<i64: 1, 8, 10, 64>}, {transform_indices = @transform_1, window_bounds = array<i64: 1, 2, 10, 64>}, {pipeline_mode = #tpu.pipeline_mode<synchronous>, transform_indices = @transform_2, window_bounds = array<i64: 3, 3, 64, 128>}, {pipeline_mode = #tpu.pipeline_mode<synchronous>, transform_indices = @transform_3, window_bounds = array<i64: 1, 128>}, {transform_indices = @transform_4, window_bounds = array<i64: 1, 4, 4, 128>}]} {
    %c0 = arith.constant 0 : index
    %c0_0 = arith.constant 0 : index
    %c0_1 = arith.constant 0 : index
    %c0_2 = arith.constant 0 : index
    %0 = vector.load %arg2[%c0, %c0_0, %c0_1, %c0_2] : memref<1x8x10x64xf32, #tpu.memory_space<vmem>>, vector<1x8x10x64xf32>
    %1 = vector.shape_cast %0 : vector<1x8x10x64xf32> to vector<8x10x64xf32>
    %c0_3 = arith.constant 0 : index
    %c0_4 = arith.constant 0 : index
    %c0_5 = arith.constant 0 : index
    %c0_6 = arith.constant 0 : index
    %2 = vector.load %arg3[%c0_3, %c0_4, %c0_5, %c0_6] : memref<1x2x10x64xf32, #tpu.memory_space<vmem>>, vector<1x2x10x64xf32>
    %3 = vector.shape_cast %2 : vector<1x2x10x64xf32> to vector<2x10x64xf32>
    %4 = tpu.concatenate %1, %3 in 0 : vector<8x10x64xf32>, vector<2x10x64xf32> -> vector<10x10x64xf32>
    %c0_7 = arith.constant 0 : index
    %c0_8 = arith.constant 0 : index
    %c0_9 = arith.constant 0 : index
    %c0_10 = arith.constant 0 : index
    %5 = vector.load %arg4[%c0_7, %c0_8, %c0_9, %c0_10] : memref<3x3x64x128xf32, #tpu.memory_space<vmem>>, vector<3x3x64x128xf32>
    %cst = arith.constant 0.000000e+00 : f32
    %6 = vector.broadcast %cst : f32 to vector<64x128xf32>
    %7 = vector.extract_strided_slice %4 {offsets = [0, 0, 0], sizes = [8, 8, 64], strides = [1, 1, 1]} : vector<10x10x64xf32> to vector<8x8x64xf32>
    %8 = vector.shape_cast %7 : vector<8x8x64xf32> to vector<64x64xf32>
    %9 = vector.extract_strided_slice %5 {offsets = [0, 0, 0, 0], sizes = [1, 1, 64, 128], strides = [1, 1, 1, 1]} : vector<3x3x64x128xf32> to vector<1x1x64x128xf32>
    %10 = vector.shape_cast %9 : vector<1x1x64x128xf32> to vector<64x128xf32>
    %cst_11 = arith.constant dense<0.000000e+00> : vector<64x128xf32>
    %11 = tpu.matmul %8, %10, %cst_11 {dimension_numbers = #tpu.dot_dimension_numbers<[1], [0], [0], [1], [0, 0, 1, 1], [], []>} : vector<64x64xf32>, vector<64x128xf32>, vector<64x128xf32> -> vector<64x128xf32>
    %12 = arith.addf %6, %11 : vector<64x128xf32>
    %13 = vector.extract_strided_slice %4 {offsets = [0, 1, 0], sizes = [8, 8, 64], strides = [1, 1, 1]} : vector<10x10x64xf32> to vector<8x8x64xf32>
    %14 = vector.shape_cast %13 : vector<8x8x64xf32> to vector<64x64xf32>
    %15 = vector.extract_strided_slice %5 {offsets = [0, 1, 0, 0], sizes = [1, 1, 64, 128], strides = [1, 1, 1, 1]} : vector<3x3x64x128xf32> to vector<1x1x64x128xf32>
    %16 = vector.shape_cast %15 : vector<1x1x64x128xf32> to vector<64x128xf32>
    %cst_12 = arith.constant dense<0.000000e+00> : vector<64x128xf32>
    %17 = tpu.matmul %14, %16, %cst_12 {dimension_numbers = #tpu.dot_dimension_numbers<[1], [0], [0], [1], [0, 0, 1, 1], [], []>} : vector<64x64xf32>, vector<64x128xf32>, vector<64x128xf32> -> vector<64x128xf32>
    %18 = arith.addf %12, %17 : vector<64x128xf32>
    %19 = vector.extract_strided_slice %4 {offsets = [0, 2, 0], sizes = [8, 8, 64], strides = [1, 1, 1]} : vector<10x10x64xf32> to vector<8x8x64xf32>
    %20 = vector.shape_cast %19 : vector<8x8x64xf32> to vector<64x64xf32>
    %21 = vector.extract_strided_slice %5 {offsets = [0, 2, 0, 0], sizes = [1, 1, 64, 128], strides = [1, 1, 1, 1]} : vector<3x3x64x128xf32> to vector<1x1x64x128xf32>
    %22 = vector.shape_cast %21 : vector<1x1x64x128xf32> to vector<64x128xf32>
    %cst_13 = arith.constant dense<0.000000e+00> : vector<64x128xf32>
    %23 = tpu.matmul %20, %22, %cst_13 {dimension_numbers = #tpu.dot_dimension_numbers<[1], [0], [0], [1], [0, 0, 1, 1], [], []>} : vector<64x64xf32>, vector<64x128xf32>, vector<64x128xf32> -> vector<64x128xf32>
    %24 = arith.addf %18, %23 : vector<64x128xf32>
    %25 = vector.extract_strided_slice %4 {offsets = [1, 0, 0], sizes = [8, 8, 64], strides = [1, 1, 1]} : vector<10x10x64xf32> to vector<8x8x64xf32>
    %26 = vector.shape_cast %25 : vector<8x8x64xf32> to vector<64x64xf32>
    %27 = vector.extract_strided_slice %5 {offsets = [1, 0, 0, 0], sizes = [1, 1, 64, 128], strides = [1, 1, 1, 1]} : vector<3x3x64x128xf32> to vector<1x1x64x128xf32>
    %28 = vector.shape_cast %27 : vector<1x1x64x128xf32> to vector<64x128xf32>
    %cst_14 = arith.constant dense<0.000000e+00> : vector<64x128xf32>
    %29 = tpu.matmul %26, %28, %cst_14 {dimension_numbers = #tpu.dot_dimension_numbers<[1], [0], [0], [1], [0, 0, 1, 1], [], []>} : vector<64x64xf32>, vector<64x128xf32>, vector<64x128xf32> -> vector<64x128xf32>
    %30 = arith.addf %24, %29 : vector<64x128xf32>
    %31 = vector.extract_strided_slice %4 {offsets = [1, 1, 0], sizes = [8, 8, 64], strides = [1, 1, 1]} : vector<10x10x64xf32> to vector<8x8x64xf32>
    %32 = vector.shape_cast %31 : vector<8x8x64xf32> to vector<64x64xf32>
    %33 = vector.extract_strided_slice %5 {offsets = [1, 1, 0, 0], sizes = [1, 1, 64, 128], strides = [1, 1, 1, 1]} : vector<3x3x64x128xf32> to vector<1x1x64x128xf32>
    %34 = vector.shape_cast %33 : vector<1x1x64x128xf32> to vector<64x128xf32>
    %cst_15 = arith.constant dense<0.000000e+00> : vector<64x128xf32>
    %35 = tpu.matmul %32, %34, %cst_15 {dimension_numbers = #tpu.dot_dimension_numbers<[1], [0], [0], [1], [0, 0, 1, 1], [], []>} : vector<64x64xf32>, vector<64x128xf32>, vector<64x128xf32> -> vector<64x128xf32>
    %36 = arith.addf %30, %35 : vector<64x128xf32>
    %37 = vector.extract_strided_slice %4 {offsets = [1, 2, 0], sizes = [8, 8, 64], strides = [1, 1, 1]} : vector<10x10x64xf32> to vector<8x8x64xf32>
    %38 = vector.shape_cast %37 : vector<8x8x64xf32> to vector<64x64xf32>
    %39 = vector.extract_strided_slice %5 {offsets = [1, 2, 0, 0], sizes = [1, 1, 64, 128], strides = [1, 1, 1, 1]} : vector<3x3x64x128xf32> to vector<1x1x64x128xf32>
    %40 = vector.shape_cast %39 : vector<1x1x64x128xf32> to vector<64x128xf32>
    %cst_16 = arith.constant dense<0.000000e+00> : vector<64x128xf32>
    %41 = tpu.matmul %38, %40, %cst_16 {dimension_numbers = #tpu.dot_dimension_numbers<[1], [0], [0], [1], [0, 0, 1, 1], [], []>} : vector<64x64xf32>, vector<64x128xf32>, vector<64x128xf32> -> vector<64x128xf32>
    %42 = arith.addf %36, %41 : vector<64x128xf32>
    %43 = vector.extract_strided_slice %4 {offsets = [2, 0, 0], sizes = [8, 8, 64], strides = [1, 1, 1]} : vector<10x10x64xf32> to vector<8x8x64xf32>
    %44 = vector.shape_cast %43 : vector<8x8x64xf32> to vector<64x64xf32>
    %45 = vector.extract_strided_slice %5 {offsets = [2, 0, 0, 0], sizes = [1, 1, 64, 128], strides = [1, 1, 1, 1]} : vector<3x3x64x128xf32> to vector<1x1x64x128xf32>
    %46 = vector.shape_cast %45 : vector<1x1x64x128xf32> to vector<64x128xf32>
    %cst_17 = arith.constant dense<0.000000e+00> : vector<64x128xf32>
    %47 = tpu.matmul %44, %46, %cst_17 {dimension_numbers = #tpu.dot_dimension_numbers<[1], [0], [0], [1], [0, 0, 1, 1], [], []>} : vector<64x64xf32>, vector<64x128xf32>, vector<64x128xf32> -> vector<64x128xf32>
    %48 = arith.addf %42, %47 : vector<64x128xf32>
    %49 = vector.extract_strided_slice %4 {offsets = [2, 1, 0], sizes = [8, 8, 64], strides = [1, 1, 1]} : vector<10x10x64xf32> to vector<8x8x64xf32>
    %50 = vector.shape_cast %49 : vector<8x8x64xf32> to vector<64x64xf32>
    %51 = vector.extract_strided_slice %5 {offsets = [2, 1, 0, 0], sizes = [1, 1, 64, 128], strides = [1, 1, 1, 1]} : vector<3x3x64x128xf32> to vector<1x1x64x128xf32>
    %52 = vector.shape_cast %51 : vector<1x1x64x128xf32> to vector<64x128xf32>
    %cst_18 = arith.constant dense<0.000000e+00> : vector<64x128xf32>
    %53 = tpu.matmul %50, %52, %cst_18 {dimension_numbers = #tpu.dot_dimension_numbers<[1], [0], [0], [1], [0, 0, 1, 1], [], []>} : vector<64x64xf32>, vector<64x128xf32>, vector<64x128xf32> -> vector<64x128xf32>
    %54 = arith.addf %48, %53 : vector<64x128xf32>
    %55 = vector.extract_strided_slice %4 {offsets = [2, 2, 0], sizes = [8, 8, 64], strides = [1, 1, 1]} : vector<10x10x64xf32> to vector<8x8x64xf32>
    %56 = vector.shape_cast %55 : vector<8x8x64xf32> to vector<64x64xf32>
    %57 = vector.extract_strided_slice %5 {offsets = [2, 2, 0, 0], sizes = [1, 1, 64, 128], strides = [1, 1, 1, 1]} : vector<3x3x64x128xf32> to vector<1x1x64x128xf32>
    %58 = vector.shape_cast %57 : vector<1x1x64x128xf32> to vector<64x128xf32>
    %cst_19 = arith.constant dense<0.000000e+00> : vector<64x128xf32>
    %59 = tpu.matmul %56, %58, %cst_19 {dimension_numbers = #tpu.dot_dimension_numbers<[1], [0], [0], [1], [0, 0, 1, 1], [], []>} : vector<64x64xf32>, vector<64x128xf32>, vector<64x128xf32> -> vector<64x128xf32>
    %60 = arith.addf %54, %59 : vector<64x128xf32>
    %c0_20 = arith.constant 0 : index
    %c0_21 = arith.constant 0 : index
    %61 = vector.load %arg5[%c0_20, %c0_21] : memref<1x128xf32, #tpu.memory_space<vmem>>, vector<1x128xf32>
    %62 = vector.broadcast %61 : vector<1x128xf32> to vector<64x128xf32>
    %63 = arith.addf %60, %62 : vector<64x128xf32>
    %cst_22 = arith.constant 0.000000e+00 : f32
    %64 = vector.broadcast %cst_22 : f32 to vector<64x128xf32>
    %65 = arith.maximumf %63, %64 : vector<64x128xf32>
    %66 = vector.shape_cast %65 : vector<64x128xf32> to vector<32x2x128xf32>
    %67 = vector.extract_strided_slice %66 {offsets = [0, 0, 0], sizes = [32, 1, 128], strides = [1, 1, 1]} : vector<32x2x128xf32> to vector<32x1x128xf32>
    %68 = vector.shape_cast %67 : vector<32x1x128xf32> to vector<32x128xf32>
    %69 = vector.extract_strided_slice %66 {offsets = [0, 1, 0], sizes = [32, 1, 128], strides = [1, 1, 1]} : vector<32x2x128xf32> to vector<32x1x128xf32>
    %70 = vector.shape_cast %69 : vector<32x1x128xf32> to vector<32x128xf32>
    %71 = arith.maximumf %68, %70 : vector<32x128xf32>
    %72 = vector.shape_cast %71 : vector<32x128xf32> to vector<4x2x4x128xf32>
    %73 = vector.extract_strided_slice %72 {offsets = [0, 0, 0, 0], sizes = [4, 1, 4, 128], strides = [1, 1, 1, 1]} : vector<4x2x4x128xf32> to vector<4x1x4x128xf32>
    %74 = vector.shape_cast %73 : vector<4x1x4x128xf32> to vector<4x4x128xf32>
    %75 = vector.extract_strided_slice %72 {offsets = [0, 1, 0, 0], sizes = [4, 1, 4, 128], strides = [1, 1, 1, 1]} : vector<4x2x4x128xf32> to vector<4x1x4x128xf32>
    %76 = vector.shape_cast %75 : vector<4x1x4x128xf32> to vector<4x4x128xf32>
    %77 = arith.maximumf %74, %76 : vector<4x4x128xf32>
    %78 = vector.shape_cast %77 : vector<4x4x128xf32> to vector<1x4x4x128xf32>
    %c0_23 = arith.constant 0 : index
    %c0_24 = arith.constant 0 : index
    %c0_25 = arith.constant 0 : index
    %c0_26 = arith.constant 0 : index
    %79 = vector.load %arg6[%c0_23, %c0_24, %c0_25, %c0_26] : memref<1x4x4x128xf32, #tpu.memory_space<vmem>>, vector<1x4x4x128xf32>
    tpu.vector_store %arg6[%c0_23, %c0_24, %c0_25, %c0_26], %78 {strides = array<i32>} : memref<1x4x4x128xf32, #tpu.memory_space<vmem>>, vector<1x4x4x128xf32>,
    return
  }
  func.func @transform_0(%arg0: i32, %arg1: i32) -> (i32, i32, i32, i32) {
    %c0_i32 = arith.constant 0 : i32
    %c0_i32_0 = arith.constant 0 : i32
    %c0_i32_1 = arith.constant 0 : i32
    return %arg0, %arg1, %c0_i32, %c0_i32_0 : i32, i32, i32, i32
  }
  func.func @transform_1(%arg0: i32, %arg1: i32) -> (i32, i32, i32, i32) {
    %c1_i32 = arith.constant 1 : i32
    %0 = arith.addi %arg1, %c1_i32 : i32
    %c4_i32 = arith.constant 4 : i32
    %1 = arith.muli %c4_i32, %0 : i32
    %c0_i32 = arith.constant 0 : i32
    %c0_i32_0 = arith.constant 0 : i32
    %c0_i32_1 = arith.constant 0 : i32
    return %arg0, %1, %c0_i32, %c0_i32_0 : i32, i32, i32, i32
  }
  func.func @transform_2(%arg0: i32, %arg1: i32) -> (i32, i32, i32, i32) {
    %c0_i32 = arith.constant 0 : i32
    %c0_i32_0 = arith.constant 0 : i32
    %c0_i32_1 = arith.constant 0 : i32
    %c0_i32_2 = arith.constant 0 : i32
    %c0_i32_3 = arith.constant 0 : i32
    return %c0_i32, %c0_i32_0, %c0_i32_1, %c0_i32_2 : i32, i32, i32, i32
  }
  func.func @transform_3(%arg0: i32, %arg1: i32) -> (i32, i32) {
    %c0_i32 = arith.constant 0 : i32
    %c0_i32_0 = arith.constant 0 : i32
    %c0_i32_1 = arith.constant 0 : i32
    return %c0_i32, %c0_i32_0 : i32, i32
  }
  func.func @transform_4(%arg0: i32, %arg1: i32) -> (i32, i32, i32, i32) {
    %c0_i32 = arith.constant 0 : i32
    %c0_i32_0 = arith.constant 0 : i32
    %c0_i32_1 = arith.constant 0 : i32
    return %arg0, %arg1, %c0_i32, %c0_i32_0 : i32, i32, i32, i32
  }
}

module attributes {stable_mosaic.version = 11 : i64} {
  func.func @_conv3x3_relu_pool_kernel(%arg0: i32, %arg1: i32, %arg2: memref<1x4x6x128xf32, #tpu.memory_space<vmem>>, %arg3: memref<1x2x6x128xf32, #tpu.memory_space<vmem>>, %arg4: memref<3x3x128x256xf32, #tpu.memory_space<vmem>>, %arg5: memref<1x256xf32, #tpu.memory_space<vmem>>, %arg6: memref<1x2x2x256xf32, #tpu.memory_space<vmem>>) attributes {dimension_semantics = [#tpu.dimension_semantics<parallel>, #tpu.dimension_semantics<parallel>], iteration_bounds = array<i64: 2, 1>, scalar_prefetch = 0 : i64, scratch_operands = 0 : i64, tpu.core_type = #tpu.core_type<tc>, window_params = [{transform_indices = @transform_0, window_bounds = array<i64: 1, 4, 6, 128>}, {transform_indices = @transform_1, window_bounds = array<i64: 1, 2, 6, 128>}, {pipeline_mode = #tpu.pipeline_mode<synchronous>, transform_indices = @transform_2, window_bounds = array<i64: 3, 3, 128, 256>}, {pipeline_mode = #tpu.pipeline_mode<synchronous>, transform_indices = @transform_3, window_bounds = array<i64: 1, 256>}, {transform_indices = @transform_4, window_bounds = array<i64: 1, 2, 2, 256>}]} {
    %c0 = arith.constant 0 : index
    %c0_0 = arith.constant 0 : index
    %c0_1 = arith.constant 0 : index
    %c0_2 = arith.constant 0 : index
    %0 = vector.load %arg2[%c0, %c0_0, %c0_1, %c0_2] : memref<1x4x6x128xf32, #tpu.memory_space<vmem>>, vector<1x4x6x128xf32>
    %1 = vector.shape_cast %0 : vector<1x4x6x128xf32> to vector<4x6x128xf32>
    %c0_3 = arith.constant 0 : index
    %c0_4 = arith.constant 0 : index
    %c0_5 = arith.constant 0 : index
    %c0_6 = arith.constant 0 : index
    %2 = vector.load %arg3[%c0_3, %c0_4, %c0_5, %c0_6] : memref<1x2x6x128xf32, #tpu.memory_space<vmem>>, vector<1x2x6x128xf32>
    %3 = vector.shape_cast %2 : vector<1x2x6x128xf32> to vector<2x6x128xf32>
    %4 = tpu.concatenate %1, %3 in 0 : vector<4x6x128xf32>, vector<2x6x128xf32> -> vector<6x6x128xf32>
    %c0_7 = arith.constant 0 : index
    %c0_8 = arith.constant 0 : index
    %c0_9 = arith.constant 0 : index
    %c0_10 = arith.constant 0 : index
    %5 = vector.load %arg4[%c0_7, %c0_8, %c0_9, %c0_10] : memref<3x3x128x256xf32, #tpu.memory_space<vmem>>, vector<3x3x128x256xf32>
    %cst = arith.constant 0.000000e+00 : f32
    %6 = vector.broadcast %cst : f32 to vector<16x256xf32>
    %7 = vector.extract_strided_slice %4 {offsets = [0, 0, 0], sizes = [4, 4, 128], strides = [1, 1, 1]} : vector<6x6x128xf32> to vector<4x4x128xf32>
    %8 = vector.shape_cast %7 : vector<4x4x128xf32> to vector<16x128xf32>
    %9 = vector.extract_strided_slice %5 {offsets = [0, 0, 0, 0], sizes = [1, 1, 128, 256], strides = [1, 1, 1, 1]} : vector<3x3x128x256xf32> to vector<1x1x128x256xf32>
    %10 = vector.shape_cast %9 : vector<1x1x128x256xf32> to vector<128x256xf32>
    %cst_11 = arith.constant dense<0.000000e+00> : vector<16x256xf32>
    %11 = tpu.matmul %8, %10, %cst_11 {dimension_numbers = #tpu.dot_dimension_numbers<[1], [0], [0], [1], [0, 0, 1, 1], [], []>} : vector<16x128xf32>, vector<128x256xf32>, vector<16x256xf32> -> vector<16x256xf32>
    %12 = arith.addf %6, %11 : vector<16x256xf32>
    %13 = vector.extract_strided_slice %4 {offsets = [0, 1, 0], sizes = [4, 4, 128], strides = [1, 1, 1]} : vector<6x6x128xf32> to vector<4x4x128xf32>
    %14 = vector.shape_cast %13 : vector<4x4x128xf32> to vector<16x128xf32>
    %15 = vector.extract_strided_slice %5 {offsets = [0, 1, 0, 0], sizes = [1, 1, 128, 256], strides = [1, 1, 1, 1]} : vector<3x3x128x256xf32> to vector<1x1x128x256xf32>
    %16 = vector.shape_cast %15 : vector<1x1x128x256xf32> to vector<128x256xf32>
    %cst_12 = arith.constant dense<0.000000e+00> : vector<16x256xf32>
    %17 = tpu.matmul %14, %16, %cst_12 {dimension_numbers = #tpu.dot_dimension_numbers<[1], [0], [0], [1], [0, 0, 1, 1], [], []>} : vector<16x128xf32>, vector<128x256xf32>, vector<16x256xf32> -> vector<16x256xf32>
    %18 = arith.addf %12, %17 : vector<16x256xf32>
    %19 = vector.extract_strided_slice %4 {offsets = [0, 2, 0], sizes = [4, 4, 128], strides = [1, 1, 1]} : vector<6x6x128xf32> to vector<4x4x128xf32>
    %20 = vector.shape_cast %19 : vector<4x4x128xf32> to vector<16x128xf32>
    %21 = vector.extract_strided_slice %5 {offsets = [0, 2, 0, 0], sizes = [1, 1, 128, 256], strides = [1, 1, 1, 1]} : vector<3x3x128x256xf32> to vector<1x1x128x256xf32>
    %22 = vector.shape_cast %21 : vector<1x1x128x256xf32> to vector<128x256xf32>
    %cst_13 = arith.constant dense<0.000000e+00> : vector<16x256xf32>
    %23 = tpu.matmul %20, %22, %cst_13 {dimension_numbers = #tpu.dot_dimension_numbers<[1], [0], [0], [1], [0, 0, 1, 1], [], []>} : vector<16x128xf32>, vector<128x256xf32>, vector<16x256xf32> -> vector<16x256xf32>
    %24 = arith.addf %18, %23 : vector<16x256xf32>
    %25 = vector.extract_strided_slice %4 {offsets = [1, 0, 0], sizes = [4, 4, 128], strides = [1, 1, 1]} : vector<6x6x128xf32> to vector<4x4x128xf32>
    %26 = vector.shape_cast %25 : vector<4x4x128xf32> to vector<16x128xf32>
    %27 = vector.extract_strided_slice %5 {offsets = [1, 0, 0, 0], sizes = [1, 1, 128, 256], strides = [1, 1, 1, 1]} : vector<3x3x128x256xf32> to vector<1x1x128x256xf32>
    %28 = vector.shape_cast %27 : vector<1x1x128x256xf32> to vector<128x256xf32>
    %cst_14 = arith.constant dense<0.000000e+00> : vector<16x256xf32>
    %29 = tpu.matmul %26, %28, %cst_14 {dimension_numbers = #tpu.dot_dimension_numbers<[1], [0], [0], [1], [0, 0, 1, 1], [], []>} : vector<16x128xf32>, vector<128x256xf32>, vector<16x256xf32> -> vector<16x256xf32>
    %30 = arith.addf %24, %29 : vector<16x256xf32>
    %31 = vector.extract_strided_slice %4 {offsets = [1, 1, 0], sizes = [4, 4, 128], strides = [1, 1, 1]} : vector<6x6x128xf32> to vector<4x4x128xf32>
    %32 = vector.shape_cast %31 : vector<4x4x128xf32> to vector<16x128xf32>
    %33 = vector.extract_strided_slice %5 {offsets = [1, 1, 0, 0], sizes = [1, 1, 128, 256], strides = [1, 1, 1, 1]} : vector<3x3x128x256xf32> to vector<1x1x128x256xf32>
    %34 = vector.shape_cast %33 : vector<1x1x128x256xf32> to vector<128x256xf32>
    %cst_15 = arith.constant dense<0.000000e+00> : vector<16x256xf32>
    %35 = tpu.matmul %32, %34, %cst_15 {dimension_numbers = #tpu.dot_dimension_numbers<[1], [0], [0], [1], [0, 0, 1, 1], [], []>} : vector<16x128xf32>, vector<128x256xf32>, vector<16x256xf32> -> vector<16x256xf32>
    %36 = arith.addf %30, %35 : vector<16x256xf32>
    %37 = vector.extract_strided_slice %4 {offsets = [1, 2, 0], sizes = [4, 4, 128], strides = [1, 1, 1]} : vector<6x6x128xf32> to vector<4x4x128xf32>
    %38 = vector.shape_cast %37 : vector<4x4x128xf32> to vector<16x128xf32>
    %39 = vector.extract_strided_slice %5 {offsets = [1, 2, 0, 0], sizes = [1, 1, 128, 256], strides = [1, 1, 1, 1]} : vector<3x3x128x256xf32> to vector<1x1x128x256xf32>
    %40 = vector.shape_cast %39 : vector<1x1x128x256xf32> to vector<128x256xf32>
    %cst_16 = arith.constant dense<0.000000e+00> : vector<16x256xf32>
    %41 = tpu.matmul %38, %40, %cst_16 {dimension_numbers = #tpu.dot_dimension_numbers<[1], [0], [0], [1], [0, 0, 1, 1], [], []>} : vector<16x128xf32>, vector<128x256xf32>, vector<16x256xf32> -> vector<16x256xf32>
    %42 = arith.addf %36, %41 : vector<16x256xf32>
    %43 = vector.extract_strided_slice %4 {offsets = [2, 0, 0], sizes = [4, 4, 128], strides = [1, 1, 1]} : vector<6x6x128xf32> to vector<4x4x128xf32>
    %44 = vector.shape_cast %43 : vector<4x4x128xf32> to vector<16x128xf32>
    %45 = vector.extract_strided_slice %5 {offsets = [2, 0, 0, 0], sizes = [1, 1, 128, 256], strides = [1, 1, 1, 1]} : vector<3x3x128x256xf32> to vector<1x1x128x256xf32>
    %46 = vector.shape_cast %45 : vector<1x1x128x256xf32> to vector<128x256xf32>
    %cst_17 = arith.constant dense<0.000000e+00> : vector<16x256xf32>
    %47 = tpu.matmul %44, %46, %cst_17 {dimension_numbers = #tpu.dot_dimension_numbers<[1], [0], [0], [1], [0, 0, 1, 1], [], []>} : vector<16x128xf32>, vector<128x256xf32>, vector<16x256xf32> -> vector<16x256xf32>
    %48 = arith.addf %42, %47 : vector<16x256xf32>
    %49 = vector.extract_strided_slice %4 {offsets = [2, 1, 0], sizes = [4, 4, 128], strides = [1, 1, 1]} : vector<6x6x128xf32> to vector<4x4x128xf32>
    %50 = vector.shape_cast %49 : vector<4x4x128xf32> to vector<16x128xf32>
    %51 = vector.extract_strided_slice %5 {offsets = [2, 1, 0, 0], sizes = [1, 1, 128, 256], strides = [1, 1, 1, 1]} : vector<3x3x128x256xf32> to vector<1x1x128x256xf32>
    %52 = vector.shape_cast %51 : vector<1x1x128x256xf32> to vector<128x256xf32>
    %cst_18 = arith.constant dense<0.000000e+00> : vector<16x256xf32>
    %53 = tpu.matmul %50, %52, %cst_18 {dimension_numbers = #tpu.dot_dimension_numbers<[1], [0], [0], [1], [0, 0, 1, 1], [], []>} : vector<16x128xf32>, vector<128x256xf32>, vector<16x256xf32> -> vector<16x256xf32>
    %54 = arith.addf %48, %53 : vector<16x256xf32>
    %55 = vector.extract_strided_slice %4 {offsets = [2, 2, 0], sizes = [4, 4, 128], strides = [1, 1, 1]} : vector<6x6x128xf32> to vector<4x4x128xf32>
    %56 = vector.shape_cast %55 : vector<4x4x128xf32> to vector<16x128xf32>
    %57 = vector.extract_strided_slice %5 {offsets = [2, 2, 0, 0], sizes = [1, 1, 128, 256], strides = [1, 1, 1, 1]} : vector<3x3x128x256xf32> to vector<1x1x128x256xf32>
    %58 = vector.shape_cast %57 : vector<1x1x128x256xf32> to vector<128x256xf32>
    %cst_19 = arith.constant dense<0.000000e+00> : vector<16x256xf32>
    %59 = tpu.matmul %56, %58, %cst_19 {dimension_numbers = #tpu.dot_dimension_numbers<[1], [0], [0], [1], [0, 0, 1, 1], [], []>} : vector<16x128xf32>, vector<128x256xf32>, vector<16x256xf32> -> vector<16x256xf32>
    %60 = arith.addf %54, %59 : vector<16x256xf32>
    %c0_20 = arith.constant 0 : index
    %c0_21 = arith.constant 0 : index
    %61 = vector.load %arg5[%c0_20, %c0_21] : memref<1x256xf32, #tpu.memory_space<vmem>>, vector<1x256xf32>
    %62 = vector.broadcast %61 : vector<1x256xf32> to vector<16x256xf32>
    %63 = arith.addf %60, %62 : vector<16x256xf32>
    %cst_22 = arith.constant 0.000000e+00 : f32
    %64 = vector.broadcast %cst_22 : f32 to vector<16x256xf32>
    %65 = arith.maximumf %63, %64 : vector<16x256xf32>
    %66 = vector.shape_cast %65 : vector<16x256xf32> to vector<8x2x256xf32>
    %67 = vector.extract_strided_slice %66 {offsets = [0, 0, 0], sizes = [8, 1, 256], strides = [1, 1, 1]} : vector<8x2x256xf32> to vector<8x1x256xf32>
    %68 = vector.shape_cast %67 : vector<8x1x256xf32> to vector<8x256xf32>
    %69 = vector.extract_strided_slice %66 {offsets = [0, 1, 0], sizes = [8, 1, 256], strides = [1, 1, 1]} : vector<8x2x256xf32> to vector<8x1x256xf32>
    %70 = vector.shape_cast %69 : vector<8x1x256xf32> to vector<8x256xf32>
    %71 = arith.maximumf %68, %70 : vector<8x256xf32>
    %72 = vector.shape_cast %71 : vector<8x256xf32> to vector<2x2x2x256xf32>
    %73 = vector.extract_strided_slice %72 {offsets = [0, 0, 0, 0], sizes = [2, 1, 2, 256], strides = [1, 1, 1, 1]} : vector<2x2x2x256xf32> to vector<2x1x2x256xf32>
    %74 = vector.shape_cast %73 : vector<2x1x2x256xf32> to vector<2x2x256xf32>
    %75 = vector.extract_strided_slice %72 {offsets = [0, 1, 0, 0], sizes = [2, 1, 2, 256], strides = [1, 1, 1, 1]} : vector<2x2x2x256xf32> to vector<2x1x2x256xf32>
    %76 = vector.shape_cast %75 : vector<2x1x2x256xf32> to vector<2x2x256xf32>
    %77 = arith.maximumf %74, %76 : vector<2x2x256xf32>
    %78 = vector.shape_cast %77 : vector<2x2x256xf32> to vector<1x2x2x256xf32>
    %c0_23 = arith.constant 0 : index
    %c0_24 = arith.constant 0 : index
    %c0_25 = arith.constant 0 : index
    %c0_26 = arith.constant 0 : index
    %79 = vector.load %arg6[%c0_23, %c0_24, %c0_25, %c0_26] : memref<1x2x2x256xf32, #tpu.memory_space<vmem>>, vector<1x2x2x256xf32>
    tpu.vector_store %arg6[%c0_23, %c0_24, %c0_25, %c0_26], %78 {strides = array<i32>} : memref<1x2x2x256xf32, #tpu.memory_space<vmem>>, vector<1x2x2x256xf32>,
    return
  }
  func.func @transform_0(%arg0: i32, %arg1: i32) -> (i32, i32, i32, i32) {
    %c0_i32 = arith.constant 0 : i32
    %c0_i32_0 = arith.constant 0 : i32
    %c0_i32_1 = arith.constant 0 : i32
    return %arg0, %arg1, %c0_i32, %c0_i32_0 : i32, i32, i32, i32
  }
  func.func @transform_1(%arg0: i32, %arg1: i32) -> (i32, i32, i32, i32) {
    %c1_i32 = arith.constant 1 : i32
    %0 = arith.addi %arg1, %c1_i32 : i32
    %c2_i32 = arith.constant 2 : i32
    %1 = arith.muli %c2_i32, %0 : i32
    %c0_i32 = arith.constant 0 : i32
    %c0_i32_0 = arith.constant 0 : i32
    %c0_i32_1 = arith.constant 0 : i32
    return %arg0, %1, %c0_i32, %c0_i32_0 : i32, i32, i32, i32
  }
  func.func @transform_2(%arg0: i32, %arg1: i32) -> (i32, i32, i32, i32) {
    %c0_i32 = arith.constant 0 : i32
    %c0_i32_0 = arith.constant 0 : i32
    %c0_i32_1 = arith.constant 0 : i32
    %c0_i32_2 = arith.constant 0 : i32
    %c0_i32_3 = arith.constant 0 : i32
    return %c0_i32, %c0_i32_0, %c0_i32_1, %c0_i32_2 : i32, i32, i32, i32
  }
  func.func @transform_3(%arg0: i32, %arg1: i32) -> (i32, i32) {
    %c0_i32 = arith.constant 0 : i32
    %c0_i32_0 = arith.constant 0 : i32
    %c0_i32_1 = arith.constant 0 : i32
    return %c0_i32, %c0_i32_0 : i32, i32
  }
  func.func @transform_4(%arg0: i32, %arg1: i32) -> (i32, i32, i32, i32) {
    %c0_i32 = arith.constant 0 : i32
    %c0_i32_0 = arith.constant 0 : i32
    %c0_i32_1 = arith.constant 0 : i32
    return %arg0, %arg1, %c0_i32, %c0_i32_0 : i32, i32, i32, i32
  }
}

module attributes {stable_mosaic.version = 11 : i64} {
  func.func @_deconv2x2_kernel(%arg0: i32, %arg1: i32, %arg2: memref<1x2x2x256xf32, #tpu.memory_space<vmem>>, %arg3: memref<1x256x256xf32, #tpu.memory_space<vmem>>, %arg4: memref<1x256xf32, #tpu.memory_space<vmem>>, %arg5: memref<1x2x1x2x256xf32, #tpu.memory_space<vmem>>) attributes {dimension_semantics = [#tpu.dimension_semantics<parallel>, #tpu.dimension_semantics<parallel>], iteration_bounds = array<i64: 2, 2>, scalar_prefetch = 0 : i64, scratch_operands = 0 : i64, tpu.core_type = #tpu.core_type<tc>, window_params = [{transform_indices = @transform_0, window_bounds = array<i64: 1, 2, 2, 256>}, {transform_indices = @transform_1, window_bounds = array<i64: 1, 256, 256>}, {pipeline_mode = #tpu.pipeline_mode<synchronous>, transform_indices = @transform_2, window_bounds = array<i64: 1, 256>}, {transform_indices = @transform_3, window_bounds = array<i64: 1, 2, 1, 2, 256>}]} {
    %c0 = arith.constant 0 : index
    %c0_0 = arith.constant 0 : index
    %c0_1 = arith.constant 0 : index
    %c0_2 = arith.constant 0 : index
    %0 = vector.load %arg2[%c0, %c0_0, %c0_1, %c0_2] : memref<1x2x2x256xf32, #tpu.memory_space<vmem>>, vector<1x2x2x256xf32>
    %1 = vector.shape_cast %0 : vector<1x2x2x256xf32> to vector<4x256xf32>
    %c0_3 = arith.constant 0 : index
    %c0_4 = arith.constant 0 : index
    %c0_5 = arith.constant 0 : index
    %2 = vector.load %arg3[%c0_3, %c0_4, %c0_5] : memref<1x256x256xf32, #tpu.memory_space<vmem>>, vector<1x256x256xf32>
    %3 = vector.shape_cast %2 : vector<1x256x256xf32> to vector<256x256xf32>
    %cst = arith.constant dense<0.000000e+00> : vector<4x256xf32>
    %4 = tpu.matmul %1, %3, %cst {dimension_numbers = #tpu.dot_dimension_numbers<[1], [0], [0], [1], [0, 0, 1, 1], [], []>} : vector<4x256xf32>, vector<256x256xf32>, vector<4x256xf32> -> vector<4x256xf32>
    %c0_6 = arith.constant 0 : index
    %c0_7 = arith.constant 0 : index
    %5 = vector.load %arg4[%c0_6, %c0_7] : memref<1x256xf32, #tpu.memory_space<vmem>>, vector<1x256xf32>
    %6 = vector.broadcast %5 : vector<1x256xf32> to vector<4x256xf32>
    %7 = arith.addf %4, %6 : vector<4x256xf32>
    %8 = vector.shape_cast %7 : vector<4x256xf32> to vector<1x2x1x2x256xf32>
    %c0_8 = arith.constant 0 : index
    %c0_9 = arith.constant 0 : index
    %c0_10 = arith.constant 0 : index
    %c0_11 = arith.constant 0 : index
    %c0_12 = arith.constant 0 : index
    %9 = vector.load %arg5[%c0_8, %c0_9, %c0_10, %c0_11, %c0_12] : memref<1x2x1x2x256xf32, #tpu.memory_space<vmem>>, vector<1x2x1x2x256xf32>
    tpu.vector_store %arg5[%c0_8, %c0_9, %c0_10, %c0_11, %c0_12], %8 {strides = array<i32>} : memref<1x2x1x2x256xf32, #tpu.memory_space<vmem>>, vector<1x2x1x2x256xf32>,
    return
  }
  func.func @transform_0(%arg0: i32, %arg1: i32) -> (i32, i32, i32, i32) {
    %c0_i32 = arith.constant 0 : i32
    %c0_i32_0 = arith.constant 0 : i32
    %c0_i32_1 = arith.constant 0 : i32
    %c0_i32_2 = arith.constant 0 : i32
    return %arg0, %c0_i32, %c0_i32_0, %c0_i32_1 : i32, i32, i32, i32
  }
  func.func @transform_1(%arg0: i32, %arg1: i32) -> (i32, i32, i32) {
    %c0_i32 = arith.constant 0 : i32
    %c0_i32_0 = arith.constant 0 : i32
    %c0_i32_1 = arith.constant 0 : i32
    return %arg1, %c0_i32, %c0_i32_0 : i32, i32, i32
  }
  func.func @transform_2(%arg0: i32, %arg1: i32) -> (i32, i32) {
    %c0_i32 = arith.constant 0 : i32
    %c0_i32_0 = arith.constant 0 : i32
    %c0_i32_1 = arith.constant 0 : i32
    return %c0_i32, %c0_i32_0 : i32, i32
  }
  func.func @transform_3(%arg0: i32, %arg1: i32) -> (i32, i32, i32, i32, i32) {
    %c0_i32 = arith.constant 0 : i32
    %c0_i32_0 = arith.constant 0 : i32
    %c0_i32_1 = arith.constant 0 : i32
    %c0_i32_2 = arith.constant 0 : i32
    return %arg0, %c0_i32, %arg1, %c0_i32_0, %c0_i32_1 : i32, i32, i32, i32, i32
  }
}

module attributes {stable_mosaic.version = 11 : i64} {
  func.func @_deconv2x2_kernel(%arg0: i32, %arg1: i32, %arg2: memref<1x4x4x128xf32, #tpu.memory_space<vmem>>, %arg3: memref<1x128x128xf32, #tpu.memory_space<vmem>>, %arg4: memref<1x128xf32, #tpu.memory_space<vmem>>, %arg5: memref<1x4x1x4x128xf32, #tpu.memory_space<vmem>>) attributes {dimension_semantics = [#tpu.dimension_semantics<parallel>, #tpu.dimension_semantics<parallel>], iteration_bounds = array<i64: 2, 2>, scalar_prefetch = 0 : i64, scratch_operands = 0 : i64, tpu.core_type = #tpu.core_type<tc>, window_params = [{transform_indices = @transform_0, window_bounds = array<i64: 1, 4, 4, 128>}, {transform_indices = @transform_1, window_bounds = array<i64: 1, 128, 128>}, {pipeline_mode = #tpu.pipeline_mode<synchronous>, transform_indices = @transform_2, window_bounds = array<i64: 1, 128>}, {transform_indices = @transform_3, window_bounds = array<i64: 1, 4, 1, 4, 128>}]} {
    %c0 = arith.constant 0 : index
    %c0_0 = arith.constant 0 : index
    %c0_1 = arith.constant 0 : index
    %c0_2 = arith.constant 0 : index
    %0 = vector.load %arg2[%c0, %c0_0, %c0_1, %c0_2] : memref<1x4x4x128xf32, #tpu.memory_space<vmem>>, vector<1x4x4x128xf32>
    %1 = vector.shape_cast %0 : vector<1x4x4x128xf32> to vector<16x128xf32>
    %c0_3 = arith.constant 0 : index
    %c0_4 = arith.constant 0 : index
    %c0_5 = arith.constant 0 : index
    %2 = vector.load %arg3[%c0_3, %c0_4, %c0_5] : memref<1x128x128xf32, #tpu.memory_space<vmem>>, vector<1x128x128xf32>
    %3 = vector.shape_cast %2 : vector<1x128x128xf32> to vector<128x128xf32>
    %cst = arith.constant dense<0.000000e+00> : vector<16x128xf32>
    %4 = tpu.matmul %1, %3, %cst {dimension_numbers = #tpu.dot_dimension_numbers<[1], [0], [0], [1], [0, 0, 1, 1], [], []>} : vector<16x128xf32>, vector<128x128xf32>, vector<16x128xf32> -> vector<16x128xf32>
    %c0_6 = arith.constant 0 : index
    %c0_7 = arith.constant 0 : index
    %5 = vector.load %arg4[%c0_6, %c0_7] : memref<1x128xf32, #tpu.memory_space<vmem>>, vector<1x128xf32>
    %6 = vector.broadcast %5 : vector<1x128xf32> to vector<16x128xf32>
    %7 = arith.addf %4, %6 : vector<16x128xf32>
    %8 = vector.shape_cast %7 : vector<16x128xf32> to vector<1x4x1x4x128xf32>
    %c0_8 = arith.constant 0 : index
    %c0_9 = arith.constant 0 : index
    %c0_10 = arith.constant 0 : index
    %c0_11 = arith.constant 0 : index
    %c0_12 = arith.constant 0 : index
    %9 = vector.load %arg5[%c0_8, %c0_9, %c0_10, %c0_11, %c0_12] : memref<1x4x1x4x128xf32, #tpu.memory_space<vmem>>, vector<1x4x1x4x128xf32>
    tpu.vector_store %arg5[%c0_8, %c0_9, %c0_10, %c0_11, %c0_12], %8 {strides = array<i32>} : memref<1x4x1x4x128xf32, #tpu.memory_space<vmem>>, vector<1x4x1x4x128xf32>,
    return
  }
  func.func @transform_0(%arg0: i32, %arg1: i32) -> (i32, i32, i32, i32) {
    %c0_i32 = arith.constant 0 : i32
    %c0_i32_0 = arith.constant 0 : i32
    %c0_i32_1 = arith.constant 0 : i32
    %c0_i32_2 = arith.constant 0 : i32
    return %arg0, %c0_i32, %c0_i32_0, %c0_i32_1 : i32, i32, i32, i32
  }
  func.func @transform_1(%arg0: i32, %arg1: i32) -> (i32, i32, i32) {
    %c0_i32 = arith.constant 0 : i32
    %c0_i32_0 = arith.constant 0 : i32
    %c0_i32_1 = arith.constant 0 : i32
    return %arg1, %c0_i32, %c0_i32_0 : i32, i32, i32
  }
  func.func @transform_2(%arg0: i32, %arg1: i32) -> (i32, i32) {
    %c0_i32 = arith.constant 0 : i32
    %c0_i32_0 = arith.constant 0 : i32
    %c0_i32_1 = arith.constant 0 : i32
    return %c0_i32, %c0_i32_0 : i32, i32
  }
  func.func @transform_3(%arg0: i32, %arg1: i32) -> (i32, i32, i32, i32, i32) {
    %c0_i32 = arith.constant 0 : i32
    %c0_i32_0 = arith.constant 0 : i32
    %c0_i32_1 = arith.constant 0 : i32
    %c0_i32_2 = arith.constant 0 : i32
    return %arg0, %c0_i32, %arg1, %c0_i32_0, %c0_i32_1 : i32, i32, i32, i32, i32
  }
}

module attributes {stable_mosaic.version = 11 : i64} {
  func.func @_deconv2x2_kernel(%arg0: i32, %arg1: i32, %arg2: memref<1x8x8x64xf32, #tpu.memory_space<vmem>>, %arg3: memref<1x64x6xf32, #tpu.memory_space<vmem>>, %arg4: memref<1x6xf32, #tpu.memory_space<vmem>>, %arg5: memref<1x8x1x8x6xf32, #tpu.memory_space<vmem>>) attributes {dimension_semantics = [#tpu.dimension_semantics<parallel>, #tpu.dimension_semantics<parallel>], iteration_bounds = array<i64: 2, 2>, scalar_prefetch = 0 : i64, scratch_operands = 0 : i64, tpu.core_type = #tpu.core_type<tc>, window_params = [{transform_indices = @transform_0, window_bounds = array<i64: 1, 8, 8, 64>}, {transform_indices = @transform_1, window_bounds = array<i64: 1, 64, 6>}, {pipeline_mode = #tpu.pipeline_mode<synchronous>, transform_indices = @transform_2, window_bounds = array<i64: 1, 6>}, {transform_indices = @transform_3, window_bounds = array<i64: 1, 8, 1, 8, 6>}]} {
    %c0 = arith.constant 0 : index
    %c0_0 = arith.constant 0 : index
    %c0_1 = arith.constant 0 : index
    %c0_2 = arith.constant 0 : index
    %0 = vector.load %arg2[%c0, %c0_0, %c0_1, %c0_2] : memref<1x8x8x64xf32, #tpu.memory_space<vmem>>, vector<1x8x8x64xf32>
    %1 = vector.shape_cast %0 : vector<1x8x8x64xf32> to vector<64x64xf32>
    %c0_3 = arith.constant 0 : index
    %c0_4 = arith.constant 0 : index
    %c0_5 = arith.constant 0 : index
    %2 = vector.load %arg3[%c0_3, %c0_4, %c0_5] : memref<1x64x6xf32, #tpu.memory_space<vmem>>, vector<1x64x6xf32>
    %3 = vector.shape_cast %2 : vector<1x64x6xf32> to vector<64x6xf32>
    %cst = arith.constant dense<0.000000e+00> : vector<64x6xf32>
    %4 = tpu.matmul %1, %3, %cst {dimension_numbers = #tpu.dot_dimension_numbers<[1], [0], [0], [1], [0, 0, 1, 1], [], []>} : vector<64x64xf32>, vector<64x6xf32>, vector<64x6xf32> -> vector<64x6xf32>
    %c0_6 = arith.constant 0 : index
    %c0_7 = arith.constant 0 : index
    %5 = vector.load %arg4[%c0_6, %c0_7] : memref<1x6xf32, #tpu.memory_space<vmem>>, vector<1x6xf32>
    %6 = vector.broadcast %5 : vector<1x6xf32> to vector<64x6xf32>
    %7 = arith.addf %4, %6 : vector<64x6xf32>
    %8 = vector.shape_cast %7 : vector<64x6xf32> to vector<1x8x1x8x6xf32>
    %c0_8 = arith.constant 0 : index
    %c0_9 = arith.constant 0 : index
    %c0_10 = arith.constant 0 : index
    %c0_11 = arith.constant 0 : index
    %c0_12 = arith.constant 0 : index
    %9 = vector.load %arg5[%c0_8, %c0_9, %c0_10, %c0_11, %c0_12] : memref<1x8x1x8x6xf32, #tpu.memory_space<vmem>>, vector<1x8x1x8x6xf32>
    tpu.vector_store %arg5[%c0_8, %c0_9, %c0_10, %c0_11, %c0_12], %8 {strides = array<i32>} : memref<1x8x1x8x6xf32, #tpu.memory_space<vmem>>, vector<1x8x1x8x6xf32>,
    return
  }
  func.func @transform_0(%arg0: i32, %arg1: i32) -> (i32, i32, i32, i32) {
    %c0_i32 = arith.constant 0 : i32
    %c0_i32_0 = arith.constant 0 : i32
    %c0_i32_1 = arith.constant 0 : i32
    %c0_i32_2 = arith.constant 0 : i32
    return %arg0, %c0_i32, %c0_i32_0, %c0_i32_1 : i32, i32, i32, i32
  }
  func.func @transform_1(%arg0: i32, %arg1: i32) -> (i32, i32, i32) {
    %c0_i32 = arith.constant 0 : i32
    %c0_i32_0 = arith.constant 0 : i32
    %c0_i32_1 = arith.constant 0 : i32
    return %arg1, %c0_i32, %c0_i32_0 : i32, i32, i32
  }
  func.func @transform_2(%arg0: i32, %arg1: i32) -> (i32, i32) {
    %c0_i32 = arith.constant 0 : i32
    %c0_i32_0 = arith.constant 0 : i32
    %c0_i32_1 = arith.constant 0 : i32
    return %c0_i32, %c0_i32_0 : i32, i32
  }
  func.func @transform_3(%arg0: i32, %arg1: i32) -> (i32, i32, i32, i32, i32) {
    %c0_i32 = arith.constant 0 : i32
    %c0_i32_0 = arith.constant 0 : i32
    %c0_i32_1 = arith.constant 0 : i32
    %c0_i32_2 = arith.constant 0 : i32
    return %arg0, %c0_i32, %arg1, %c0_i32_0, %c0_i32_1 : i32, i32, i32, i32, i32
  }
}

</mosaic_0001>

<llo_original>
// kernel: simple_fcn_forward.7
$region0: #{simple_fcn_forward.7}
  #allocation0 [shape = 'u32[]', space=smem, size = 0x4, offset = 0x4, fixed_abs, tag = 'smem constant byte address 0x4 - core index']
  #allocation1 [shape = 'u32[144,128]{1,0:T(1,128)}', space=vmem, size = 0x12000, scoped, tag = 'internal scratch']
  %s0 = inlined_call_operand.vmem [shape: f32[2,10,10,64], index: 0, kind: input, shape index: {}, may-alias: {0,1}]
  %s1 = inlined_call_operand.vmem [shape: f32[2,10,10,64], index: 1, kind: input, shape index: {}, may-alias: {0,1}]
  %s2 = inlined_call_operand.vmem [shape: f32[3,3,64,128], index: 2, kind: input, shape index: {}]
  %s3 = inlined_call_operand.vmem [shape: f32[1,128], index: 3, kind: input, shape index: {}]
  %s4 = inlined_call_operand.vmem [shape: f32[2,4,4,128], index: 4, kind: output, shape index: {}]
  %s5 = sld [smem:[#allocation0]]
  $region49: #{simple_fcn_forward.7} parent=0
    _
  %s7 = ssub.s32 1, %s5
  %s8 = scalar_select 0, %s7, %s5
  loop: start=0, step=1, limit=4
  $region2: #{simple_fcn_forward.7} parent=0 // loop_pre_header
    _
  $region3: #{simple_fcn_forward.7} parent=0 // loop_header
    %s10 = sphi 0, %s14
    %p11 = scmp.ge.s32.totalorder %s10, 4
    %s17 = sphi 0, %s29
    %s18 = sphi 0, %s25
    %s19 = sphi 0, %s17
    %s20 = sphi 0, %s18
    %s21 = sphi 0, %s19
    %s22 = sphi 0, %s20
    %s34 = sphi 0, %s36
    %s37 = sphi 0, %s34
    %s38 = sphi 0, %s37
    %s54 = sphi 0, %s38
    %s66 = sphi 0, %s68
    %s69 = sphi 0, %s66
    %s70 = sphi 0, %s69
    %s86 = sphi 0, %s70
    %s90 = sphi 0, %s90
    %s92 = sphi 0, %s90
    %s93 = sphi 0, %s92
    %s107 = sphi 0, %s93
    %s111 = sphi 0, %s111
    %s113 = sphi 0, %s111
    %s114 = sphi 0, %s113
    %s128 = sphi 0, %s114
    %s136 = sphi 0, %s138
    %s139 = sphi 0, %s136
    %s140 = sphi 0, %s139
    %s156 = sphi 0, %s140
  $region4: #{simple_fcn_forward.7} parent=0 // loop_header_branch
    %13 = sbr.rel (%p11) target = $region8
  $region5: #{simple_fcn_forward.7} parent=0 // loop_body
    %s15 = ssub.s32 %s10, 1
    %s16 = ssub.s32 %s10, 2
    %s23 = sadd.s32 1, %s18
    %p24 = scmp.ge.s32.totalorder %s23, 1
    %s25 = scalar_select %p24, 0, %s23
    %s26 = sadd.s32 1, %s17
    %s27 = scalar_select %p24, %s26, %s17
    %p28 = scmp.ge.s32.totalorder %s27, 2
    %s29 = scalar_select %p28, 0, %s27
    %s30 = ssub.s32 %s17, %s29
    %s31 = ssub.s32 %s18, %s25
    %s32 = sor.u32 %s30, %s31
    %p33 = scmp.eq.s32.totalorder %s32, 0
    %s35 = sadd.s32 %s34, 1
    %s36 = scalar_select %p33, %s34, %s35
    %p39 = pneg %p33
    %p40 = scmp.eq.s32.totalorder %s10, 1
    %p41 = por %p39, %p40
    %p42 = scmp.ne.s32.totalorder %s34, %s37
    %p43 = scmp.eq.s32.totalorder %s10, 0
    %p44 = por %p42, %p43
    %p45 = scmp.ne.s32.totalorder %s34, %s37
    %p46 = scmp.eq.s32.totalorder %s15, 1
    %p47 = por %p45, %p46
    %p48 = scmp.ne.s32.totalorder %s37, %s38
    %p49 = scmp.eq.s32.totalorder %s15, 0
    %p50 = por %p48, %p49
    %p51 = scmp.ne.s32.totalorder %s37, %s38
    %p52 = scmp.eq.s32.totalorder %s16, 1
    %p53 = por %p51, %p52
    %p55 = scmp.ne.s32.totalorder %s38, %s54
    %p56 = scmp.eq.s32.totalorder %s16, 0
    %p57 = por %p55, %p56
    %s58 = sadd.s32 %s18, 1
    %s59 = smul.u32 %s58, 4
    %s60 = sadd.s32 %s25, 1
    %s61 = smul.u32 %s60, 4
    %s62 = ssub.s32 %s17, %s29
    %s63 = ssub.s32 %s59, %s61
    %s64 = sor.u32 %s62, %s63
    %p65 = scmp.eq.s32.totalorder %s64, 0
    %s67 = sadd.s32 %s66, 1
    %s68 = scalar_select %p65, %s66, %s67
    %p71 = pneg %p65
    %p72 = scmp.eq.s32.totalorder %s10, 1
    %p73 = por %p71, %p72
    %p74 = scmp.ne.s32.totalorder %s66, %s69
    %p75 = scmp.eq.s32.totalorder %s10, 0
    %p76 = por %p74, %p75
    %p77 = scmp.ne.s32.totalorder %s66, %s69
    %p78 = scmp.eq.s32.totalorder %s15, 1
    %p79 = por %p77, %p78
    %p80 = scmp.ne.s32.totalorder %s69, %s70
    %p81 = scmp.eq.s32.totalorder %s15, 0
    %p82 = por %p80, %p81
    %p83 = scmp.ne.s32.totalorder %s69, %s70
    %p84 = scmp.eq.s32.totalorder %s16, 1
    %p85 = por %p83, %p84
    %p87 = scmp.ne.s32.totalorder %s70, %s86
    %p88 = scmp.eq.s32.totalorder %s16, 0
    %p89 = por %p87, %p88
    %s91 = sadd.s32 %s90, 1
    %p94 = scmp.eq.s32.totalorder %s10, 1
    %p95 = scmp.ne.s32.totalorder %s90, %s92
    %p96 = scmp.eq.s32.totalorder %s10, 0
    %p97 = por %p95, %p96
    %p98 = scmp.ne.s32.totalorder %s90, %s92
    %p99 = scmp.eq.s32.totalorder %s15, 1
    %p100 = por %p98, %p99
    %p101 = scmp.ne.s32.totalorder %s92, %s93
    %p102 = scmp.eq.s32.totalorder %s15, 0
    %p103 = por %p101, %p102
    %p104 = scmp.ne.s32.totalorder %s92, %s93
    %p105 = scmp.eq.s32.totalorder %s16, 1
    %p106 = por %p104, %p105
    %p108 = scmp.ne.s32.totalorder %s93, %s107
    %p109 = scmp.eq.s32.totalorder %s16, 0
    %p110 = por %p108, %p109
    %s112 = sadd.s32 %s111, 1
    %p115 = scmp.eq.s32.totalorder %s10, 1
    %p116 = scmp.ne.s32.totalorder %s111, %s113
    %p117 = scmp.eq.s32.totalorder %s10, 0
    %p118 = por %p116, %p117
    %p119 = scmp.ne.s32.totalorder %s111, %s113
    %p120 = scmp.eq.s32.totalorder %s15, 1
    %p121 = por %p119, %p120
    %p122 = scmp.ne.s32.totalorder %s113, %s114
    %p123 = scmp.eq.s32.totalorder %s15, 0
    %p124 = por %p122, %p123
    %p125 = scmp.ne.s32.totalorder %s113, %s114
    %p126 = scmp.eq.s32.totalorder %s16, 1
    %p127 = por %p125, %p126
    %p129 = scmp.ne.s32.totalorder %s114, %s128
    %p130 = scmp.eq.s32.totalorder %s16, 0
    %p131 = por %p129, %p130
    %s132 = ssub.s32 %s17, %s29
    %s133 = ssub.s32 %s18, %s25
    %s134 = sor.u32 %s132, %s133
    %p135 = scmp.eq.s32.totalorder %s134, 0
    %s137 = sadd.s32 %s136, 1
    %s138 = scalar_select %p135, %s136, %s137
    %p141 = pneg %p135
    %p142 = scmp.eq.s32.totalorder %s10, 1
    %p143 = por %p141, %p142
    %p144 = scmp.ne.s32.totalorder %s136, %s139
    %p145 = scmp.eq.s32.totalorder %s10, 0
    %p146 = por %p144, %p145
    %p147 = scmp.ne.s32.totalorder %s136, %s139
    %p148 = scmp.eq.s32.totalorder %s15, 1
    %p149 = por %p147, %p148
    %p150 = scmp.ne.s32.totalorder %s139, %s140
    %p151 = scmp.eq.s32.totalorder %s15, 0
    %p152 = por %p150, %p151
    %p153 = scmp.ne.s32.totalorder %s139, %s140
    %p154 = scmp.eq.s32.totalorder %s16, 1
    %p155 = por %p153, %p154
    %p157 = scmp.ne.s32.totalorder %s140, %s156
    %p158 = scmp.eq.s32.totalorder %s16, 0
    %p159 = por %p157, %p158
    %p160 = scmp.le.s32.totalorder 1, %s10
    %p161 = scmp.lt.s32.totalorder %s10, 3
    %p162 = pnand %p160, %p161
    %p163 = pneg %p162
    // Predicated region
    $region9: #{simple_fcn_forward.7} parent=5 // pred_check
      _
    $region10: #{simple_fcn_forward.7} parent=5 // pred_check_branch
      %165 = sbr.rel (%p162) target = $region12
    $region11: #{simple_fcn_forward.7} parent=5 // pred_region
      %s166 = ssub.s32 %s10, 1
      // Predicated region
      $region13: #{simple_fcn_forward.7} parent=11 // pred_check
        %p167 = pneg %p103
      $region14: #{simple_fcn_forward.7} parent=11 // pred_check_branch
        %169 = sbr.rel (%p167) target = $region16
      $region15: #{simple_fcn_forward.7} parent=11 // pred_region
        _
      $region16: #{simple_fcn_forward.7} parent=11 // pred_fallthru
        _
      // Predicated region
      $region17: #{simple_fcn_forward.7} parent=11 // pred_check
        %p170 = pneg %p124
      $region18: #{simple_fcn_forward.7} parent=11 // pred_check_branch
        %172 = sbr.rel (%p170) target = $region20
      $region19: #{simple_fcn_forward.7} parent=11 // pred_region
        _
      $region20: #{simple_fcn_forward.7} parent=11 // pred_fallthru
        _
    $region12: #{simple_fcn_forward.7} parent=5 // pred_fallthru
      _
    %p173 = scmp.lt.s32.totalorder %s10, 2
    // Predicated region
    $region21: #{simple_fcn_forward.7} parent=5 // pred_check
      %p174 = pneg %p173
    $region22: #{simple_fcn_forward.7} parent=5 // pred_check_branch
      %176 = sbr.rel (%p174) target = $region24
    $region23: #{simple_fcn_forward.7} parent=5 // pred_region
      // Predicated region
      $region25: #{simple_fcn_forward.7} parent=23 // pred_check
        %p177 = pneg %p44
      $region26: #{simple_fcn_forward.7} parent=23 // pred_check_branch
        %179 = sbr.rel (%p177) target = $region28
      $region27: #{simple_fcn_forward.7} parent=23 // pred_region
        %s180 = smul.u32 8, %s18
        %s181 = ssub.s32 10, %s180
        %p182 = scmp.lt.s32.totalorder %s181, 8
        %s183 = scalar_select %p182, %s181, 8
        %s184 = smul.u32 128, %s183
        %s185 = smul.u32 %s184, 2
        %p186 = scmp.lt.s32.totalorder %s17, 1
        %s187 = scalar_select %p186, %s17, 1
        %p188 = scmp.lt.s32.totalorder %s180, 9
        %s189 = scalar_select %p188, %s180, 9
        %s190 = smul.addr %s189, 2
        %s191 = smul.addr %s187, 20
        %s192 = sadd.s32 %s190, %s191
        %s193 = smul.addr %s192, 8
        %s194 = scalar_lea.vmem %s0, %s193
        %s195 = smul.u32 8, %s18
        %s196 = ssub.s32 10, %s195
        %p197 = scmp.lt.s32.totalorder %s196, 8
        %s198 = scalar_select %p197, %s196, 8
        %s199 = smul.u32 128, %s198
        %s200 = smul.u32 %s199, 2
      $region28: #{simple_fcn_forward.7} parent=23 // pred_fallthru
        _
      // Predicated region
      $region29: #{simple_fcn_forward.7} parent=23 // pred_check
        %p201 = pneg %p76
      $region30: #{simple_fcn_forward.7} parent=23 // pred_check_branch
        %203 = sbr.rel (%p201) target = $region32
      $region31: #{simple_fcn_forward.7} parent=23 // pred_region
        %s204 = sadd.s32 %s18, 1
        %s205 = smul.u32 %s204, 4
        %s206 = smul.u32 2, %s205
        %p207 = scmp.lt.s32.totalorder %s17, 1
        %s208 = scalar_select %p207, %s17, 1
        %p209 = scmp.lt.s32.totalorder %s206, 9
        %s210 = scalar_select %p209, %s206, 9
        %s211 = smul.addr %s210, 2
        %s212 = smul.addr %s208, 20
        %s213 = sadd.s32 %s211, %s212
        %s214 = smul.addr %s213, 8
        %s215 = scalar_lea.vmem %s1, %s214
        %s216 = sadd.s32 %s18, 1
        %s217 = smul.u32 %s216, 4
        %s218 = smul.u32 2, %s217
      $region32: #{simple_fcn_forward.7} parent=23 // pred_fallthru
        _
    $region24: #{simple_fcn_forward.7} parent=5 // pred_fallthru
      _
    %p219 = scmp.le.s32.totalorder 1, %s10
    %p220 = scmp.lt.s32.totalorder %s10, 3
    %p221 = pnand %p219, %p220
    %p222 = pneg %p221
    // Predicated region
    $region33: #{simple_fcn_forward.7} parent=5 // pred_check
      _
    $region34: #{simple_fcn_forward.7} parent=5 // pred_check_branch
      %224 = sbr.rel (%p221) target = $region36
    $region35: #{simple_fcn_forward.7} parent=5 // pred_region
      %s225 = ssub.s32 %s10, 1
      %s226 = smul.u32 8, %s20
      %s227 = ssub.s32 10, %s226
      %p228 = scmp.lt.s32.totalorder %s227, 8
      %s229 = scalar_select %p228, %s227, 8
      %s230 = smul.u32 128, %s229
      %s231 = smul.u32 %s230, 2
      %p232 = scmp.lt.s32.totalorder %s19, 1
      %s233 = scalar_select %p232, %s19, 1
      %p234 = scmp.lt.s32.totalorder %s226, 9
      %s235 = scalar_select %p234, %s226, 9
      %s236 = smul.addr %s235, 2
      %s237 = smul.addr %s233, 20
      %s238 = sadd.s32 %s236, %s237
      %s239 = smul.addr %s238, 8
      %s240 = scalar_lea.vmem %s0, %s239
      %p241 = pneg %p50
      %p242 = pneg %p47
      %s243 = sadd.s32 %s20, 1
      %s244 = smul.u32 %s243, 4
      %s245 = smul.u32 2, %s244
      %p246 = scmp.lt.s32.totalorder %s19, 1
      %s247 = scalar_select %p246, %s19, 1
      %p248 = scmp.lt.s32.totalorder %s245, 9
      %s249 = scalar_select %p248, %s245, 9
      %s250 = smul.addr %s249, 2
      %s251 = smul.addr %s247, 20
      %s252 = sadd.s32 %s250, %s251
      %s253 = smul.addr %s252, 8
      %s254 = scalar_lea.vmem %s1, %s253
      %p255 = pneg %p82
      %p256 = pneg %p79
      %p257 = pneg %p103
      %p258 = pneg %p100
      %p259 = pneg %p124
      %p260 = pneg %p121
      %p261 = pneg %p152
      %p262 = pneg %p149
      %s263 = smul.u32 4, %s20
      %p264 = scmp.lt.s32.totalorder %s19, 1
      %s265 = scalar_select %p264, %s19, 1
      %p266 = scmp.lt.s32.totalorder %s263, 3
      %s267 = scalar_select %p266, %s263, 3
      %s268 = smul.addr %s265, 4
      %s269 = sadd.s32 %s267, %s268
      %s270 = smul.addr %s269, 4
      %s271 = scalar_lea.vmem %s4, %s270
      %s272 = smul.u32 8, %s20
      %s273 = ssub.s32 10, %s272
      %p274 = scmp.lt.s32.totalorder %s273, 8
      %s275 = scalar_select %p274, %s273, 8
      %s276 = smul.u32 128, %s275
      %s277 = smul.u32 %s276, 2
      %p278 = scmp.lt.s32.totalorder %s19, 1
      %s279 = scalar_select %p278, %s19, 1
      %p280 = scmp.lt.s32.totalorder %s272, 9
      %s281 = scalar_select %p280, %s272, 9
      %s282 = smul.addr %s281, 2
      %s283 = smul.addr %s279, 20
      %s284 = sadd.s32 %s282, %s283
      %s285 = smul.addr %s284, 8
      %s286 = scalar_lea.vmem %s0, %s285
      %s287 = smul.u32 8, %s20
      %s288 = ssub.s32 10, %s287
      %p289 = scmp.lt.s32.totalorder %s288, 8
      %s290 = scalar_select %p289, %s288, 8
      %s291 = smul.u32 128, %s290
      %s292 = smul.u32 %s291, 2
      %s293 = sadd.s32 %s20, 1
      %s294 = smul.u32 %s293, 4
      %s295 = smul.u32 2, %s294
      %p296 = scmp.lt.s32.totalorder %s19, 1
      %s297 = scalar_select %p296, %s19, 1
      %p298 = scmp.lt.s32.totalorder %s295, 9
      %s299 = scalar_select %p298, %s295, 9
      %s300 = smul.addr %s299, 2
      %s301 = smul.addr %s297, 20
      %s302 = sadd.s32 %s300, %s301
      %s303 = smul.addr %s302, 8
      %s304 = scalar_lea.vmem %s1, %s303
      %s305 = sadd.s32 %s20, 1
      %s306 = smul.u32 %s305, 4
      %s307 = smul.u32 2, %s306
      %s308 = smul.u32 4, %s20
      %p309 = scmp.lt.s32.totalorder %s19, 1
      %s310 = scalar_select %p309, %s19, 1
      %p311 = scmp.lt.s32.totalorder %s308, 3
      %s312 = scalar_select %p311, %s308, 3
      %s313 = smul.addr %s310, 4
      %s314 = sadd.s32 %s312, %s313
      %s315 = smul.addr %s314, 4
      %s316 = scalar_lea.vmem %s4, %s315
      %s317 = smul.u32 4, %s20
      %v318 = vld [vmem:[%s286] sm:$0xff]
      %v319 = vld [vmem:[%s286 + $0x8] sm:$0x3]
      %v320 = vld [vmem:[%s286 + $0x10] sm:$0xff]
      %v321 = vld [vmem:[%s286 + $0x18] sm:$0x3]
      %v322 = vld [vmem:[%s286 + $0x20] sm:$0xff]
      %v323 = vld [vmem:[%s286 + $0x28] sm:$0x3]
      %v324 = vld [vmem:[%s286 + $0x30] sm:$0xff]
      %v325 = vld [vmem:[%s286 + $0x38] sm:$0x3]
      %v326 = vld [vmem:[%s286 + $0x40] sm:$0xff]
      %v327 = vld [vmem:[%s286 + $0x48] sm:$0x3]
      %v328 = vld [vmem:[%s286 + $0x50] sm:$0xff]
      %v329 = vld [vmem:[%s286 + $0x58] sm:$0x3]
      %v330 = vld [vmem:[%s286 + $0x60] sm:$0xff]
      %v331 = vld [vmem:[%s286 + $0x68] sm:$0x3]
      %v332 = vld [vmem:[%s286 + $0x70] sm:$0xff]
      %v333 = vld [vmem:[%s286 + $0x78] sm:$0x3]
      %v334 = vld [vmem:[%s304] sm:$0xff]
      %v335 = vld [vmem:[%s304 + $0x8] sm:$0x3]
      %v336 = vld [vmem:[%s304 + $0x10] sm:$0xff]
      %v337 = vld [vmem:[%s304 + $0x18] sm:$0x3]
      %v338 = vld [vmem:[%s2] sm:$0xff]
      %v339 = vld [vmem:[%s2 + $0x8] sm:$0xff]
      %v340 = vld [vmem:[%s2 + $0x10] sm:$0xff]
      %v341 = vld [vmem:[%s2 + $0x18] sm:$0xff]
      %v342 = vld [vmem:[%s2 + $0x20] sm:$0xff]
      %v343 = vld [vmem:[%s2 + $0x28] sm:$0xff]
      %v344 = vld [vmem:[%s2 + $0x30] sm:$0xff]
      %v345 = vld [vmem:[%s2 + $0x38] sm:$0xff]
      %v346 = vld [vmem:[%s2 + $0x40] sm:$0xff]
      %v347 = vld [vmem:[%s2 + $0x48] sm:$0xff]
      %v348 = vld [vmem:[%s2 + $0x50] sm:$0xff]
      %v349 = vld [vmem:[%s2 + $0x58] sm:$0xff]
      %v350 = vld [vmem:[%s2 + $0x60] sm:$0xff]
      %v351 = vld [vmem:[%s2 + $0x68] sm:$0xff]
      %v352 = vld [vmem:[%s2 + $0x70] sm:$0xff]
      %v353 = vld [vmem:[%s2 + $0x78] sm:$0xff]
      %v354 = vld [vmem:[%s2 + $0x80] sm:$0xff]
      %v355 = vld [vmem:[%s2 + $0x88] sm:$0xff]
      %v356 = vld [vmem:[%s2 + $0x90] sm:$0xff]
      %v357 = vld [vmem:[%s2 + $0x98] sm:$0xff]
      %v358 = vld [vmem:[%s2 + $0xa0] sm:$0xff]
      %v359 = vld [vmem:[%s2 + $0xa8] sm:$0xff]
      %v360 = vld [vmem:[%s2 + $0xb0] sm:$0xff]
      %v361 = vld [vmem:[%s2 + $0xb8] sm:$0xff]
      %v362 = vld [vmem:[%s2 + $0xc0] sm:$0xff]
      %v363 = vld [vmem:[%s2 + $0xc8] sm:$0xff]
      %v364 = vld [vmem:[%s2 + $0xd0] sm:$0xff]
      %v365 = vld [vmem:[%s2 + $0xd8] sm:$0xff]
      %v366 = vld [vmem:[%s2 + $0xe0] sm:$0xff]
      %v367 = vld [vmem:[%s2 + $0xe8] sm:$0xff]
      %v368 = vld [vmem:[%s2 + $0xf0] sm:$0xff]
      %v369 = vld [vmem:[%s2 + $0xf8] sm:$0xff]
      %v370 = vld [vmem:[%s2 + $0x100] sm:$0xff]
      %v371 = vld [vmem:[%s2 + $0x108] sm:$0xff]
      %v372 = vld [vmem:[%s2 + $0x110] sm:$0xff]
      %v373 = vld [vmem:[%s2 + $0x118] sm:$0xff]
      %v374 = vld [vmem:[%s2 + $0x120] sm:$0xff]
      %v375 = vld [vmem:[%s2 + $0x128] sm:$0xff]
      %v376 = vld [vmem:[%s2 + $0x130] sm:$0xff]
      %v377 = vld [vmem:[%s2 + $0x138] sm:$0xff]
      %v378 = vld [vmem:[%s2 + $0x140] sm:$0xff]
      %v379 = vld [vmem:[%s2 + $0x148] sm:$0xff]
      %v380 = vld [vmem:[%s2 + $0x150] sm:$0xff]
      %v381 = vld [vmem:[%s2 + $0x158] sm:$0xff]
      %v382 = vld [vmem:[%s2 + $0x160] sm:$0xff]
      %v383 = vld [vmem:[%s2 + $0x168] sm:$0xff]
      %v384 = vld [vmem:[%s2 + $0x170] sm:$0xff]
      %v385 = vld [vmem:[%s2 + $0x178] sm:$0xff]
      %v386 = vld [vmem:[%s2 + $0x180] sm:$0xff]
      %v387 = vld [vmem:[%s2 + $0x188] sm:$0xff]
      %v388 = vld [vmem:[%s2 + $0x190] sm:$0xff]
      %v389 = vld [vmem:[%s2 + $0x198] sm:$0xff]
      %v390 = vld [vmem:[%s2 + $0x1a0] sm:$0xff]
      %v391 = vld [vmem:[%s2 + $0x1a8] sm:$0xff]
      %v392 = vld [vmem:[%s2 + $0x1b0] sm:$0xff]
      %v393 = vld [vmem:[%s2 + $0x1b8] sm:$0xff]
      %v394 = vld [vmem:[%s2 + $0x1c0] sm:$0xff]
      %v395 = vld [vmem:[%s2 + $0x1c8] sm:$0xff]
      %v396 = vld [vmem:[%s2 + $0x1d0] sm:$0xff]
      %v397 = vld [vmem:[%s2 + $0x1d8] sm:$0xff]
      %v398 = vld [vmem:[%s2 + $0x1e0] sm:$0xff]
      %v399 = vld [vmem:[%s2 + $0x1e8] sm:$0xff]
      %v400 = vld [vmem:[%s2 + $0x1f0] sm:$0xff]
      %v401 = vld [vmem:[%s2 + $0x1f8] sm:$0xff]
      %v402 = vld [vmem:[%s2 + $0x200] sm:$0xff]
      %v403 = vld [vmem:[%s2 + $0x208] sm:$0xff]
      %v404 = vld [vmem:[%s2 + $0x210] sm:$0xff]
      %v405 = vld [vmem:[%s2 + $0x218] sm:$0xff]
      %v406 = vld [vmem:[%s2 + $0x220] sm:$0xff]
      %v407 = vld [vmem:[%s2 + $0x228] sm:$0xff]
      %v408 = vld [vmem:[%s2 + $0x230] sm:$0xff]
      %v409 = vld [vmem:[%s2 + $0x238] sm:$0xff]
      %vm426 = vcmask 1046528
      %v427 = vrot.slane %v318, 1
      %v428 = vrot.slane %v319, 1
      %v429 = vsel %vm426, %v427, %v428
      %v430 = vrot.slane %v320, 1
      %v431 = vrot.slane %v321, 1
      %v432 = vsel %vm426, %v430, %v431
      %v433 = vrot.slane %v322, 1
      %v434 = vrot.slane %v323, 1
      %v435 = vsel %vm426, %v433, %v434
      %v436 = vrot.slane %v324, 1
      %v437 = vrot.slane %v325, 1
      %v438 = vsel %vm426, %v436, %v437
      %v439 = vrot.slane %v326, 1
      %v440 = vrot.slane %v327, 1
      %v441 = vsel %vm426, %v439, %v440
      %v442 = vrot.slane %v328, 1
      %v443 = vrot.slane %v329, 1
      %v444 = vsel %vm426, %v442, %v443
      %v445 = vrot.slane %v330, 1
      %v446 = vrot.slane %v331, 1
      %v447 = vsel %vm426, %v445, %v446
      %v448 = vrot.slane %v332, 1
      %v449 = vrot.slane %v333, 1
      %v450 = vsel %vm426, %v448, %v449
      %vm451 = vcmask 523264
      %v452 = vsel %vm451, %v429, 0
      %v454 = vsel %vm451, %v432, 0
      %v456 = vsel %vm451, %v435, 0
      %v458 = vsel %vm451, %v438, 0
      %v460 = vsel %vm451, %v441, 0
      %v462 = vsel %vm451, %v444, 0
      %v464 = vsel %vm451, %v447, 0
      %v466 = vsel %vm451, %v450, 0
      %468 = vmatprep.subr.mxu0 0.0
      %469 = vmatpush1.msra.mxu0 0.0
      %470 = vmatprep.subr.mxu0 0.0
      %471 = vmatpush1.msra.mxu0 0.0
      %472 = vmatprep.subr.mxu0 0.0
      %473 = vmatpush1.msra.mxu0 0.0
      %474 = vmatprep.subr.mxu0 0.0
      %475 = vmatpush1.msra.mxu0 0.0
      %476 = vmatprep.subr.mxu0 0.0
      %477 = vmatpush1.msra.mxu0 0.0
      %478 = vmatprep.subr.mxu0 0.0
      %479 = vmatpush1.msra.mxu0 0.0
      %480 = vmatprep.subr.mxu0 0.0
      %481 = vmatpush1.msra.mxu0 0.0
      %482 = vmatprep.subr.mxu0 0.0
      %483 = vmatpush1.msra.mxu0 0.0
      %484 = vmatprep.subr.mxu0 0.0
      %485 = vmatpush1.msra.mxu0 %v353
      %486 = vmatprep.subr.mxu0 0.0
      %487 = vmatpush1.msra.mxu0 %v352
      %488 = vmatprep.subr.mxu0 0.0
      %489 = vmatpush1.msra.mxu0 %v351
      %490 = vmatprep.subr.mxu0 0.0
      %491 = vmatpush1.msra.mxu0 %v350
      %492 = vmatprep.subr.mxu0 0.0
      %493 = vmatpush1.msra.mxu0 %v349
      %494 = vmatprep.subr.mxu0 0.0
      %495 = vmatpush1.msra.mxu0 %v348
      %496 = vmatprep.subr.mxu0 0.0
      %497 = vmatpush1.msra.mxu0 %v347
      %498 = vmatprep.subr.mxu0 0.0
      %499 = vmatpush1.msra.mxu0 %v346
      %500 = vmatprep.subr.mxu0 0.0
      %501 = vmatpush2.msra.mxu0 0.0
      %502 = vmatprep.subr.mxu0 0.0
      %503 = vmatpush2.msra.mxu0 0.0
      %504 = vmatprep.subr.mxu0 0.0
      %505 = vmatpush2.msra.mxu0 0.0
      %506 = vmatprep.subr.mxu0 0.0
      %507 = vmatpush2.msra.mxu0 0.0
      %508 = vmatprep.subr.mxu0 0.0
      %509 = vmatpush2.msra.mxu0 0.0
      %510 = vmatprep.subr.mxu0 0.0
      %511 = vmatpush2.msra.mxu0 0.0
      %512 = vmatprep.subr.mxu0 0.0
      %513 = vmatpush2.msra.mxu0 0.0
      %514 = vmatprep.subr.mxu0 0.0
      %515 = vmatpush2.msra.mxu0 0.0
      %516 = vmatprep.subr.mxu0 0.0
      %517 = vmatpush2.msra.mxu0 0.0
      %518 = vmatprep.subr.mxu0 0.0
      %519 = vmatpush2.msra.mxu0 0.0
      %520 = vmatprep.subr.mxu0 0.0
      %521 = vmatpush2.msra.mxu0 0.0
      %522 = vmatprep.subr.mxu0 0.0
      %523 = vmatpush2.msra.mxu0 0.0
      %524 = vmatprep.subr.mxu0 0.0
      %525 = vmatpush2.msra.mxu0 0.0
      %526 = vmatprep.subr.mxu0 0.0
      %527 = vmatpush2.msra.mxu0 0.0
      %528 = vmatprep.subr.mxu0 0.0
      %529 = vmatpush2.msra.mxu0 0.0
      %530 = vmatprep.subr.mxu0 0.0
      %531 = vmatpush2.msra.mxu0 0.0
      %532 = vmatprep.mubr.f32.mxu0 0.0
      %533 = vmatmul.mubr.f32.gmra.mxu0 %v452
      %v534 = vpop.f32.mrf.mxu0
      %v535 = vadd.f32 0.0, %v534
      %v536 = vpop.f32.mrf.mxu0
      %537 = vmatprep.mubr.f32.mxu0 0.0
      %538 = vmatmul.mubr.f32.gmra.mxu0 %v454
      %v539 = vpop.f32.mrf.mxu0
      %v540 = vadd.f32 0.0, %v539
      %v541 = vpop.f32.mrf.mxu0
      %542 = vmatprep.mubr.f32.mxu0 0.0
      %543 = vmatmul.mubr.f32.gmra.mxu0 %v456
      %v544 = vpop.f32.mrf.mxu0
      %v545 = vadd.f32 0.0, %v544
      %v546 = vpop.f32.mrf.mxu0
      %547 = vmatprep.mubr.f32.mxu0 0.0
      %548 = vmatmul.mubr.f32.gmra.mxu0 %v458
      %v549 = vpop.f32.mrf.mxu0
      %v550 = vadd.f32 0.0, %v549
      %v551 = vpop.f32.mrf.mxu0
      %552 = vmatprep.mubr.f32.mxu0 0.0
      %553 = vmatmul.mubr.f32.gmra.mxu0 %v460
      %v554 = vpop.f32.mrf.mxu0
      %v555 = vadd.f32 0.0, %v554
      %v556 = vpop.f32.mrf.mxu0
      %557 = vmatprep.mubr.f32.mxu0 0.0
      %558 = vmatmul.mubr.f32.gmra.mxu0 %v462
      %v559 = vpop.f32.mrf.mxu0
      %v560 = vadd.f32 0.0, %v559
      %v561 = vpop.f32.mrf.mxu0
      %562 = vmatprep.mubr.f32.mxu0 0.0
      %563 = vmatmul.mubr.f32.gmra.mxu0 %v464
      %v564 = vpop.f32.mrf.mxu0
      %v565 = vadd.f32 0.0, %v564
      %v566 = vpop.f32.mrf.mxu0
      %567 = vmatprep.mubr.f32.mxu0 0.0
      %568 = vmatmul.mubr.f32.gmra.mxu0 %v466
      %v569 = vpop.f32.mrf.mxu0
      %v570 = vadd.f32 0.0, %v569
      %v571 = vpop.f32.mrf.mxu0
      %572 = vdwg.mxu0
      %v573 = vsel %vm451, %v318, 0
      %v575 = vsel %vm451, %v320, 0
      %v577 = vsel %vm451, %v322, 0
      %v579 = vsel %vm451, %v324, 0
      %v581 = vsel %vm451, %v326, 0
      %v583 = vsel %vm451, %v328, 0
      %v585 = vsel %vm451, %v330, 0
      %v587 = vsel %vm451, %v332, 0
      %589 = vmatprep.subr.mxu0 0.0
      %590 = vmatpush1.msra.mxu0 0.0
      %591 = vmatprep.subr.mxu0 0.0
      %592 = vmatpush1.msra.mxu0 0.0
      %593 = vmatprep.subr.mxu0 0.0
      %594 = vmatpush1.msra.mxu0 0.0
      %595 = vmatprep.subr.mxu0 0.0
      %596 = vmatpush1.msra.mxu0 0.0
      %597 = vmatprep.subr.mxu0 0.0
      %598 = vmatpush1.msra.mxu0 0.0
      %599 = vmatprep.subr.mxu0 0.0
      %600 = vmatpush1.msra.mxu0 0.0
      %601 = vmatprep.subr.mxu0 0.0
      %602 = vmatpush1.msra.mxu0 0.0
      %603 = vmatprep.subr.mxu0 0.0
      %604 = vmatpush1.msra.mxu0 0.0
      %605 = vmatprep.subr.mxu0 0.0
      %606 = vmatpush1.msra.mxu0 %v345
      %607 = vmatprep.subr.mxu0 0.0
      %608 = vmatpush1.msra.mxu0 %v344
      %609 = vmatprep.subr.mxu0 0.0
      %610 = vmatpush1.msra.mxu0 %v343
      %611 = vmatprep.subr.mxu0 0.0
      %612 = vmatpush1.msra.mxu0 %v342
      %613 = vmatprep.subr.mxu0 0.0
      %614 = vmatpush1.msra.mxu0 %v341
      %615 = vmatprep.subr.mxu0 0.0
      %616 = vmatpush1.msra.mxu0 %v340
      %617 = vmatprep.subr.mxu0 0.0
      %618 = vmatpush1.msra.mxu0 %v339
      %619 = vmatprep.subr.mxu0 0.0
      %620 = vmatpush1.msra.mxu0 %v338
      %621 = vmatprep.subr.mxu0 0.0
      %622 = vmatpush2.msra.mxu0 0.0
      %623 = vmatprep.subr.mxu0 0.0
      %624 = vmatpush2.msra.mxu0 0.0
      %625 = vmatprep.subr.mxu0 0.0
      %626 = vmatpush2.msra.mxu0 0.0
      %627 = vmatprep.subr.mxu0 0.0
      %628 = vmatpush2.msra.mxu0 0.0
      %629 = vmatprep.subr.mxu0 0.0
      %630 = vmatpush2.msra.mxu0 0.0
      %631 = vmatprep.subr.mxu0 0.0
      %632 = vmatpush2.msra.mxu0 0.0
      %633 = vmatprep.subr.mxu0 0.0
      %634 = vmatpush2.msra.mxu0 0.0
      %635 = vmatprep.subr.mxu0 0.0
      %636 = vmatpush2.msra.mxu0 0.0
      %637 = vmatprep.subr.mxu0 0.0
      %638 = vmatpush2.msra.mxu0 0.0
      %639 = vmatprep.subr.mxu0 0.0
      %640 = vmatpush2.msra.mxu0 0.0
      %641 = vmatprep.subr.mxu0 0.0
      %642 = vmatpush2.msra.mxu0 0.0
      %643 = vmatprep.subr.mxu0 0.0
      %644 = vmatpush2.msra.mxu0 0.0
      %645 = vmatprep.subr.mxu0 0.0
      %646 = vmatpush2.msra.mxu0 0.0
      %647 = vmatprep.subr.mxu0 0.0
      %648 = vmatpush2.msra.mxu0 0.0
      %649 = vmatprep.subr.mxu0 0.0
      %650 = vmatpush2.msra.mxu0 0.0
      %651 = vmatprep.subr.mxu0 0.0
      %652 = vmatpush2.msra.mxu0 0.0
      %653 = vmatprep.mubr.f32.mxu0 0.0
      %654 = vmatmul.mubr.f32.gmra.mxu0 %v573
      %v655 = vpop.f32.mrf.mxu0
      %v656 = vadd.f32 %v535, %v655
      %v657 = vpop.f32.mrf.mxu0
      %658 = vmatprep.mubr.f32.mxu0 0.0
      %659 = vmatmul.mubr.f32.gmra.mxu0 %v575
      %v660 = vpop.f32.mrf.mxu0
      %v661 = vadd.f32 %v540, %v660
      %v662 = vpop.f32.mrf.mxu0
      %663 = vmatprep.mubr.f32.mxu0 0.0
      %664 = vmatmul.mubr.f32.gmra.mxu0 %v577
      %v665 = vpop.f32.mrf.mxu0
      %v666 = vadd.f32 %v545, %v665
      %v667 = vpop.f32.mrf.mxu0
      %668 = vmatprep.mubr.f32.mxu0 0.0
      %669 = vmatmul.mubr.f32.gmra.mxu0 %v579
      %v670 = vpop.f32.mrf.mxu0
      %v671 = vadd.f32 %v550, %v670
      %v672 = vpop.f32.mrf.mxu0
      %673 = vmatprep.mubr.f32.mxu0 0.0
      %674 = vmatmul.mubr.f32.gmra.mxu0 %v581
      %v675 = vpop.f32.mrf.mxu0
      %v676 = vadd.f32 %v555, %v675
      %v677 = vpop.f32.mrf.mxu0
      %678 = vmatprep.mubr.f32.mxu0 0.0
      %679 = vmatmul.mubr.f32.gmra.mxu0 %v583
      %v680 = vpop.f32.mrf.mxu0
      %v681 = vadd.f32 %v560, %v680
      %v682 = vpop.f32.mrf.mxu0
      %683 = vmatprep.mubr.f32.mxu0 0.0
      %684 = vmatmul.mubr.f32.gmra.mxu0 %v585
      %v685 = vpop.f32.mrf.mxu0
      %v686 = vadd.f32 %v565, %v685
      %v687 = vpop.f32.mrf.mxu0
      %688 = vmatprep.mubr.f32.mxu0 0.0
      %689 = vmatmul.mubr.f32.gmra.mxu0 %v587
      %v690 = vpop.f32.mrf.mxu0
      %v691 = vadd.f32 %v570, %v690
      %v692 = vpop.f32.mrf.mxu0
      %693 = vdwg.mxu0
      %vm694 = vcmask 1045504
      %v695 = vrot.slane %v318, 2
      %v696 = vrot.slane %v319, 2
      %v697 = vsel %vm694, %v695, %v696
      %v698 = vrot.slane %v320, 2
      %v699 = vrot.slane %v321, 2
      %v700 = vsel %vm694, %v698, %v699
      %v701 = vrot.slane %v322, 2
      %v702 = vrot.slane %v323, 2
      %v703 = vsel %vm694, %v701, %v702
      %v704 = vrot.slane %v324, 2
      %v705 = vrot.slane %v325, 2
      %v706 = vsel %vm694, %v704, %v705
      %v707 = vrot.slane %v326, 2
      %v708 = vrot.slane %v327, 2
      %v709 = vsel %vm694, %v707, %v708
      %v710 = vrot.slane %v328, 2
      %v711 = vrot.slane %v329, 2
      %v712 = vsel %vm694, %v710, %v711
      %v713 = vrot.slane %v330, 2
      %v714 = vrot.slane %v331, 2
      %v715 = vsel %vm694, %v713, %v714
      %v716 = vrot.slane %v332, 2
      %v717 = vrot.slane %v333, 2
      %v718 = vsel %vm694, %v716, %v717
      %v719 = vsel %vm451, %v697, 0
      %v721 = vsel %vm451, %v700, 0
      %v723 = vsel %vm451, %v703, 0
      %v725 = vsel %vm451, %v706, 0
      %v727 = vsel %vm451, %v709, 0
      %v729 = vsel %vm451, %v712, 0
      %v731 = vsel %vm451, %v715, 0
      %v733 = vsel %vm451, %v718, 0
      %735 = vmatprep.subr.mxu0 0.0
      %736 = vmatpush1.msra.mxu0 0.0
      %737 = vmatprep.subr.mxu0 0.0
      %738 = vmatpush1.msra.mxu0 0.0
      %739 = vmatprep.subr.mxu0 0.0
      %740 = vmatpush1.msra.mxu0 0.0
      %741 = vmatprep.subr.mxu0 0.0
      %742 = vmatpush1.msra.mxu0 0.0
      %743 = vmatprep.subr.mxu0 0.0
      %744 = vmatpush1.msra.mxu0 0.0
      %745 = vmatprep.subr.mxu0 0.0
      %746 = vmatpush1.msra.mxu0 0.0
      %747 = vmatprep.subr.mxu0 0.0
      %748 = vmatpush1.msra.mxu0 0.0
      %749 = vmatprep.subr.mxu0 0.0
      %750 = vmatpush1.msra.mxu0 0.0
      %751 = vmatprep.subr.mxu0 0.0
      %752 = vmatpush1.msra.mxu0 %v361
      %753 = vmatprep.subr.mxu0 0.0
      %754 = vmatpush1.msra.mxu0 %v360
      %755 = vmatprep.subr.mxu0 0.0
      %756 = vmatpush1.msra.mxu0 %v359
      %757 = vmatprep.subr.mxu0 0.0
      %758 = vmatpush1.msra.mxu0 %v358
      %759 = vmatprep.subr.mxu0 0.0
      %760 = vmatpush1.msra.mxu0 %v357
      %761 = vmatprep.subr.mxu0 0.0
      %762 = vmatpush1.msra.mxu0 %v356
      %763 = vmatprep.subr.mxu0 0.0
      %764 = vmatpush1.msra.mxu0 %v355
      %765 = vmatprep.subr.mxu0 0.0
      %766 = vmatpush1.msra.mxu0 %v354
      %767 = vmatprep.subr.mxu0 0.0
      %768 = vmatpush2.msra.mxu0 0.0
      %769 = vmatprep.subr.mxu0 0.0
      %770 = vmatpush2.msra.mxu0 0.0
      %771 = vmatprep.subr.mxu0 0.0
      %772 = vmatpush2.msra.mxu0 0.0
      %773 = vmatprep.subr.mxu0 0.0
      %774 = vmatpush2.msra.mxu0 0.0
      %775 = vmatprep.subr.mxu0 0.0
      %776 = vmatpush2.msra.mxu0 0.0
      %777 = vmatprep.subr.mxu0 0.0
      %778 = vmatpush2.msra.mxu0 0.0
      %779 = vmatprep.subr.mxu0 0.0
      %780 = vmatpush2.msra.mxu0 0.0
      %781 = vmatprep.subr.mxu0 0.0
      %782 = vmatpush2.msra.mxu0 0.0
      %783 = vmatprep.subr.mxu0 0.0
      %784 = vmatpush2.msra.mxu0 0.0
      %785 = vmatprep.subr.mxu0 0.0
      %786 = vmatpush2.msra.mxu0 0.0
      %787 = vmatprep.subr.mxu0 0.0
      %788 = vmatpush2.msra.mxu0 0.0
      %789 = vmatprep.subr.mxu0 0.0
      %790 = vmatpush2.msra.mxu0 0.0
      %791 = vmatprep.subr.mxu0 0.0
      %792 = vmatpush2.msra.mxu0 0.0
      %793 = vmatprep.subr.mxu0 0.0
      %794 = vmatpush2.msra.mxu0 0.0
      %795 = vmatprep.subr.mxu0 0.0
      %796 = vmatpush2.msra.mxu0 0.0
      %797 = vmatprep.subr.mxu0 0.0
      %798 = vmatpush2.msra.mxu0 0.0
      %799 = vmatprep.mubr.f32.mxu0 0.0
      %800 = vmatmul.mubr.f32.gmra.mxu0 %v719
      %v801 = vpop.f32.mrf.mxu0
      %v802 = vadd.f32 0.0, %v801
      %v803 = vpop.f32.mrf.mxu0
      %804 = vmatprep.mubr.f32.mxu0 0.0
      %805 = vmatmul.mubr.f32.gmra.mxu0 %v721
      %v806 = vpop.f32.mrf.mxu0
      %v807 = vadd.f32 0.0, %v806
      %v808 = vpop.f32.mrf.mxu0
      %809 = vmatprep.mubr.f32.mxu0 0.0
      %810 = vmatmul.mubr.f32.gmra.mxu0 %v723
      %v811 = vpop.f32.mrf.mxu0
      %v812 = vadd.f32 0.0, %v811
      %v813 = vpop.f32.mrf.mxu0
      %814 = vmatprep.mubr.f32.mxu0 0.0
      %815 = vmatmul.mubr.f32.gmra.mxu0 %v725
      %v816 = vpop.f32.mrf.mxu0
      %v817 = vadd.f32 0.0, %v816
      %v818 = vpop.f32.mrf.mxu0
      %819 = vmatprep.mubr.f32.mxu0 0.0
      %820 = vmatmul.mubr.f32.gmra.mxu0 %v727
      %v821 = vpop.f32.mrf.mxu0
      %v822 = vadd.f32 0.0, %v821
      %v823 = vpop.f32.mrf.mxu0
      %824 = vmatprep.mubr.f32.mxu0 0.0
      %825 = vmatmul.mubr.f32.gmra.mxu0 %v729
      %v826 = vpop.f32.mrf.mxu0
      %v827 = vadd.f32 0.0, %v826
      %v828 = vpop.f32.mrf.mxu0
      %829 = vmatprep.mubr.f32.mxu0 0.0
      %830 = vmatmul.mubr.f32.gmra.mxu0 %v731
      %v831 = vpop.f32.mrf.mxu0
      %v832 = vadd.f32 0.0, %v831
      %v833 = vpop.f32.mrf.mxu0
      %834 = vmatprep.mubr.f32.mxu0 0.0
      %835 = vmatmul.mubr.f32.gmra.mxu0 %v733
      %v836 = vpop.f32.mrf.mxu0
      %v837 = vadd.f32 0.0, %v836
      %v838 = vpop.f32.mrf.mxu0
      %839 = vdwg.mxu0
      %v840 = vadd.f32 %v656, %v802
      %v841 = vadd.f32 %v661, %v807
      %v842 = vadd.f32 %v666, %v812
      %v843 = vadd.f32 %v671, %v817
      %v844 = vadd.f32 %v676, %v822
      %v845 = vadd.f32 %v681, %v827
      %v846 = vadd.f32 %v686, %v832
      %v847 = vadd.f32 %v691, %v837
      %v849 = vsel %vm451, %v334, 0
      %851 = vmatprep.subr.mxu0 0.0
      %852 = vmatpush1.msra.mxu0 0.0
      %853 = vmatprep.subr.mxu0 0.0
      %854 = vmatpush1.msra.mxu0 0.0
      %855 = vmatprep.subr.mxu0 0.0
      %856 = vmatpush1.msra.mxu0 0.0
      %857 = vmatprep.subr.mxu0 0.0
      %858 = vmatpush1.msra.mxu0 0.0
      %859 = vmatprep.subr.mxu0 0.0
      %860 = vmatpush1.msra.mxu0 0.0
      %861 = vmatprep.subr.mxu0 0.0
      %862 = vmatpush1.msra.mxu0 0.0
      %863 = vmatprep.subr.mxu0 0.0
      %864 = vmatpush1.msra.mxu0 0.0
      %865 = vmatprep.subr.mxu0 0.0
      %866 = vmatpush1.msra.mxu0 0.0
      %867 = vmatprep.subr.mxu0 0.0
      %868 = vmatpush1.msra.mxu0 %v369
      %869 = vmatprep.subr.mxu0 0.0
      %870 = vmatpush1.msra.mxu0 %v368
      %871 = vmatprep.subr.mxu0 0.0
      %872 = vmatpush1.msra.mxu0 %v367
      %873 = vmatprep.subr.mxu0 0.0
      %874 = vmatpush1.msra.mxu0 %v366
      %875 = vmatprep.subr.mxu0 0.0
      %876 = vmatpush1.msra.mxu0 %v365
      %877 = vmatprep.subr.mxu0 0.0
      %878 = vmatpush1.msra.mxu0 %v364
      %879 = vmatprep.subr.mxu0 0.0
      %880 = vmatpush1.msra.mxu0 %v363
      %881 = vmatprep.subr.mxu0 0.0
      %882 = vmatpush1.msra.mxu0 %v362
      %883 = vmatprep.subr.mxu0 0.0
      %884 = vmatpush2.msra.mxu0 0.0
      %885 = vmatprep.subr.mxu0 0.0
      %886 = vmatpush2.msra.mxu0 0.0
      %887 = vmatprep.subr.mxu0 0.0
      %888 = vmatpush2.msra.mxu0 0.0
      %889 = vmatprep.subr.mxu0 0.0
      %890 = vmatpush2.msra.mxu0 0.0
      %891 = vmatprep.subr.mxu0 0.0
      %892 = vmatpush2.msra.mxu0 0.0
      %893 = vmatprep.subr.mxu0 0.0
      %894 = vmatpush2.msra.mxu0 0.0
      %895 = vmatprep.subr.mxu0 0.0
      %896 = vmatpush2.msra.mxu0 0.0
      %897 = vmatprep.subr.mxu0 0.0
      %898 = vmatpush2.msra.mxu0 0.0
      %899 = vmatprep.subr.mxu0 0.0
      %900 = vmatpush2.msra.mxu0 0.0
      %901 = vmatprep.subr.mxu0 0.0
      %902 = vmatpush2.msra.mxu0 0.0
      %903 = vmatprep.subr.mxu0 0.0
      %904 = vmatpush2.msra.mxu0 0.0
      %905 = vmatprep.subr.mxu0 0.0
      %906 = vmatpush2.msra.mxu0 0.0
      %907 = vmatprep.subr.mxu0 0.0
      %908 = vmatpush2.msra.mxu0 0.0
      %909 = vmatprep.subr.mxu0 0.0
      %910 = vmatpush2.msra.mxu0 0.0
      %911 = vmatprep.subr.mxu0 0.0
      %912 = vmatpush2.msra.mxu0 0.0
      %913 = vmatprep.subr.mxu0 0.0
      %914 = vmatpush2.msra.mxu0 0.0
      %915 = vmatprep.mubr.f32.mxu0 0.0
      %916 = vmatmul.mubr.f32.gmra.mxu0 %v575
      %v917 = vpop.f32.mrf.mxu0
      %v918 = vadd.f32 0.0, %v917
      %v919 = vpop.f32.mrf.mxu0
      %920 = vmatprep.mubr.f32.mxu0 0.0
      %921 = vmatmul.mubr.f32.gmra.mxu0 %v577
      %v922 = vpop.f32.mrf.mxu0
      %v923 = vadd.f32 0.0, %v922
      %v924 = vpop.f32.mrf.mxu0
      %925 = vmatprep.mubr.f32.mxu0 0.0
      %926 = vmatmul.mubr.f32.gmra.mxu0 %v579
      %v927 = vpop.f32.mrf.mxu0
      %v928 = vadd.f32 0.0, %v927
      %v929 = vpop.f32.mrf.mxu0
      %930 = vmatprep.mubr.f32.mxu0 0.0
      %931 = vmatmul.mubr.f32.gmra.mxu0 %v581
      %v932 = vpop.f32.mrf.mxu0
      %v933 = vadd.f32 0.0, %v932
      %v934 = vpop.f32.mrf.mxu0
      %935 = vmatprep.mubr.f32.mxu0 0.0
      %936 = vmatmul.mubr.f32.gmra.mxu0 %v583
      %v937 = vpop.f32.mrf.mxu0
      %v938 = vadd.f32 0.0, %v937
      %v939 = vpop.f32.mrf.mxu0
      %940 = vmatprep.mubr.f32.mxu0 0.0
      %941 = vmatmul.mubr.f32.gmra.mxu0 %v585
      %v942 = vpop.f32.mrf.mxu0
      %v943 = vadd.f32 0.0, %v942
      %v944 = vpop.f32.mrf.mxu0
      %945 = vmatprep.mubr.f32.mxu0 0.0
      %946 = vmatmul.mubr.f32.gmra.mxu0 %v587
      %v947 = vpop.f32.mrf.mxu0
      %v948 = vadd.f32 0.0, %v947
      %v949 = vpop.f32.mrf.mxu0
      %950 = vmatprep.mubr.f32.mxu0 0.0
      %951 = vmatmul.mubr.f32.gmra.mxu0 %v849
      %v952 = vpop.f32.mrf.mxu0
      %v953 = vadd.f32 0.0, %v952
      %v954 = vpop.f32.mrf.mxu0
      %955 = vdwg.mxu0
      %v956 = vadd.f32 %v840, %v918
      %v957 = vadd.f32 %v841, %v923
      %v958 = vadd.f32 %v842, %v928
      %v959 = vadd.f32 %v843, %v933
      %v960 = vadd.f32 %v844, %v938
      %v961 = vadd.f32 %v845, %v943
      %v962 = vadd.f32 %v846, %v948
      %v963 = vadd.f32 %v847, %v953
      %v965 = vrot.slane %v334, 1
      %v966 = vrot.slane %v335, 1
      %v967 = vsel %vm426, %v965, %v966
      %v968 = vsel %vm451, %v967, 0
      %970 = vmatprep.subr.mxu0 0.0
      %971 = vmatpush1.msra.mxu0 0.0
      %972 = vmatprep.subr.mxu0 0.0
      %973 = vmatpush1.msra.mxu0 0.0
      %974 = vmatprep.subr.mxu0 0.0
      %975 = vmatpush1.msra.mxu0 0.0
      %976 = vmatprep.subr.mxu0 0.0
      %977 = vmatpush1.msra.mxu0 0.0
      %978 = vmatprep.subr.mxu0 0.0
      %979 = vmatpush1.msra.mxu0 0.0
      %980 = vmatprep.subr.mxu0 0.0
      %981 = vmatpush1.msra.mxu0 0.0
      %982 = vmatprep.subr.mxu0 0.0
      %983 = vmatpush1.msra.mxu0 0.0
      %984 = vmatprep.subr.mxu0 0.0
      %985 = vmatpush1.msra.mxu0 0.0
      %986 = vmatprep.subr.mxu0 0.0
      %987 = vmatpush1.msra.mxu0 %v377
      %988 = vmatprep.subr.mxu0 0.0
      %989 = vmatpush1.msra.mxu0 %v376
      %990 = vmatprep.subr.mxu0 0.0
      %991 = vmatpush1.msra.mxu0 %v375
      %992 = vmatprep.subr.mxu0 0.0
      %993 = vmatpush1.msra.mxu0 %v374
      %994 = vmatprep.subr.mxu0 0.0
      %995 = vmatpush1.msra.mxu0 %v373
      %996 = vmatprep.subr.mxu0 0.0
      %997 = vmatpush1.msra.mxu0 %v372
      %998 = vmatprep.subr.mxu0 0.0
      %999 = vmatpush1.msra.mxu0 %v371
      %1000 = vmatprep.subr.mxu0 0.0
      %1001 = vmatpush1.msra.mxu0 %v370
      %1002 = vmatprep.subr.mxu0 0.0
      %1003 = vmatpush2.msra.mxu0 0.0
      %1004 = vmatprep.subr.mxu0 0.0
      %1005 = vmatpush2.msra.mxu0 0.0
      %1006 = vmatprep.subr.mxu0 0.0
      %1007 = vmatpush2.msra.mxu0 0.0
      %1008 = vmatprep.subr.mxu0 0.0
      %1009 = vmatpush2.msra.mxu0 0.0
      %1010 = vmatprep.subr.mxu0 0.0
      %1011 = vmatpush2.msra.mxu0 0.0
      %1012 = vmatprep.subr.mxu0 0.0
      %1013 = vmatpush2.msra.mxu0 0.0
      %1014 = vmatprep.subr.mxu0 0.0
      %1015 = vmatpush2.msra.mxu0 0.0
      %1016 = vmatprep.subr.mxu0 0.0
      %1017 = vmatpush2.msra.mxu0 0.0
      %1018 = vmatprep.subr.mxu0 0.0
      %1019 = vmatpush2.msra.mxu0 0.0
      %1020 = vmatprep.subr.mxu0 0.0
      %1021 = vmatpush2.msra.mxu0 0.0
      %1022 = vmatprep.subr.mxu0 0.0
      %1023 = vmatpush2.msra.mxu0 0.0
      %1024 = vmatprep.subr.mxu0 0.0
      %1025 = vmatpush2.msra.mxu0 0.0
      %1026 = vmatprep.subr.mxu0 0.0
      %1027 = vmatpush2.msra.mxu0 0.0
      %1028 = vmatprep.subr.mxu0 0.0
      %1029 = vmatpush2.msra.mxu0 0.0
      %1030 = vmatprep.subr.mxu0 0.0
      %1031 = vmatpush2.msra.mxu0 0.0
      %1032 = vmatprep.subr.mxu0 0.0
      %1033 = vmatpush2.msra.mxu0 0.0
      %1034 = vmatprep.mubr.f32.mxu0 0.0
      %1035 = vmatmul.mubr.f32.gmra.mxu0 %v454
      %v1036 = vpop.f32.mrf.mxu0
      %v1037 = vadd.f32 0.0, %v1036
      %v1038 = vpop.f32.mrf.mxu0
      %1039 = vmatprep.mubr.f32.mxu0 0.0
      %1040 = vmatmul.mubr.f32.gmra.mxu0 %v456
      %v1041 = vpop.f32.mrf.mxu0
      %v1042 = vadd.f32 0.0, %v1041
      %v1043 = vpop.f32.mrf.mxu0
      %1044 = vmatprep.mubr.f32.mxu0 0.0
      %1045 = vmatmul.mubr.f32.gmra.mxu0 %v458
      %v1046 = vpop.f32.mrf.mxu0
      %v1047 = vadd.f32 0.0, %v1046
      %v1048 = vpop.f32.mrf.mxu0
      %1049 = vmatprep.mubr.f32.mxu0 0.0
      %1050 = vmatmul.mubr.f32.gmra.mxu0 %v460
      %v1051 = vpop.f32.mrf.mxu0
      %v1052 = vadd.f32 0.0, %v1051
      %v1053 = vpop.f32.mrf.mxu0
      %1054 = vmatprep.mubr.f32.mxu0 0.0
      %1055 = vmatmul.mubr.f32.gmra.mxu0 %v462
      %v1056 = vpop.f32.mrf.mxu0
      %v1057 = vadd.f32 0.0, %v1056
      %v1058 = vpop.f32.mrf.mxu0
      %1059 = vmatprep.mubr.f32.mxu0 0.0
      %1060 = vmatmul.mubr.f32.gmra.mxu0 %v464
      %v1061 = vpop.f32.mrf.mxu0
      %v1062 = vadd.f32 0.0, %v1061
      %v1063 = vpop.f32.mrf.mxu0
      %1064 = vmatprep.mubr.f32.mxu0 0.0
      %1065 = vmatmul.mubr.f32.gmra.mxu0 %v466
      %v1066 = vpop.f32.mrf.mxu0
      %v1067 = vadd.f32 0.0, %v1066
      %v1068 = vpop.f32.mrf.mxu0
      %1069 = vmatprep.mubr.f32.mxu0 0.0
      %1070 = vmatmul.mubr.f32.gmra.mxu0 %v968
      %v1071 = vpop.f32.mrf.mxu0
      %v1072 = vadd.f32 0.0, %v1071
      %v1073 = vpop.f32.mrf.mxu0
      %1074 = vdwg.mxu0
      %v1075 = vadd.f32 %v956, %v1037
      %v1076 = vadd.f32 %v957, %v1042
      %v1077 = vadd.f32 %v958, %v1047
      %v1078 = vadd.f32 %v959, %v1052
      %v1079 = vadd.f32 %v960, %v1057
      %v1080 = vadd.f32 %v961, %v1062
      %v1081 = vadd.f32 %v962, %v1067
      %v1082 = vadd.f32 %v963, %v1072
      %v1083 = vrot.slane %v334, 2
      %v1084 = vrot.slane %v335, 2
      %v1085 = vsel %vm694, %v1083, %v1084
      %v1086 = vsel %vm451, %v1085, 0
      %1088 = vmatprep.subr.mxu0 0.0
      %1089 = vmatpush1.msra.mxu0 0.0
      %1090 = vmatprep.subr.mxu0 0.0
      %1091 = vmatpush1.msra.mxu0 0.0
      %1092 = vmatprep.subr.mxu0 0.0
      %1093 = vmatpush1.msra.mxu0 0.0
      %1094 = vmatprep.subr.mxu0 0.0
      %1095 = vmatpush1.msra.mxu0 0.0
      %1096 = vmatprep.subr.mxu0 0.0
      %1097 = vmatpush1.msra.mxu0 0.0
      %1098 = vmatprep.subr.mxu0 0.0
      %1099 = vmatpush1.msra.mxu0 0.0
      %1100 = vmatprep.subr.mxu0 0.0
      %1101 = vmatpush1.msra.mxu0 0.0
      %1102 = vmatprep.subr.mxu0 0.0
      %1103 = vmatpush1.msra.mxu0 0.0
      %1104 = vmatprep.subr.mxu0 0.0
      %1105 = vmatpush1.msra.mxu0 %v385
      %1106 = vmatprep.subr.mxu0 0.0
      %1107 = vmatpush1.msra.mxu0 %v384
      %1108 = vmatprep.subr.mxu0 0.0
      %1109 = vmatpush1.msra.mxu0 %v383
      %1110 = vmatprep.subr.mxu0 0.0
      %1111 = vmatpush1.msra.mxu0 %v382
      %1112 = vmatprep.subr.mxu0 0.0
      %1113 = vmatpush1.msra.mxu0 %v381
      %1114 = vmatprep.subr.mxu0 0.0
      %1115 = vmatpush1.msra.mxu0 %v380
      %1116 = vmatprep.subr.mxu0 0.0
      %1117 = vmatpush1.msra.mxu0 %v379
      %1118 = vmatprep.subr.mxu0 0.0
      %1119 = vmatpush1.msra.mxu0 %v378
      %1120 = vmatprep.subr.mxu0 0.0
      %1121 = vmatpush2.msra.mxu0 0.0
      %1122 = vmatprep.subr.mxu0 0.0
      %1123 = vmatpush2.msra.mxu0 0.0
      %1124 = vmatprep.subr.mxu0 0.0
      %1125 = vmatpush2.msra.mxu0 0.0
      %1126 = vmatprep.subr.mxu0 0.0
      %1127 = vmatpush2.msra.mxu0 0.0
      %1128 = vmatprep.subr.mxu0 0.0
      %1129 = vmatpush2.msra.mxu0 0.0
      %1130 = vmatprep.subr.mxu0 0.0
      %1131 = vmatpush2.msra.mxu0 0.0
      %1132 = vmatprep.subr.mxu0 0.0
      %1133 = vmatpush2.msra.mxu0 0.0
      %1134 = vmatprep.subr.mxu0 0.0
      %1135 = vmatpush2.msra.mxu0 0.0
      %1136 = vmatprep.subr.mxu0 0.0
      %1137 = vmatpush2.msra.mxu0 0.0
      %1138 = vmatprep.subr.mxu0 0.0
      %1139 = vmatpush2.msra.mxu0 0.0
      %1140 = vmatprep.subr.mxu0 0.0
      %1141 = vmatpush2.msra.mxu0 0.0
      %1142 = vmatprep.subr.mxu0 0.0
      %1143 = vmatpush2.msra.mxu0 0.0
      %1144 = vmatprep.subr.mxu0 0.0
      %1145 = vmatpush2.msra.mxu0 0.0
      %1146 = vmatprep.subr.mxu0 0.0
      %1147 = vmatpush2.msra.mxu0 0.0
      %1148 = vmatprep.subr.mxu0 0.0
      %1149 = vmatpush2.msra.mxu0 0.0
      %1150 = vmatprep.subr.mxu0 0.0
      %1151 = vmatpush2.msra.mxu0 0.0
      %1152 = vmatprep.mubr.f32.mxu0 0.0
      %1153 = vmatmul.mubr.f32.gmra.mxu0 %v721
      %v1154 = vpop.f32.mrf.mxu0
      %v1155 = vadd.f32 0.0, %v1154
      %v1156 = vpop.f32.mrf.mxu0
      %1157 = vmatprep.mubr.f32.mxu0 0.0
      %1158 = vmatmul.mubr.f32.gmra.mxu0 %v723
      %v1159 = vpop.f32.mrf.mxu0
      %v1160 = vadd.f32 0.0, %v1159
      %v1161 = vpop.f32.mrf.mxu0
      %1162 = vmatprep.mubr.f32.mxu0 0.0
      %1163 = vmatmul.mubr.f32.gmra.mxu0 %v725
      %v1164 = vpop.f32.mrf.mxu0
      %v1165 = vadd.f32 0.0, %v1164
      %v1166 = vpop.f32.mrf.mxu0
      %1167 = vmatprep.mubr.f32.mxu0 0.0
      %1168 = vmatmul.mubr.f32.gmra.mxu0 %v727
      %v1169 = vpop.f32.mrf.mxu0
      %v1170 = vadd.f32 0.0, %v1169
      %v1171 = vpop.f32.mrf.mxu0
      %1172 = vmatprep.mubr.f32.mxu0 0.0
      %1173 = vmatmul.mubr.f32.gmra.mxu0 %v729
      %v1174 = vpop.f32.mrf.mxu0
      %v1175 = vadd.f32 0.0, %v1174
      %v1176 = vpop.f32.mrf.mxu0
      %1177 = vmatprep.mubr.f32.mxu0 0.0
      %1178 = vmatmul.mubr.f32.gmra.mxu0 %v731
      %v1179 = vpop.f32.mrf.mxu0
      %v1180 = vadd.f32 0.0, %v1179
      %v1181 = vpop.f32.mrf.mxu0
      %1182 = vmatprep.mubr.f32.mxu0 0.0
      %1183 = vmatmul.mubr.f32.gmra.mxu0 %v733
      %v1184 = vpop.f32.mrf.mxu0
      %v1185 = vadd.f32 0.0, %v1184
      %v1186 = vpop.f32.mrf.mxu0
      %1187 = vmatprep.mubr.f32.mxu0 0.0
      %1188 = vmatmul.mubr.f32.gmra.mxu0 %v1086
      %v1189 = vpop.f32.mrf.mxu0
      %v1190 = vadd.f32 0.0, %v1189
      %v1191 = vpop.f32.mrf.mxu0
      %1192 = vdwg.mxu0
      %v1193 = vadd.f32 %v1075, %v1155
      %v1194 = vadd.f32 %v1076, %v1160
      %v1195 = vadd.f32 %v1077, %v1165
      %v1196 = vadd.f32 %v1078, %v1170
      %v1197 = vadd.f32 %v1079, %v1175
      %v1198 = vadd.f32 %v1080, %v1180
      %v1199 = vadd.f32 %v1081, %v1185
      %v1200 = vadd.f32 %v1082, %v1190
      %v1202 = vsel %vm451, %v336, 0
      %1204 = vmatprep.subr.mxu0 0.0
      %1205 = vmatpush1.msra.mxu0 0.0
      %1206 = vmatprep.subr.mxu0 0.0
      %1207 = vmatpush1.msra.mxu0 0.0
      %1208 = vmatprep.subr.mxu0 0.0
      %1209 = vmatpush1.msra.mxu0 0.0
      %1210 = vmatprep.subr.mxu0 0.0
      %1211 = vmatpush1.msra.mxu0 0.0
      %1212 = vmatprep.subr.mxu0 0.0
      %1213 = vmatpush1.msra.mxu0 0.0
      %1214 = vmatprep.subr.mxu0 0.0
      %1215 = vmatpush1.msra.mxu0 0.0
      %1216 = vmatprep.subr.mxu0 0.0
      %1217 = vmatpush1.msra.mxu0 0.0
      %1218 = vmatprep.subr.mxu0 0.0
      %1219 = vmatpush1.msra.mxu0 0.0
      %1220 = vmatprep.subr.mxu0 0.0
      %1221 = vmatpush1.msra.mxu0 %v393
      %1222 = vmatprep.subr.mxu0 0.0
      %1223 = vmatpush1.msra.mxu0 %v392
      %1224 = vmatprep.subr.mxu0 0.0
      %1225 = vmatpush1.msra.mxu0 %v391
      %1226 = vmatprep.subr.mxu0 0.0
      %1227 = vmatpush1.msra.mxu0 %v390
      %1228 = vmatprep.subr.mxu0 0.0
      %1229 = vmatpush1.msra.mxu0 %v389
      %1230 = vmatprep.subr.mxu0 0.0
      %1231 = vmatpush1.msra.mxu0 %v388
      %1232 = vmatprep.subr.mxu0 0.0
      %1233 = vmatpush1.msra.mxu0 %v387
      %1234 = vmatprep.subr.mxu0 0.0
      %1235 = vmatpush1.msra.mxu0 %v386
      %1236 = vmatprep.subr.mxu0 0.0
      %1237 = vmatpush2.msra.mxu0 0.0
      %1238 = vmatprep.subr.mxu0 0.0
      %1239 = vmatpush2.msra.mxu0 0.0
      %1240 = vmatprep.subr.mxu0 0.0
      %1241 = vmatpush2.msra.mxu0 0.0
      %1242 = vmatprep.subr.mxu0 0.0
      %1243 = vmatpush2.msra.mxu0 0.0
      %1244 = vmatprep.subr.mxu0 0.0
      %1245 = vmatpush2.msra.mxu0 0.0
      %1246 = vmatprep.subr.mxu0 0.0
      %1247 = vmatpush2.msra.mxu0 0.0
      %1248 = vmatprep.subr.mxu0 0.0
      %1249 = vmatpush2.msra.mxu0 0.0
      %1250 = vmatprep.subr.mxu0 0.0
      %1251 = vmatpush2.msra.mxu0 0.0
      %1252 = vmatprep.subr.mxu0 0.0
      %1253 = vmatpush2.msra.mxu0 0.0
      %1254 = vmatprep.subr.mxu0 0.0
      %1255 = vmatpush2.msra.mxu0 0.0
      %1256 = vmatprep.subr.mxu0 0.0
      %1257 = vmatpush2.msra.mxu0 0.0
      %1258 = vmatprep.subr.mxu0 0.0
      %1259 = vmatpush2.msra.mxu0 0.0
      %1260 = vmatprep.subr.mxu0 0.0
      %1261 = vmatpush2.msra.mxu0 0.0
      %1262 = vmatprep.subr.mxu0 0.0
      %1263 = vmatpush2.msra.mxu0 0.0
      %1264 = vmatprep.subr.mxu0 0.0
      %1265 = vmatpush2.msra.mxu0 0.0
      %1266 = vmatprep.subr.mxu0 0.0
      %1267 = vmatpush2.msra.mxu0 0.0
      %1268 = vmatprep.mubr.f32.mxu0 0.0
      %1269 = vmatmul.mubr.f32.gmra.mxu0 %v577
      %v1270 = vpop.f32.mrf.mxu0
      %v1271 = vadd.f32 0.0, %v1270
      %v1272 = vpop.f32.mrf.mxu0
      %1273 = vmatprep.mubr.f32.mxu0 0.0
      %1274 = vmatmul.mubr.f32.gmra.mxu0 %v579
      %v1275 = vpop.f32.mrf.mxu0
      %v1276 = vadd.f32 0.0, %v1275
      %v1277 = vpop.f32.mrf.mxu0
      %1278 = vmatprep.mubr.f32.mxu0 0.0
      %1279 = vmatmul.mubr.f32.gmra.mxu0 %v581
      %v1280 = vpop.f32.mrf.mxu0
      %v1281 = vadd.f32 0.0, %v1280
      %v1282 = vpop.f32.mrf.mxu0
      %1283 = vmatprep.mubr.f32.mxu0 0.0
      %1284 = vmatmul.mubr.f32.gmra.mxu0 %v583
      %v1285 = vpop.f32.mrf.mxu0
      %v1286 = vadd.f32 0.0, %v1285
      %v1287 = vpop.f32.mrf.mxu0
      %1288 = vmatprep.mubr.f32.mxu0 0.0
      %1289 = vmatmul.mubr.f32.gmra.mxu0 %v585
      %v1290 = vpop.f32.mrf.mxu0
      %v1291 = vadd.f32 0.0, %v1290
      %v1292 = vpop.f32.mrf.mxu0
      %1293 = vmatprep.mubr.f32.mxu0 0.0
      %1294 = vmatmul.mubr.f32.gmra.mxu0 %v587
      %v1295 = vpop.f32.mrf.mxu0
      %v1296 = vadd.f32 0.0, %v1295
      %v1297 = vpop.f32.mrf.mxu0
      %1298 = vmatprep.mubr.f32.mxu0 0.0
      %1299 = vmatmul.mubr.f32.gmra.mxu0 %v849
      %v1300 = vpop.f32.mrf.mxu0
      %v1301 = vadd.f32 0.0, %v1300
      %v1302 = vpop.f32.mrf.mxu0
      %1303 = vmatprep.mubr.f32.mxu0 0.0
      %1304 = vmatmul.mubr.f32.gmra.mxu0 %v1202
      %v1305 = vpop.f32.mrf.mxu0
      %v1306 = vadd.f32 0.0, %v1305
      %v1307 = vpop.f32.mrf.mxu0
      %1308 = vdwg.mxu0
      %v1309 = vadd.f32 %v1193, %v1271
      %v1310 = vadd.f32 %v1194, %v1276
      %v1311 = vadd.f32 %v1195, %v1281
      %v1312 = vadd.f32 %v1196, %v1286
      %v1313 = vadd.f32 %v1197, %v1291
      %v1314 = vadd.f32 %v1198, %v1296
      %v1315 = vadd.f32 %v1199, %v1301
      %v1316 = vadd.f32 %v1200, %v1306
      %v1318 = vrot.slane %v336, 1
      %v1319 = vrot.slane %v337, 1
      %v1320 = vsel %vm426, %v1318, %v1319
      %v1321 = vsel %vm451, %v1320, 0
      %1323 = vmatprep.subr.mxu0 0.0
      %1324 = vmatpush1.msra.mxu0 0.0
      %1325 = vmatprep.subr.mxu0 0.0
      %1326 = vmatpush1.msra.mxu0 0.0
      %1327 = vmatprep.subr.mxu0 0.0
      %1328 = vmatpush1.msra.mxu0 0.0
      %1329 = vmatprep.subr.mxu0 0.0
      %1330 = vmatpush1.msra.mxu0 0.0
      %1331 = vmatprep.subr.mxu0 0.0
      %1332 = vmatpush1.msra.mxu0 0.0
      %1333 = vmatprep.subr.mxu0 0.0
      %1334 = vmatpush1.msra.mxu0 0.0
      %1335 = vmatprep.subr.mxu0 0.0
      %1336 = vmatpush1.msra.mxu0 0.0
      %1337 = vmatprep.subr.mxu0 0.0
      %1338 = vmatpush1.msra.mxu0 0.0
      %1339 = vmatprep.subr.mxu0 0.0
      %1340 = vmatpush1.msra.mxu0 %v401
      %1341 = vmatprep.subr.mxu0 0.0
      %1342 = vmatpush1.msra.mxu0 %v400
      %1343 = vmatprep.subr.mxu0 0.0
      %1344 = vmatpush1.msra.mxu0 %v399
      %1345 = vmatprep.subr.mxu0 0.0
      %1346 = vmatpush1.msra.mxu0 %v398
      %1347 = vmatprep.subr.mxu0 0.0
      %1348 = vmatpush1.msra.mxu0 %v397
      %1349 = vmatprep.subr.mxu0 0.0
      %1350 = vmatpush1.msra.mxu0 %v396
      %1351 = vmatprep.subr.mxu0 0.0
      %1352 = vmatpush1.msra.mxu0 %v395
      %1353 = vmatprep.subr.mxu0 0.0
      %1354 = vmatpush1.msra.mxu0 %v394
      %1355 = vmatprep.subr.mxu0 0.0
      %1356 = vmatpush2.msra.mxu0 0.0
      %1357 = vmatprep.subr.mxu0 0.0
      %1358 = vmatpush2.msra.mxu0 0.0
      %1359 = vmatprep.subr.mxu0 0.0
      %1360 = vmatpush2.msra.mxu0 0.0
      %1361 = vmatprep.subr.mxu0 0.0
      %1362 = vmatpush2.msra.mxu0 0.0
      %1363 = vmatprep.subr.mxu0 0.0
      %1364 = vmatpush2.msra.mxu0 0.0
      %1365 = vmatprep.subr.mxu0 0.0
      %1366 = vmatpush2.msra.mxu0 0.0
      %1367 = vmatprep.subr.mxu0 0.0
      %1368 = vmatpush2.msra.mxu0 0.0
      %1369 = vmatprep.subr.mxu0 0.0
      %1370 = vmatpush2.msra.mxu0 0.0
      %1371 = vmatprep.subr.mxu0 0.0
      %1372 = vmatpush2.msra.mxu0 0.0
      %1373 = vmatprep.subr.mxu0 0.0
      %1374 = vmatpush2.msra.mxu0 0.0
      %1375 = vmatprep.subr.mxu0 0.0
      %1376 = vmatpush2.msra.mxu0 0.0
      %1377 = vmatprep.subr.mxu0 0.0
      %1378 = vmatpush2.msra.mxu0 0.0
      %1379 = vmatprep.subr.mxu0 0.0
      %1380 = vmatpush2.msra.mxu0 0.0
      %1381 = vmatprep.subr.mxu0 0.0
      %1382 = vmatpush2.msra.mxu0 0.0
      %1383 = vmatprep.subr.mxu0 0.0
      %1384 = vmatpush2.msra.mxu0 0.0
      %1385 = vmatprep.subr.mxu0 0.0
      %1386 = vmatpush2.msra.mxu0 0.0
      %1387 = vmatprep.mubr.f32.mxu0 0.0
      %1388 = vmatmul.mubr.f32.gmra.mxu0 %v456
      %v1389 = vpop.f32.mrf.mxu0
      %v1390 = vadd.f32 0.0, %v1389
      %v1391 = vpop.f32.mrf.mxu0
      %1392 = vmatprep.mubr.f32.mxu0 0.0
      %1393 = vmatmul.mubr.f32.gmra.mxu0 %v458
      %v1394 = vpop.f32.mrf.mxu0
      %v1395 = vadd.f32 0.0, %v1394
      %v1396 = vpop.f32.mrf.mxu0
      %1397 = vmatprep.mubr.f32.mxu0 0.0
      %1398 = vmatmul.mubr.f32.gmra.mxu0 %v460
      %v1399 = vpop.f32.mrf.mxu0
      %v1400 = vadd.f32 0.0, %v1399
      %v1401 = vpop.f32.mrf.mxu0
      %1402 = vmatprep.mubr.f32.mxu0 0.0
      %1403 = vmatmul.mubr.f32.gmra.mxu0 %v462
      %v1404 = vpop.f32.mrf.mxu0
      %v1405 = vadd.f32 0.0, %v1404
      %v1406 = vpop.f32.mrf.mxu0
      %1407 = vmatprep.mubr.f32.mxu0 0.0
      %1408 = vmatmul.mubr.f32.gmra.mxu0 %v464
      %v1409 = vpop.f32.mrf.mxu0
      %v1410 = vadd.f32 0.0, %v1409
      %v1411 = vpop.f32.mrf.mxu0
      %1412 = vmatprep.mubr.f32.mxu0 0.0
      %1413 = vmatmul.mubr.f32.gmra.mxu0 %v466
      %v1414 = vpop.f32.mrf.mxu0
      %v1415 = vadd.f32 0.0, %v1414
      %v1416 = vpop.f32.mrf.mxu0
      %1417 = vmatprep.mubr.f32.mxu0 0.0
      %1418 = vmatmul.mubr.f32.gmra.mxu0 %v968
      %v1419 = vpop.f32.mrf.mxu0
      %v1420 = vadd.f32 0.0, %v1419
      %v1421 = vpop.f32.mrf.mxu0
      %1422 = vmatprep.mubr.f32.mxu0 0.0
      %1423 = vmatmul.mubr.f32.gmra.mxu0 %v1321
      %v1424 = vpop.f32.mrf.mxu0
      %v1425 = vadd.f32 0.0, %v1424
      %v1426 = vpop.f32.mrf.mxu0
      %1427 = vdwg.mxu0
      %v1428 = vadd.f32 %v1309, %v1390
      %v1429 = vadd.f32 %v1310, %v1395
      %v1430 = vadd.f32 %v1311, %v1400
      %v1431 = vadd.f32 %v1312, %v1405
      %v1432 = vadd.f32 %v1313, %v1410
      %v1433 = vadd.f32 %v1314, %v1415
      %v1434 = vadd.f32 %v1315, %v1420
      %v1435 = vadd.f32 %v1316, %v1425
      %v1436 = vrot.slane %v336, 2
      %v1437 = vrot.slane %v337, 2
      %v1438 = vsel %vm694, %v1436, %v1437
      %v1439 = vsel %vm451, %v1438, 0
      %1441 = vmatprep.subr.mxu0 0.0
      %1442 = vmatpush1.msra.mxu0 0.0
      %1443 = vmatprep.subr.mxu0 0.0
      %1444 = vmatpush1.msra.mxu0 0.0
      %1445 = vmatprep.subr.mxu0 0.0
      %1446 = vmatpush1.msra.mxu0 0.0
      %1447 = vmatprep.subr.mxu0 0.0
      %1448 = vmatpush1.msra.mxu0 0.0
      %1449 = vmatprep.subr.mxu0 0.0
      %1450 = vmatpush1.msra.mxu0 0.0
      %1451 = vmatprep.subr.mxu0 0.0
      %1452 = vmatpush1.msra.mxu0 0.0
      %1453 = vmatprep.subr.mxu0 0.0
      %1454 = vmatpush1.msra.mxu0 0.0
      %1455 = vmatprep.subr.mxu0 0.0
      %1456 = vmatpush1.msra.mxu0 0.0
      %1457 = vmatprep.subr.mxu0 0.0
      %1458 = vmatpush1.msra.mxu0 %v409
      %1459 = vmatprep.subr.mxu0 0.0
      %1460 = vmatpush1.msra.mxu0 %v408
      %1461 = vmatprep.subr.mxu0 0.0
      %1462 = vmatpush1.msra.mxu0 %v407
      %1463 = vmatprep.subr.mxu0 0.0
      %1464 = vmatpush1.msra.mxu0 %v406
      %1465 = vmatprep.subr.mxu0 0.0
      %1466 = vmatpush1.msra.mxu0 %v405
      %1467 = vmatprep.subr.mxu0 0.0
      %1468 = vmatpush1.msra.mxu0 %v404
      %1469 = vmatprep.subr.mxu0 0.0
      %1470 = vmatpush1.msra.mxu0 %v403
      %1471 = vmatprep.subr.mxu0 0.0
      %1472 = vmatpush1.msra.mxu0 %v402
      %1473 = vmatprep.subr.mxu0 0.0
      %1474 = vmatpush2.msra.mxu0 0.0
      %1475 = vmatprep.subr.mxu0 0.0
      %1476 = vmatpush2.msra.mxu0 0.0
      %1477 = vmatprep.subr.mxu0 0.0
      %1478 = vmatpush2.msra.mxu0 0.0
      %1479 = vmatprep.subr.mxu0 0.0
      %1480 = vmatpush2.msra.mxu0 0.0
      %1481 = vmatprep.subr.mxu0 0.0
      %1482 = vmatpush2.msra.mxu0 0.0
      %1483 = vmatprep.subr.mxu0 0.0
      %1484 = vmatpush2.msra.mxu0 0.0
      %1485 = vmatprep.subr.mxu0 0.0
      %1486 = vmatpush2.msra.mxu0 0.0
      %1487 = vmatprep.subr.mxu0 0.0
      %1488 = vmatpush2.msra.mxu0 0.0
      %1489 = vmatprep.subr.mxu0 0.0
      %1490 = vmatpush2.msra.mxu0 0.0
      %1491 = vmatprep.subr.mxu0 0.0
      %1492 = vmatpush2.msra.mxu0 0.0
      %1493 = vmatprep.subr.mxu0 0.0
      %1494 = vmatpush2.msra.mxu0 0.0
      %1495 = vmatprep.subr.mxu0 0.0
      %1496 = vmatpush2.msra.mxu0 0.0
      %1497 = vmatprep.subr.mxu0 0.0
      %1498 = vmatpush2.msra.mxu0 0.0
      %1499 = vmatprep.subr.mxu0 0.0
      %1500 = vmatpush2.msra.mxu0 0.0
      %1501 = vmatprep.subr.mxu0 0.0
      %1502 = vmatpush2.msra.mxu0 0.0
      %1503 = vmatprep.subr.mxu0 0.0
      %1504 = vmatpush2.msra.mxu0 0.0
      %1505 = vmatprep.mubr.f32.mxu0 0.0
      %1506 = vmatmul.mubr.f32.gmra.mxu0 %v723
      %v1507 = vpop.f32.mrf.mxu0
      %v1508 = vadd.f32 0.0, %v1507
      %v1509 = vpop.f32.mrf.mxu0
      %1510 = vmatprep.mubr.f32.mxu0 0.0
      %1511 = vmatmul.mubr.f32.gmra.mxu0 %v725
      %v1512 = vpop.f32.mrf.mxu0
      %v1513 = vadd.f32 0.0, %v1512
      %v1514 = vpop.f32.mrf.mxu0
      %1515 = vmatprep.mubr.f32.mxu0 0.0
      %1516 = vmatmul.mubr.f32.gmra.mxu0 %v727
      %v1517 = vpop.f32.mrf.mxu0
      %v1518 = vadd.f32 0.0, %v1517
      %v1519 = vpop.f32.mrf.mxu0
      %1520 = vmatprep.mubr.f32.mxu0 0.0
      %1521 = vmatmul.mubr.f32.gmra.mxu0 %v729
      %v1522 = vpop.f32.mrf.mxu0
      %v1523 = vadd.f32 0.0, %v1522
      %v1524 = vpop.f32.mrf.mxu0
      %1525 = vmatprep.mubr.f32.mxu0 0.0
      %1526 = vmatmul.mubr.f32.gmra.mxu0 %v731
      %v1527 = vpop.f32.mrf.mxu0
      %v1528 = vadd.f32 0.0, %v1527
      %v1529 = vpop.f32.mrf.mxu0
      %1530 = vmatprep.mubr.f32.mxu0 0.0
      %1531 = vmatmul.mubr.f32.gmra.mxu0 %v733
      %v1532 = vpop.f32.mrf.mxu0
      %v1533 = vadd.f32 0.0, %v1532
      %v1534 = vpop.f32.mrf.mxu0
      %1535 = vmatprep.mubr.f32.mxu0 0.0
      %1536 = vmatmul.mubr.f32.gmra.mxu0 %v1086
      %v1537 = vpop.f32.mrf.mxu0
      %v1538 = vadd.f32 0.0, %v1537
      %v1539 = vpop.f32.mrf.mxu0
      %1540 = vmatprep.mubr.f32.mxu0 0.0
      %1541 = vmatmul.mubr.f32.gmra.mxu0 %v1439
      %v1542 = vpop.f32.mrf.mxu0
      %v1543 = vadd.f32 0.0, %v1542
      %v1544 = vpop.f32.mrf.mxu0
      %1545 = vdwg.mxu0
      %v1546 = vadd.f32 %v1428, %v1508
      %v1547 = vadd.f32 %v1429, %v1513
      %v1548 = vadd.f32 %v1430, %v1518
      %v1549 = vadd.f32 %v1431, %v1523
      %v1550 = vadd.f32 %v1432, %v1528
      %v1551 = vadd.f32 %v1433, %v1533
      %v1552 = vadd.f32 %v1434, %v1538
      %v1553 = vadd.f32 %v1435, %v1543
      %v1554 = vld [vmem:[%s3] sm:$0x1]
      %v1556 = vlaneseq
      %v1557 = vshrl.u32 %v1556, 7
      %v1558 = vsub.s32 0, %v1557
      %v1559 = vrot.slane %v1554, %v1558
      %v1561 = vadd.f32 %v1546, %v1559
      %v1562 = vadd.f32 %v1547, %v1559
      %v1563 = vadd.f32 %v1548, %v1559
      %v1564 = vadd.f32 %v1549, %v1559
      %v1565 = vadd.f32 %v1550, %v1559
      %v1566 = vadd.f32 %v1551, %v1559
      %v1567 = vadd.f32 %v1552, %v1559
      %v1568 = vadd.f32 %v1553, %v1559
      %v1569 = vmax.f32 %v1561, 0.0
      %v1570 = vmax.f32 %v1562, 0.0
      %v1571 = vmax.f32 %v1563, 0.0
      %v1572 = vmax.f32 %v1564, 0.0
      %v1573 = vmax.f32 %v1565, 0.0
      %v1574 = vmax.f32 %v1566, 0.0
      %v1575 = vmax.f32 %v1567, 0.0
      %v1576 = vmax.f32 %v1568, 0.0
      %v1585 = vcombine.high %v1569, %v1569
      %v1587 = vunpack.c.l.s4 1983009808
      %v1588 = vunpack.c.0.s8 %v1587
      %v1589 = vlaneseq
      %v1590 = vshrl.u32 %v1589, 7
      %v1591 = vsub.s32 %v1588, %v1590
      %v1592 = vrot.slane %v1569, %v1591
      %v1594 = vunpack.c.l.s4 1983009808
      %v1595 = vunpack.c.0.s8 %v1594
      %v1596 = vlaneseq
      %v1597 = vshrl.u32 %v1596, 7
      %v1598 = vsub.s32 %v1595, %v1597
      %v1599 = vrot.slane %v1585, %v1598
      %v1600 = vcombine.high %v1592, %v1592
      %v1601 = vcombine.high %v1599, %v1599
      %v1602 = vcombine.high %v1570, %v1570
      %v1604 = vunpack.c.l.s4 1983009808
      %v1605 = vunpack.c.0.s8 %v1604
      %v1606 = vlaneseq
      %v1607 = vshrl.u32 %v1606, 7
      %v1608 = vsub.s32 %v1605, %v1607
      %v1609 = vrot.slane %v1570, %v1608
      %v1611 = vunpack.c.l.s4 1983009808
      %v1612 = vunpack.c.0.s8 %v1611
      %v1613 = vlaneseq
      %v1614 = vshrl.u32 %v1613, 7
      %v1615 = vsub.s32 %v1612, %v1614
      %v1616 = vrot.slane %v1602, %v1615
      %v1617 = vcombine.high %v1609, %v1609
      %v1618 = vcombine.high %v1616, %v1616
      %v1619 = vcombine.high %v1571, %v1571
      %v1621 = vunpack.c.l.s4 1983009808
      %v1622 = vunpack.c.0.s8 %v1621
      %v1623 = vlaneseq
      %v1624 = vshrl.u32 %v1623, 7
      %v1625 = vsub.s32 %v1622, %v1624
      %v1626 = vrot.slane %v1571, %v1625
      %v1628 = vunpack.c.l.s4 1983009808
      %v1629 = vunpack.c.0.s8 %v1628
      %v1630 = vlaneseq
      %v1631 = vshrl.u32 %v1630, 7
      %v1632 = vsub.s32 %v1629, %v1631
      %v1633 = vrot.slane %v1619, %v1632
      %v1634 = vcombine.high %v1626, %v1626
      %v1635 = vcombine.high %v1633, %v1633
      %v1636 = vcombine.high %v1572, %v1572
      %v1638 = vunpack.c.l.s4 1983009808
      %v1639 = vunpack.c.0.s8 %v1638
      %v1640 = vlaneseq
      %v1641 = vshrl.u32 %v1640, 7
      %v1642 = vsub.s32 %v1639, %v1641
      %v1643 = vrot.slane %v1572, %v1642
      %v1645 = vunpack.c.l.s4 1983009808
      %v1646 = vunpack.c.0.s8 %v1645
      %v1647 = vlaneseq
      %v1648 = vshrl.u32 %v1647, 7
      %v1649 = vsub.s32 %v1646, %v1648
      %v1650 = vrot.slane %v1636, %v1649
      %v1651 = vcombine.high %v1643, %v1643
      %v1652 = vcombine.high %v1650, %v1650
      %v1653 = vcombine.high %v1573, %v1573
      %v1655 = vunpack.c.l.s4 1983009808
      %v1656 = vunpack.c.0.s8 %v1655
      %v1657 = vlaneseq
      %v1658 = vshrl.u32 %v1657, 7
      %v1659 = vsub.s32 %v1656, %v1658
      %v1660 = vrot.slane %v1573, %v1659
      %v1662 = vunpack.c.l.s4 1983009808
      %v1663 = vunpack.c.0.s8 %v1662
      %v1664 = vlaneseq
      %v1665 = vshrl.u32 %v1664, 7
      %v1666 = vsub.s32 %v1663, %v1665
      %v1667 = vrot.slane %v1653, %v1666
      %v1668 = vcombine.high %v1660, %v1660
      %v1669 = vcombine.high %v1667, %v1667
      %v1670 = vcombine.high %v1574, %v1574
      %v1672 = vunpack.c.l.s4 1983009808
      %v1673 = vunpack.c.0.s8 %v1672
      %v1674 = vlaneseq
      %v1675 = vshrl.u32 %v1674, 7
      %v1676 = vsub.s32 %v1673, %v1675
      %v1677 = vrot.slane %v1574, %v1676
      %v1679 = vunpack.c.l.s4 1983009808
      %v1680 = vunpack.c.0.s8 %v1679
      %v1681 = vlaneseq
      %v1682 = vshrl.u32 %v1681, 7
      %v1683 = vsub.s32 %v1680, %v1682
      %v1684 = vrot.slane %v1670, %v1683
      %v1685 = vcombine.high %v1677, %v1677
      %v1686 = vcombine.high %v1684, %v1684
      %v1687 = vcombine.high %v1575, %v1575
      %v1689 = vunpack.c.l.s4 1983009808
      %v1690 = vunpack.c.0.s8 %v1689
      %v1691 = vlaneseq
      %v1692 = vshrl.u32 %v1691, 7
      %v1693 = vsub.s32 %v1690, %v1692
      %v1694 = vrot.slane %v1575, %v1693
      %v1696 = vunpack.c.l.s4 1983009808
      %v1697 = vunpack.c.0.s8 %v1696
      %v1698 = vlaneseq
      %v1699 = vshrl.u32 %v1698, 7
      %v1700 = vsub.s32 %v1697, %v1699
      %v1701 = vrot.slane %v1687, %v1700
      %v1702 = vcombine.high %v1694, %v1694
      %v1703 = vcombine.high %v1701, %v1701
      %v1704 = vcombine.high %v1576, %v1576
      %v1706 = vunpack.c.l.s4 1983009808
      %v1707 = vunpack.c.0.s8 %v1706
      %v1708 = vlaneseq
      %v1709 = vshrl.u32 %v1708, 7
      %v1710 = vsub.s32 %v1707, %v1709
      %v1711 = vrot.slane %v1576, %v1710
      %v1713 = vunpack.c.l.s4 1983009808
      %v1714 = vunpack.c.0.s8 %v1713
      %v1715 = vlaneseq
      %v1716 = vshrl.u32 %v1715, 7
      %v1717 = vsub.s32 %v1714, %v1716
      %v1718 = vrot.slane %v1704, %v1717
      %v1719 = vcombine.high %v1711, %v1711
      %v1720 = vcombine.high %v1718, %v1718
      %v1753 = vrot.slane %v1592, 7
      %v1754 = vrot.slane %v1753, 2
      %v1755 = vrot.slane %v1600, 7
      %v1756 = vrot.slane %v1755, 2
      %v1757 = vrot.slane %v1599, 7
      %v1758 = vrot.slane %v1757, 2
      %v1759 = vrot.slane %v1601, 7
      %v1760 = vrot.slane %v1759, 2
      %v1761 = vrot.slane %v1609, 7
      %v1762 = vrot.slane %v1761, 2
      %v1763 = vrot.slane %v1617, 7
      %v1764 = vrot.slane %v1763, 2
      %v1765 = vrot.slane %v1616, 7
      %v1766 = vrot.slane %v1765, 2
      %v1767 = vrot.slane %v1618, 7
      %v1768 = vrot.slane %v1767, 2
      %v1769 = vrot.slane %v1626, 7
      %v1770 = vrot.slane %v1769, 2
      %v1771 = vrot.slane %v1634, 7
      %v1772 = vrot.slane %v1771, 2
      %v1773 = vrot.slane %v1633, 7
      %v1774 = vrot.slane %v1773, 2
      %v1775 = vrot.slane %v1635, 7
      %v1776 = vrot.slane %v1775, 2
      %v1777 = vrot.slane %v1643, 7
      %v1778 = vrot.slane %v1777, 2
      %v1779 = vrot.slane %v1651, 7
      %v1780 = vrot.slane %v1779, 2
      %v1781 = vrot.slane %v1650, 7
      %v1782 = vrot.slane %v1781, 2
      %v1783 = vrot.slane %v1652, 7
      %v1784 = vrot.slane %v1783, 2
      %v1785 = vrot.slane %v1660, 7
      %v1786 = vrot.slane %v1785, 2
      %v1787 = vrot.slane %v1668, 7
      %v1788 = vrot.slane %v1787, 2
      %v1789 = vrot.slane %v1667, 7
      %v1790 = vrot.slane %v1789, 2
      %v1791 = vrot.slane %v1669, 7
      %v1792 = vrot.slane %v1791, 2
      %v1793 = vrot.slane %v1677, 7
      %v1794 = vrot.slane %v1793, 2
      %v1795 = vrot.slane %v1685, 7
      %v1796 = vrot.slane %v1795, 2
      %v1797 = vrot.slane %v1684, 7
      %v1798 = vrot.slane %v1797, 2
      %v1799 = vrot.slane %v1686, 7
      %v1800 = vrot.slane %v1799, 2
      %v1801 = vrot.slane %v1694, 7
      %v1802 = vrot.slane %v1801, 2
      %v1803 = vrot.slane %v1702, 7
      %v1804 = vrot.slane %v1803, 2
      %v1805 = vrot.slane %v1701, 7
      %v1806 = vrot.slane %v1805, 2
      %v1807 = vrot.slane %v1703, 7
      %v1808 = vrot.slane %v1807, 2
      %v1809 = vrot.slane %v1711, 7
      %v1810 = vrot.slane %v1809, 2
      %v1811 = vrot.slane %v1719, 7
      %v1812 = vrot.slane %v1811, 2
      %v1813 = vrot.slane %v1718, 7
      %v1814 = vrot.slane %v1813, 2
      %v1815 = vrot.slane %v1720, 7
      %v1816 = vrot.slane %v1815, 2
      %v1849 = vmax.f32 %v1592, %v1754
      %v1850 = vmax.f32 %v1600, %v1756
      %v1851 = vmax.f32 %v1599, %v1758
      %v1852 = vmax.f32 %v1601, %v1760
      %v1853 = vmax.f32 %v1609, %v1762
      %v1854 = vmax.f32 %v1617, %v1764
      %v1855 = vmax.f32 %v1616, %v1766
      %v1856 = vmax.f32 %v1618, %v1768
      %v1857 = vmax.f32 %v1626, %v1770
      %v1858 = vmax.f32 %v1634, %v1772
      %v1859 = vmax.f32 %v1633, %v1774
      %v1860 = vmax.f32 %v1635, %v1776
      %v1861 = vmax.f32 %v1643, %v1778
      %v1862 = vmax.f32 %v1651, %v1780
      %v1863 = vmax.f32 %v1650, %v1782
      %v1864 = vmax.f32 %v1652, %v1784
      %v1865 = vmax.f32 %v1660, %v1786
      %v1866 = vmax.f32 %v1668, %v1788
      %v1867 = vmax.f32 %v1667, %v1790
      %v1868 = vmax.f32 %v1669, %v1792
      %v1869 = vmax.f32 %v1677, %v1794
      %v1870 = vmax.f32 %v1685, %v1796
      %v1871 = vmax.f32 %v1684, %v1798
      %v1872 = vmax.f32 %v1686, %v1800
      %v1873 = vmax.f32 %v1694, %v1802
      %v1874 = vmax.f32 %v1702, %v1804
      %v1875 = vmax.f32 %v1701, %v1806
      %v1876 = vmax.f32 %v1703, %v1808
      %v1877 = vmax.f32 %v1711, %v1810
      %v1878 = vmax.f32 %v1719, %v1812
      %v1879 = vmax.f32 %v1718, %v1814
      %v1880 = vmax.f32 %v1720, %v1816
      %v1881 = vmax.f32 %v1849, %v1853
      %v1882 = vmax.f32 %v1850, %v1854
      %v1883 = vmax.f32 %v1851, %v1855
      %v1884 = vmax.f32 %v1852, %v1856
      %v1885 = vmax.f32 %v1857, %v1861
      %v1886 = vmax.f32 %v1858, %v1862
      %v1887 = vmax.f32 %v1859, %v1863
      %v1888 = vmax.f32 %v1860, %v1864
      %v1889 = vmax.f32 %v1865, %v1869
      %v1890 = vmax.f32 %v1866, %v1870
      %v1891 = vmax.f32 %v1867, %v1871
      %v1892 = vmax.f32 %v1868, %v1872
      %v1893 = vmax.f32 %v1873, %v1877
      %v1894 = vmax.f32 %v1874, %v1878
      %v1895 = vmax.f32 %v1875, %v1879
      %v1896 = vmax.f32 %v1876, %v1880
      %v1913 = vlaneseq
      %v1914 = vshrl.u32 %v1913, 7
      %v1915 = vsub.s32 0, %v1914
      %v1916 = vrot.slane %v1881, %v1915
      %v1917 = vlaneseq
      %v1918 = vshrl.u32 %v1917, 7
      %v1919 = vsub.s32 0, %v1918
      %v1920 = vrot.slane %v1882, %v1919
      %v1921 = vlaneseq
      %v1922 = vshrl.u32 %v1921, 7
      %v1923 = vsub.s32 0, %v1922
      %v1924 = vrot.slane %v1883, %v1923
      %v1925 = vlaneseq
      %v1926 = vshrl.u32 %v1925, 7
      %v1927 = vsub.s32 0, %v1926
      %v1928 = vrot.slane %v1884, %v1927
      %v1929 = vlaneseq
      %v1930 = vshrl.u32 %v1929, 7
      %v1931 = vsub.s32 0, %v1930
      %v1932 = vrot.slane %v1885, %v1931
      %v1933 = vlaneseq
      %v1934 = vshrl.u32 %v1933, 7
      %v1935 = vsub.s32 0, %v1934
      %v1936 = vrot.slane %v1886, %v1935
      %v1937 = vlaneseq
      %v1938 = vshrl.u32 %v1937, 7
      %v1939 = vsub.s32 0, %v1938
      %v1940 = vrot.slane %v1887, %v1939
      %v1941 = vlaneseq
      %v1942 = vshrl.u32 %v1941, 7
      %v1943 = vsub.s32 0, %v1942
      %v1944 = vrot.slane %v1888, %v1943
      %v1945 = vlaneseq
      %v1946 = vshrl.u32 %v1945, 7
      %v1947 = vsub.s32 0, %v1946
      %v1948 = vrot.slane %v1889, %v1947
      %v1949 = vlaneseq
      %v1950 = vshrl.u32 %v1949, 7
      %v1951 = vsub.s32 0, %v1950
      %v1952 = vrot.slane %v1890, %v1951
      %v1953 = vlaneseq
      %v1954 = vshrl.u32 %v1953, 7
      %v1955 = vsub.s32 0, %v1954
      %v1956 = vrot.slane %v1891, %v1955
      %v1957 = vlaneseq
      %v1958 = vshrl.u32 %v1957, 7
      %v1959 = vsub.s32 0, %v1958
      %v1960 = vrot.slane %v1892, %v1959
      %v1961 = vlaneseq
      %v1962 = vshrl.u32 %v1961, 7
      %v1963 = vsub.s32 0, %v1962
      %v1964 = vrot.slane %v1893, %v1963
      %v1965 = vlaneseq
      %v1966 = vshrl.u32 %v1965, 7
      %v1967 = vsub.s32 0, %v1966
      %v1968 = vrot.slane %v1894, %v1967
      %v1969 = vlaneseq
      %v1970 = vshrl.u32 %v1969, 7
      %v1971 = vsub.s32 0, %v1970
      %v1972 = vrot.slane %v1895, %v1971
      %v1973 = vlaneseq
      %v1974 = vshrl.u32 %v1973, 7
      %v1975 = vsub.s32 0, %v1974
      %v1976 = vrot.slane %v1896, %v1975
      %vm1977 = vcmask 1041409
      %v1978 = vsel %vm1977, %v1920, %v1916
      %vm1979 = vcmask 1042434
      %v1980 = vsel %vm1979, %v1924, %v1978
      %vm1981 = vcmask 1043459
      %v1982 = vsel %vm1981, %v1928, %v1980
      %v1983 = vsel %vm1977, %v1936, %v1932
      %v1984 = vsel %vm1979, %v1940, %v1983
      %v1985 = vsel %vm1981, %v1944, %v1984
      %v1986 = vsel %vm1977, %v1952, %v1948
      %v1987 = vsel %vm1979, %v1956, %v1986
      %v1988 = vsel %vm1981, %v1960, %v1987
      %v1989 = vsel %vm1977, %v1968, %v1964
      %v1990 = vsel %vm1979, %v1972, %v1989
      %v1991 = vsel %vm1981, %v1976, %v1990
      %1996 = vst [vmem:[%s316] sm:$0xf] %v1982
      %1997 = vst [vmem:[%s316 + $0x4] sm:$0xf] %v1985
      %1998 = vst [vmem:[%s316 + $0x8] sm:$0xf] %v1988
      %1999 = vst [vmem:[%s316 + $0xc] sm:$0xf] %v1991
      %s2000 = smul.u32 4, %s20
      %p2001 = scmp.lt.s32.totalorder %s19, 1
      %s2002 = scalar_select %p2001, %s19, 1
      %p2003 = scmp.lt.s32.totalorder %s2000, 3
      %s2004 = scalar_select %p2003, %s2000, 3
      %s2005 = smul.addr %s2002, 4
      %s2006 = sadd.s32 %s2004, %s2005
      %s2007 = smul.addr %s2006, 4
      %s2008 = scalar_lea.vmem %s4, %s2007
      // Predicated region
      $region37: #{simple_fcn_forward.7} parent=35 // pred_check
        %p2009 = pneg %p149
      $region38: #{simple_fcn_forward.7} parent=35 // pred_check_branch
        %2011 = sbr.rel (%p2009) target = $region40
      $region39: #{simple_fcn_forward.7} parent=35 // pred_region
        %s2012 = smul.u32 4, %s20
      $region40: #{simple_fcn_forward.7} parent=35 // pred_fallthru
        _
    $region36: #{simple_fcn_forward.7} parent=5 // pred_fallthru
      _
    %p2013 = scmp.le.s32.totalorder 2, %s10
    // Predicated region
    $region41: #{simple_fcn_forward.7} parent=5 // pred_check
      %p2014 = pneg %p2013
    $region42: #{simple_fcn_forward.7} parent=5 // pred_check_branch
      %2016 = sbr.rel (%p2014) target = $region44
    $region43: #{simple_fcn_forward.7} parent=5 // pred_region
      %s2017 = ssub.s32 %s10, 2
      // Predicated region
      $region45: #{simple_fcn_forward.7} parent=43 // pred_check
        %p2018 = pneg %p155
      $region46: #{simple_fcn_forward.7} parent=43 // pred_check_branch
        %2020 = sbr.rel (%p2018) target = $region48
      $region47: #{simple_fcn_forward.7} parent=43 // pred_region
        %s2021 = smul.u32 4, %s22
        %p2022 = scmp.lt.s32.totalorder %s21, 1
        %s2023 = scalar_select %p2022, %s21, 1
        %p2024 = scmp.lt.s32.totalorder %s2021, 3
        %s2025 = scalar_select %p2024, %s2021, 3
        %s2026 = smul.addr %s2023, 4
        %s2027 = sadd.s32 %s2025, %s2026
        %s2028 = smul.addr %s2027, 4
        %s2029 = scalar_lea.vmem %s4, %s2028
      $region48: #{simple_fcn_forward.7} parent=43 // pred_fallthru
        _
    $region44: #{simple_fcn_forward.7} parent=5 // pred_fallthru
      _
  $region6: #{simple_fcn_forward.7} parent=0 // loop_footer
    %s14 = sadd.s32 1, %s10
  $region7: #{simple_fcn_forward.7} parent=0 // loop_footer_branch
    %9 = sbr.rel target = $region3
  $region8: #{simple_fcn_forward.7} parent=0 // loop_exit
    _

// kernel: simple_fcn_forward.8
$region0: #{simple_fcn_forward.8}
  #allocation0 [shape = 'u32[]', space=smem, size = 0x4, offset = 0x4, fixed_abs, tag = 'smem constant byte address 0x4 - core index']
  #allocation1 [shape = 'u32[144,128]{1,0:T(1,128)}', space=vmem, size = 0x12000, scoped, tag = 'internal scratch']
  %s0 = inlined_call_operand.vmem [shape: f32[2,6,6,128], index: 0, kind: input, shape index: {}, may-alias: {0,1}]
  %s1 = inlined_call_operand.vmem [shape: f32[2,6,6,128], index: 1, kind: input, shape index: {}, may-alias: {0,1}]
  %s2 = inlined_call_operand.vmem [shape: f32[3,3,128,256], index: 2, kind: input, shape index: {}]
  %s3 = inlined_call_operand.vmem [shape: f32[1,256], index: 3, kind: input, shape index: {}]
  %s4 = inlined_call_operand.vmem [shape: f32[2,2,2,256], index: 4, kind: output, shape index: {}]
  %s5 = sld [smem:[#allocation0]]
  $region49: #{simple_fcn_forward.8} parent=0
    _
  %s7 = ssub.s32 1, %s5
  %s8 = scalar_select 0, %s7, %s5
  loop: start=0, step=1, limit=4
  $region2: #{simple_fcn_forward.8} parent=0 // loop_pre_header
    _
  $region3: #{simple_fcn_forward.8} parent=0 // loop_header
    %s10 = sphi 0, %s14
    %p11 = scmp.ge.s32.totalorder %s10, 4
    %s17 = sphi 0, %s29
    %s18 = sphi 0, %s25
    %s19 = sphi 0, %s17
    %s20 = sphi 0, %s18
    %s21 = sphi 0, %s19
    %s22 = sphi 0, %s20
    %s34 = sphi 0, %s36
    %s37 = sphi 0, %s34
    %s38 = sphi 0, %s37
    %s54 = sphi 0, %s38
    %s66 = sphi 0, %s68
    %s69 = sphi 0, %s66
    %s70 = sphi 0, %s69
    %s86 = sphi 0, %s70
    %s90 = sphi 0, %s90
    %s92 = sphi 0, %s90
    %s93 = sphi 0, %s92
    %s107 = sphi 0, %s93
    %s111 = sphi 0, %s111
    %s113 = sphi 0, %s111
    %s114 = sphi 0, %s113
    %s128 = sphi 0, %s114
    %s136 = sphi 0, %s138
    %s139 = sphi 0, %s136
    %s140 = sphi 0, %s139
    %s156 = sphi 0, %s140
  $region4: #{simple_fcn_forward.8} parent=0 // loop_header_branch
    %13 = sbr.rel (%p11) target = $region8
  $region5: #{simple_fcn_forward.8} parent=0 // loop_body
    %s15 = ssub.s32 %s10, 1
    %s16 = ssub.s32 %s10, 2
    %s23 = sadd.s32 1, %s18
    %p24 = scmp.ge.s32.totalorder %s23, 1
    %s25 = scalar_select %p24, 0, %s23
    %s26 = sadd.s32 1, %s17
    %s27 = scalar_select %p24, %s26, %s17
    %p28 = scmp.ge.s32.totalorder %s27, 2
    %s29 = scalar_select %p28, 0, %s27
    %s30 = ssub.s32 %s17, %s29
    %s31 = ssub.s32 %s18, %s25
    %s32 = sor.u32 %s30, %s31
    %p33 = scmp.eq.s32.totalorder %s32, 0
    %s35 = sadd.s32 %s34, 1
    %s36 = scalar_select %p33, %s34, %s35
    %p39 = pneg %p33
    %p40 = scmp.eq.s32.totalorder %s10, 1
    %p41 = por %p39, %p40
    %p42 = scmp.ne.s32.totalorder %s34, %s37
    %p43 = scmp.eq.s32.totalorder %s10, 0
    %p44 = por %p42, %p43
    %p45 = scmp.ne.s32.totalorder %s34, %s37
    %p46 = scmp.eq.s32.totalorder %s15, 1
    %p47 = por %p45, %p46
    %p48 = scmp.ne.s32.totalorder %s37, %s38
    %p49 = scmp.eq.s32.totalorder %s15, 0
    %p50 = por %p48, %p49
    %p51 = scmp.ne.s32.totalorder %s37, %s38
    %p52 = scmp.eq.s32.totalorder %s16, 1
    %p53 = por %p51, %p52
    %p55 = scmp.ne.s32.totalorder %s38, %s54
    %p56 = scmp.eq.s32.totalorder %s16, 0
    %p57 = por %p55, %p56
    %s58 = sadd.s32 %s18, 1
    %s59 = smul.u32 %s58, 2
    %s60 = sadd.s32 %s25, 1
    %s61 = smul.u32 %s60, 2
    %s62 = ssub.s32 %s17, %s29
    %s63 = ssub.s32 %s59, %s61
    %s64 = sor.u32 %s62, %s63
    %p65 = scmp.eq.s32.totalorder %s64, 0
    %s67 = sadd.s32 %s66, 1
    %s68 = scalar_select %p65, %s66, %s67
    %p71 = pneg %p65
    %p72 = scmp.eq.s32.totalorder %s10, 1
    %p73 = por %p71, %p72
    %p74 = scmp.ne.s32.totalorder %s66, %s69
    %p75 = scmp.eq.s32.totalorder %s10, 0
    %p76 = por %p74, %p75
    %p77 = scmp.ne.s32.totalorder %s66, %s69
    %p78 = scmp.eq.s32.totalorder %s15, 1
    %p79 = por %p77, %p78
    %p80 = scmp.ne.s32.totalorder %s69, %s70
    %p81 = scmp.eq.s32.totalorder %s15, 0
    %p82 = por %p80, %p81
    %p83 = scmp.ne.s32.totalorder %s69, %s70
    %p84 = scmp.eq.s32.totalorder %s16, 1
    %p85 = por %p83, %p84
    %p87 = scmp.ne.s32.totalorder %s70, %s86
    %p88 = scmp.eq.s32.totalorder %s16, 0
    %p89 = por %p87, %p88
    %s91 = sadd.s32 %s90, 1
    %p94 = scmp.eq.s32.totalorder %s10, 1
    %p95 = scmp.ne.s32.totalorder %s90, %s92
    %p96 = scmp.eq.s32.totalorder %s10, 0
    %p97 = por %p95, %p96
    %p98 = scmp.ne.s32.totalorder %s90, %s92
    %p99 = scmp.eq.s32.totalorder %s15, 1
    %p100 = por %p98, %p99
    %p101 = scmp.ne.s32.totalorder %s92, %s93
    %p102 = scmp.eq.s32.totalorder %s15, 0
    %p103 = por %p101, %p102
    %p104 = scmp.ne.s32.totalorder %s92, %s93
    %p105 = scmp.eq.s32.totalorder %s16, 1
    %p106 = por %p104, %p105
    %p108 = scmp.ne.s32.totalorder %s93, %s107
    %p109 = scmp.eq.s32.totalorder %s16, 0
    %p110 = por %p108, %p109
    %s112 = sadd.s32 %s111, 1
    %p115 = scmp.eq.s32.totalorder %s10, 1
    %p116 = scmp.ne.s32.totalorder %s111, %s113
    %p117 = scmp.eq.s32.totalorder %s10, 0
    %p118 = por %p116, %p117
    %p119 = scmp.ne.s32.totalorder %s111, %s113
    %p120 = scmp.eq.s32.totalorder %s15, 1
    %p121 = por %p119, %p120
    %p122 = scmp.ne.s32.totalorder %s113, %s114
    %p123 = scmp.eq.s32.totalorder %s15, 0
    %p124 = por %p122, %p123
    %p125 = scmp.ne.s32.totalorder %s113, %s114
    %p126 = scmp.eq.s32.totalorder %s16, 1
    %p127 = por %p125, %p126
    %p129 = scmp.ne.s32.totalorder %s114, %s128
    %p130 = scmp.eq.s32.totalorder %s16, 0
    %p131 = por %p129, %p130
    %s132 = ssub.s32 %s17, %s29
    %s133 = ssub.s32 %s18, %s25
    %s134 = sor.u32 %s132, %s133
    %p135 = scmp.eq.s32.totalorder %s134, 0
    %s137 = sadd.s32 %s136, 1
    %s138 = scalar_select %p135, %s136, %s137
    %p141 = pneg %p135
    %p142 = scmp.eq.s32.totalorder %s10, 1
    %p143 = por %p141, %p142
    %p144 = scmp.ne.s32.totalorder %s136, %s139
    %p145 = scmp.eq.s32.totalorder %s10, 0
    %p146 = por %p144, %p145
    %p147 = scmp.ne.s32.totalorder %s136, %s139
    %p148 = scmp.eq.s32.totalorder %s15, 1
    %p149 = por %p147, %p148
    %p150 = scmp.ne.s32.totalorder %s139, %s140
    %p151 = scmp.eq.s32.totalorder %s15, 0
    %p152 = por %p150, %p151
    %p153 = scmp.ne.s32.totalorder %s139, %s140
    %p154 = scmp.eq.s32.totalorder %s16, 1
    %p155 = por %p153, %p154
    %p157 = scmp.ne.s32.totalorder %s140, %s156
    %p158 = scmp.eq.s32.totalorder %s16, 0
    %p159 = por %p157, %p158
    %p160 = scmp.le.s32.totalorder 1, %s10
    %p161 = scmp.lt.s32.totalorder %s10, 3
    %p162 = pnand %p160, %p161
    %p163 = pneg %p162
    // Predicated region
    $region9: #{simple_fcn_forward.8} parent=5 // pred_check
      _
    $region10: #{simple_fcn_forward.8} parent=5 // pred_check_branch
      %165 = sbr.rel (%p162) target = $region12
    $region11: #{simple_fcn_forward.8} parent=5 // pred_region
      %s166 = ssub.s32 %s10, 1
      // Predicated region
      $region13: #{simple_fcn_forward.8} parent=11 // pred_check
        %p167 = pneg %p103
      $region14: #{simple_fcn_forward.8} parent=11 // pred_check_branch
        %169 = sbr.rel (%p167) target = $region16
      $region15: #{simple_fcn_forward.8} parent=11 // pred_region
        _
      $region16: #{simple_fcn_forward.8} parent=11 // pred_fallthru
        _
      // Predicated region
      $region17: #{simple_fcn_forward.8} parent=11 // pred_check
        %p170 = pneg %p124
      $region18: #{simple_fcn_forward.8} parent=11 // pred_check_branch
        %172 = sbr.rel (%p170) target = $region20
      $region19: #{simple_fcn_forward.8} parent=11 // pred_region
        _
      $region20: #{simple_fcn_forward.8} parent=11 // pred_fallthru
        _
    $region12: #{simple_fcn_forward.8} parent=5 // pred_fallthru
      _
    %p173 = scmp.lt.s32.totalorder %s10, 2
    // Predicated region
    $region21: #{simple_fcn_forward.8} parent=5 // pred_check
      %p174 = pneg %p173
    $region22: #{simple_fcn_forward.8} parent=5 // pred_check_branch
      %176 = sbr.rel (%p174) target = $region24
    $region23: #{simple_fcn_forward.8} parent=5 // pred_region
      // Predicated region
      $region25: #{simple_fcn_forward.8} parent=23 // pred_check
        %p177 = pneg %p44
      $region26: #{simple_fcn_forward.8} parent=23 // pred_check_branch
        %179 = sbr.rel (%p177) target = $region28
      $region27: #{simple_fcn_forward.8} parent=23 // pred_region
        %s180 = smul.u32 4, %s18
        %s181 = ssub.s32 6, %s180
        %p182 = scmp.lt.s32.totalorder %s181, 4
        %s183 = scalar_select %p182, %s181, 4
        %s184 = smul.u32 128, %s183
        %p185 = scmp.lt.s32.totalorder %s17, 1
        %s186 = scalar_select %p185, %s17, 1
        %p187 = scmp.lt.s32.totalorder %s180, 5
        %s188 = scalar_select %p187, %s180, 5
        %s189 = smul.addr %s186, 6
        %s190 = sadd.s32 %s188, %s189
        %s191 = smul.addr %s190, 8
        %s192 = scalar_lea.vmem %s0, %s191
        %s193 = smul.u32 4, %s18
        %s194 = ssub.s32 6, %s193
        %p195 = scmp.lt.s32.totalorder %s194, 4
        %s196 = scalar_select %p195, %s194, 4
        %s197 = smul.u32 128, %s196
      $region28: #{simple_fcn_forward.8} parent=23 // pred_fallthru
        _
      // Predicated region
      $region29: #{simple_fcn_forward.8} parent=23 // pred_check
        %p198 = pneg %p76
      $region30: #{simple_fcn_forward.8} parent=23 // pred_check_branch
        %200 = sbr.rel (%p198) target = $region32
      $region31: #{simple_fcn_forward.8} parent=23 // pred_region
        %s201 = sadd.s32 %s18, 1
        %s202 = smul.u32 %s201, 2
        %s203 = smul.u32 2, %s202
        %p204 = scmp.lt.s32.totalorder %s17, 1
        %s205 = scalar_select %p204, %s17, 1
        %p206 = scmp.lt.s32.totalorder %s203, 5
        %s207 = scalar_select %p206, %s203, 5
        %s208 = smul.addr %s205, 6
        %s209 = sadd.s32 %s207, %s208
        %s210 = smul.addr %s209, 8
        %s211 = scalar_lea.vmem %s1, %s210
        %s212 = sadd.s32 %s18, 1
        %s213 = smul.u32 %s212, 2
        %s214 = smul.u32 2, %s213
      $region32: #{simple_fcn_forward.8} parent=23 // pred_fallthru
        _
    $region24: #{simple_fcn_forward.8} parent=5 // pred_fallthru
      _
    %p215 = scmp.le.s32.totalorder 1, %s10
    %p216 = scmp.lt.s32.totalorder %s10, 3
    %p217 = pnand %p215, %p216
    %p218 = pneg %p217
    // Predicated region
    $region33: #{simple_fcn_forward.8} parent=5 // pred_check
      _
    $region34: #{simple_fcn_forward.8} parent=5 // pred_check_branch
      %220 = sbr.rel (%p217) target = $region36
    $region35: #{simple_fcn_forward.8} parent=5 // pred_region
      %s221 = ssub.s32 %s10, 1
      %s222 = smul.u32 4, %s20
      %s223 = ssub.s32 6, %s222
      %p224 = scmp.lt.s32.totalorder %s223, 4
      %s225 = scalar_select %p224, %s223, 4
      %s226 = smul.u32 128, %s225
      %p227 = scmp.lt.s32.totalorder %s19, 1
      %s228 = scalar_select %p227, %s19, 1
      %p229 = scmp.lt.s32.totalorder %s222, 5
      %s230 = scalar_select %p229, %s222, 5
      %s231 = smul.addr %s228, 6
      %s232 = sadd.s32 %s230, %s231
      %s233 = smul.addr %s232, 8
      %s234 = scalar_lea.vmem %s0, %s233
      %p235 = pneg %p50
      %p236 = pneg %p47
      %s237 = sadd.s32 %s20, 1
      %s238 = smul.u32 %s237, 2
      %s239 = smul.u32 2, %s238
      %p240 = scmp.lt.s32.totalorder %s19, 1
      %s241 = scalar_select %p240, %s19, 1
      %p242 = scmp.lt.s32.totalorder %s239, 5
      %s243 = scalar_select %p242, %s239, 5
      %s244 = smul.addr %s241, 6
      %s245 = sadd.s32 %s243, %s244
      %s246 = smul.addr %s245, 8
      %s247 = scalar_lea.vmem %s1, %s246
      %p248 = pneg %p82
      %p249 = pneg %p79
      %p250 = pneg %p103
      %p251 = pneg %p100
      %p252 = pneg %p124
      %p253 = pneg %p121
      %p254 = pneg %p152
      %p255 = pneg %p149
      %s256 = smul.u32 2, %s20
      %p257 = scmp.lt.s32.totalorder %s19, 1
      %s258 = scalar_select %p257, %s19, 1
      %p259 = scmp.lt.s32.totalorder %s256, 1
      %s260 = scalar_select %p259, %s256, 1
      %s261 = smul.addr %s260, 2
      %s262 = smul.addr %s258, 4
      %s263 = sadd.s32 %s261, %s262
      %s264 = smul.addr %s263, 2
      %s265 = scalar_lea.vmem %s4, %s264
      %s266 = smul.u32 4, %s20
      %s267 = ssub.s32 6, %s266
      %p268 = scmp.lt.s32.totalorder %s267, 4
      %s269 = scalar_select %p268, %s267, 4
      %s270 = smul.u32 128, %s269
      %p271 = scmp.lt.s32.totalorder %s19, 1
      %s272 = scalar_select %p271, %s19, 1
      %p273 = scmp.lt.s32.totalorder %s266, 5
      %s274 = scalar_select %p273, %s266, 5
      %s275 = smul.addr %s272, 6
      %s276 = sadd.s32 %s274, %s275
      %s277 = smul.addr %s276, 8
      %s278 = scalar_lea.vmem %s0, %s277
      %s279 = smul.u32 4, %s20
      %s280 = ssub.s32 6, %s279
      %p281 = scmp.lt.s32.totalorder %s280, 4
      %s282 = scalar_select %p281, %s280, 4
      %s283 = smul.u32 128, %s282
      %s284 = sadd.s32 %s20, 1
      %s285 = smul.u32 %s284, 2
      %s286 = smul.u32 2, %s285
      %p287 = scmp.lt.s32.totalorder %s19, 1
      %s288 = scalar_select %p287, %s19, 1
      %p289 = scmp.lt.s32.totalorder %s286, 5
      %s290 = scalar_select %p289, %s286, 5
      %s291 = smul.addr %s288, 6
      %s292 = sadd.s32 %s290, %s291
      %s293 = smul.addr %s292, 8
      %s294 = scalar_lea.vmem %s1, %s293
      %s295 = sadd.s32 %s20, 1
      %s296 = smul.u32 %s295, 2
      %s297 = smul.u32 2, %s296
      %s298 = smul.u32 2, %s20
      %p299 = scmp.lt.s32.totalorder %s19, 1
      %s300 = scalar_select %p299, %s19, 1
      %p301 = scmp.lt.s32.totalorder %s298, 1
      %s302 = scalar_select %p301, %s298, 1
      %s303 = smul.addr %s302, 2
      %s304 = smul.addr %s300, 4
      %s305 = sadd.s32 %s303, %s304
      %s306 = smul.addr %s305, 2
      %s307 = scalar_lea.vmem %s4, %s306
      %s308 = smul.u32 2, %s20
      %v309 = vld [vmem:[%s278] sm:$0x3f]
      %v310 = vld [vmem:[%s278 + $0x8] sm:$0x3f]
      %v311 = vld [vmem:[%s278 + $0x10] sm:$0x3f]
      %v312 = vld [vmem:[%s278 + $0x18] sm:$0x3f]
      %v313 = vld [vmem:[%s294] sm:$0x3f]
      %v314 = vld [vmem:[%s294 + $0x8] sm:$0x3f]
      %v315 = vld [vmem:[%s2] sm:$0xff]
      %v316 = vld [vmem:[%s2 + $0x8] sm:$0xff]
      %v317 = vld [vmem:[%s2 + $0x10] sm:$0xff]
      %v318 = vld [vmem:[%s2 + $0x18] sm:$0xff]
      %v319 = vld [vmem:[%s2 + $0x20] sm:$0xff]
      %v320 = vld [vmem:[%s2 + $0x28] sm:$0xff]
      %v321 = vld [vmem:[%s2 + $0x30] sm:$0xff]
      %v322 = vld [vmem:[%s2 + $0x38] sm:$0xff]
      %v323 = vld [vmem:[%s2 + $0x40] sm:$0xff]
      %v324 = vld [vmem:[%s2 + $0x48] sm:$0xff]
      %v325 = vld [vmem:[%s2 + $0x50] sm:$0xff]
      %v326 = vld [vmem:[%s2 + $0x58] sm:$0xff]
      %v327 = vld [vmem:[%s2 + $0x60] sm:$0xff]
      %v328 = vld [vmem:[%s2 + $0x68] sm:$0xff]
      %v329 = vld [vmem:[%s2 + $0x70] sm:$0xff]
      %v330 = vld [vmem:[%s2 + $0x78] sm:$0xff]
      %v331 = vld [vmem:[%s2 + $0x80] sm:$0xff]
      %v332 = vld [vmem:[%s2 + $0x88] sm:$0xff]
      %v333 = vld [vmem:[%s2 + $0x90] sm:$0xff]
      %v334 = vld [vmem:[%s2 + $0x98] sm:$0xff]
      %v335 = vld [vmem:[%s2 + $0xa0] sm:$0xff]
      %v336 = vld [vmem:[%s2 + $0xa8] sm:$0xff]
      %v337 = vld [vmem:[%s2 + $0xb0] sm:$0xff]
      %v338 = vld [vmem:[%s2 + $0xb8] sm:$0xff]
      %v339 = vld [vmem:[%s2 + $0xc0] sm:$0xff]
      %v340 = vld [vmem:[%s2 + $0xc8] sm:$0xff]
      %v341 = vld [vmem:[%s2 + $0xd0] sm:$0xff]
      %v342 = vld [vmem:[%s2 + $0xd8] sm:$0xff]
      %v343 = vld [vmem:[%s2 + $0xe0] sm:$0xff]
      %v344 = vld [vmem:[%s2 + $0xe8] sm:$0xff]
      %v345 = vld [vmem:[%s2 + $0xf0] sm:$0xff]
      %v346 = vld [vmem:[%s2 + $0xf8] sm:$0xff]
      %v347 = vld [vmem:[%s2 + $0x100] sm:$0xff]
      %v348 = vld [vmem:[%s2 + $0x108] sm:$0xff]
      %v349 = vld [vmem:[%s2 + $0x110] sm:$0xff]
      %v350 = vld [vmem:[%s2 + $0x118] sm:$0xff]
      %v351 = vld [vmem:[%s2 + $0x120] sm:$0xff]
      %v352 = vld [vmem:[%s2 + $0x128] sm:$0xff]
      %v353 = vld [vmem:[%s2 + $0x130] sm:$0xff]
      %v354 = vld [vmem:[%s2 + $0x138] sm:$0xff]
      %v355 = vld [vmem:[%s2 + $0x140] sm:$0xff]
      %v356 = vld [vmem:[%s2 + $0x148] sm:$0xff]
      %v357 = vld [vmem:[%s2 + $0x150] sm:$0xff]
      %v358 = vld [vmem:[%s2 + $0x158] sm:$0xff]
      %v359 = vld [vmem:[%s2 + $0x160] sm:$0xff]
      %v360 = vld [vmem:[%s2 + $0x168] sm:$0xff]
      %v361 = vld [vmem:[%s2 + $0x170] sm:$0xff]
      %v362 = vld [vmem:[%s2 + $0x178] sm:$0xff]
      %v363 = vld [vmem:[%s2 + $0x180] sm:$0xff]
      %v364 = vld [vmem:[%s2 + $0x188] sm:$0xff]
      %v365 = vld [vmem:[%s2 + $0x190] sm:$0xff]
      %v366 = vld [vmem:[%s2 + $0x198] sm:$0xff]
      %v367 = vld [vmem:[%s2 + $0x1a0] sm:$0xff]
      %v368 = vld [vmem:[%s2 + $0x1a8] sm:$0xff]
      %v369 = vld [vmem:[%s2 + $0x1b0] sm:$0xff]
      %v370 = vld [vmem:[%s2 + $0x1b8] sm:$0xff]
      %v371 = vld [vmem:[%s2 + $0x1c0] sm:$0xff]
      %v372 = vld [vmem:[%s2 + $0x1c8] sm:$0xff]
      %v373 = vld [vmem:[%s2 + $0x1d0] sm:$0xff]
      %v374 = vld [vmem:[%s2 + $0x1d8] sm:$0xff]
      %v375 = vld [vmem:[%s2 + $0x1e0] sm:$0xff]
      %v376 = vld [vmem:[%s2 + $0x1e8] sm:$0xff]
      %v377 = vld [vmem:[%s2 + $0x1f0] sm:$0xff]
      %v378 = vld [vmem:[%s2 + $0x1f8] sm:$0xff]
      %v379 = vld [vmem:[%s2 + $0x200] sm:$0xff]
      %v380 = vld [vmem:[%s2 + $0x208] sm:$0xff]
      %v381 = vld [vmem:[%s2 + $0x210] sm:$0xff]
      %v382 = vld [vmem:[%s2 + $0x218] sm:$0xff]
      %v383 = vld [vmem:[%s2 + $0x220] sm:$0xff]
      %v384 = vld [vmem:[%s2 + $0x228] sm:$0xff]
      %v385 = vld [vmem:[%s2 + $0x230] sm:$0xff]
      %v386 = vld [vmem:[%s2 + $0x238] sm:$0xff]
      %v387 = vld [vmem:[%s2 + $0x240] sm:$0xff]
      %v388 = vld [vmem:[%s2 + $0x248] sm:$0xff]
      %v389 = vld [vmem:[%s2 + $0x250] sm:$0xff]
      %v390 = vld [vmem:[%s2 + $0x258] sm:$0xff]
      %v391 = vld [vmem:[%s2 + $0x260] sm:$0xff]
      %v392 = vld [vmem:[%s2 + $0x268] sm:$0xff]
      %v393 = vld [vmem:[%s2 + $0x270] sm:$0xff]
      %v394 = vld [vmem:[%s2 + $0x278] sm:$0xff]
      %v395 = vld [vmem:[%s2 + $0x280] sm:$0xff]
      %v396 = vld [vmem:[%s2 + $0x288] sm:$0xff]
      %v397 = vld [vmem:[%s2 + $0x290] sm:$0xff]
      %v398 = vld [vmem:[%s2 + $0x298] sm:$0xff]
      %v399 = vld [vmem:[%s2 + $0x2a0] sm:$0xff]
      %v400 = vld [vmem:[%s2 + $0x2a8] sm:$0xff]
      %v401 = vld [vmem:[%s2 + $0x2b0] sm:$0xff]
      %v402 = vld [vmem:[%s2 + $0x2b8] sm:$0xff]
      %v403 = vld [vmem:[%s2 + $0x2c0] sm:$0xff]
      %v404 = vld [vmem:[%s2 + $0x2c8] sm:$0xff]
      %v405 = vld [vmem:[%s2 + $0x2d0] sm:$0xff]
      %v406 = vld [vmem:[%s2 + $0x2d8] sm:$0xff]
      %v407 = vld [vmem:[%s2 + $0x2e0] sm:$0xff]
      %v408 = vld [vmem:[%s2 + $0x2e8] sm:$0xff]
      %v409 = vld [vmem:[%s2 + $0x2f0] sm:$0xff]
      %v410 = vld [vmem:[%s2 + $0x2f8] sm:$0xff]
      %v411 = vld [vmem:[%s2 + $0x300] sm:$0xff]
      %v412 = vld [vmem:[%s2 + $0x308] sm:$0xff]
      %v413 = vld [vmem:[%s2 + $0x310] sm:$0xff]
      %v414 = vld [vmem:[%s2 + $0x318] sm:$0xff]
      %v415 = vld [vmem:[%s2 + $0x320] sm:$0xff]
      %v416 = vld [vmem:[%s2 + $0x328] sm:$0xff]
      %v417 = vld [vmem:[%s2 + $0x330] sm:$0xff]
      %v418 = vld [vmem:[%s2 + $0x338] sm:$0xff]
      %v419 = vld [vmem:[%s2 + $0x340] sm:$0xff]
      %v420 = vld [vmem:[%s2 + $0x348] sm:$0xff]
      %v421 = vld [vmem:[%s2 + $0x350] sm:$0xff]
      %v422 = vld [vmem:[%s2 + $0x358] sm:$0xff]
      %v423 = vld [vmem:[%s2 + $0x360] sm:$0xff]
      %v424 = vld [vmem:[%s2 + $0x368] sm:$0xff]
      %v425 = vld [vmem:[%s2 + $0x370] sm:$0xff]
      %v426 = vld [vmem:[%s2 + $0x378] sm:$0xff]
      %v427 = vld [vmem:[%s2 + $0x380] sm:$0xff]
      %v428 = vld [vmem:[%s2 + $0x388] sm:$0xff]
      %v429 = vld [vmem:[%s2 + $0x390] sm:$0xff]
      %v430 = vld [vmem:[%s2 + $0x398] sm:$0xff]
      %v431 = vld [vmem:[%s2 + $0x3a0] sm:$0xff]
      %v432 = vld [vmem:[%s2 + $0x3a8] sm:$0xff]
      %v433 = vld [vmem:[%s2 + $0x3b0] sm:$0xff]
      %v434 = vld [vmem:[%s2 + $0x3b8] sm:$0xff]
      %v435 = vld [vmem:[%s2 + $0x3c0] sm:$0xff]
      %v436 = vld [vmem:[%s2 + $0x3c8] sm:$0xff]
      %v437 = vld [vmem:[%s2 + $0x3d0] sm:$0xff]
      %v438 = vld [vmem:[%s2 + $0x3d8] sm:$0xff]
      %v439 = vld [vmem:[%s2 + $0x3e0] sm:$0xff]
      %v440 = vld [vmem:[%s2 + $0x3e8] sm:$0xff]
      %v441 = vld [vmem:[%s2 + $0x3f0] sm:$0xff]
      %v442 = vld [vmem:[%s2 + $0x3f8] sm:$0xff]
      %v443 = vld [vmem:[%s2 + $0x400] sm:$0xff]
      %v444 = vld [vmem:[%s2 + $0x408] sm:$0xff]
      %v445 = vld [vmem:[%s2 + $0x410] sm:$0xff]
      %v446 = vld [vmem:[%s2 + $0x418] sm:$0xff]
      %v447 = vld [vmem:[%s2 + $0x420] sm:$0xff]
      %v448 = vld [vmem:[%s2 + $0x428] sm:$0xff]
      %v449 = vld [vmem:[%s2 + $0x430] sm:$0xff]
      %v450 = vld [vmem:[%s2 + $0x438] sm:$0xff]
      %v451 = vld [vmem:[%s2 + $0x440] sm:$0xff]
      %v452 = vld [vmem:[%s2 + $0x448] sm:$0xff]
      %v453 = vld [vmem:[%s2 + $0x450] sm:$0xff]
      %v454 = vld [vmem:[%s2 + $0x458] sm:$0xff]
      %v455 = vld [vmem:[%s2 + $0x460] sm:$0xff]
      %v456 = vld [vmem:[%s2 + $0x468] sm:$0xff]
      %v457 = vld [vmem:[%s2 + $0x470] sm:$0xff]
      %v458 = vld [vmem:[%s2 + $0x478] sm:$0xff]
      %v459 = vld [vmem:[%s2 + $0x480] sm:$0xff]
      %v460 = vld [vmem:[%s2 + $0x488] sm:$0xff]
      %v461 = vld [vmem:[%s2 + $0x490] sm:$0xff]
      %v462 = vld [vmem:[%s2 + $0x498] sm:$0xff]
      %v463 = vld [vmem:[%s2 + $0x4a0] sm:$0xff]
      %v464 = vld [vmem:[%s2 + $0x4a8] sm:$0xff]
      %v465 = vld [vmem:[%s2 + $0x4b0] sm:$0xff]
      %v466 = vld [vmem:[%s2 + $0x4b8] sm:$0xff]
      %v467 = vld [vmem:[%s2 + $0x4c0] sm:$0xff]
      %v468 = vld [vmem:[%s2 + $0x4c8] sm:$0xff]
      %v469 = vld [vmem:[%s2 + $0x4d0] sm:$0xff]
      %v470 = vld [vmem:[%s2 + $0x4d8] sm:$0xff]
      %v471 = vld [vmem:[%s2 + $0x4e0] sm:$0xff]
      %v472 = vld [vmem:[%s2 + $0x4e8] sm:$0xff]
      %v473 = vld [vmem:[%s2 + $0x4f0] sm:$0xff]
      %v474 = vld [vmem:[%s2 + $0x4f8] sm:$0xff]
      %v475 = vld [vmem:[%s2 + $0x500] sm:$0xff]
      %v476 = vld [vmem:[%s2 + $0x508] sm:$0xff]
      %v477 = vld [vmem:[%s2 + $0x510] sm:$0xff]
      %v478 = vld [vmem:[%s2 + $0x518] sm:$0xff]
      %v479 = vld [vmem:[%s2 + $0x520] sm:$0xff]
      %v480 = vld [vmem:[%s2 + $0x528] sm:$0xff]
      %v481 = vld [vmem:[%s2 + $0x530] sm:$0xff]
      %v482 = vld [vmem:[%s2 + $0x538] sm:$0xff]
      %v483 = vld [vmem:[%s2 + $0x540] sm:$0xff]
      %v484 = vld [vmem:[%s2 + $0x548] sm:$0xff]
      %v485 = vld [vmem:[%s2 + $0x550] sm:$0xff]
      %v486 = vld [vmem:[%s2 + $0x558] sm:$0xff]
      %v487 = vld [vmem:[%s2 + $0x560] sm:$0xff]
      %v488 = vld [vmem:[%s2 + $0x568] sm:$0xff]
      %v489 = vld [vmem:[%s2 + $0x570] sm:$0xff]
      %v490 = vld [vmem:[%s2 + $0x578] sm:$0xff]
      %v491 = vld [vmem:[%s2 + $0x580] sm:$0xff]
      %v492 = vld [vmem:[%s2 + $0x588] sm:$0xff]
      %v493 = vld [vmem:[%s2 + $0x590] sm:$0xff]
      %v494 = vld [vmem:[%s2 + $0x598] sm:$0xff]
      %v495 = vld [vmem:[%s2 + $0x5a0] sm:$0xff]
      %v496 = vld [vmem:[%s2 + $0x5a8] sm:$0xff]
      %v497 = vld [vmem:[%s2 + $0x5b0] sm:$0xff]
      %v498 = vld [vmem:[%s2 + $0x5b8] sm:$0xff]
      %v499 = vld [vmem:[%s2 + $0x5c0] sm:$0xff]
      %v500 = vld [vmem:[%s2 + $0x5c8] sm:$0xff]
      %v501 = vld [vmem:[%s2 + $0x5d0] sm:$0xff]
      %v502 = vld [vmem:[%s2 + $0x5d8] sm:$0xff]
      %v503 = vld [vmem:[%s2 + $0x5e0] sm:$0xff]
      %v504 = vld [vmem:[%s2 + $0x5e8] sm:$0xff]
      %v505 = vld [vmem:[%s2 + $0x5f0] sm:$0xff]
      %v506 = vld [vmem:[%s2 + $0x5f8] sm:$0xff]
      %v507 = vld [vmem:[%s2 + $0x600] sm:$0xff]
      %v508 = vld [vmem:[%s2 + $0x608] sm:$0xff]
      %v509 = vld [vmem:[%s2 + $0x610] sm:$0xff]
      %v510 = vld [vmem:[%s2 + $0x618] sm:$0xff]
      %v511 = vld [vmem:[%s2 + $0x620] sm:$0xff]
      %v512 = vld [vmem:[%s2 + $0x628] sm:$0xff]
      %v513 = vld [vmem:[%s2 + $0x630] sm:$0xff]
      %v514 = vld [vmem:[%s2 + $0x638] sm:$0xff]
      %v515 = vld [vmem:[%s2 + $0x640] sm:$0xff]
      %v516 = vld [vmem:[%s2 + $0x648] sm:$0xff]
      %v517 = vld [vmem:[%s2 + $0x650] sm:$0xff]
      %v518 = vld [vmem:[%s2 + $0x658] sm:$0xff]
      %v519 = vld [vmem:[%s2 + $0x660] sm:$0xff]
      %v520 = vld [vmem:[%s2 + $0x668] sm:$0xff]
      %v521 = vld [vmem:[%s2 + $0x670] sm:$0xff]
      %v522 = vld [vmem:[%s2 + $0x678] sm:$0xff]
      %v523 = vld [vmem:[%s2 + $0x680] sm:$0xff]
      %v524 = vld [vmem:[%s2 + $0x688] sm:$0xff]
      %v525 = vld [vmem:[%s2 + $0x690] sm:$0xff]
      %v526 = vld [vmem:[%s2 + $0x698] sm:$0xff]
      %v527 = vld [vmem:[%s2 + $0x6a0] sm:$0xff]
      %v528 = vld [vmem:[%s2 + $0x6a8] sm:$0xff]
      %v529 = vld [vmem:[%s2 + $0x6b0] sm:$0xff]
      %v530 = vld [vmem:[%s2 + $0x6b8] sm:$0xff]
      %v531 = vld [vmem:[%s2 + $0x6c0] sm:$0xff]
      %v532 = vld [vmem:[%s2 + $0x6c8] sm:$0xff]
      %v533 = vld [vmem:[%s2 + $0x6d0] sm:$0xff]
      %v534 = vld [vmem:[%s2 + $0x6d8] sm:$0xff]
      %v535 = vld [vmem:[%s2 + $0x6e0] sm:$0xff]
      %v536 = vld [vmem:[%s2 + $0x6e8] sm:$0xff]
      %v537 = vld [vmem:[%s2 + $0x6f0] sm:$0xff]
      %v538 = vld [vmem:[%s2 + $0x6f8] sm:$0xff]
      %v539 = vld [vmem:[%s2 + $0x700] sm:$0xff]
      %v540 = vld [vmem:[%s2 + $0x708] sm:$0xff]
      %v541 = vld [vmem:[%s2 + $0x710] sm:$0xff]
      %v542 = vld [vmem:[%s2 + $0x718] sm:$0xff]
      %v543 = vld [vmem:[%s2 + $0x720] sm:$0xff]
      %v544 = vld [vmem:[%s2 + $0x728] sm:$0xff]
      %v545 = vld [vmem:[%s2 + $0x730] sm:$0xff]
      %v546 = vld [vmem:[%s2 + $0x738] sm:$0xff]
      %v547 = vld [vmem:[%s2 + $0x740] sm:$0xff]
      %v548 = vld [vmem:[%s2 + $0x748] sm:$0xff]
      %v549 = vld [vmem:[%s2 + $0x750] sm:$0xff]
      %v550 = vld [vmem:[%s2 + $0x758] sm:$0xff]
      %v551 = vld [vmem:[%s2 + $0x760] sm:$0xff]
      %v552 = vld [vmem:[%s2 + $0x768] sm:$0xff]
      %v553 = vld [vmem:[%s2 + $0x770] sm:$0xff]
      %v554 = vld [vmem:[%s2 + $0x778] sm:$0xff]
      %v555 = vld [vmem:[%s2 + $0x780] sm:$0xff]
      %v556 = vld [vmem:[%s2 + $0x788] sm:$0xff]
      %v557 = vld [vmem:[%s2 + $0x790] sm:$0xff]
      %v558 = vld [vmem:[%s2 + $0x798] sm:$0xff]
      %v559 = vld [vmem:[%s2 + $0x7a0] sm:$0xff]
      %v560 = vld [vmem:[%s2 + $0x7a8] sm:$0xff]
      %v561 = vld [vmem:[%s2 + $0x7b0] sm:$0xff]
      %v562 = vld [vmem:[%s2 + $0x7b8] sm:$0xff]
      %v563 = vld [vmem:[%s2 + $0x7c0] sm:$0xff]
      %v564 = vld [vmem:[%s2 + $0x7c8] sm:$0xff]
      %v565 = vld [vmem:[%s2 + $0x7d0] sm:$0xff]
      %v566 = vld [vmem:[%s2 + $0x7d8] sm:$0xff]
      %v567 = vld [vmem:[%s2 + $0x7e0] sm:$0xff]
      %v568 = vld [vmem:[%s2 + $0x7e8] sm:$0xff]
      %v569 = vld [vmem:[%s2 + $0x7f0] sm:$0xff]
      %v570 = vld [vmem:[%s2 + $0x7f8] sm:$0xff]
      %v571 = vld [vmem:[%s2 + $0x800] sm:$0xff]
      %v572 = vld [vmem:[%s2 + $0x808] sm:$0xff]
      %v573 = vld [vmem:[%s2 + $0x810] sm:$0xff]
      %v574 = vld [vmem:[%s2 + $0x818] sm:$0xff]
      %v575 = vld [vmem:[%s2 + $0x820] sm:$0xff]
      %v576 = vld [vmem:[%s2 + $0x828] sm:$0xff]
      %v577 = vld [vmem:[%s2 + $0x830] sm:$0xff]
      %v578 = vld [vmem:[%s2 + $0x838] sm:$0xff]
      %v579 = vld [vmem:[%s2 + $0x840] sm:$0xff]
      %v580 = vld [vmem:[%s2 + $0x848] sm:$0xff]
      %v581 = vld [vmem:[%s2 + $0x850] sm:$0xff]
      %v582 = vld [vmem:[%s2 + $0x858] sm:$0xff]
      %v583 = vld [vmem:[%s2 + $0x860] sm:$0xff]
      %v584 = vld [vmem:[%s2 + $0x868] sm:$0xff]
      %v585 = vld [vmem:[%s2 + $0x870] sm:$0xff]
      %v586 = vld [vmem:[%s2 + $0x878] sm:$0xff]
      %v587 = vld [vmem:[%s2 + $0x880] sm:$0xff]
      %v588 = vld [vmem:[%s2 + $0x888] sm:$0xff]
      %v589 = vld [vmem:[%s2 + $0x890] sm:$0xff]
      %v590 = vld [vmem:[%s2 + $0x898] sm:$0xff]
      %v591 = vld [vmem:[%s2 + $0x8a0] sm:$0xff]
      %v592 = vld [vmem:[%s2 + $0x8a8] sm:$0xff]
      %v593 = vld [vmem:[%s2 + $0x8b0] sm:$0xff]
      %v594 = vld [vmem:[%s2 + $0x8b8] sm:$0xff]
      %v595 = vld [vmem:[%s2 + $0x8c0] sm:$0xff]
      %v596 = vld [vmem:[%s2 + $0x8c8] sm:$0xff]
      %v597 = vld [vmem:[%s2 + $0x8d0] sm:$0xff]
      %v598 = vld [vmem:[%s2 + $0x8d8] sm:$0xff]
      %v599 = vld [vmem:[%s2 + $0x8e0] sm:$0xff]
      %v600 = vld [vmem:[%s2 + $0x8e8] sm:$0xff]
      %v601 = vld [vmem:[%s2 + $0x8f0] sm:$0xff]
      %v602 = vld [vmem:[%s2 + $0x8f8] sm:$0xff]
      %v607 = vcombine.high %v309, %v309
      %v608 = vcombine.high %v310, %v310
      %v609 = vcombine.high %v311, %v311
      %v610 = vcombine.high %v312, %v312
      %vm611 = vcmask 1042432
      %vm612 = vcmask 1046532
      %vm613 = vmor %vm611, %vm612
      %v614 = vrot.slane %v309, 5
      %v615 = vrot.slane %v614, 4
      %v616 = vrot.slane %v607, 5
      %v617 = vsel %vm613, %v615, %v616
      %v618 = vrot.slane %v310, 5
      %v619 = vrot.slane %v618, 4
      %v620 = vrot.slane %v608, 5
      %v621 = vsel %vm613, %v619, %v620
      %v622 = vrot.slane %v311, 5
      %v623 = vrot.slane %v622, 4
      %v624 = vrot.slane %v609, 5
      %v625 = vsel %vm613, %v623, %v624
      %v626 = vrot.slane %v312, 5
      %v627 = vrot.slane %v626, 4
      %v628 = vrot.slane %v610, 5
      %v629 = vsel %vm613, %v627, %v628
      %v630 = vcombine.low %v617, %v621
      %v631 = vcombine.low %v625, %v629
      %634 = vmatprep.subr.mxu0 %v378
      %635 = vmatpush1.msra.mxu0 %v377
      %636 = vmatprep.subr.mxu0 %v376
      %637 = vmatpush1.msra.mxu0 %v375
      %638 = vmatprep.subr.mxu0 %v374
      %639 = vmatpush1.msra.mxu0 %v373
      %640 = vmatprep.subr.mxu0 %v372
      %641 = vmatpush1.msra.mxu0 %v371
      %642 = vmatprep.subr.mxu0 %v370
      %643 = vmatpush1.msra.mxu0 %v369
      %644 = vmatprep.subr.mxu0 %v368
      %645 = vmatpush1.msra.mxu0 %v367
      %646 = vmatprep.subr.mxu0 %v366
      %647 = vmatpush1.msra.mxu0 %v365
      %648 = vmatprep.subr.mxu0 %v364
      %649 = vmatpush1.msra.mxu0 %v363
      %650 = vmatprep.subr.mxu0 %v362
      %651 = vmatpush1.msra.mxu0 %v361
      %652 = vmatprep.subr.mxu0 %v360
      %653 = vmatpush1.msra.mxu0 %v359
      %654 = vmatprep.subr.mxu0 %v358
      %655 = vmatpush1.msra.mxu0 %v357
      %656 = vmatprep.subr.mxu0 %v356
      %657 = vmatpush1.msra.mxu0 %v355
      %658 = vmatprep.subr.mxu0 %v354
      %659 = vmatpush1.msra.mxu0 %v353
      %660 = vmatprep.subr.mxu0 %v352
      %661 = vmatpush1.msra.mxu0 %v351
      %662 = vmatprep.subr.mxu0 %v350
      %663 = vmatpush1.msra.mxu0 %v349
      %664 = vmatprep.subr.mxu0 %v348
      %665 = vmatpush1.msra.mxu0 %v347
      %666 = vmatprep.subr.mxu0 0.0
      %667 = vmatpush2.msra.mxu0 0.0
      %668 = vmatprep.subr.mxu0 0.0
      %669 = vmatpush2.msra.mxu0 0.0
      %670 = vmatprep.subr.mxu0 0.0
      %671 = vmatpush2.msra.mxu0 0.0
      %672 = vmatprep.subr.mxu0 0.0
      %673 = vmatpush2.msra.mxu0 0.0
      %674 = vmatprep.subr.mxu0 0.0
      %675 = vmatpush2.msra.mxu0 0.0
      %676 = vmatprep.subr.mxu0 0.0
      %677 = vmatpush2.msra.mxu0 0.0
      %678 = vmatprep.subr.mxu0 0.0
      %679 = vmatpush2.msra.mxu0 0.0
      %680 = vmatprep.subr.mxu0 0.0
      %681 = vmatpush2.msra.mxu0 0.0
      %682 = vmatprep.subr.mxu0 0.0
      %683 = vmatpush2.msra.mxu0 0.0
      %684 = vmatprep.subr.mxu0 0.0
      %685 = vmatpush2.msra.mxu0 0.0
      %686 = vmatprep.subr.mxu0 0.0
      %687 = vmatpush2.msra.mxu0 0.0
      %688 = vmatprep.subr.mxu0 0.0
      %689 = vmatpush2.msra.mxu0 0.0
      %690 = vmatprep.subr.mxu0 0.0
      %691 = vmatpush2.msra.mxu0 0.0
      %692 = vmatprep.subr.mxu0 0.0
      %693 = vmatpush2.msra.mxu0 0.0
      %694 = vmatprep.subr.mxu0 0.0
      %695 = vmatpush2.msra.mxu0 0.0
      %696 = vmatprep.subr.mxu0 0.0
      %697 = vmatpush2.msra.mxu0 0.0
      %698 = vmatprep.mubr.f32.mxu0 0.0
      %699 = vmatmul.mubr.f32.gmra.mxu0 %v630
      %v700 = vpop.f32.mrf.mxu0
      %v701 = vadd.f32 0.0, %v700
      %v702 = vpop.f32.mrf.mxu0
      %v703 = vadd.f32 0.0, %v702
      %704 = vmatprep.mubr.f32.mxu0 0.0
      %705 = vmatmul.mubr.f32.gmra.mxu0 %v631
      %v706 = vpop.f32.mrf.mxu0
      %v707 = vadd.f32 0.0, %v706
      %v708 = vpop.f32.mrf.mxu0
      %v709 = vadd.f32 0.0, %v708
      %710 = vdwg.mxu0
      %v711 = vcombine.low %v309, %v310
      %v712 = vcombine.low %v311, %v312
      %715 = vmatprep.subr.mxu0 %v346
      %716 = vmatpush1.msra.mxu0 %v345
      %717 = vmatprep.subr.mxu0 %v344
      %718 = vmatpush1.msra.mxu0 %v343
      %719 = vmatprep.subr.mxu0 %v342
      %720 = vmatpush1.msra.mxu0 %v341
      %721 = vmatprep.subr.mxu0 %v340
      %722 = vmatpush1.msra.mxu0 %v339
      %723 = vmatprep.subr.mxu0 %v338
      %724 = vmatpush1.msra.mxu0 %v337
      %725 = vmatprep.subr.mxu0 %v336
      %726 = vmatpush1.msra.mxu0 %v335
      %727 = vmatprep.subr.mxu0 %v334
      %728 = vmatpush1.msra.mxu0 %v333
      %729 = vmatprep.subr.mxu0 %v332
      %730 = vmatpush1.msra.mxu0 %v331
      %731 = vmatprep.subr.mxu0 %v330
      %732 = vmatpush1.msra.mxu0 %v329
      %733 = vmatprep.subr.mxu0 %v328
      %734 = vmatpush1.msra.mxu0 %v327
      %735 = vmatprep.subr.mxu0 %v326
      %736 = vmatpush1.msra.mxu0 %v325
      %737 = vmatprep.subr.mxu0 %v324
      %738 = vmatpush1.msra.mxu0 %v323
      %739 = vmatprep.subr.mxu0 %v322
      %740 = vmatpush1.msra.mxu0 %v321
      %741 = vmatprep.subr.mxu0 %v320
      %742 = vmatpush1.msra.mxu0 %v319
      %743 = vmatprep.subr.mxu0 %v318
      %744 = vmatpush1.msra.mxu0 %v317
      %745 = vmatprep.subr.mxu0 %v316
      %746 = vmatpush1.msra.mxu0 %v315
      %747 = vmatprep.subr.mxu0 0.0
      %748 = vmatpush2.msra.mxu0 0.0
      %749 = vmatprep.subr.mxu0 0.0
      %750 = vmatpush2.msra.mxu0 0.0
      %751 = vmatprep.subr.mxu0 0.0
      %752 = vmatpush2.msra.mxu0 0.0
      %753 = vmatprep.subr.mxu0 0.0
      %754 = vmatpush2.msra.mxu0 0.0
      %755 = vmatprep.subr.mxu0 0.0
      %756 = vmatpush2.msra.mxu0 0.0
      %757 = vmatprep.subr.mxu0 0.0
      %758 = vmatpush2.msra.mxu0 0.0
      %759 = vmatprep.subr.mxu0 0.0
      %760 = vmatpush2.msra.mxu0 0.0
      %761 = vmatprep.subr.mxu0 0.0
      %762 = vmatpush2.msra.mxu0 0.0
      %763 = vmatprep.subr.mxu0 0.0
      %764 = vmatpush2.msra.mxu0 0.0
      %765 = vmatprep.subr.mxu0 0.0
      %766 = vmatpush2.msra.mxu0 0.0
      %767 = vmatprep.subr.mxu0 0.0
      %768 = vmatpush2.msra.mxu0 0.0
      %769 = vmatprep.subr.mxu0 0.0
      %770 = vmatpush2.msra.mxu0 0.0
      %771 = vmatprep.subr.mxu0 0.0
      %772 = vmatpush2.msra.mxu0 0.0
      %773 = vmatprep.subr.mxu0 0.0
      %774 = vmatpush2.msra.mxu0 0.0
      %775 = vmatprep.subr.mxu0 0.0
      %776 = vmatpush2.msra.mxu0 0.0
      %777 = vmatprep.subr.mxu0 0.0
      %778 = vmatpush2.msra.mxu0 0.0
      %779 = vmatprep.mubr.f32.mxu0 0.0
      %780 = vmatmul.mubr.f32.gmra.mxu0 %v711
      %v781 = vpop.f32.mrf.mxu0
      %v782 = vadd.f32 %v701, %v781
      %v783 = vpop.f32.mrf.mxu0
      %v784 = vadd.f32 %v703, %v783
      %785 = vmatprep.mubr.f32.mxu0 0.0
      %786 = vmatmul.mubr.f32.gmra.mxu0 %v712
      %v787 = vpop.f32.mrf.mxu0
      %v788 = vadd.f32 %v707, %v787
      %v789 = vpop.f32.mrf.mxu0
      %v790 = vadd.f32 %v709, %v789
      %791 = vdwg.mxu0
      %vm792 = vcmask 1041408
      %vm793 = vcmask 1045508
      %vm794 = vmor %vm792, %vm793
      %v795 = vrot.slane %v309, 6
      %v796 = vrot.slane %v795, 4
      %v797 = vrot.slane %v607, 6
      %v798 = vsel %vm794, %v796, %v797
      %v799 = vrot.slane %v310, 6
      %v800 = vrot.slane %v799, 4
      %v801 = vrot.slane %v608, 6
      %v802 = vsel %vm794, %v800, %v801
      %v803 = vrot.slane %v311, 6
      %v804 = vrot.slane %v803, 4
      %v805 = vrot.slane %v609, 6
      %v806 = vsel %vm794, %v804, %v805
      %v807 = vrot.slane %v312, 6
      %v808 = vrot.slane %v807, 4
      %v809 = vrot.slane %v610, 6
      %v810 = vsel %vm794, %v808, %v809
      %v811 = vcombine.low %v798, %v802
      %v812 = vcombine.low %v806, %v810
      %815 = vmatprep.subr.mxu0 %v410
      %816 = vmatpush1.msra.mxu0 %v409
      %817 = vmatprep.subr.mxu0 %v408
      %818 = vmatpush1.msra.mxu0 %v407
      %819 = vmatprep.subr.mxu0 %v406
      %820 = vmatpush1.msra.mxu0 %v405
      %821 = vmatprep.subr.mxu0 %v404
      %822 = vmatpush1.msra.mxu0 %v403
      %823 = vmatprep.subr.mxu0 %v402
      %824 = vmatpush1.msra.mxu0 %v401
      %825 = vmatprep.subr.mxu0 %v400
      %826 = vmatpush1.msra.mxu0 %v399
      %827 = vmatprep.subr.mxu0 %v398
      %828 = vmatpush1.msra.mxu0 %v397
      %829 = vmatprep.subr.mxu0 %v396
      %830 = vmatpush1.msra.mxu0 %v395
      %831 = vmatprep.subr.mxu0 %v394
      %832 = vmatpush1.msra.mxu0 %v393
      %833 = vmatprep.subr.mxu0 %v392
      %834 = vmatpush1.msra.mxu0 %v391
      %835 = vmatprep.subr.mxu0 %v390
      %836 = vmatpush1.msra.mxu0 %v389
      %837 = vmatprep.subr.mxu0 %v388
      %838 = vmatpush1.msra.mxu0 %v387
      %839 = vmatprep.subr.mxu0 %v386
      %840 = vmatpush1.msra.mxu0 %v385
      %841 = vmatprep.subr.mxu0 %v384
      %842 = vmatpush1.msra.mxu0 %v383
      %843 = vmatprep.subr.mxu0 %v382
      %844 = vmatpush1.msra.mxu0 %v381
      %845 = vmatprep.subr.mxu0 %v380
      %846 = vmatpush1.msra.mxu0 %v379
      %847 = vmatprep.subr.mxu0 0.0
      %848 = vmatpush2.msra.mxu0 0.0
      %849 = vmatprep.subr.mxu0 0.0
      %850 = vmatpush2.msra.mxu0 0.0
      %851 = vmatprep.subr.mxu0 0.0
      %852 = vmatpush2.msra.mxu0 0.0
      %853 = vmatprep.subr.mxu0 0.0
      %854 = vmatpush2.msra.mxu0 0.0
      %855 = vmatprep.subr.mxu0 0.0
      %856 = vmatpush2.msra.mxu0 0.0
      %857 = vmatprep.subr.mxu0 0.0
      %858 = vmatpush2.msra.mxu0 0.0
      %859 = vmatprep.subr.mxu0 0.0
      %860 = vmatpush2.msra.mxu0 0.0
      %861 = vmatprep.subr.mxu0 0.0
      %862 = vmatpush2.msra.mxu0 0.0
      %863 = vmatprep.subr.mxu0 0.0
      %864 = vmatpush2.msra.mxu0 0.0
      %865 = vmatprep.subr.mxu0 0.0
      %866 = vmatpush2.msra.mxu0 0.0
      %867 = vmatprep.subr.mxu0 0.0
      %868 = vmatpush2.msra.mxu0 0.0
      %869 = vmatprep.subr.mxu0 0.0
      %870 = vmatpush2.msra.mxu0 0.0
      %871 = vmatprep.subr.mxu0 0.0
      %872 = vmatpush2.msra.mxu0 0.0
      %873 = vmatprep.subr.mxu0 0.0
      %874 = vmatpush2.msra.mxu0 0.0
      %875 = vmatprep.subr.mxu0 0.0
      %876 = vmatpush2.msra.mxu0 0.0
      %877 = vmatprep.subr.mxu0 0.0
      %878 = vmatpush2.msra.mxu0 0.0
      %879 = vmatprep.mubr.f32.mxu0 0.0
      %880 = vmatmul.mubr.f32.gmra.mxu0 %v811
      %v881 = vpop.f32.mrf.mxu0
      %v882 = vadd.f32 0.0, %v881
      %v883 = vpop.f32.mrf.mxu0
      %v884 = vadd.f32 0.0, %v883
      %885 = vmatprep.mubr.f32.mxu0 0.0
      %886 = vmatmul.mubr.f32.gmra.mxu0 %v812
      %v887 = vpop.f32.mrf.mxu0
      %v888 = vadd.f32 0.0, %v887
      %v889 = vpop.f32.mrf.mxu0
      %v890 = vadd.f32 0.0, %v889
      %891 = vdwg.mxu0
      %v892 = vadd.f32 %v782, %v882
      %v893 = vadd.f32 %v784, %v884
      %v894 = vadd.f32 %v788, %v888
      %v895 = vadd.f32 %v790, %v890
      %v897 = vcombine.low %v310, %v311
      %v898 = vcombine.low %v312, %v313
      %901 = vmatprep.subr.mxu0 %v442
      %902 = vmatpush1.msra.mxu0 %v441
      %903 = vmatprep.subr.mxu0 %v440
      %904 = vmatpush1.msra.mxu0 %v439
      %905 = vmatprep.subr.mxu0 %v438
      %906 = vmatpush1.msra.mxu0 %v437
      %907 = vmatprep.subr.mxu0 %v436
      %908 = vmatpush1.msra.mxu0 %v435
      %909 = vmatprep.subr.mxu0 %v434
      %910 = vmatpush1.msra.mxu0 %v433
      %911 = vmatprep.subr.mxu0 %v432
      %912 = vmatpush1.msra.mxu0 %v431
      %913 = vmatprep.subr.mxu0 %v430
      %914 = vmatpush1.msra.mxu0 %v429
      %915 = vmatprep.subr.mxu0 %v428
      %916 = vmatpush1.msra.mxu0 %v427
      %917 = vmatprep.subr.mxu0 %v426
      %918 = vmatpush1.msra.mxu0 %v425
      %919 = vmatprep.subr.mxu0 %v424
      %920 = vmatpush1.msra.mxu0 %v423
      %921 = vmatprep.subr.mxu0 %v422
      %922 = vmatpush1.msra.mxu0 %v421
      %923 = vmatprep.subr.mxu0 %v420
      %924 = vmatpush1.msra.mxu0 %v419
      %925 = vmatprep.subr.mxu0 %v418
      %926 = vmatpush1.msra.mxu0 %v417
      %927 = vmatprep.subr.mxu0 %v416
      %928 = vmatpush1.msra.mxu0 %v415
      %929 = vmatprep.subr.mxu0 %v414
      %930 = vmatpush1.msra.mxu0 %v413
      %931 = vmatprep.subr.mxu0 %v412
      %932 = vmatpush1.msra.mxu0 %v411
      %933 = vmatprep.subr.mxu0 0.0
      %934 = vmatpush2.msra.mxu0 0.0
      %935 = vmatprep.subr.mxu0 0.0
      %936 = vmatpush2.msra.mxu0 0.0
      %937 = vmatprep.subr.mxu0 0.0
      %938 = vmatpush2.msra.mxu0 0.0
      %939 = vmatprep.subr.mxu0 0.0
      %940 = vmatpush2.msra.mxu0 0.0
      %941 = vmatprep.subr.mxu0 0.0
      %942 = vmatpush2.msra.mxu0 0.0
      %943 = vmatprep.subr.mxu0 0.0
      %944 = vmatpush2.msra.mxu0 0.0
      %945 = vmatprep.subr.mxu0 0.0
      %946 = vmatpush2.msra.mxu0 0.0
      %947 = vmatprep.subr.mxu0 0.0
      %948 = vmatpush2.msra.mxu0 0.0
      %949 = vmatprep.subr.mxu0 0.0
      %950 = vmatpush2.msra.mxu0 0.0
      %951 = vmatprep.subr.mxu0 0.0
      %952 = vmatpush2.msra.mxu0 0.0
      %953 = vmatprep.subr.mxu0 0.0
      %954 = vmatpush2.msra.mxu0 0.0
      %955 = vmatprep.subr.mxu0 0.0
      %956 = vmatpush2.msra.mxu0 0.0
      %957 = vmatprep.subr.mxu0 0.0
      %958 = vmatpush2.msra.mxu0 0.0
      %959 = vmatprep.subr.mxu0 0.0
      %960 = vmatpush2.msra.mxu0 0.0
      %961 = vmatprep.subr.mxu0 0.0
      %962 = vmatpush2.msra.mxu0 0.0
      %963 = vmatprep.subr.mxu0 0.0
      %964 = vmatpush2.msra.mxu0 0.0
      %965 = vmatprep.mubr.f32.mxu0 0.0
      %966 = vmatmul.mubr.f32.gmra.mxu0 %v897
      %v967 = vpop.f32.mrf.mxu0
      %v968 = vadd.f32 0.0, %v967
      %v969 = vpop.f32.mrf.mxu0
      %v970 = vadd.f32 0.0, %v969
      %971 = vmatprep.mubr.f32.mxu0 0.0
      %972 = vmatmul.mubr.f32.gmra.mxu0 %v898
      %v973 = vpop.f32.mrf.mxu0
      %v974 = vadd.f32 0.0, %v973
      %v975 = vpop.f32.mrf.mxu0
      %v976 = vadd.f32 0.0, %v975
      %977 = vdwg.mxu0
      %v978 = vadd.f32 %v892, %v968
      %v979 = vadd.f32 %v893, %v970
      %v980 = vadd.f32 %v894, %v974
      %v981 = vadd.f32 %v895, %v976
      %v982 = vcombine.high %v313, %v313
      %v983 = vrot.slane %v313, 5
      %v984 = vrot.slane %v983, 4
      %v985 = vrot.slane %v982, 5
      %v986 = vsel %vm613, %v984, %v985
      %v987 = vcombine.low %v621, %v625
      %v988 = vcombine.low %v629, %v986
      %991 = vmatprep.subr.mxu0 %v474
      %992 = vmatpush1.msra.mxu0 %v473
      %993 = vmatprep.subr.mxu0 %v472
      %994 = vmatpush1.msra.mxu0 %v471
      %995 = vmatprep.subr.mxu0 %v470
      %996 = vmatpush1.msra.mxu0 %v469
      %997 = vmatprep.subr.mxu0 %v468
      %998 = vmatpush1.msra.mxu0 %v467
      %999 = vmatprep.subr.mxu0 %v466
      %1000 = vmatpush1.msra.mxu0 %v465
      %1001 = vmatprep.subr.mxu0 %v464
      %1002 = vmatpush1.msra.mxu0 %v463
      %1003 = vmatprep.subr.mxu0 %v462
      %1004 = vmatpush1.msra.mxu0 %v461
      %1005 = vmatprep.subr.mxu0 %v460
      %1006 = vmatpush1.msra.mxu0 %v459
      %1007 = vmatprep.subr.mxu0 %v458
      %1008 = vmatpush1.msra.mxu0 %v457
      %1009 = vmatprep.subr.mxu0 %v456
      %1010 = vmatpush1.msra.mxu0 %v455
      %1011 = vmatprep.subr.mxu0 %v454
      %1012 = vmatpush1.msra.mxu0 %v453
      %1013 = vmatprep.subr.mxu0 %v452
      %1014 = vmatpush1.msra.mxu0 %v451
      %1015 = vmatprep.subr.mxu0 %v450
      %1016 = vmatpush1.msra.mxu0 %v449
      %1017 = vmatprep.subr.mxu0 %v448
      %1018 = vmatpush1.msra.mxu0 %v447
      %1019 = vmatprep.subr.mxu0 %v446
      %1020 = vmatpush1.msra.mxu0 %v445
      %1021 = vmatprep.subr.mxu0 %v444
      %1022 = vmatpush1.msra.mxu0 %v443
      %1023 = vmatprep.subr.mxu0 0.0
      %1024 = vmatpush2.msra.mxu0 0.0
      %1025 = vmatprep.subr.mxu0 0.0
      %1026 = vmatpush2.msra.mxu0 0.0
      %1027 = vmatprep.subr.mxu0 0.0
      %1028 = vmatpush2.msra.mxu0 0.0
      %1029 = vmatprep.subr.mxu0 0.0
      %1030 = vmatpush2.msra.mxu0 0.0
      %1031 = vmatprep.subr.mxu0 0.0
      %1032 = vmatpush2.msra.mxu0 0.0
      %1033 = vmatprep.subr.mxu0 0.0
      %1034 = vmatpush2.msra.mxu0 0.0
      %1035 = vmatprep.subr.mxu0 0.0
      %1036 = vmatpush2.msra.mxu0 0.0
      %1037 = vmatprep.subr.mxu0 0.0
      %1038 = vmatpush2.msra.mxu0 0.0
      %1039 = vmatprep.subr.mxu0 0.0
      %1040 = vmatpush2.msra.mxu0 0.0
      %1041 = vmatprep.subr.mxu0 0.0
      %1042 = vmatpush2.msra.mxu0 0.0
      %1043 = vmatprep.subr.mxu0 0.0
      %1044 = vmatpush2.msra.mxu0 0.0
      %1045 = vmatprep.subr.mxu0 0.0
      %1046 = vmatpush2.msra.mxu0 0.0
      %1047 = vmatprep.subr.mxu0 0.0
      %1048 = vmatpush2.msra.mxu0 0.0
      %1049 = vmatprep.subr.mxu0 0.0
      %1050 = vmatpush2.msra.mxu0 0.0
      %1051 = vmatprep.subr.mxu0 0.0
      %1052 = vmatpush2.msra.mxu0 0.0
      %1053 = vmatprep.subr.mxu0 0.0
      %1054 = vmatpush2.msra.mxu0 0.0
      %1055 = vmatprep.mubr.f32.mxu0 0.0
      %1056 = vmatmul.mubr.f32.gmra.mxu0 %v987
      %v1057 = vpop.f32.mrf.mxu0
      %v1058 = vadd.f32 0.0, %v1057
      %v1059 = vpop.f32.mrf.mxu0
      %v1060 = vadd.f32 0.0, %v1059
      %1061 = vmatprep.mubr.f32.mxu0 0.0
      %1062 = vmatmul.mubr.f32.gmra.mxu0 %v988
      %v1063 = vpop.f32.mrf.mxu0
      %v1064 = vadd.f32 0.0, %v1063
      %v1065 = vpop.f32.mrf.mxu0
      %v1066 = vadd.f32 0.0, %v1065
      %1067 = vdwg.mxu0
      %v1068 = vadd.f32 %v978, %v1058
      %v1069 = vadd.f32 %v979, %v1060
      %v1070 = vadd.f32 %v980, %v1064
      %v1071 = vadd.f32 %v981, %v1066
      %v1072 = vrot.slane %v313, 6
      %v1073 = vrot.slane %v1072, 4
      %v1074 = vrot.slane %v982, 6
      %v1075 = vsel %vm794, %v1073, %v1074
      %v1076 = vcombine.low %v802, %v806
      %v1077 = vcombine.low %v810, %v1075
      %1080 = vmatprep.subr.mxu0 %v506
      %1081 = vmatpush1.msra.mxu0 %v505
      %1082 = vmatprep.subr.mxu0 %v504
      %1083 = vmatpush1.msra.mxu0 %v503
      %1084 = vmatprep.subr.mxu0 %v502
      %1085 = vmatpush1.msra.mxu0 %v501
      %1086 = vmatprep.subr.mxu0 %v500
      %1087 = vmatpush1.msra.mxu0 %v499
      %1088 = vmatprep.subr.mxu0 %v498
      %1089 = vmatpush1.msra.mxu0 %v497
      %1090 = vmatprep.subr.mxu0 %v496
      %1091 = vmatpush1.msra.mxu0 %v495
      %1092 = vmatprep.subr.mxu0 %v494
      %1093 = vmatpush1.msra.mxu0 %v493
      %1094 = vmatprep.subr.mxu0 %v492
      %1095 = vmatpush1.msra.mxu0 %v491
      %1096 = vmatprep.subr.mxu0 %v490
      %1097 = vmatpush1.msra.mxu0 %v489
      %1098 = vmatprep.subr.mxu0 %v488
      %1099 = vmatpush1.msra.mxu0 %v487
      %1100 = vmatprep.subr.mxu0 %v486
      %1101 = vmatpush1.msra.mxu0 %v485
      %1102 = vmatprep.subr.mxu0 %v484
      %1103 = vmatpush1.msra.mxu0 %v483
      %1104 = vmatprep.subr.mxu0 %v482
      %1105 = vmatpush1.msra.mxu0 %v481
      %1106 = vmatprep.subr.mxu0 %v480
      %1107 = vmatpush1.msra.mxu0 %v479
      %1108 = vmatprep.subr.mxu0 %v478
      %1109 = vmatpush1.msra.mxu0 %v477
      %1110 = vmatprep.subr.mxu0 %v476
      %1111 = vmatpush1.msra.mxu0 %v475
      %1112 = vmatprep.subr.mxu0 0.0
      %1113 = vmatpush2.msra.mxu0 0.0
      %1114 = vmatprep.subr.mxu0 0.0
      %1115 = vmatpush2.msra.mxu0 0.0
      %1116 = vmatprep.subr.mxu0 0.0
      %1117 = vmatpush2.msra.mxu0 0.0
      %1118 = vmatprep.subr.mxu0 0.0
      %1119 = vmatpush2.msra.mxu0 0.0
      %1120 = vmatprep.subr.mxu0 0.0
      %1121 = vmatpush2.msra.mxu0 0.0
      %1122 = vmatprep.subr.mxu0 0.0
      %1123 = vmatpush2.msra.mxu0 0.0
      %1124 = vmatprep.subr.mxu0 0.0
      %1125 = vmatpush2.msra.mxu0 0.0
      %1126 = vmatprep.subr.mxu0 0.0
      %1127 = vmatpush2.msra.mxu0 0.0
      %1128 = vmatprep.subr.mxu0 0.0
      %1129 = vmatpush2.msra.mxu0 0.0
      %1130 = vmatprep.subr.mxu0 0.0
      %1131 = vmatpush2.msra.mxu0 0.0
      %1132 = vmatprep.subr.mxu0 0.0
      %1133 = vmatpush2.msra.mxu0 0.0
      %1134 = vmatprep.subr.mxu0 0.0
      %1135 = vmatpush2.msra.mxu0 0.0
      %1136 = vmatprep.subr.mxu0 0.0
      %1137 = vmatpush2.msra.mxu0 0.0
      %1138 = vmatprep.subr.mxu0 0.0
      %1139 = vmatpush2.msra.mxu0 0.0
      %1140 = vmatprep.subr.mxu0 0.0
      %1141 = vmatpush2.msra.mxu0 0.0
      %1142 = vmatprep.subr.mxu0 0.0
      %1143 = vmatpush2.msra.mxu0 0.0
      %1144 = vmatprep.mubr.f32.mxu0 0.0
      %1145 = vmatmul.mubr.f32.gmra.mxu0 %v1076
      %v1146 = vpop.f32.mrf.mxu0
      %v1147 = vadd.f32 0.0, %v1146
      %v1148 = vpop.f32.mrf.mxu0
      %v1149 = vadd.f32 0.0, %v1148
      %1150 = vmatprep.mubr.f32.mxu0 0.0
      %1151 = vmatmul.mubr.f32.gmra.mxu0 %v1077
      %v1152 = vpop.f32.mrf.mxu0
      %v1153 = vadd.f32 0.0, %v1152
      %v1154 = vpop.f32.mrf.mxu0
      %v1155 = vadd.f32 0.0, %v1154
      %1156 = vdwg.mxu0
      %v1157 = vadd.f32 %v1068, %v1147
      %v1158 = vadd.f32 %v1069, %v1149
      %v1159 = vadd.f32 %v1070, %v1153
      %v1160 = vadd.f32 %v1071, %v1155
      %v1162 = vcombine.low %v313, %v314
      %1164 = vmatprep.subr.mxu0 %v538
      %1165 = vmatpush1.msra.mxu0 %v537
      %1166 = vmatprep.subr.mxu0 %v536
      %1167 = vmatpush1.msra.mxu0 %v535
      %1168 = vmatprep.subr.mxu0 %v534
      %1169 = vmatpush1.msra.mxu0 %v533
      %1170 = vmatprep.subr.mxu0 %v532
      %1171 = vmatpush1.msra.mxu0 %v531
      %1172 = vmatprep.subr.mxu0 %v530
      %1173 = vmatpush1.msra.mxu0 %v529
      %1174 = vmatprep.subr.mxu0 %v528
      %1175 = vmatpush1.msra.mxu0 %v527
      %1176 = vmatprep.subr.mxu0 %v526
      %1177 = vmatpush1.msra.mxu0 %v525
      %1178 = vmatprep.subr.mxu0 %v524
      %1179 = vmatpush1.msra.mxu0 %v523
      %1180 = vmatprep.subr.mxu0 %v522
      %1181 = vmatpush1.msra.mxu0 %v521
      %1182 = vmatprep.subr.mxu0 %v520
      %1183 = vmatpush1.msra.mxu0 %v519
      %1184 = vmatprep.subr.mxu0 %v518
      %1185 = vmatpush1.msra.mxu0 %v517
      %1186 = vmatprep.subr.mxu0 %v516
      %1187 = vmatpush1.msra.mxu0 %v515
      %1188 = vmatprep.subr.mxu0 %v514
      %1189 = vmatpush1.msra.mxu0 %v513
      %1190 = vmatprep.subr.mxu0 %v512
      %1191 = vmatpush1.msra.mxu0 %v511
      %1192 = vmatprep.subr.mxu0 %v510
      %1193 = vmatpush1.msra.mxu0 %v509
      %1194 = vmatprep.subr.mxu0 %v508
      %1195 = vmatpush1.msra.mxu0 %v507
      %1196 = vmatprep.subr.mxu0 0.0
      %1197 = vmatpush2.msra.mxu0 0.0
      %1198 = vmatprep.subr.mxu0 0.0
      %1199 = vmatpush2.msra.mxu0 0.0
      %1200 = vmatprep.subr.mxu0 0.0
      %1201 = vmatpush2.msra.mxu0 0.0
      %1202 = vmatprep.subr.mxu0 0.0
      %1203 = vmatpush2.msra.mxu0 0.0
      %1204 = vmatprep.subr.mxu0 0.0
      %1205 = vmatpush2.msra.mxu0 0.0
      %1206 = vmatprep.subr.mxu0 0.0
      %1207 = vmatpush2.msra.mxu0 0.0
      %1208 = vmatprep.subr.mxu0 0.0
      %1209 = vmatpush2.msra.mxu0 0.0
      %1210 = vmatprep.subr.mxu0 0.0
      %1211 = vmatpush2.msra.mxu0 0.0
      %1212 = vmatprep.subr.mxu0 0.0
      %1213 = vmatpush2.msra.mxu0 0.0
      %1214 = vmatprep.subr.mxu0 0.0
      %1215 = vmatpush2.msra.mxu0 0.0
      %1216 = vmatprep.subr.mxu0 0.0
      %1217 = vmatpush2.msra.mxu0 0.0
      %1218 = vmatprep.subr.mxu0 0.0
      %1219 = vmatpush2.msra.mxu0 0.0
      %1220 = vmatprep.subr.mxu0 0.0
      %1221 = vmatpush2.msra.mxu0 0.0
      %1222 = vmatprep.subr.mxu0 0.0
      %1223 = vmatpush2.msra.mxu0 0.0
      %1224 = vmatprep.subr.mxu0 0.0
      %1225 = vmatpush2.msra.mxu0 0.0
      %1226 = vmatprep.subr.mxu0 0.0
      %1227 = vmatpush2.msra.mxu0 0.0
      %1228 = vmatprep.mubr.f32.mxu0 0.0
      %1229 = vmatmul.mubr.f32.gmra.mxu0 %v712
      %v1230 = vpop.f32.mrf.mxu0
      %v1231 = vadd.f32 0.0, %v1230
      %v1232 = vpop.f32.mrf.mxu0
      %v1233 = vadd.f32 0.0, %v1232
      %1234 = vmatprep.mubr.f32.mxu0 0.0
      %1235 = vmatmul.mubr.f32.gmra.mxu0 %v1162
      %v1236 = vpop.f32.mrf.mxu0
      %v1237 = vadd.f32 0.0, %v1236
      %v1238 = vpop.f32.mrf.mxu0
      %v1239 = vadd.f32 0.0, %v1238
      %1240 = vdwg.mxu0
      %v1241 = vadd.f32 %v1157, %v1231
      %v1242 = vadd.f32 %v1158, %v1233
      %v1243 = vadd.f32 %v1159, %v1237
      %v1244 = vadd.f32 %v1160, %v1239
      %v1245 = vcombine.high %v314, %v314
      %v1246 = vrot.slane %v314, 5
      %v1247 = vrot.slane %v1246, 4
      %v1248 = vrot.slane %v1245, 5
      %v1249 = vsel %vm613, %v1247, %v1248
      %v1250 = vcombine.low %v986, %v1249
      %1252 = vmatprep.subr.mxu0 %v570
      %1253 = vmatpush1.msra.mxu0 %v569
      %1254 = vmatprep.subr.mxu0 %v568
      %1255 = vmatpush1.msra.mxu0 %v567
      %1256 = vmatprep.subr.mxu0 %v566
      %1257 = vmatpush1.msra.mxu0 %v565
      %1258 = vmatprep.subr.mxu0 %v564
      %1259 = vmatpush1.msra.mxu0 %v563
      %1260 = vmatprep.subr.mxu0 %v562
      %1261 = vmatpush1.msra.mxu0 %v561
      %1262 = vmatprep.subr.mxu0 %v560
      %1263 = vmatpush1.msra.mxu0 %v559
      %1264 = vmatprep.subr.mxu0 %v558
      %1265 = vmatpush1.msra.mxu0 %v557
      %1266 = vmatprep.subr.mxu0 %v556
      %1267 = vmatpush1.msra.mxu0 %v555
      %1268 = vmatprep.subr.mxu0 %v554
      %1269 = vmatpush1.msra.mxu0 %v553
      %1270 = vmatprep.subr.mxu0 %v552
      %1271 = vmatpush1.msra.mxu0 %v551
      %1272 = vmatprep.subr.mxu0 %v550
      %1273 = vmatpush1.msra.mxu0 %v549
      %1274 = vmatprep.subr.mxu0 %v548
      %1275 = vmatpush1.msra.mxu0 %v547
      %1276 = vmatprep.subr.mxu0 %v546
      %1277 = vmatpush1.msra.mxu0 %v545
      %1278 = vmatprep.subr.mxu0 %v544
      %1279 = vmatpush1.msra.mxu0 %v543
      %1280 = vmatprep.subr.mxu0 %v542
      %1281 = vmatpush1.msra.mxu0 %v541
      %1282 = vmatprep.subr.mxu0 %v540
      %1283 = vmatpush1.msra.mxu0 %v539
      %1284 = vmatprep.subr.mxu0 0.0
      %1285 = vmatpush2.msra.mxu0 0.0
      %1286 = vmatprep.subr.mxu0 0.0
      %1287 = vmatpush2.msra.mxu0 0.0
      %1288 = vmatprep.subr.mxu0 0.0
      %1289 = vmatpush2.msra.mxu0 0.0
      %1290 = vmatprep.subr.mxu0 0.0
      %1291 = vmatpush2.msra.mxu0 0.0
      %1292 = vmatprep.subr.mxu0 0.0
      %1293 = vmatpush2.msra.mxu0 0.0
      %1294 = vmatprep.subr.mxu0 0.0
      %1295 = vmatpush2.msra.mxu0 0.0
      %1296 = vmatprep.subr.mxu0 0.0
      %1297 = vmatpush2.msra.mxu0 0.0
      %1298 = vmatprep.subr.mxu0 0.0
      %1299 = vmatpush2.msra.mxu0 0.0
      %1300 = vmatprep.subr.mxu0 0.0
      %1301 = vmatpush2.msra.mxu0 0.0
      %1302 = vmatprep.subr.mxu0 0.0
      %1303 = vmatpush2.msra.mxu0 0.0
      %1304 = vmatprep.subr.mxu0 0.0
      %1305 = vmatpush2.msra.mxu0 0.0
      %1306 = vmatprep.subr.mxu0 0.0
      %1307 = vmatpush2.msra.mxu0 0.0
      %1308 = vmatprep.subr.mxu0 0.0
      %1309 = vmatpush2.msra.mxu0 0.0
      %1310 = vmatprep.subr.mxu0 0.0
      %1311 = vmatpush2.msra.mxu0 0.0
      %1312 = vmatprep.subr.mxu0 0.0
      %1313 = vmatpush2.msra.mxu0 0.0
      %1314 = vmatprep.subr.mxu0 0.0
      %1315 = vmatpush2.msra.mxu0 0.0
      %1316 = vmatprep.mubr.f32.mxu0 0.0
      %1317 = vmatmul.mubr.f32.gmra.mxu0 %v631
      %v1318 = vpop.f32.mrf.mxu0
      %v1319 = vadd.f32 0.0, %v1318
      %v1320 = vpop.f32.mrf.mxu0
      %v1321 = vadd.f32 0.0, %v1320
      %1322 = vmatprep.mubr.f32.mxu0 0.0
      %1323 = vmatmul.mubr.f32.gmra.mxu0 %v1250
      %v1324 = vpop.f32.mrf.mxu0
      %v1325 = vadd.f32 0.0, %v1324
      %v1326 = vpop.f32.mrf.mxu0
      %v1327 = vadd.f32 0.0, %v1326
      %1328 = vdwg.mxu0
      %v1329 = vadd.f32 %v1241, %v1319
      %v1330 = vadd.f32 %v1242, %v1321
      %v1331 = vadd.f32 %v1243, %v1325
      %v1332 = vadd.f32 %v1244, %v1327
      %v1333 = vrot.slane %v314, 6
      %v1334 = vrot.slane %v1333, 4
      %v1335 = vrot.slane %v1245, 6
      %v1336 = vsel %vm794, %v1334, %v1335
      %v1337 = vcombine.low %v1075, %v1336
      %1339 = vmatprep.subr.mxu0 %v602
      %1340 = vmatpush1.msra.mxu0 %v601
      %1341 = vmatprep.subr.mxu0 %v600
      %1342 = vmatpush1.msra.mxu0 %v599
      %1343 = vmatprep.subr.mxu0 %v598
      %1344 = vmatpush1.msra.mxu0 %v597
      %1345 = vmatprep.subr.mxu0 %v596
      %1346 = vmatpush1.msra.mxu0 %v595
      %1347 = vmatprep.subr.mxu0 %v594
      %1348 = vmatpush1.msra.mxu0 %v593
      %1349 = vmatprep.subr.mxu0 %v592
      %1350 = vmatpush1.msra.mxu0 %v591
      %1351 = vmatprep.subr.mxu0 %v590
      %1352 = vmatpush1.msra.mxu0 %v589
      %1353 = vmatprep.subr.mxu0 %v588
      %1354 = vmatpush1.msra.mxu0 %v587
      %1355 = vmatprep.subr.mxu0 %v586
      %1356 = vmatpush1.msra.mxu0 %v585
      %1357 = vmatprep.subr.mxu0 %v584
      %1358 = vmatpush1.msra.mxu0 %v583
      %1359 = vmatprep.subr.mxu0 %v582
      %1360 = vmatpush1.msra.mxu0 %v581
      %1361 = vmatprep.subr.mxu0 %v580
      %1362 = vmatpush1.msra.mxu0 %v579
      %1363 = vmatprep.subr.mxu0 %v578
      %1364 = vmatpush1.msra.mxu0 %v577
      %1365 = vmatprep.subr.mxu0 %v576
      %1366 = vmatpush1.msra.mxu0 %v575
      %1367 = vmatprep.subr.mxu0 %v574
      %1368 = vmatpush1.msra.mxu0 %v573
      %1369 = vmatprep.subr.mxu0 %v572
      %1370 = vmatpush1.msra.mxu0 %v571
      %1371 = vmatprep.subr.mxu0 0.0
      %1372 = vmatpush2.msra.mxu0 0.0
      %1373 = vmatprep.subr.mxu0 0.0
      %1374 = vmatpush2.msra.mxu0 0.0
      %1375 = vmatprep.subr.mxu0 0.0
      %1376 = vmatpush2.msra.mxu0 0.0
      %1377 = vmatprep.subr.mxu0 0.0
      %1378 = vmatpush2.msra.mxu0 0.0
      %1379 = vmatprep.subr.mxu0 0.0
      %1380 = vmatpush2.msra.mxu0 0.0
      %1381 = vmatprep.subr.mxu0 0.0
      %1382 = vmatpush2.msra.mxu0 0.0
      %1383 = vmatprep.subr.mxu0 0.0
      %1384 = vmatpush2.msra.mxu0 0.0
      %1385 = vmatprep.subr.mxu0 0.0
      %1386 = vmatpush2.msra.mxu0 0.0
      %1387 = vmatprep.subr.mxu0 0.0
      %1388 = vmatpush2.msra.mxu0 0.0
      %1389 = vmatprep.subr.mxu0 0.0
      %1390 = vmatpush2.msra.mxu0 0.0
      %1391 = vmatprep.subr.mxu0 0.0
      %1392 = vmatpush2.msra.mxu0 0.0
      %1393 = vmatprep.subr.mxu0 0.0
      %1394 = vmatpush2.msra.mxu0 0.0
      %1395 = vmatprep.subr.mxu0 0.0
      %1396 = vmatpush2.msra.mxu0 0.0
      %1397 = vmatprep.subr.mxu0 0.0
      %1398 = vmatpush2.msra.mxu0 0.0
      %1399 = vmatprep.subr.mxu0 0.0
      %1400 = vmatpush2.msra.mxu0 0.0
      %1401 = vmatprep.subr.mxu0 0.0
      %1402 = vmatpush2.msra.mxu0 0.0
      %1403 = vmatprep.mubr.f32.mxu0 0.0
      %1404 = vmatmul.mubr.f32.gmra.mxu0 %v812
      %v1405 = vpop.f32.mrf.mxu0
      %v1406 = vadd.f32 0.0, %v1405
      %v1407 = vpop.f32.mrf.mxu0
      %v1408 = vadd.f32 0.0, %v1407
      %1409 = vmatprep.mubr.f32.mxu0 0.0
      %1410 = vmatmul.mubr.f32.gmra.mxu0 %v1337
      %v1411 = vpop.f32.mrf.mxu0
      %v1412 = vadd.f32 0.0, %v1411
      %v1413 = vpop.f32.mrf.mxu0
      %v1414 = vadd.f32 0.0, %v1413
      %1415 = vdwg.mxu0
      %v1416 = vadd.f32 %v1329, %v1406
      %v1417 = vadd.f32 %v1330, %v1408
      %v1418 = vadd.f32 %v1331, %v1412
      %v1419 = vadd.f32 %v1332, %v1414
      %v1420 = vld [vmem:[%s3] sm:$0x3]
      %v1422 = vlaneseq
      %v1423 = vshrl.u32 %v1422, 7
      %v1424 = vsub.s32 0, %v1423
      %v1425 = vrot.slane %v1420, %v1424
      %v1426 = vlaneseq
      %v1427 = vshrl.u32 %v1426, 7
      %v1428 = vsub.s32 1, %v1427
      %v1429 = vrot.slane %v1420, %v1428
      %v1432 = vadd.f32 %v1416, %v1425
      %v1433 = vadd.f32 %v1417, %v1429
      %v1434 = vadd.f32 %v1418, %v1425
      %v1435 = vadd.f32 %v1419, %v1429
      %v1436 = vmax.f32 %v1432, 0.0
      %v1437 = vmax.f32 %v1433, 0.0
      %v1438 = vmax.f32 %v1434, 0.0
      %v1439 = vmax.f32 %v1435, 0.0
      %v1444 = vcombine.low %v1436, %v1437
      %v1445 = vcombine.high %v1436, %v1437
      %v1447 = vunpack.c.l.s4 1983009808
      %v1448 = vunpack.c.0.s8 %v1447
      %v1449 = vlaneseq
      %v1450 = vshrl.u32 %v1449, 7
      %v1451 = vsub.s32 %v1448, %v1450
      %v1452 = vrot.slane %v1444, %v1451
      %v1454 = vunpack.c.l.s4 1983009808
      %v1455 = vunpack.c.0.s8 %v1454
      %v1456 = vlaneseq
      %v1457 = vshrl.u32 %v1456, 7
      %v1458 = vsub.s32 %v1455, %v1457
      %v1459 = vrot.slane %v1445, %v1458
      %v1460 = vcombine.high %v1452, %v1452
      %v1461 = vcombine.high %v1459, %v1459
      %v1462 = vcombine.low %v1438, %v1439
      %v1463 = vcombine.high %v1438, %v1439
      %v1465 = vunpack.c.l.s4 1983009808
      %v1466 = vunpack.c.0.s8 %v1465
      %v1467 = vlaneseq
      %v1468 = vshrl.u32 %v1467, 7
      %v1469 = vsub.s32 %v1466, %v1468
      %v1470 = vrot.slane %v1462, %v1469
      %v1472 = vunpack.c.l.s4 1983009808
      %v1473 = vunpack.c.0.s8 %v1472
      %v1474 = vlaneseq
      %v1475 = vshrl.u32 %v1474, 7
      %v1476 = vsub.s32 %v1473, %v1475
      %v1477 = vrot.slane %v1463, %v1476
      %v1478 = vcombine.high %v1470, %v1470
      %v1479 = vcombine.high %v1477, %v1477
      %v1488 = vrot.slane %v1452, 7
      %v1489 = vrot.slane %v1488, 2
      %v1490 = vrot.slane %v1460, 7
      %v1491 = vrot.slane %v1490, 2
      %v1492 = vrot.slane %v1459, 7
      %v1493 = vrot.slane %v1492, 2
      %v1494 = vrot.slane %v1461, 7
      %v1495 = vrot.slane %v1494, 2
      %v1496 = vrot.slane %v1470, 7
      %v1497 = vrot.slane %v1496, 2
      %v1498 = vrot.slane %v1478, 7
      %v1499 = vrot.slane %v1498, 2
      %v1500 = vrot.slane %v1477, 7
      %v1501 = vrot.slane %v1500, 2
      %v1502 = vrot.slane %v1479, 7
      %v1503 = vrot.slane %v1502, 2
      %v1512 = vmax.f32 %v1452, %v1489
      %v1513 = vmax.f32 %v1460, %v1491
      %v1514 = vmax.f32 %v1459, %v1493
      %v1515 = vmax.f32 %v1461, %v1495
      %v1516 = vmax.f32 %v1470, %v1497
      %v1517 = vmax.f32 %v1478, %v1499
      %v1518 = vmax.f32 %v1477, %v1501
      %v1519 = vmax.f32 %v1479, %v1503
      %v1520 = vmax.f32 %v1512, %v1514
      %v1521 = vmax.f32 %v1513, %v1515
      %v1522 = vmax.f32 %v1516, %v1518
      %v1523 = vmax.f32 %v1517, %v1519
      %vm1528 = vcmask 1044484
      %v1529 = vsel %vm1528, %v1520, %v1520
      %vm1530 = vcmask 1046534
      %v1531 = vsel %vm1530, %v1520, %v1529
      %v1532 = vrot.slane %v1521, 7
      %vm1533 = vcmask 1041409
      %v1534 = vsel %vm1533, %v1532, %v1531
      %vm1535 = vcmask 1043459
      %v1536 = vsel %vm1535, %v1532, %v1534
      %vm1537 = vcmask 1045509
      %v1538 = vsel %vm1537, %v1532, %v1536
      %vm1539 = vcmask 1047559
      %v1540 = vsel %vm1539, %v1532, %v1538
      %v1541 = vsel %vm1528, %v1522, %v1522
      %v1542 = vsel %vm1530, %v1522, %v1541
      %v1543 = vrot.slane %v1523, 7
      %v1544 = vsel %vm1533, %v1543, %v1542
      %v1545 = vsel %vm1535, %v1543, %v1544
      %v1546 = vsel %vm1537, %v1543, %v1545
      %v1547 = vsel %vm1539, %v1543, %v1546
      %1550 = vst [vmem:[%s307] sm:$0xf] %v1540
      %1551 = vst [vmem:[%s307 + $0x4] sm:$0xf] %v1547
      %s1552 = smul.u32 2, %s20
      %p1553 = scmp.lt.s32.totalorder %s19, 1
      %s1554 = scalar_select %p1553, %s19, 1
      %p1555 = scmp.lt.s32.totalorder %s1552, 1
      %s1556 = scalar_select %p1555, %s1552, 1
      %s1557 = smul.addr %s1556, 2
      %s1558 = smul.addr %s1554, 4
      %s1559 = sadd.s32 %s1557, %s1558
      %s1560 = smul.addr %s1559, 2
      %s1561 = scalar_lea.vmem %s4, %s1560
      // Predicated region
      $region37: #{simple_fcn_forward.8} parent=35 // pred_check
        %p1562 = pneg %p149
      $region38: #{simple_fcn_forward.8} parent=35 // pred_check_branch
        %1564 = sbr.rel (%p1562) target = $region40
      $region39: #{simple_fcn_forward.8} parent=35 // pred_region
        %s1565 = smul.u32 2, %s20
      $region40: #{simple_fcn_forward.8} parent=35 // pred_fallthru
        _
    $region36: #{simple_fcn_forward.8} parent=5 // pred_fallthru
      _
    %p1566 = scmp.le.s32.totalorder 2, %s10
    // Predicated region
    $region41: #{simple_fcn_forward.8} parent=5 // pred_check
      %p1567 = pneg %p1566
    $region42: #{simple_fcn_forward.8} parent=5 // pred_check_branch
      %1569 = sbr.rel (%p1567) target = $region44
    $region43: #{simple_fcn_forward.8} parent=5 // pred_region
      %s1570 = ssub.s32 %s10, 2
      // Predicated region
      $region45: #{simple_fcn_forward.8} parent=43 // pred_check
        %p1571 = pneg %p155
      $region46: #{simple_fcn_forward.8} parent=43 // pred_check_branch
        %1573 = sbr.rel (%p1571) target = $region48
      $region47: #{simple_fcn_forward.8} parent=43 // pred_region
        %s1574 = smul.u32 2, %s22
        %p1575 = scmp.lt.s32.totalorder %s21, 1
        %s1576 = scalar_select %p1575, %s21, 1
        %p1577 = scmp.lt.s32.totalorder %s1574, 1
        %s1578 = scalar_select %p1577, %s1574, 1
        %s1579 = smul.addr %s1578, 2
        %s1580 = smul.addr %s1576, 4
        %s1581 = sadd.s32 %s1579, %s1580
        %s1582 = smul.addr %s1581, 2
        %s1583 = scalar_lea.vmem %s4, %s1582
      $region48: #{simple_fcn_forward.8} parent=43 // pred_fallthru
        _
    $region44: #{simple_fcn_forward.8} parent=5 // pred_fallthru
      _
  $region6: #{simple_fcn_forward.8} parent=0 // loop_footer
    %s14 = sadd.s32 1, %s10
  $region7: #{simple_fcn_forward.8} parent=0 // loop_footer_branch
    %9 = sbr.rel target = $region3
  $region8: #{simple_fcn_forward.8} parent=0 // loop_exit
    _

// kernel: simple_fcn_forward.6
$region0: #{simple_fcn_forward.6}
  #allocation0 [shape = 'u32[]', space=smem, size = 0x4, offset = 0x4, fixed_abs, tag = 'smem constant byte address 0x4 - core index']
  #allocation1 [shape = 'u32[144,128]{1,0:T(1,128)}', space=vmem, size = 0x12000, scoped, tag = 'internal scratch']
  %s0 = inlined_call_operand.vmem [shape: f32[2,18,18,4], index: 0, kind: input, shape index: {}, may-alias: {0,1}]
  %s1 = inlined_call_operand.vmem [shape: f32[2,18,18,4], index: 1, kind: input, shape index: {}, may-alias: {0,1}]
  %s2 = inlined_call_operand.hbm [shape: f32[3,3,4,64], index: 2, kind: input, shape index: {}]
  %s3 = inlined_call_operand.hbm [shape: f32[1,64], index: 3, kind: input, shape index: {}]
  %s4 = inlined_call_operand.vmem [shape: f32[2,8,8,64], index: 4, kind: output, shape index: {}]
  %s5 = sld [smem:[#allocation0]]
  $region57: #{simple_fcn_forward.6} parent=0
    _
  %s7 = ssub.s32 1, %s5
  %s8 = scalar_select 0, %s7, %s5
  $region1: #{simple_fcn_forward.6} parent=0
    #allocation2 [shape = 'u8[18432]{0}', space=vmem, size = 0x4800, scoped, tag = 'input window, operand 2, single buffered']
    #allocation3 [shape = 's32[2]{0}', space=sflag, size = 0x8, scoped, tag = 'scoped memory for simple_fcn_forward.6']
    #allocation4 [shape = 'u8[512]{0}', space=vmem, size = 0x400, scoped, tag = 'input window, operand 3, single buffered']
    #allocation5 [shape = 's32[1]{0}', space=sflag, size = 0x4, scoped, tag = 'scoped memory for simple_fcn_forward.6']
    %9 = vsyncpa [#allocation3], 0
    %10 = vsyncpa [#allocation5], 0
    loop: start=0, step=1, limit=4
    $region2: #{simple_fcn_forward.6} parent=1 // loop_pre_header
      _
    $region3: #{simple_fcn_forward.6} parent=1 // loop_header
      %s12 = sphi 0, %s16
      %p13 = scmp.ge.s32.totalorder %s12, 4
      %s19 = sphi 0, %s31
      %s20 = sphi 0, %s27
      %s21 = sphi 0, %s19
      %s22 = sphi 0, %s20
      %s23 = sphi 0, %s21
      %s24 = sphi 0, %s22
      %s36 = sphi 0, %s38
      %s39 = sphi 0, %s36
      %s40 = sphi 0, %s39
      %s56 = sphi 0, %s40
      %s68 = sphi 0, %s70
      %s71 = sphi 0, %s68
      %s72 = sphi 0, %s71
      %s88 = sphi 0, %s72
      %s92 = sphi 0, %s92
      %s94 = sphi 0, %s92
      %s95 = sphi 0, %s94
      %s109 = sphi 0, %s95
      %s113 = sphi 0, %s113
      %s115 = sphi 0, %s113
      %s116 = sphi 0, %s115
      %s130 = sphi 0, %s116
      %s138 = sphi 0, %s140
      %s141 = sphi 0, %s138
      %s142 = sphi 0, %s141
      %s158 = sphi 0, %s142
    $region4: #{simple_fcn_forward.6} parent=1 // loop_header_branch
      %15 = sbr.rel (%p13) target = $region8
    $region5: #{simple_fcn_forward.6} parent=1 // loop_body
      %s17 = ssub.s32 %s12, 1
      %s18 = ssub.s32 %s12, 2
      %s25 = sadd.s32 1, %s20
      %p26 = scmp.ge.s32.totalorder %s25, 1
      %s27 = scalar_select %p26, 0, %s25
      %s28 = sadd.s32 1, %s19
      %s29 = scalar_select %p26, %s28, %s19
      %p30 = scmp.ge.s32.totalorder %s29, 2
      %s31 = scalar_select %p30, 0, %s29
      %s32 = ssub.s32 %s19, %s31
      %s33 = ssub.s32 %s20, %s27
      %s34 = sor.u32 %s32, %s33
      %p35 = scmp.eq.s32.totalorder %s34, 0
      %s37 = sadd.s32 %s36, 1
      %s38 = scalar_select %p35, %s36, %s37
      %p41 = pneg %p35
      %p42 = scmp.eq.s32.totalorder %s12, 1
      %p43 = por %p41, %p42
      %p44 = scmp.ne.s32.totalorder %s36, %s39
      %p45 = scmp.eq.s32.totalorder %s12, 0
      %p46 = por %p44, %p45
      %p47 = scmp.ne.s32.totalorder %s36, %s39
      %p48 = scmp.eq.s32.totalorder %s17, 1
      %p49 = por %p47, %p48
      %p50 = scmp.ne.s32.totalorder %s39, %s40
      %p51 = scmp.eq.s32.totalorder %s17, 0
      %p52 = por %p50, %p51
      %p53 = scmp.ne.s32.totalorder %s39, %s40
      %p54 = scmp.eq.s32.totalorder %s18, 1
      %p55 = por %p53, %p54
      %p57 = scmp.ne.s32.totalorder %s40, %s56
      %p58 = scmp.eq.s32.totalorder %s18, 0
      %p59 = por %p57, %p58
      %s60 = sadd.s32 %s20, 1
      %s61 = smul.u32 %s60, 8
      %s62 = sadd.s32 %s27, 1
      %s63 = smul.u32 %s62, 8
      %s64 = ssub.s32 %s19, %s31
      %s65 = ssub.s32 %s61, %s63
      %s66 = sor.u32 %s64, %s65
      %p67 = scmp.eq.s32.totalorder %s66, 0
      %s69 = sadd.s32 %s68, 1
      %s70 = scalar_select %p67, %s68, %s69
      %p73 = pneg %p67
      %p74 = scmp.eq.s32.totalorder %s12, 1
      %p75 = por %p73, %p74
      %p76 = scmp.ne.s32.totalorder %s68, %s71
      %p77 = scmp.eq.s32.totalorder %s12, 0
      %p78 = por %p76, %p77
      %p79 = scmp.ne.s32.totalorder %s68, %s71
      %p80 = scmp.eq.s32.totalorder %s17, 1
      %p81 = por %p79, %p80
      %p82 = scmp.ne.s32.totalorder %s71, %s72
      %p83 = scmp.eq.s32.totalorder %s17, 0
      %p84 = por %p82, %p83
      %p85 = scmp.ne.s32.totalorder %s71, %s72
      %p86 = scmp.eq.s32.totalorder %s18, 1
      %p87 = por %p85, %p86
      %p89 = scmp.ne.s32.totalorder %s72, %s88
      %p90 = scmp.eq.s32.totalorder %s18, 0
      %p91 = por %p89, %p90
      %s93 = sadd.s32 %s92, 1
      %p96 = scmp.eq.s32.totalorder %s12, 1
      %p97 = scmp.ne.s32.totalorder %s92, %s94
      %p98 = scmp.eq.s32.totalorder %s12, 0
      %p99 = por %p97, %p98
      %p100 = scmp.ne.s32.totalorder %s92, %s94
      %p101 = scmp.eq.s32.totalorder %s17, 1
      %p102 = por %p100, %p101
      %p103 = scmp.ne.s32.totalorder %s94, %s95
      %p104 = scmp.eq.s32.totalorder %s17, 0
      %p105 = por %p103, %p104
      %p106 = scmp.ne.s32.totalorder %s94, %s95
      %p107 = scmp.eq.s32.totalorder %s18, 1
      %p108 = por %p106, %p107
      %p110 = scmp.ne.s32.totalorder %s95, %s109
      %p111 = scmp.eq.s32.totalorder %s18, 0
      %p112 = por %p110, %p111
      %s114 = sadd.s32 %s113, 1
      %p117 = scmp.eq.s32.totalorder %s12, 1
      %p118 = scmp.ne.s32.totalorder %s113, %s115
      %p119 = scmp.eq.s32.totalorder %s12, 0
      %p120 = por %p118, %p119
      %p121 = scmp.ne.s32.totalorder %s113, %s115
      %p122 = scmp.eq.s32.totalorder %s17, 1
      %p123 = por %p121, %p122
      %p124 = scmp.ne.s32.totalorder %s115, %s116
      %p125 = scmp.eq.s32.totalorder %s17, 0
      %p126 = por %p124, %p125
      %p127 = scmp.ne.s32.totalorder %s115, %s116
      %p128 = scmp.eq.s32.totalorder %s18, 1
      %p129 = por %p127, %p128
      %p131 = scmp.ne.s32.totalorder %s116, %s130
      %p132 = scmp.eq.s32.totalorder %s18, 0
      %p133 = por %p131, %p132
      %s134 = ssub.s32 %s19, %s31
      %s135 = ssub.s32 %s20, %s27
      %s136 = sor.u32 %s134, %s135
      %p137 = scmp.eq.s32.totalorder %s136, 0
      %s139 = sadd.s32 %s138, 1
      %s140 = scalar_select %p137, %s138, %s139
      %p143 = pneg %p137
      %p144 = scmp.eq.s32.totalorder %s12, 1
      %p145 = por %p143, %p144
      %p146 = scmp.ne.s32.totalorder %s138, %s141
      %p147 = scmp.eq.s32.totalorder %s12, 0
      %p148 = por %p146, %p147
      %p149 = scmp.ne.s32.totalorder %s138, %s141
      %p150 = scmp.eq.s32.totalorder %s17, 1
      %p151 = por %p149, %p150
      %p152 = scmp.ne.s32.totalorder %s141, %s142
      %p153 = scmp.eq.s32.totalorder %s17, 0
      %p154 = por %p152, %p153
      %p155 = scmp.ne.s32.totalorder %s141, %s142
      %p156 = scmp.eq.s32.totalorder %s18, 1
      %p157 = por %p155, %p156
      %p159 = scmp.ne.s32.totalorder %s142, %s158
      %p160 = scmp.eq.s32.totalorder %s18, 0
      %p161 = por %p159, %p160
      %p162 = scmp.le.s32.totalorder 1, %s12
      %p163 = scmp.lt.s32.totalorder %s12, 3
      %p164 = pnand %p162, %p163
      %p165 = pneg %p164
      // Predicated region
      $region9: #{simple_fcn_forward.6} parent=5 // pred_check
        _
      $region10: #{simple_fcn_forward.6} parent=5 // pred_check_branch
        %167 = sbr.rel (%p164) target = $region12
      $region11: #{simple_fcn_forward.6} parent=5 // pred_region
        %s168 = ssub.s32 %s12, 1
        // Predicated region
        $region13: #{simple_fcn_forward.6} parent=11 // pred_check
          %p169 = pneg %p105
        $region14: #{simple_fcn_forward.6} parent=11 // pred_check_branch
          %171 = sbr.rel (%p169) target = $region16
        $region15: #{simple_fcn_forward.6} parent=11 // pred_region
          %s173 = ssub.s32 576, 576
          %174 = vsyncadd [#allocation3], %s173
          %s175 = sshll.u32 [#allocation2], 4
          %s176 = int_to_ptr.vmem [resolvable:$true] %s175
          %181 = dma.hbm_to_vmem [thread:$0]  %s2, 576, %s176, [#allocation3], 64, 64, 4
        $region16: #{simple_fcn_forward.6} parent=11 // pred_fallthru
          _
        // Predicated region
        $region17: #{simple_fcn_forward.6} parent=11 // pred_check
          %p182 = pneg %p126
        $region18: #{simple_fcn_forward.6} parent=11 // pred_check_branch
          %184 = sbr.rel (%p182) target = $region20
        $region19: #{simple_fcn_forward.6} parent=11 // pred_region
          %s186 = ssub.s32 16, 16
          %187 = vsyncadd [#allocation5], %s186
          %s189 = sshll.u32 [#allocation4], 4
          %s190 = int_to_ptr.vmem [resolvable:$true] %s189
          %192 = dma.hbm_to_vmem [thread:$0]  %s3, 16, %s190, [#allocation5]
        $region20: #{simple_fcn_forward.6} parent=11 // pred_fallthru
          _
      $region12: #{simple_fcn_forward.6} parent=5 // pred_fallthru
        _
      %p193 = scmp.lt.s32.totalorder %s12, 2
      // Predicated region
      $region21: #{simple_fcn_forward.6} parent=5 // pred_check
        %p194 = pneg %p193
      $region22: #{simple_fcn_forward.6} parent=5 // pred_check_branch
        %196 = sbr.rel (%p194) target = $region24
      $region23: #{simple_fcn_forward.6} parent=5 // pred_region
        // Predicated region
        $region25: #{simple_fcn_forward.6} parent=23 // pred_check
          %p197 = pneg %p46
        $region26: #{simple_fcn_forward.6} parent=23 // pred_check_branch
          %199 = sbr.rel (%p197) target = $region28
        $region27: #{simple_fcn_forward.6} parent=23 // pred_region
          %s200 = smul.u32 16, %s20
          %s201 = ssub.s32 18, %s200
          %p202 = scmp.lt.s32.totalorder %s201, 16
          %s203 = scalar_select %p202, %s201, 16
          %s204 = smul.u32 128, %s203
          %s205 = smul.u32 %s204, 3
          %p206 = scmp.lt.s32.totalorder %s19, 1
          %s207 = scalar_select %p206, %s19, 1
          %p208 = scmp.lt.s32.totalorder %s200, 17
          %s209 = scalar_select %p208, %s200, 17
          %s210 = smul.addr %s209, 3
          %s211 = smul.addr %s207, 54
          %s212 = sadd.s32 %s210, %s211
          %s213 = smul.addr %s212, 8
          %s214 = scalar_lea.vmem %s0, %s213
          %s215 = smul.u32 16, %s20
          %s216 = ssub.s32 18, %s215
          %p217 = scmp.lt.s32.totalorder %s216, 16
          %s218 = scalar_select %p217, %s216, 16
          %s219 = smul.u32 128, %s218
          %s220 = smul.u32 %s219, 3
        $region28: #{simple_fcn_forward.6} parent=23 // pred_fallthru
          _
        // Predicated region
        $region29: #{simple_fcn_forward.6} parent=23 // pred_check
          %p221 = pneg %p78
        $region30: #{simple_fcn_forward.6} parent=23 // pred_check_branch
          %223 = sbr.rel (%p221) target = $region32
        $region31: #{simple_fcn_forward.6} parent=23 // pred_region
          %s224 = sadd.s32 %s20, 1
          %s225 = smul.u32 %s224, 8
          %s226 = smul.u32 2, %s225
          %p227 = scmp.lt.s32.totalorder %s19, 1
          %s228 = scalar_select %p227, %s19, 1
          %p229 = scmp.lt.s32.totalorder %s226, 17
          %s230 = scalar_select %p229, %s226, 17
          %s231 = smul.addr %s230, 3
          %s232 = smul.addr %s228, 54
          %s233 = sadd.s32 %s231, %s232
          %s234 = smul.addr %s233, 8
          %s235 = scalar_lea.vmem %s1, %s234
          %s236 = sadd.s32 %s20, 1
          %s237 = smul.u32 %s236, 8
          %s238 = smul.u32 2, %s237
        $region32: #{simple_fcn_forward.6} parent=23 // pred_fallthru
          _
      $region24: #{simple_fcn_forward.6} parent=5 // pred_fallthru
        _
      %p239 = scmp.le.s32.totalorder 1, %s12
      %p240 = scmp.lt.s32.totalorder %s12, 3
      %p241 = pnand %p239, %p240
      %p242 = pneg %p241
      // Predicated region
      $region33: #{simple_fcn_forward.6} parent=5 // pred_check
        _
      $region34: #{simple_fcn_forward.6} parent=5 // pred_check_branch
        %244 = sbr.rel (%p241) target = $region36
      $region35: #{simple_fcn_forward.6} parent=5 // pred_region
        %s245 = ssub.s32 %s12, 1
        // Predicated region
        $region37: #{simple_fcn_forward.6} parent=35 // pred_check
          %p246 = pneg %p105
        $region38: #{simple_fcn_forward.6} parent=35 // pred_check_branch
          %248 = sbr.rel (%p246) target = $region40
        $region39: #{simple_fcn_forward.6} parent=35 // pred_region
          %249 = dma.done [#allocation3], 576
        $region40: #{simple_fcn_forward.6} parent=35 // pred_fallthru
          _
        // Predicated region
        $region41: #{simple_fcn_forward.6} parent=35 // pred_check
          %p250 = pneg %p126
        $region42: #{simple_fcn_forward.6} parent=35 // pred_check_branch
          %252 = sbr.rel (%p250) target = $region44
        $region43: #{simple_fcn_forward.6} parent=35 // pred_region
          %253 = dma.done [#allocation5], 16
        $region44: #{simple_fcn_forward.6} parent=35 // pred_fallthru
          _
        %s254 = smul.u32 16, %s22
        %s255 = ssub.s32 18, %s254
        %p256 = scmp.lt.s32.totalorder %s255, 16
        %s257 = scalar_select %p256, %s255, 16
        %s258 = smul.u32 128, %s257
        %s259 = smul.u32 %s258, 3
        %p260 = scmp.lt.s32.totalorder %s21, 1
        %s261 = scalar_select %p260, %s21, 1
        %p262 = scmp.lt.s32.totalorder %s254, 17
        %s263 = scalar_select %p262, %s254, 17
        %s264 = smul.addr %s263, 3
        %s265 = smul.addr %s261, 54
        %s266 = sadd.s32 %s264, %s265
        %s267 = smul.addr %s266, 8
        %s268 = scalar_lea.vmem %s0, %s267
        %p269 = pneg %p52
        %p270 = pneg %p49
        %s271 = sadd.s32 %s22, 1
        %s272 = smul.u32 %s271, 8
        %s273 = smul.u32 2, %s272
        %p274 = scmp.lt.s32.totalorder %s21, 1
        %s275 = scalar_select %p274, %s21, 1
        %p276 = scmp.lt.s32.totalorder %s273, 17
        %s277 = scalar_select %p276, %s273, 17
        %s278 = smul.addr %s277, 3
        %s279 = smul.addr %s275, 54
        %s280 = sadd.s32 %s278, %s279
        %s281 = smul.addr %s280, 8
        %s282 = scalar_lea.vmem %s1, %s281
        %p283 = pneg %p84
        %p284 = pneg %p81
        %p285 = pneg %p105
        %p286 = pneg %p102
        %p287 = pneg %p126
        %p288 = pneg %p123
        %p289 = pneg %p154
        %p290 = pneg %p151
        %s291 = smul.u32 8, %s22
        %p292 = scmp.lt.s32.totalorder %s21, 1
        %s293 = scalar_select %p292, %s21, 1
        %p294 = scmp.lt.s32.totalorder %s291, 7
        %s295 = scalar_select %p294, %s291, 7
        %s296 = smul.addr %s293, 8
        %s297 = sadd.s32 %s295, %s296
        %s298 = smul.addr %s297, 8
        %s299 = scalar_lea.vmem %s4, %s298
        %s300 = smul.u32 16, %s22
        %s301 = ssub.s32 18, %s300
        %p302 = scmp.lt.s32.totalorder %s301, 16
        %s303 = scalar_select %p302, %s301, 16
        %s304 = smul.u32 128, %s303
        %s305 = smul.u32 %s304, 3
        %p306 = scmp.lt.s32.totalorder %s21, 1
        %s307 = scalar_select %p306, %s21, 1
        %p308 = scmp.lt.s32.totalorder %s300, 17
        %s309 = scalar_select %p308, %s300, 17
        %s310 = smul.addr %s309, 3
        %s311 = smul.addr %s307, 54
        %s312 = sadd.s32 %s310, %s311
        %s313 = smul.addr %s312, 8
        %s314 = scalar_lea.vmem %s0, %s313
        %s315 = smul.u32 16, %s22
        %s316 = ssub.s32 18, %s315
        %p317 = scmp.lt.s32.totalorder %s316, 16
        %s318 = scalar_select %p317, %s316, 16
        %s319 = smul.u32 128, %s318
        %s320 = smul.u32 %s319, 3
        %s321 = sadd.s32 %s22, 1
        %s322 = smul.u32 %s321, 8
        %s323 = smul.u32 2, %s322
        %p324 = scmp.lt.s32.totalorder %s21, 1
        %s325 = scalar_select %p324, %s21, 1
        %p326 = scmp.lt.s32.totalorder %s323, 17
        %s327 = scalar_select %p326, %s323, 17
        %s328 = smul.addr %s327, 3
        %s329 = smul.addr %s325, 54
        %s330 = sadd.s32 %s328, %s329
        %s331 = smul.addr %s330, 8
        %s332 = scalar_lea.vmem %s1, %s331
        %s333 = sadd.s32 %s22, 1
        %s334 = smul.u32 %s333, 8
        %s335 = smul.u32 2, %s334
        %s336 = smul.u32 8, %s22
        %p337 = scmp.lt.s32.totalorder %s21, 1
        %s338 = scalar_select %p337, %s21, 1
        %p339 = scmp.lt.s32.totalorder %s336, 7
        %s340 = scalar_select %p339, %s336, 7
        %s341 = smul.addr %s338, 8
        %s342 = sadd.s32 %s340, %s341
        %s343 = smul.addr %s342, 8
        %s344 = scalar_lea.vmem %s4, %s343
        %s345 = smul.u32 8, %s22
        %v346 = vld [vmem:[%s314] sm:$0xff]
        %v347 = vld [vmem:[%s314 + $0x8] sm:$0xff]
        %v348 = vld [vmem:[%s314 + $0x10] sm:$0x3]
        %v349 = vld [vmem:[%s314 + $0x18] sm:$0xff]
        %v350 = vld [vmem:[%s314 + $0x20] sm:$0xff]
        %v351 = vld [vmem:[%s314 + $0x28] sm:$0x3]
        %v352 = vld [vmem:[%s314 + $0x30] sm:$0xff]
        %v353 = vld [vmem:[%s314 + $0x38] sm:$0xff]
        %v354 = vld [vmem:[%s314 + $0x40] sm:$0x3]
        %v355 = vld [vmem:[%s314 + $0x48] sm:$0xff]
        %v356 = vld [vmem:[%s314 + $0x50] sm:$0xff]
        %v357 = vld [vmem:[%s314 + $0x58] sm:$0x3]
        %v358 = vld [vmem:[%s314 + $0x60] sm:$0xff]
        %v359 = vld [vmem:[%s314 + $0x68] sm:$0xff]
        %v360 = vld [vmem:[%s314 + $0x70] sm:$0x3]
        %v361 = vld [vmem:[%s314 + $0x78] sm:$0xff]
        %v362 = vld [vmem:[%s314 + $0x80] sm:$0xff]
        %v363 = vld [vmem:[%s314 + $0x88] sm:$0x3]
        %v364 = vld [vmem:[%s314 + $0x90] sm:$0xff]
        %v365 = vld [vmem:[%s314 + $0x98] sm:$0xff]
        %v366 = vld [vmem:[%s314 + $0xa0] sm:$0x3]
        %v367 = vld [vmem:[%s314 + $0xa8] sm:$0xff]
        %v368 = vld [vmem:[%s314 + $0xb0] sm:$0xff]
        %v369 = vld [vmem:[%s314 + $0xb8] sm:$0x3]
        %v370 = vld [vmem:[%s314 + $0xc0] sm:$0xff]
        %v371 = vld [vmem:[%s314 + $0xc8] sm:$0xff]
        %v372 = vld [vmem:[%s314 + $0xd0] sm:$0x3]
        %v373 = vld [vmem:[%s314 + $0xd8] sm:$0xff]
        %v374 = vld [vmem:[%s314 + $0xe0] sm:$0xff]
        %v375 = vld [vmem:[%s314 + $0xe8] sm:$0x3]
        %v376 = vld [vmem:[%s314 + $0xf0] sm:$0xff]
        %v377 = vld [vmem:[%s314 + $0xf8] sm:$0xff]
        %v378 = vld [vmem:[%s314 + $0x100] sm:$0x3]
        %v379 = vld [vmem:[%s314 + $0x108] sm:$0xff]
        %v380 = vld [vmem:[%s314 + $0x110] sm:$0xff]
        %v381 = vld [vmem:[%s314 + $0x118] sm:$0x3]
        %v382 = vld [vmem:[%s314 + $0x120] sm:$0xff]
        %v383 = vld [vmem:[%s314 + $0x128] sm:$0xff]
        %v384 = vld [vmem:[%s314 + $0x130] sm:$0x3]
        %v385 = vld [vmem:[%s314 + $0x138] sm:$0xff]
        %v386 = vld [vmem:[%s314 + $0x140] sm:$0xff]
        %v387 = vld [vmem:[%s314 + $0x148] sm:$0x3]
        %v388 = vld [vmem:[%s314 + $0x150] sm:$0xff]
        %v389 = vld [vmem:[%s314 + $0x158] sm:$0xff]
        %v390 = vld [vmem:[%s314 + $0x160] sm:$0x3]
        %v391 = vld [vmem:[%s314 + $0x168] sm:$0xff]
        %v392 = vld [vmem:[%s314 + $0x170] sm:$0xff]
        %v393 = vld [vmem:[%s314 + $0x178] sm:$0x3]
        %v394 = vld [vmem:[%s332] sm:$0xff]
        %v395 = vld [vmem:[%s332 + $0x8] sm:$0xff]
        %v396 = vld [vmem:[%s332 + $0x10] sm:$0x3]
        %v397 = vld [vmem:[%s332 + $0x18] sm:$0xff]
        %v398 = vld [vmem:[%s332 + $0x20] sm:$0xff]
        %v399 = vld [vmem:[%s332 + $0x28] sm:$0x3]
        %v400 = vld [vmem:[#allocation2] sm:$0xf]
        %v401 = vld [vmem:[#allocation2 + $0x4] sm:$0xf]
        %v402 = vld [vmem:[#allocation2 + $0x8] sm:$0xf]
        %v403 = vld [vmem:[#allocation2 + $0xc] sm:$0xf]
        %v404 = vld [vmem:[#allocation2 + $0x10] sm:$0xf]
        %v405 = vld [vmem:[#allocation2 + $0x14] sm:$0xf]
        %v406 = vld [vmem:[#allocation2 + $0x18] sm:$0xf]
        %v407 = vld [vmem:[#allocation2 + $0x1c] sm:$0xf]
        %v408 = vld [vmem:[#allocation2 + $0x20] sm:$0xf]
        %vm457 = vcmask 1046528
        %v458 = vrot.slane %v346, 1
        %v459 = vrot.slane %v347, 1
        %v460 = vsel %vm457, %v458, %v459
        %v461 = vrot.slane %v348, 1
        %v462 = vsel %vm457, %v459, %v461
        %v463 = vrot.slane %v349, 1
        %v464 = vrot.slane %v350, 1
        %v465 = vsel %vm457, %v463, %v464
        %v466 = vrot.slane %v351, 1
        %v467 = vsel %vm457, %v464, %v466
        %v468 = vrot.slane %v352, 1
        %v469 = vrot.slane %v353, 1
        %v470 = vsel %vm457, %v468, %v469
        %v471 = vrot.slane %v354, 1
        %v472 = vsel %vm457, %v469, %v471
        %v473 = vrot.slane %v355, 1
        %v474 = vrot.slane %v356, 1
        %v475 = vsel %vm457, %v473, %v474
        %v476 = vrot.slane %v357, 1
        %v477 = vsel %vm457, %v474, %v476
        %v478 = vrot.slane %v358, 1
        %v479 = vrot.slane %v359, 1
        %v480 = vsel %vm457, %v478, %v479
        %v481 = vrot.slane %v360, 1
        %v482 = vsel %vm457, %v479, %v481
        %v483 = vrot.slane %v361, 1
        %v484 = vrot.slane %v362, 1
        %v485 = vsel %vm457, %v483, %v484
        %v486 = vrot.slane %v363, 1
        %v487 = vsel %vm457, %v484, %v486
        %v488 = vrot.slane %v364, 1
        %v489 = vrot.slane %v365, 1
        %v490 = vsel %vm457, %v488, %v489
        %v491 = vrot.slane %v366, 1
        %v492 = vsel %vm457, %v489, %v491
        %v493 = vrot.slane %v367, 1
        %v494 = vrot.slane %v368, 1
        %v495 = vsel %vm457, %v493, %v494
        %v496 = vrot.slane %v369, 1
        %v497 = vsel %vm457, %v494, %v496
        %v498 = vrot.slane %v370, 1
        %v499 = vrot.slane %v371, 1
        %v500 = vsel %vm457, %v498, %v499
        %v501 = vrot.slane %v372, 1
        %v502 = vsel %vm457, %v499, %v501
        %v503 = vrot.slane %v373, 1
        %v504 = vrot.slane %v374, 1
        %v505 = vsel %vm457, %v503, %v504
        %v506 = vrot.slane %v375, 1
        %v507 = vsel %vm457, %v504, %v506
        %v508 = vrot.slane %v376, 1
        %v509 = vrot.slane %v377, 1
        %v510 = vsel %vm457, %v508, %v509
        %v511 = vrot.slane %v378, 1
        %v512 = vsel %vm457, %v509, %v511
        %v513 = vrot.slane %v379, 1
        %v514 = vrot.slane %v380, 1
        %v515 = vsel %vm457, %v513, %v514
        %v516 = vrot.slane %v381, 1
        %v517 = vsel %vm457, %v514, %v516
        %v518 = vrot.slane %v382, 1
        %v519 = vrot.slane %v383, 1
        %v520 = vsel %vm457, %v518, %v519
        %v521 = vrot.slane %v384, 1
        %v522 = vsel %vm457, %v519, %v521
        %v523 = vrot.slane %v385, 1
        %v524 = vrot.slane %v386, 1
        %v525 = vsel %vm457, %v523, %v524
        %v526 = vrot.slane %v387, 1
        %v527 = vsel %vm457, %v524, %v526
        %v528 = vrot.slane %v388, 1
        %v529 = vrot.slane %v389, 1
        %v530 = vsel %vm457, %v528, %v529
        %v531 = vrot.slane %v390, 1
        %v532 = vsel %vm457, %v529, %v531
        %v533 = vrot.slane %v391, 1
        %v534 = vrot.slane %v392, 1
        %v535 = vsel %vm457, %v533, %v534
        %v536 = vrot.slane %v393, 1
        %v537 = vsel %vm457, %v534, %v536
        %vm538 = vcmask 31744
        %v539 = vsel %vm538, %v460, 0
        %v541 = vsel %vm538, %v462, 0
        %v543 = vsel %vm538, %v465, 0
        %v545 = vsel %vm538, %v467, 0
        %v547 = vsel %vm538, %v470, 0
        %v549 = vsel %vm538, %v472, 0
        %v551 = vsel %vm538, %v475, 0
        %v553 = vsel %vm538, %v477, 0
        %v555 = vsel %vm538, %v480, 0
        %v557 = vsel %vm538, %v482, 0
        %v559 = vsel %vm538, %v485, 0
        %v561 = vsel %vm538, %v487, 0
        %v563 = vsel %vm538, %v490, 0
        %v565 = vsel %vm538, %v492, 0
        %v567 = vsel %vm538, %v495, 0
        %v569 = vsel %vm538, %v497, 0
        %v571 = vsel %vm538, %v500, 0
        %v573 = vsel %vm538, %v502, 0
        %v575 = vsel %vm538, %v505, 0
        %v577 = vsel %vm538, %v507, 0
        %v579 = vsel %vm538, %v510, 0
        %v581 = vsel %vm538, %v512, 0
        %v583 = vsel %vm538, %v515, 0
        %v585 = vsel %vm538, %v517, 0
        %v587 = vsel %vm538, %v520, 0
        %v589 = vsel %vm538, %v522, 0
        %v591 = vsel %vm538, %v525, 0
        %v593 = vsel %vm538, %v527, 0
        %v595 = vsel %vm538, %v530, 0
        %v597 = vsel %vm538, %v532, 0
        %v599 = vsel %vm538, %v535, 0
        %v601 = vsel %vm538, %v537, 0
        %vm603 = vcmask 1043456
        %v605 = vsel %vm603, %v401, 0
        %607 = vmatprep.subr.mxu0 0.0
        %608 = vmatpush1.msra.mxu0 0.0
        %609 = vmatprep.subr.mxu0 0.0
        %610 = vmatpush1.msra.mxu0 0.0
        %611 = vmatprep.subr.mxu0 0.0
        %612 = vmatpush1.msra.mxu0 0.0
        %613 = vmatprep.subr.mxu0 0.0
        %614 = vmatpush1.msra.mxu0 0.0
        %615 = vmatprep.subr.mxu0 0.0
        %616 = vmatpush1.msra.mxu0 0.0
        %617 = vmatprep.subr.mxu0 0.0
        %618 = vmatpush1.msra.mxu0 0.0
        %619 = vmatprep.subr.mxu0 0.0
        %620 = vmatpush1.msra.mxu0 0.0
        %621 = vmatprep.subr.mxu0 0.0
        %622 = vmatpush1.msra.mxu0 0.0
        %623 = vmatprep.subr.mxu0 0.0
        %624 = vmatpush1.msra.mxu0 0.0
        %625 = vmatprep.subr.mxu0 0.0
        %626 = vmatpush1.msra.mxu0 0.0
        %627 = vmatprep.subr.mxu0 0.0
        %628 = vmatpush1.msra.mxu0 0.0
        %629 = vmatprep.subr.mxu0 0.0
        %630 = vmatpush1.msra.mxu0 0.0
        %631 = vmatprep.subr.mxu0 0.0
        %632 = vmatpush1.msra.mxu0 0.0
        %633 = vmatprep.subr.mxu0 0.0
        %634 = vmatpush1.msra.mxu0 0.0
        %635 = vmatprep.subr.mxu0 0.0
        %636 = vmatpush1.msra.mxu0 0.0
        %637 = vmatprep.subr.mxu0 0.0
        %638 = vmatpush1.msra.mxu0 %v605
        %639 = vmatprep.subr.mxu0 0.0
        %640 = vmatpush2.msra.mxu0 0.0
        %641 = vmatprep.subr.mxu0 0.0
        %642 = vmatpush2.msra.mxu0 0.0
        %643 = vmatprep.subr.mxu0 0.0
        %644 = vmatpush2.msra.mxu0 0.0
        %645 = vmatprep.subr.mxu0 0.0
        %646 = vmatpush2.msra.mxu0 0.0
        %647 = vmatprep.subr.mxu0 0.0
        %648 = vmatpush2.msra.mxu0 0.0
        %649 = vmatprep.subr.mxu0 0.0
        %650 = vmatpush2.msra.mxu0 0.0
        %651 = vmatprep.subr.mxu0 0.0
        %652 = vmatpush2.msra.mxu0 0.0
        %653 = vmatprep.subr.mxu0 0.0
        %654 = vmatpush2.msra.mxu0 0.0
        %655 = vmatprep.subr.mxu0 0.0
        %656 = vmatpush2.msra.mxu0 0.0
        %657 = vmatprep.subr.mxu0 0.0
        %658 = vmatpush2.msra.mxu0 0.0
        %659 = vmatprep.subr.mxu0 0.0
        %660 = vmatpush2.msra.mxu0 0.0
        %661 = vmatprep.subr.mxu0 0.0
        %662 = vmatpush2.msra.mxu0 0.0
        %663 = vmatprep.subr.mxu0 0.0
        %664 = vmatpush2.msra.mxu0 0.0
        %665 = vmatprep.subr.mxu0 0.0
        %666 = vmatpush2.msra.mxu0 0.0
        %667 = vmatprep.subr.mxu0 0.0
        %668 = vmatpush2.msra.mxu0 0.0
        %669 = vmatprep.subr.mxu0 0.0
        %670 = vmatpush2.msra.mxu0 0.0
        %671 = vmatprep.mubr.f32.mxu0 0.0
        %672 = vmatmul.mubr.f32.gmra.mxu0 %v539
        %v673 = vpop.f32.mrf.mxu0
        %v674 = vadd.f32 0.0, %v673
        %v675 = vpop.f32.mrf.mxu0
        %676 = vmatprep.mubr.f32.mxu0 0.0
        %677 = vmatmul.mubr.f32.gmra.mxu0 %v541
        %v678 = vpop.f32.mrf.mxu0
        %v679 = vadd.f32 0.0, %v678
        %v680 = vpop.f32.mrf.mxu0
        %681 = vmatprep.mubr.f32.mxu0 0.0
        %682 = vmatmul.mubr.f32.gmra.mxu0 %v543
        %v683 = vpop.f32.mrf.mxu0
        %v684 = vadd.f32 0.0, %v683
        %v685 = vpop.f32.mrf.mxu0
        %686 = vmatprep.mubr.f32.mxu0 0.0
        %687 = vmatmul.mubr.f32.gmra.mxu0 %v545
        %v688 = vpop.f32.mrf.mxu0
        %v689 = vadd.f32 0.0, %v688
        %v690 = vpop.f32.mrf.mxu0
        %691 = vmatprep.mubr.f32.mxu0 0.0
        %692 = vmatmul.mubr.f32.gmra.mxu0 %v547
        %v693 = vpop.f32.mrf.mxu0
        %v694 = vadd.f32 0.0, %v693
        %v695 = vpop.f32.mrf.mxu0
        %696 = vmatprep.mubr.f32.mxu0 0.0
        %697 = vmatmul.mubr.f32.gmra.mxu0 %v549
        %v698 = vpop.f32.mrf.mxu0
        %v699 = vadd.f32 0.0, %v698
        %v700 = vpop.f32.mrf.mxu0
        %701 = vmatprep.mubr.f32.mxu0 0.0
        %702 = vmatmul.mubr.f32.gmra.mxu0 %v551
        %v703 = vpop.f32.mrf.mxu0
        %v704 = vadd.f32 0.0, %v703
        %v705 = vpop.f32.mrf.mxu0
        %706 = vmatprep.mubr.f32.mxu0 0.0
        %707 = vmatmul.mubr.f32.gmra.mxu0 %v553
        %v708 = vpop.f32.mrf.mxu0
        %v709 = vadd.f32 0.0, %v708
        %v710 = vpop.f32.mrf.mxu0
        %711 = vmatprep.mubr.f32.mxu0 0.0
        %712 = vmatmul.mubr.f32.gmra.mxu0 %v555
        %v713 = vpop.f32.mrf.mxu0
        %v714 = vadd.f32 0.0, %v713
        %v715 = vpop.f32.mrf.mxu0
        %716 = vmatprep.mubr.f32.mxu0 0.0
        %717 = vmatmul.mubr.f32.gmra.mxu0 %v557
        %v718 = vpop.f32.mrf.mxu0
        %v719 = vadd.f32 0.0, %v718
        %v720 = vpop.f32.mrf.mxu0
        %721 = vmatprep.mubr.f32.mxu0 0.0
        %722 = vmatmul.mubr.f32.gmra.mxu0 %v559
        %v723 = vpop.f32.mrf.mxu0
        %v724 = vadd.f32 0.0, %v723
        %v725 = vpop.f32.mrf.mxu0
        %726 = vmatprep.mubr.f32.mxu0 0.0
        %727 = vmatmul.mubr.f32.gmra.mxu0 %v561
        %v728 = vpop.f32.mrf.mxu0
        %v729 = vadd.f32 0.0, %v728
        %v730 = vpop.f32.mrf.mxu0
        %731 = vmatprep.mubr.f32.mxu0 0.0
        %732 = vmatmul.mubr.f32.gmra.mxu0 %v563
        %v733 = vpop.f32.mrf.mxu0
        %v734 = vadd.f32 0.0, %v733
        %v735 = vpop.f32.mrf.mxu0
        %736 = vmatprep.mubr.f32.mxu0 0.0
        %737 = vmatmul.mubr.f32.gmra.mxu0 %v565
        %v738 = vpop.f32.mrf.mxu0
        %v739 = vadd.f32 0.0, %v738
        %v740 = vpop.f32.mrf.mxu0
        %741 = vmatprep.mubr.f32.mxu0 0.0
        %742 = vmatmul.mubr.f32.gmra.mxu0 %v567
        %v743 = vpop.f32.mrf.mxu0
        %v744 = vadd.f32 0.0, %v743
        %v745 = vpop.f32.mrf.mxu0
        %746 = vmatprep.mubr.f32.mxu0 0.0
        %747 = vmatmul.mubr.f32.gmra.mxu0 %v569
        %v748 = vpop.f32.mrf.mxu0
        %v749 = vadd.f32 0.0, %v748
        %v750 = vpop.f32.mrf.mxu0
        %751 = vmatprep.mubr.f32.mxu0 0.0
        %752 = vmatmul.mubr.f32.gmra.mxu0 %v571
        %v753 = vpop.f32.mrf.mxu0
        %v754 = vadd.f32 0.0, %v753
        %v755 = vpop.f32.mrf.mxu0
        %756 = vmatprep.mubr.f32.mxu0 0.0
        %757 = vmatmul.mubr.f32.gmra.mxu0 %v573
        %v758 = vpop.f32.mrf.mxu0
        %v759 = vadd.f32 0.0, %v758
        %v760 = vpop.f32.mrf.mxu0
        %761 = vmatprep.mubr.f32.mxu0 0.0
        %762 = vmatmul.mubr.f32.gmra.mxu0 %v575
        %v763 = vpop.f32.mrf.mxu0
        %v764 = vadd.f32 0.0, %v763
        %v765 = vpop.f32.mrf.mxu0
        %766 = vmatprep.mubr.f32.mxu0 0.0
        %767 = vmatmul.mubr.f32.gmra.mxu0 %v577
        %v768 = vpop.f32.mrf.mxu0
        %v769 = vadd.f32 0.0, %v768
        %v770 = vpop.f32.mrf.mxu0
        %771 = vmatprep.mubr.f32.mxu0 0.0
        %772 = vmatmul.mubr.f32.gmra.mxu0 %v579
        %v773 = vpop.f32.mrf.mxu0
        %v774 = vadd.f32 0.0, %v773
        %v775 = vpop.f32.mrf.mxu0
        %776 = vmatprep.mubr.f32.mxu0 0.0
        %777 = vmatmul.mubr.f32.gmra.mxu0 %v581
        %v778 = vpop.f32.mrf.mxu0
        %v779 = vadd.f32 0.0, %v778
        %v780 = vpop.f32.mrf.mxu0
        %781 = vmatprep.mubr.f32.mxu0 0.0
        %782 = vmatmul.mubr.f32.gmra.mxu0 %v583
        %v783 = vpop.f32.mrf.mxu0
        %v784 = vadd.f32 0.0, %v783
        %v785 = vpop.f32.mrf.mxu0
        %786 = vmatprep.mubr.f32.mxu0 0.0
        %787 = vmatmul.mubr.f32.gmra.mxu0 %v585
        %v788 = vpop.f32.mrf.mxu0
        %v789 = vadd.f32 0.0, %v788
        %v790 = vpop.f32.mrf.mxu0
        %791 = vmatprep.mubr.f32.mxu0 0.0
        %792 = vmatmul.mubr.f32.gmra.mxu0 %v587
        %v793 = vpop.f32.mrf.mxu0
        %v794 = vadd.f32 0.0, %v793
        %v795 = vpop.f32.mrf.mxu0
        %796 = vmatprep.mubr.f32.mxu0 0.0
        %797 = vmatmul.mubr.f32.gmra.mxu0 %v589
        %v798 = vpop.f32.mrf.mxu0
        %v799 = vadd.f32 0.0, %v798
        %v800 = vpop.f32.mrf.mxu0
        %801 = vmatprep.mubr.f32.mxu0 0.0
        %802 = vmatmul.mubr.f32.gmra.mxu0 %v591
        %v803 = vpop.f32.mrf.mxu0
        %v804 = vadd.f32 0.0, %v803
        %v805 = vpop.f32.mrf.mxu0
        %806 = vmatprep.mubr.f32.mxu0 0.0
        %807 = vmatmul.mubr.f32.gmra.mxu0 %v593
        %v808 = vpop.f32.mrf.mxu0
        %v809 = vadd.f32 0.0, %v808
        %v810 = vpop.f32.mrf.mxu0
        %811 = vmatprep.mubr.f32.mxu0 0.0
        %812 = vmatmul.mubr.f32.gmra.mxu0 %v595
        %v813 = vpop.f32.mrf.mxu0
        %v814 = vadd.f32 0.0, %v813
        %v815 = vpop.f32.mrf.mxu0
        %816 = vmatprep.mubr.f32.mxu0 0.0
        %817 = vmatmul.mubr.f32.gmra.mxu0 %v597
        %v818 = vpop.f32.mrf.mxu0
        %v819 = vadd.f32 0.0, %v818
        %v820 = vpop.f32.mrf.mxu0
        %821 = vmatprep.mubr.f32.mxu0 0.0
        %822 = vmatmul.mubr.f32.gmra.mxu0 %v599
        %v823 = vpop.f32.mrf.mxu0
        %v824 = vadd.f32 0.0, %v823
        %v825 = vpop.f32.mrf.mxu0
        %826 = vmatprep.mubr.f32.mxu0 0.0
        %827 = vmatmul.mubr.f32.gmra.mxu0 %v601
        %v828 = vpop.f32.mrf.mxu0
        %v829 = vadd.f32 0.0, %v828
        %v830 = vpop.f32.mrf.mxu0
        %831 = vdwg.mxu0
        %v832 = vsel %vm538, %v346, 0
        %v834 = vsel %vm538, %v347, 0
        %v836 = vsel %vm538, %v349, 0
        %v838 = vsel %vm538, %v350, 0
        %v840 = vsel %vm538, %v352, 0
        %v842 = vsel %vm538, %v353, 0
        %v844 = vsel %vm538, %v355, 0
        %v846 = vsel %vm538, %v356, 0
        %v848 = vsel %vm538, %v358, 0
        %v850 = vsel %vm538, %v359, 0
        %v852 = vsel %vm538, %v361, 0
        %v854 = vsel %vm538, %v362, 0
        %v856 = vsel %vm538, %v364, 0
        %v858 = vsel %vm538, %v365, 0
        %v860 = vsel %vm538, %v367, 0
        %v862 = vsel %vm538, %v368, 0
        %v864 = vsel %vm538, %v370, 0
        %v866 = vsel %vm538, %v371, 0
        %v868 = vsel %vm538, %v373, 0
        %v870 = vsel %vm538, %v374, 0
        %v872 = vsel %vm538, %v376, 0
        %v874 = vsel %vm538, %v377, 0
        %v876 = vsel %vm538, %v379, 0
        %v878 = vsel %vm538, %v380, 0
        %v880 = vsel %vm538, %v382, 0
        %v882 = vsel %vm538, %v383, 0
        %v884 = vsel %vm538, %v385, 0
        %v886 = vsel %vm538, %v386, 0
        %v888 = vsel %vm538, %v388, 0
        %v890 = vsel %vm538, %v389, 0
        %v892 = vsel %vm538, %v391, 0
        %v894 = vsel %vm538, %v392, 0
        %v897 = vsel %vm603, %v400, 0
        %899 = vmatprep.subr.mxu0 0.0
        %900 = vmatpush1.msra.mxu0 0.0
        %901 = vmatprep.subr.mxu0 0.0
        %902 = vmatpush1.msra.mxu0 0.0
        %903 = vmatprep.subr.mxu0 0.0
        %904 = vmatpush1.msra.mxu0 0.0
        %905 = vmatprep.subr.mxu0 0.0
        %906 = vmatpush1.msra.mxu0 0.0
        %907 = vmatprep.subr.mxu0 0.0
        %908 = vmatpush1.msra.mxu0 0.0
        %909 = vmatprep.subr.mxu0 0.0
        %910 = vmatpush1.msra.mxu0 0.0
        %911 = vmatprep.subr.mxu0 0.0
        %912 = vmatpush1.msra.mxu0 0.0
        %913 = vmatprep.subr.mxu0 0.0
        %914 = vmatpush1.msra.mxu0 0.0
        %915 = vmatprep.subr.mxu0 0.0
        %916 = vmatpush1.msra.mxu0 0.0
        %917 = vmatprep.subr.mxu0 0.0
        %918 = vmatpush1.msra.mxu0 0.0
        %919 = vmatprep.subr.mxu0 0.0
        %920 = vmatpush1.msra.mxu0 0.0
        %921 = vmatprep.subr.mxu0 0.0
        %922 = vmatpush1.msra.mxu0 0.0
        %923 = vmatprep.subr.mxu0 0.0
        %924 = vmatpush1.msra.mxu0 0.0
        %925 = vmatprep.subr.mxu0 0.0
        %926 = vmatpush1.msra.mxu0 0.0
        %927 = vmatprep.subr.mxu0 0.0
        %928 = vmatpush1.msra.mxu0 0.0
        %929 = vmatprep.subr.mxu0 0.0
        %930 = vmatpush1.msra.mxu0 %v897
        %931 = vmatprep.subr.mxu0 0.0
        %932 = vmatpush2.msra.mxu0 0.0
        %933 = vmatprep.subr.mxu0 0.0
        %934 = vmatpush2.msra.mxu0 0.0
        %935 = vmatprep.subr.mxu0 0.0
        %936 = vmatpush2.msra.mxu0 0.0
        %937 = vmatprep.subr.mxu0 0.0
        %938 = vmatpush2.msra.mxu0 0.0
        %939 = vmatprep.subr.mxu0 0.0
        %940 = vmatpush2.msra.mxu0 0.0
        %941 = vmatprep.subr.mxu0 0.0
        %942 = vmatpush2.msra.mxu0 0.0
        %943 = vmatprep.subr.mxu0 0.0
        %944 = vmatpush2.msra.mxu0 0.0
        %945 = vmatprep.subr.mxu0 0.0
        %946 = vmatpush2.msra.mxu0 0.0
        %947 = vmatprep.subr.mxu0 0.0
        %948 = vmatpush2.msra.mxu0 0.0
        %949 = vmatprep.subr.mxu0 0.0
        %950 = vmatpush2.msra.mxu0 0.0
        %951 = vmatprep.subr.mxu0 0.0
        %952 = vmatpush2.msra.mxu0 0.0
        %953 = vmatprep.subr.mxu0 0.0
        %954 = vmatpush2.msra.mxu0 0.0
        %955 = vmatprep.subr.mxu0 0.0
        %956 = vmatpush2.msra.mxu0 0.0
        %957 = vmatprep.subr.mxu0 0.0
        %958 = vmatpush2.msra.mxu0 0.0
        %959 = vmatprep.subr.mxu0 0.0
        %960 = vmatpush2.msra.mxu0 0.0
        %961 = vmatprep.subr.mxu0 0.0
        %962 = vmatpush2.msra.mxu0 0.0
        %963 = vmatprep.mubr.f32.mxu0 0.0
        %964 = vmatmul.mubr.f32.gmra.mxu0 %v832
        %v965 = vpop.f32.mrf.mxu0
        %v966 = vadd.f32 %v674, %v965
        %v967 = vpop.f32.mrf.mxu0
        %968 = vmatprep.mubr.f32.mxu0 0.0
        %969 = vmatmul.mubr.f32.gmra.mxu0 %v834
        %v970 = vpop.f32.mrf.mxu0
        %v971 = vadd.f32 %v679, %v970
        %v972 = vpop.f32.mrf.mxu0
        %973 = vmatprep.mubr.f32.mxu0 0.0
        %974 = vmatmul.mubr.f32.gmra.mxu0 %v836
        %v975 = vpop.f32.mrf.mxu0
        %v976 = vadd.f32 %v684, %v975
        %v977 = vpop.f32.mrf.mxu0
        %978 = vmatprep.mubr.f32.mxu0 0.0
        %979 = vmatmul.mubr.f32.gmra.mxu0 %v838
        %v980 = vpop.f32.mrf.mxu0
        %v981 = vadd.f32 %v689, %v980
        %v982 = vpop.f32.mrf.mxu0
        %983 = vmatprep.mubr.f32.mxu0 0.0
        %984 = vmatmul.mubr.f32.gmra.mxu0 %v840
        %v985 = vpop.f32.mrf.mxu0
        %v986 = vadd.f32 %v694, %v985
        %v987 = vpop.f32.mrf.mxu0
        %988 = vmatprep.mubr.f32.mxu0 0.0
        %989 = vmatmul.mubr.f32.gmra.mxu0 %v842
        %v990 = vpop.f32.mrf.mxu0
        %v991 = vadd.f32 %v699, %v990
        %v992 = vpop.f32.mrf.mxu0
        %993 = vmatprep.mubr.f32.mxu0 0.0
        %994 = vmatmul.mubr.f32.gmra.mxu0 %v844
        %v995 = vpop.f32.mrf.mxu0
        %v996 = vadd.f32 %v704, %v995
        %v997 = vpop.f32.mrf.mxu0
        %998 = vmatprep.mubr.f32.mxu0 0.0
        %999 = vmatmul.mubr.f32.gmra.mxu0 %v846
        %v1000 = vpop.f32.mrf.mxu0
        %v1001 = vadd.f32 %v709, %v1000
        %v1002 = vpop.f32.mrf.mxu0
        %1003 = vmatprep.mubr.f32.mxu0 0.0
        %1004 = vmatmul.mubr.f32.gmra.mxu0 %v848
        %v1005 = vpop.f32.mrf.mxu0
        %v1006 = vadd.f32 %v714, %v1005
        %v1007 = vpop.f32.mrf.mxu0
        %1008 = vmatprep.mubr.f32.mxu0 0.0
        %1009 = vmatmul.mubr.f32.gmra.mxu0 %v850
        %v1010 = vpop.f32.mrf.mxu0
        %v1011 = vadd.f32 %v719, %v1010
        %v1012 = vpop.f32.mrf.mxu0
        %1013 = vmatprep.mubr.f32.mxu0 0.0
        %1014 = vmatmul.mubr.f32.gmra.mxu0 %v852
        %v1015 = vpop.f32.mrf.mxu0
        %v1016 = vadd.f32 %v724, %v1015
        %v1017 = vpop.f32.mrf.mxu0
        %1018 = vmatprep.mubr.f32.mxu0 0.0
        %1019 = vmatmul.mubr.f32.gmra.mxu0 %v854
        %v1020 = vpop.f32.mrf.mxu0
        %v1021 = vadd.f32 %v729, %v1020
        %v1022 = vpop.f32.mrf.mxu0
        %1023 = vmatprep.mubr.f32.mxu0 0.0
        %1024 = vmatmul.mubr.f32.gmra.mxu0 %v856
        %v1025 = vpop.f32.mrf.mxu0
        %v1026 = vadd.f32 %v734, %v1025
        %v1027 = vpop.f32.mrf.mxu0
        %1028 = vmatprep.mubr.f32.mxu0 0.0
        %1029 = vmatmul.mubr.f32.gmra.mxu0 %v858
        %v1030 = vpop.f32.mrf.mxu0
        %v1031 = vadd.f32 %v739, %v1030
        %v1032 = vpop.f32.mrf.mxu0
        %1033 = vmatprep.mubr.f32.mxu0 0.0
        %1034 = vmatmul.mubr.f32.gmra.mxu0 %v860
        %v1035 = vpop.f32.mrf.mxu0
        %v1036 = vadd.f32 %v744, %v1035
        %v1037 = vpop.f32.mrf.mxu0
        %1038 = vmatprep.mubr.f32.mxu0 0.0
        %1039 = vmatmul.mubr.f32.gmra.mxu0 %v862
        %v1040 = vpop.f32.mrf.mxu0
        %v1041 = vadd.f32 %v749, %v1040
        %v1042 = vpop.f32.mrf.mxu0
        %1043 = vmatprep.mubr.f32.mxu0 0.0
        %1044 = vmatmul.mubr.f32.gmra.mxu0 %v864
        %v1045 = vpop.f32.mrf.mxu0
        %v1046 = vadd.f32 %v754, %v1045
        %v1047 = vpop.f32.mrf.mxu0
        %1048 = vmatprep.mubr.f32.mxu0 0.0
        %1049 = vmatmul.mubr.f32.gmra.mxu0 %v866
        %v1050 = vpop.f32.mrf.mxu0
        %v1051 = vadd.f32 %v759, %v1050
        %v1052 = vpop.f32.mrf.mxu0
        %1053 = vmatprep.mubr.f32.mxu0 0.0
        %1054 = vmatmul.mubr.f32.gmra.mxu0 %v868
        %v1055 = vpop.f32.mrf.mxu0
        %v1056 = vadd.f32 %v764, %v1055
        %v1057 = vpop.f32.mrf.mxu0
        %1058 = vmatprep.mubr.f32.mxu0 0.0
        %1059 = vmatmul.mubr.f32.gmra.mxu0 %v870
        %v1060 = vpop.f32.mrf.mxu0
        %v1061 = vadd.f32 %v769, %v1060
        %v1062 = vpop.f32.mrf.mxu0
        %1063 = vmatprep.mubr.f32.mxu0 0.0
        %1064 = vmatmul.mubr.f32.gmra.mxu0 %v872
        %v1065 = vpop.f32.mrf.mxu0
        %v1066 = vadd.f32 %v774, %v1065
        %v1067 = vpop.f32.mrf.mxu0
        %1068 = vmatprep.mubr.f32.mxu0 0.0
        %1069 = vmatmul.mubr.f32.gmra.mxu0 %v874
        %v1070 = vpop.f32.mrf.mxu0
        %v1071 = vadd.f32 %v779, %v1070
        %v1072 = vpop.f32.mrf.mxu0
        %1073 = vmatprep.mubr.f32.mxu0 0.0
        %1074 = vmatmul.mubr.f32.gmra.mxu0 %v876
        %v1075 = vpop.f32.mrf.mxu0
        %v1076 = vadd.f32 %v784, %v1075
        %v1077 = vpop.f32.mrf.mxu0
        %1078 = vmatprep.mubr.f32.mxu0 0.0
        %1079 = vmatmul.mubr.f32.gmra.mxu0 %v878
        %v1080 = vpop.f32.mrf.mxu0
        %v1081 = vadd.f32 %v789, %v1080
        %v1082 = vpop.f32.mrf.mxu0
        %1083 = vmatprep.mubr.f32.mxu0 0.0
        %1084 = vmatmul.mubr.f32.gmra.mxu0 %v880
        %v1085 = vpop.f32.mrf.mxu0
        %v1086 = vadd.f32 %v794, %v1085
        %v1087 = vpop.f32.mrf.mxu0
        %1088 = vmatprep.mubr.f32.mxu0 0.0
        %1089 = vmatmul.mubr.f32.gmra.mxu0 %v882
        %v1090 = vpop.f32.mrf.mxu0
        %v1091 = vadd.f32 %v799, %v1090
        %v1092 = vpop.f32.mrf.mxu0
        %1093 = vmatprep.mubr.f32.mxu0 0.0
        %1094 = vmatmul.mubr.f32.gmra.mxu0 %v884
        %v1095 = vpop.f32.mrf.mxu0
        %v1096 = vadd.f32 %v804, %v1095
        %v1097 = vpop.f32.mrf.mxu0
        %1098 = vmatprep.mubr.f32.mxu0 0.0
        %1099 = vmatmul.mubr.f32.gmra.mxu0 %v886
        %v1100 = vpop.f32.mrf.mxu0
        %v1101 = vadd.f32 %v809, %v1100
        %v1102 = vpop.f32.mrf.mxu0
        %1103 = vmatprep.mubr.f32.mxu0 0.0
        %1104 = vmatmul.mubr.f32.gmra.mxu0 %v888
        %v1105 = vpop.f32.mrf.mxu0
        %v1106 = vadd.f32 %v814, %v1105
        %v1107 = vpop.f32.mrf.mxu0
        %1108 = vmatprep.mubr.f32.mxu0 0.0
        %1109 = vmatmul.mubr.f32.gmra.mxu0 %v890
        %v1110 = vpop.f32.mrf.mxu0
        %v1111 = vadd.f32 %v819, %v1110
        %v1112 = vpop.f32.mrf.mxu0
        %1113 = vmatprep.mubr.f32.mxu0 0.0
        %1114 = vmatmul.mubr.f32.gmra.mxu0 %v892
        %v1115 = vpop.f32.mrf.mxu0
        %v1116 = vadd.f32 %v824, %v1115
        %v1117 = vpop.f32.mrf.mxu0
        %1118 = vmatprep.mubr.f32.mxu0 0.0
        %1119 = vmatmul.mubr.f32.gmra.mxu0 %v894
        %v1120 = vpop.f32.mrf.mxu0
        %v1121 = vadd.f32 %v829, %v1120
        %v1122 = vpop.f32.mrf.mxu0
        %1123 = vdwg.mxu0
        %vm1124 = vcmask 1045504
        %v1125 = vrot.slane %v346, 2
        %v1126 = vrot.slane %v347, 2
        %v1127 = vsel %vm1124, %v1125, %v1126
        %v1128 = vrot.slane %v348, 2
        %v1129 = vsel %vm1124, %v1126, %v1128
        %v1130 = vrot.slane %v349, 2
        %v1131 = vrot.slane %v350, 2
        %v1132 = vsel %vm1124, %v1130, %v1131
        %v1133 = vrot.slane %v351, 2
        %v1134 = vsel %vm1124, %v1131, %v1133
        %v1135 = vrot.slane %v352, 2
        %v1136 = vrot.slane %v353, 2
        %v1137 = vsel %vm1124, %v1135, %v1136
        %v1138 = vrot.slane %v354, 2
        %v1139 = vsel %vm1124, %v1136, %v1138
        %v1140 = vrot.slane %v355, 2
        %v1141 = vrot.slane %v356, 2
        %v1142 = vsel %vm1124, %v1140, %v1141
        %v1143 = vrot.slane %v357, 2
        %v1144 = vsel %vm1124, %v1141, %v1143
        %v1145 = vrot.slane %v358, 2
        %v1146 = vrot.slane %v359, 2
        %v1147 = vsel %vm1124, %v1145, %v1146
        %v1148 = vrot.slane %v360, 2
        %v1149 = vsel %vm1124, %v1146, %v1148
        %v1150 = vrot.slane %v361, 2
        %v1151 = vrot.slane %v362, 2
        %v1152 = vsel %vm1124, %v1150, %v1151
        %v1153 = vrot.slane %v363, 2
        %v1154 = vsel %vm1124, %v1151, %v1153
        %v1155 = vrot.slane %v364, 2
        %v1156 = vrot.slane %v365, 2
        %v1157 = vsel %vm1124, %v1155, %v1156
        %v1158 = vrot.slane %v366, 2
        %v1159 = vsel %vm1124, %v1156, %v1158
        %v1160 = vrot.slane %v367, 2
        %v1161 = vrot.slane %v368, 2
        %v1162 = vsel %vm1124, %v1160, %v1161
        %v1163 = vrot.slane %v369, 2
        %v1164 = vsel %vm1124, %v1161, %v1163
        %v1165 = vrot.slane %v370, 2
        %v1166 = vrot.slane %v371, 2
        %v1167 = vsel %vm1124, %v1165, %v1166
        %v1168 = vrot.slane %v372, 2
        %v1169 = vsel %vm1124, %v1166, %v1168
        %v1170 = vrot.slane %v373, 2
        %v1171 = vrot.slane %v374, 2
        %v1172 = vsel %vm1124, %v1170, %v1171
        %v1173 = vrot.slane %v375, 2
        %v1174 = vsel %vm1124, %v1171, %v1173
        %v1175 = vrot.slane %v376, 2
        %v1176 = vrot.slane %v377, 2
        %v1177 = vsel %vm1124, %v1175, %v1176
        %v1178 = vrot.slane %v378, 2
        %v1179 = vsel %vm1124, %v1176, %v1178
        %v1180 = vrot.slane %v379, 2
        %v1181 = vrot.slane %v380, 2
        %v1182 = vsel %vm1124, %v1180, %v1181
        %v1183 = vrot.slane %v381, 2
        %v1184 = vsel %vm1124, %v1181, %v1183
        %v1185 = vrot.slane %v382, 2
        %v1186 = vrot.slane %v383, 2
        %v1187 = vsel %vm1124, %v1185, %v1186
        %v1188 = vrot.slane %v384, 2
        %v1189 = vsel %vm1124, %v1186, %v1188
        %v1190 = vrot.slane %v385, 2
        %v1191 = vrot.slane %v386, 2
        %v1192 = vsel %vm1124, %v1190, %v1191
        %v1193 = vrot.slane %v387, 2
        %v1194 = vsel %vm1124, %v1191, %v1193
        %v1195 = vrot.slane %v388, 2
        %v1196 = vrot.slane %v389, 2
        %v1197 = vsel %vm1124, %v1195, %v1196
        %v1198 = vrot.slane %v390, 2
        %v1199 = vsel %vm1124, %v1196, %v1198
        %v1200 = vrot.slane %v391, 2
        %v1201 = vrot.slane %v392, 2
        %v1202 = vsel %vm1124, %v1200, %v1201
        %v1203 = vrot.slane %v393, 2
        %v1204 = vsel %vm1124, %v1201, %v1203
        %v1205 = vsel %vm538, %v1127, 0
        %v1207 = vsel %vm538, %v1129, 0
        %v1209 = vsel %vm538, %v1132, 0
        %v1211 = vsel %vm538, %v1134, 0
        %v1213 = vsel %vm538, %v1137, 0
        %v1215 = vsel %vm538, %v1139, 0
        %v1217 = vsel %vm538, %v1142, 0
        %v1219 = vsel %vm538, %v1144, 0
        %v1221 = vsel %vm538, %v1147, 0
        %v1223 = vsel %vm538, %v1149, 0
        %v1225 = vsel %vm538, %v1152, 0
        %v1227 = vsel %vm538, %v1154, 0
        %v1229 = vsel %vm538, %v1157, 0
        %v1231 = vsel %vm538, %v1159, 0
        %v1233 = vsel %vm538, %v1162, 0
        %v1235 = vsel %vm538, %v1164, 0
        %v1237 = vsel %vm538, %v1167, 0
        %v1239 = vsel %vm538, %v1169, 0
        %v1241 = vsel %vm538, %v1172, 0
        %v1243 = vsel %vm538, %v1174, 0
        %v1245 = vsel %vm538, %v1177, 0
        %v1247 = vsel %vm538, %v1179, 0
        %v1249 = vsel %vm538, %v1182, 0
        %v1251 = vsel %vm538, %v1184, 0
        %v1253 = vsel %vm538, %v1187, 0
        %v1255 = vsel %vm538, %v1189, 0
        %v1257 = vsel %vm538, %v1192, 0
        %v1259 = vsel %vm538, %v1194, 0
        %v1261 = vsel %vm538, %v1197, 0
        %v1263 = vsel %vm538, %v1199, 0
        %v1265 = vsel %vm538, %v1202, 0
        %v1267 = vsel %vm538, %v1204, 0
        %v1270 = vsel %vm603, %v402, 0
        %1272 = vmatprep.subr.mxu0 0.0
        %1273 = vmatpush1.msra.mxu0 0.0
        %1274 = vmatprep.subr.mxu0 0.0
        %1275 = vmatpush1.msra.mxu0 0.0
        %1276 = vmatprep.subr.mxu0 0.0
        %1277 = vmatpush1.msra.mxu0 0.0
        %1278 = vmatprep.subr.mxu0 0.0
        %1279 = vmatpush1.msra.mxu0 0.0
        %1280 = vmatprep.subr.mxu0 0.0
        %1281 = vmatpush1.msra.mxu0 0.0
        %1282 = vmatprep.subr.mxu0 0.0
        %1283 = vmatpush1.msra.mxu0 0.0
        %1284 = vmatprep.subr.mxu0 0.0
        %1285 = vmatpush1.msra.mxu0 0.0
        %1286 = vmatprep.subr.mxu0 0.0
        %1287 = vmatpush1.msra.mxu0 0.0
        %1288 = vmatprep.subr.mxu0 0.0
        %1289 = vmatpush1.msra.mxu0 0.0
        %1290 = vmatprep.subr.mxu0 0.0
        %1291 = vmatpush1.msra.mxu0 0.0
        %1292 = vmatprep.subr.mxu0 0.0
        %1293 = vmatpush1.msra.mxu0 0.0
        %1294 = vmatprep.subr.mxu0 0.0
        %1295 = vmatpush1.msra.mxu0 0.0
        %1296 = vmatprep.subr.mxu0 0.0
        %1297 = vmatpush1.msra.mxu0 0.0
        %1298 = vmatprep.subr.mxu0 0.0
        %1299 = vmatpush1.msra.mxu0 0.0
        %1300 = vmatprep.subr.mxu0 0.0
        %1301 = vmatpush1.msra.mxu0 0.0
        %1302 = vmatprep.subr.mxu0 0.0
        %1303 = vmatpush1.msra.mxu0 %v1270
        %1304 = vmatprep.subr.mxu0 0.0
        %1305 = vmatpush2.msra.mxu0 0.0
        %1306 = vmatprep.subr.mxu0 0.0
        %1307 = vmatpush2.msra.mxu0 0.0
        %1308 = vmatprep.subr.mxu0 0.0
        %1309 = vmatpush2.msra.mxu0 0.0
        %1310 = vmatprep.subr.mxu0 0.0
        %1311 = vmatpush2.msra.mxu0 0.0
        %1312 = vmatprep.subr.mxu0 0.0
        %1313 = vmatpush2.msra.mxu0 0.0
        %1314 = vmatprep.subr.mxu0 0.0
        %1315 = vmatpush2.msra.mxu0 0.0
        %1316 = vmatprep.subr.mxu0 0.0
        %1317 = vmatpush2.msra.mxu0 0.0
        %1318 = vmatprep.subr.mxu0 0.0
        %1319 = vmatpush2.msra.mxu0 0.0
        %1320 = vmatprep.subr.mxu0 0.0
        %1321 = vmatpush2.msra.mxu0 0.0
        %1322 = vmatprep.subr.mxu0 0.0
        %1323 = vmatpush2.msra.mxu0 0.0
        %1324 = vmatprep.subr.mxu0 0.0
        %1325 = vmatpush2.msra.mxu0 0.0
        %1326 = vmatprep.subr.mxu0 0.0
        %1327 = vmatpush2.msra.mxu0 0.0
        %1328 = vmatprep.subr.mxu0 0.0
        %1329 = vmatpush2.msra.mxu0 0.0
        %1330 = vmatprep.subr.mxu0 0.0
        %1331 = vmatpush2.msra.mxu0 0.0
        %1332 = vmatprep.subr.mxu0 0.0
        %1333 = vmatpush2.msra.mxu0 0.0
        %1334 = vmatprep.subr.mxu0 0.0
        %1335 = vmatpush2.msra.mxu0 0.0
        %1336 = vmatprep.mubr.f32.mxu0 0.0
        %1337 = vmatmul.mubr.f32.gmra.mxu0 %v1205
        %v1338 = vpop.f32.mrf.mxu0
        %v1339 = vadd.f32 0.0, %v1338
        %v1340 = vpop.f32.mrf.mxu0
        %1341 = vmatprep.mubr.f32.mxu0 0.0
        %1342 = vmatmul.mubr.f32.gmra.mxu0 %v1207
        %v1343 = vpop.f32.mrf.mxu0
        %v1344 = vadd.f32 0.0, %v1343
        %v1345 = vpop.f32.mrf.mxu0
        %1346 = vmatprep.mubr.f32.mxu0 0.0
        %1347 = vmatmul.mubr.f32.gmra.mxu0 %v1209
        %v1348 = vpop.f32.mrf.mxu0
        %v1349 = vadd.f32 0.0, %v1348
        %v1350 = vpop.f32.mrf.mxu0
        %1351 = vmatprep.mubr.f32.mxu0 0.0
        %1352 = vmatmul.mubr.f32.gmra.mxu0 %v1211
        %v1353 = vpop.f32.mrf.mxu0
        %v1354 = vadd.f32 0.0, %v1353
        %v1355 = vpop.f32.mrf.mxu0
        %1356 = vmatprep.mubr.f32.mxu0 0.0
        %1357 = vmatmul.mubr.f32.gmra.mxu0 %v1213
        %v1358 = vpop.f32.mrf.mxu0
        %v1359 = vadd.f32 0.0, %v1358
        %v1360 = vpop.f32.mrf.mxu0
        %1361 = vmatprep.mubr.f32.mxu0 0.0
        %1362 = vmatmul.mubr.f32.gmra.mxu0 %v1215
        %v1363 = vpop.f32.mrf.mxu0
        %v1364 = vadd.f32 0.0, %v1363
        %v1365 = vpop.f32.mrf.mxu0
        %1366 = vmatprep.mubr.f32.mxu0 0.0
        %1367 = vmatmul.mubr.f32.gmra.mxu0 %v1217
        %v1368 = vpop.f32.mrf.mxu0
        %v1369 = vadd.f32 0.0, %v1368
        %v1370 = vpop.f32.mrf.mxu0
        %1371 = vmatprep.mubr.f32.mxu0 0.0
        %1372 = vmatmul.mubr.f32.gmra.mxu0 %v1219
        %v1373 = vpop.f32.mrf.mxu0
        %v1374 = vadd.f32 0.0, %v1373
        %v1375 = vpop.f32.mrf.mxu0
        %1376 = vmatprep.mubr.f32.mxu0 0.0
        %1377 = vmatmul.mubr.f32.gmra.mxu0 %v1221
        %v1378 = vpop.f32.mrf.mxu0
        %v1379 = vadd.f32 0.0, %v1378
        %v1380 = vpop.f32.mrf.mxu0
        %1381 = vmatprep.mubr.f32.mxu0 0.0
        %1382 = vmatmul.mubr.f32.gmra.mxu0 %v1223
        %v1383 = vpop.f32.mrf.mxu0
        %v1384 = vadd.f32 0.0, %v1383
        %v1385 = vpop.f32.mrf.mxu0
        %1386 = vmatprep.mubr.f32.mxu0 0.0
        %1387 = vmatmul.mubr.f32.gmra.mxu0 %v1225
        %v1388 = vpop.f32.mrf.mxu0
        %v1389 = vadd.f32 0.0, %v1388
        %v1390 = vpop.f32.mrf.mxu0
        %1391 = vmatprep.mubr.f32.mxu0 0.0
        %1392 = vmatmul.mubr.f32.gmra.mxu0 %v1227
        %v1393 = vpop.f32.mrf.mxu0
        %v1394 = vadd.f32 0.0, %v1393
        %v1395 = vpop.f32.mrf.mxu0
        %1396 = vmatprep.mubr.f32.mxu0 0.0
        %1397 = vmatmul.mubr.f32.gmra.mxu0 %v1229
        %v1398 = vpop.f32.mrf.mxu0
        %v1399 = vadd.f32 0.0, %v1398
        %v1400 = vpop.f32.mrf.mxu0
        %1401 = vmatprep.mubr.f32.mxu0 0.0
        %1402 = vmatmul.mubr.f32.gmra.mxu0 %v1231
        %v1403 = vpop.f32.mrf.mxu0
        %v1404 = vadd.f32 0.0, %v1403
        %v1405 = vpop.f32.mrf.mxu0
        %1406 = vmatprep.mubr.f32.mxu0 0.0
        %1407 = vmatmul.mubr.f32.gmra.mxu0 %v1233
        %v1408 = vpop.f32.mrf.mxu0
        %v1409 = vadd.f32 0.0, %v1408
        %v1410 = vpop.f32.mrf.mxu0
        %1411 = vmatprep.mubr.f32.mxu0 0.0
        %1412 = vmatmul.mubr.f32.gmra.mxu0 %v1235
        %v1413 = vpop.f32.mrf.mxu0
        %v1414 = vadd.f32 0.0, %v1413
        %v1415 = vpop.f32.mrf.mxu0
        %1416 = vmatprep.mubr.f32.mxu0 0.0
        %1417 = vmatmul.mubr.f32.gmra.mxu0 %v1237
        %v1418 = vpop.f32.mrf.mxu0
        %v1419 = vadd.f32 0.0, %v1418
        %v1420 = vpop.f32.mrf.mxu0
        %1421 = vmatprep.mubr.f32.mxu0 0.0
        %1422 = vmatmul.mubr.f32.gmra.mxu0 %v1239
        %v1423 = vpop.f32.mrf.mxu0
        %v1424 = vadd.f32 0.0, %v1423
        %v1425 = vpop.f32.mrf.mxu0
        %1426 = vmatprep.mubr.f32.mxu0 0.0
        %1427 = vmatmul.mubr.f32.gmra.mxu0 %v1241
        %v1428 = vpop.f32.mrf.mxu0
        %v1429 = vadd.f32 0.0, %v1428
        %v1430 = vpop.f32.mrf.mxu0
        %1431 = vmatprep.mubr.f32.mxu0 0.0
        %1432 = vmatmul.mubr.f32.gmra.mxu0 %v1243
        %v1433 = vpop.f32.mrf.mxu0
        %v1434 = vadd.f32 0.0, %v1433
        %v1435 = vpop.f32.mrf.mxu0
        %1436 = vmatprep.mubr.f32.mxu0 0.0
        %1437 = vmatmul.mubr.f32.gmra.mxu0 %v1245
        %v1438 = vpop.f32.mrf.mxu0
        %v1439 = vadd.f32 0.0, %v1438
        %v1440 = vpop.f32.mrf.mxu0
        %1441 = vmatprep.mubr.f32.mxu0 0.0
        %1442 = vmatmul.mubr.f32.gmra.mxu0 %v1247
        %v1443 = vpop.f32.mrf.mxu0
        %v1444 = vadd.f32 0.0, %v1443
        %v1445 = vpop.f32.mrf.mxu0
        %1446 = vmatprep.mubr.f32.mxu0 0.0
        %1447 = vmatmul.mubr.f32.gmra.mxu0 %v1249
        %v1448 = vpop.f32.mrf.mxu0
        %v1449 = vadd.f32 0.0, %v1448
        %v1450 = vpop.f32.mrf.mxu0
        %1451 = vmatprep.mubr.f32.mxu0 0.0
        %1452 = vmatmul.mubr.f32.gmra.mxu0 %v1251
        %v1453 = vpop.f32.mrf.mxu0
        %v1454 = vadd.f32 0.0, %v1453
        %v1455 = vpop.f32.mrf.mxu0
        %1456 = vmatprep.mubr.f32.mxu0 0.0
        %1457 = vmatmul.mubr.f32.gmra.mxu0 %v1253
        %v1458 = vpop.f32.mrf.mxu0
        %v1459 = vadd.f32 0.0, %v1458
        %v1460 = vpop.f32.mrf.mxu0
        %1461 = vmatprep.mubr.f32.mxu0 0.0
        %1462 = vmatmul.mubr.f32.gmra.mxu0 %v1255
        %v1463 = vpop.f32.mrf.mxu0
        %v1464 = vadd.f32 0.0, %v1463
        %v1465 = vpop.f32.mrf.mxu0
        %1466 = vmatprep.mubr.f32.mxu0 0.0
        %1467 = vmatmul.mubr.f32.gmra.mxu0 %v1257
        %v1468 = vpop.f32.mrf.mxu0
        %v1469 = vadd.f32 0.0, %v1468
        %v1470 = vpop.f32.mrf.mxu0
        %1471 = vmatprep.mubr.f32.mxu0 0.0
        %1472 = vmatmul.mubr.f32.gmra.mxu0 %v1259
        %v1473 = vpop.f32.mrf.mxu0
        %v1474 = vadd.f32 0.0, %v1473
        %v1475 = vpop.f32.mrf.mxu0
        %1476 = vmatprep.mubr.f32.mxu0 0.0
        %1477 = vmatmul.mubr.f32.gmra.mxu0 %v1261
        %v1478 = vpop.f32.mrf.mxu0
        %v1479 = vadd.f32 0.0, %v1478
        %v1480 = vpop.f32.mrf.mxu0
        %1481 = vmatprep.mubr.f32.mxu0 0.0
        %1482 = vmatmul.mubr.f32.gmra.mxu0 %v1263
        %v1483 = vpop.f32.mrf.mxu0
        %v1484 = vadd.f32 0.0, %v1483
        %v1485 = vpop.f32.mrf.mxu0
        %1486 = vmatprep.mubr.f32.mxu0 0.0
        %1487 = vmatmul.mubr.f32.gmra.mxu0 %v1265
        %v1488 = vpop.f32.mrf.mxu0
        %v1489 = vadd.f32 0.0, %v1488
        %v1490 = vpop.f32.mrf.mxu0
        %1491 = vmatprep.mubr.f32.mxu0 0.0
        %1492 = vmatmul.mubr.f32.gmra.mxu0 %v1267
        %v1493 = vpop.f32.mrf.mxu0
        %v1494 = vadd.f32 0.0, %v1493
        %v1495 = vpop.f32.mrf.mxu0
        %1496 = vdwg.mxu0
        %v1497 = vadd.f32 %v966, %v1339
        %v1498 = vadd.f32 %v971, %v1344
        %v1499 = vadd.f32 %v976, %v1349
        %v1500 = vadd.f32 %v981, %v1354
        %v1501 = vadd.f32 %v986, %v1359
        %v1502 = vadd.f32 %v991, %v1364
        %v1503 = vadd.f32 %v996, %v1369
        %v1504 = vadd.f32 %v1001, %v1374
        %v1505 = vadd.f32 %v1006, %v1379
        %v1506 = vadd.f32 %v1011, %v1384
        %v1507 = vadd.f32 %v1016, %v1389
        %v1508 = vadd.f32 %v1021, %v1394
        %v1509 = vadd.f32 %v1026, %v1399
        %v1510 = vadd.f32 %v1031, %v1404
        %v1511 = vadd.f32 %v1036, %v1409
        %v1512 = vadd.f32 %v1041, %v1414
        %v1513 = vadd.f32 %v1046, %v1419
        %v1514 = vadd.f32 %v1051, %v1424
        %v1515 = vadd.f32 %v1056, %v1429
        %v1516 = vadd.f32 %v1061, %v1434
        %v1517 = vadd.f32 %v1066, %v1439
        %v1518 = vadd.f32 %v1071, %v1444
        %v1519 = vadd.f32 %v1076, %v1449
        %v1520 = vadd.f32 %v1081, %v1454
        %v1521 = vadd.f32 %v1086, %v1459
        %v1522 = vadd.f32 %v1091, %v1464
        %v1523 = vadd.f32 %v1096, %v1469
        %v1524 = vadd.f32 %v1101, %v1474
        %v1525 = vadd.f32 %v1106, %v1479
        %v1526 = vadd.f32 %v1111, %v1484
        %v1527 = vadd.f32 %v1116, %v1489
        %v1528 = vadd.f32 %v1121, %v1494
        %v1530 = vsel %vm538, %v394, 0
        %v1533 = vsel %vm538, %v395, 0
        %v1536 = vsel %vm603, %v403, 0
        %1538 = vmatprep.subr.mxu0 0.0
        %1539 = vmatpush1.msra.mxu0 0.0
        %1540 = vmatprep.subr.mxu0 0.0
        %1541 = vmatpush1.msra.mxu0 0.0
        %1542 = vmatprep.subr.mxu0 0.0
        %1543 = vmatpush1.msra.mxu0 0.0
        %1544 = vmatprep.subr.mxu0 0.0
        %1545 = vmatpush1.msra.mxu0 0.0
        %1546 = vmatprep.subr.mxu0 0.0
        %1547 = vmatpush1.msra.mxu0 0.0
        %1548 = vmatprep.subr.mxu0 0.0
        %1549 = vmatpush1.msra.mxu0 0.0
        %1550 = vmatprep.subr.mxu0 0.0
        %1551 = vmatpush1.msra.mxu0 0.0
        %1552 = vmatprep.subr.mxu0 0.0
        %1553 = vmatpush1.msra.mxu0 0.0
        %1554 = vmatprep.subr.mxu0 0.0
        %1555 = vmatpush1.msra.mxu0 0.0
        %1556 = vmatprep.subr.mxu0 0.0
        %1557 = vmatpush1.msra.mxu0 0.0
        %1558 = vmatprep.subr.mxu0 0.0
        %1559 = vmatpush1.msra.mxu0 0.0
        %1560 = vmatprep.subr.mxu0 0.0
        %1561 = vmatpush1.msra.mxu0 0.0
        %1562 = vmatprep.subr.mxu0 0.0
        %1563 = vmatpush1.msra.mxu0 0.0
        %1564 = vmatprep.subr.mxu0 0.0
        %1565 = vmatpush1.msra.mxu0 0.0
        %1566 = vmatprep.subr.mxu0 0.0
        %1567 = vmatpush1.msra.mxu0 0.0
        %1568 = vmatprep.subr.mxu0 0.0
        %1569 = vmatpush1.msra.mxu0 %v1536
        %1570 = vmatprep.subr.mxu0 0.0
        %1571 = vmatpush2.msra.mxu0 0.0
        %1572 = vmatprep.subr.mxu0 0.0
        %1573 = vmatpush2.msra.mxu0 0.0
        %1574 = vmatprep.subr.mxu0 0.0
        %1575 = vmatpush2.msra.mxu0 0.0
        %1576 = vmatprep.subr.mxu0 0.0
        %1577 = vmatpush2.msra.mxu0 0.0
        %1578 = vmatprep.subr.mxu0 0.0
        %1579 = vmatpush2.msra.mxu0 0.0
        %1580 = vmatprep.subr.mxu0 0.0
        %1581 = vmatpush2.msra.mxu0 0.0
        %1582 = vmatprep.subr.mxu0 0.0
        %1583 = vmatpush2.msra.mxu0 0.0
        %1584 = vmatprep.subr.mxu0 0.0
        %1585 = vmatpush2.msra.mxu0 0.0
        %1586 = vmatprep.subr.mxu0 0.0
        %1587 = vmatpush2.msra.mxu0 0.0
        %1588 = vmatprep.subr.mxu0 0.0
        %1589 = vmatpush2.msra.mxu0 0.0
        %1590 = vmatprep.subr.mxu0 0.0
        %1591 = vmatpush2.msra.mxu0 0.0
        %1592 = vmatprep.subr.mxu0 0.0
        %1593 = vmatpush2.msra.mxu0 0.0
        %1594 = vmatprep.subr.mxu0 0.0
        %1595 = vmatpush2.msra.mxu0 0.0
        %1596 = vmatprep.subr.mxu0 0.0
        %1597 = vmatpush2.msra.mxu0 0.0
        %1598 = vmatprep.subr.mxu0 0.0
        %1599 = vmatpush2.msra.mxu0 0.0
        %1600 = vmatprep.subr.mxu0 0.0
        %1601 = vmatpush2.msra.mxu0 0.0
        %1602 = vmatprep.mubr.f32.mxu0 0.0
        %1603 = vmatmul.mubr.f32.gmra.mxu0 %v836
        %v1604 = vpop.f32.mrf.mxu0
        %v1605 = vadd.f32 0.0, %v1604
        %v1606 = vpop.f32.mrf.mxu0
        %1607 = vmatprep.mubr.f32.mxu0 0.0
        %1608 = vmatmul.mubr.f32.gmra.mxu0 %v838
        %v1609 = vpop.f32.mrf.mxu0
        %v1610 = vadd.f32 0.0, %v1609
        %v1611 = vpop.f32.mrf.mxu0
        %1612 = vmatprep.mubr.f32.mxu0 0.0
        %1613 = vmatmul.mubr.f32.gmra.mxu0 %v840
        %v1614 = vpop.f32.mrf.mxu0
        %v1615 = vadd.f32 0.0, %v1614
        %v1616 = vpop.f32.mrf.mxu0
        %1617 = vmatprep.mubr.f32.mxu0 0.0
        %1618 = vmatmul.mubr.f32.gmra.mxu0 %v842
        %v1619 = vpop.f32.mrf.mxu0
        %v1620 = vadd.f32 0.0, %v1619
        %v1621 = vpop.f32.mrf.mxu0
        %1622 = vmatprep.mubr.f32.mxu0 0.0
        %1623 = vmatmul.mubr.f32.gmra.mxu0 %v844
        %v1624 = vpop.f32.mrf.mxu0
        %v1625 = vadd.f32 0.0, %v1624
        %v1626 = vpop.f32.mrf.mxu0
        %1627 = vmatprep.mubr.f32.mxu0 0.0
        %1628 = vmatmul.mubr.f32.gmra.mxu0 %v846
        %v1629 = vpop.f32.mrf.mxu0
        %v1630 = vadd.f32 0.0, %v1629
        %v1631 = vpop.f32.mrf.mxu0
        %1632 = vmatprep.mubr.f32.mxu0 0.0
        %1633 = vmatmul.mubr.f32.gmra.mxu0 %v848
        %v1634 = vpop.f32.mrf.mxu0
        %v1635 = vadd.f32 0.0, %v1634
        %v1636 = vpop.f32.mrf.mxu0
        %1637 = vmatprep.mubr.f32.mxu0 0.0
        %1638 = vmatmul.mubr.f32.gmra.mxu0 %v850
        %v1639 = vpop.f32.mrf.mxu0
        %v1640 = vadd.f32 0.0, %v1639
        %v1641 = vpop.f32.mrf.mxu0
        %1642 = vmatprep.mubr.f32.mxu0 0.0
        %1643 = vmatmul.mubr.f32.gmra.mxu0 %v852
        %v1644 = vpop.f32.mrf.mxu0
        %v1645 = vadd.f32 0.0, %v1644
        %v1646 = vpop.f32.mrf.mxu0
        %1647 = vmatprep.mubr.f32.mxu0 0.0
        %1648 = vmatmul.mubr.f32.gmra.mxu0 %v854
        %v1649 = vpop.f32.mrf.mxu0
        %v1650 = vadd.f32 0.0, %v1649
        %v1651 = vpop.f32.mrf.mxu0
        %1652 = vmatprep.mubr.f32.mxu0 0.0
        %1653 = vmatmul.mubr.f32.gmra.mxu0 %v856
        %v1654 = vpop.f32.mrf.mxu0
        %v1655 = vadd.f32 0.0, %v1654
        %v1656 = vpop.f32.mrf.mxu0
        %1657 = vmatprep.mubr.f32.mxu0 0.0
        %1658 = vmatmul.mubr.f32.gmra.mxu0 %v858
        %v1659 = vpop.f32.mrf.mxu0
        %v1660 = vadd.f32 0.0, %v1659
        %v1661 = vpop.f32.mrf.mxu0
        %1662 = vmatprep.mubr.f32.mxu0 0.0
        %1663 = vmatmul.mubr.f32.gmra.mxu0 %v860
        %v1664 = vpop.f32.mrf.mxu0
        %v1665 = vadd.f32 0.0, %v1664
        %v1666 = vpop.f32.mrf.mxu0
        %1667 = vmatprep.mubr.f32.mxu0 0.0
        %1668 = vmatmul.mubr.f32.gmra.mxu0 %v862
        %v1669 = vpop.f32.mrf.mxu0
        %v1670 = vadd.f32 0.0, %v1669
        %v1671 = vpop.f32.mrf.mxu0
        %1672 = vmatprep.mubr.f32.mxu0 0.0
        %1673 = vmatmul.mubr.f32.gmra.mxu0 %v864
        %v1674 = vpop.f32.mrf.mxu0
        %v1675 = vadd.f32 0.0, %v1674
        %v1676 = vpop.f32.mrf.mxu0
        %1677 = vmatprep.mubr.f32.mxu0 0.0
        %1678 = vmatmul.mubr.f32.gmra.mxu0 %v866
        %v1679 = vpop.f32.mrf.mxu0
        %v1680 = vadd.f32 0.0, %v1679
        %v1681 = vpop.f32.mrf.mxu0
        %1682 = vmatprep.mubr.f32.mxu0 0.0
        %1683 = vmatmul.mubr.f32.gmra.mxu0 %v868
        %v1684 = vpop.f32.mrf.mxu0
        %v1685 = vadd.f32 0.0, %v1684
        %v1686 = vpop.f32.mrf.mxu0
        %1687 = vmatprep.mubr.f32.mxu0 0.0
        %1688 = vmatmul.mubr.f32.gmra.mxu0 %v870
        %v1689 = vpop.f32.mrf.mxu0
        %v1690 = vadd.f32 0.0, %v1689
        %v1691 = vpop.f32.mrf.mxu0
        %1692 = vmatprep.mubr.f32.mxu0 0.0
        %1693 = vmatmul.mubr.f32.gmra.mxu0 %v872
        %v1694 = vpop.f32.mrf.mxu0
        %v1695 = vadd.f32 0.0, %v1694
        %v1696 = vpop.f32.mrf.mxu0
        %1697 = vmatprep.mubr.f32.mxu0 0.0
        %1698 = vmatmul.mubr.f32.gmra.mxu0 %v874
        %v1699 = vpop.f32.mrf.mxu0
        %v1700 = vadd.f32 0.0, %v1699
        %v1701 = vpop.f32.mrf.mxu0
        %1702 = vmatprep.mubr.f32.mxu0 0.0
        %1703 = vmatmul.mubr.f32.gmra.mxu0 %v876
        %v1704 = vpop.f32.mrf.mxu0
        %v1705 = vadd.f32 0.0, %v1704
        %v1706 = vpop.f32.mrf.mxu0
        %1707 = vmatprep.mubr.f32.mxu0 0.0
        %1708 = vmatmul.mubr.f32.gmra.mxu0 %v878
        %v1709 = vpop.f32.mrf.mxu0
        %v1710 = vadd.f32 0.0, %v1709
        %v1711 = vpop.f32.mrf.mxu0
        %1712 = vmatprep.mubr.f32.mxu0 0.0
        %1713 = vmatmul.mubr.f32.gmra.mxu0 %v880
        %v1714 = vpop.f32.mrf.mxu0
        %v1715 = vadd.f32 0.0, %v1714
        %v1716 = vpop.f32.mrf.mxu0
        %1717 = vmatprep.mubr.f32.mxu0 0.0
        %1718 = vmatmul.mubr.f32.gmra.mxu0 %v882
        %v1719 = vpop.f32.mrf.mxu0
        %v1720 = vadd.f32 0.0, %v1719
        %v1721 = vpop.f32.mrf.mxu0
        %1722 = vmatprep.mubr.f32.mxu0 0.0
        %1723 = vmatmul.mubr.f32.gmra.mxu0 %v884
        %v1724 = vpop.f32.mrf.mxu0
        %v1725 = vadd.f32 0.0, %v1724
        %v1726 = vpop.f32.mrf.mxu0
        %1727 = vmatprep.mubr.f32.mxu0 0.0
        %1728 = vmatmul.mubr.f32.gmra.mxu0 %v886
        %v1729 = vpop.f32.mrf.mxu0
        %v1730 = vadd.f32 0.0, %v1729
        %v1731 = vpop.f32.mrf.mxu0
        %1732 = vmatprep.mubr.f32.mxu0 0.0
        %1733 = vmatmul.mubr.f32.gmra.mxu0 %v888
        %v1734 = vpop.f32.mrf.mxu0
        %v1735 = vadd.f32 0.0, %v1734
        %v1736 = vpop.f32.mrf.mxu0
        %1737 = vmatprep.mubr.f32.mxu0 0.0
        %1738 = vmatmul.mubr.f32.gmra.mxu0 %v890
        %v1739 = vpop.f32.mrf.mxu0
        %v1740 = vadd.f32 0.0, %v1739
        %v1741 = vpop.f32.mrf.mxu0
        %1742 = vmatprep.mubr.f32.mxu0 0.0
        %1743 = vmatmul.mubr.f32.gmra.mxu0 %v892
        %v1744 = vpop.f32.mrf.mxu0
        %v1745 = vadd.f32 0.0, %v1744
        %v1746 = vpop.f32.mrf.mxu0
        %1747 = vmatprep.mubr.f32.mxu0 0.0
        %1748 = vmatmul.mubr.f32.gmra.mxu0 %v894
        %v1749 = vpop.f32.mrf.mxu0
        %v1750 = vadd.f32 0.0, %v1749
        %v1751 = vpop.f32.mrf.mxu0
        %1752 = vmatprep.mubr.f32.mxu0 0.0
        %1753 = vmatmul.mubr.f32.gmra.mxu0 %v1530
        %v1754 = vpop.f32.mrf.mxu0
        %v1755 = vadd.f32 0.0, %v1754
        %v1756 = vpop.f32.mrf.mxu0
        %1757 = vmatprep.mubr.f32.mxu0 0.0
        %1758 = vmatmul.mubr.f32.gmra.mxu0 %v1533
        %v1759 = vpop.f32.mrf.mxu0
        %v1760 = vadd.f32 0.0, %v1759
        %v1761 = vpop.f32.mrf.mxu0
        %1762 = vdwg.mxu0
        %v1763 = vadd.f32 %v1497, %v1605
        %v1764 = vadd.f32 %v1498, %v1610
        %v1765 = vadd.f32 %v1499, %v1615
        %v1766 = vadd.f32 %v1500, %v1620
        %v1767 = vadd.f32 %v1501, %v1625
        %v1768 = vadd.f32 %v1502, %v1630
        %v1769 = vadd.f32 %v1503, %v1635
        %v1770 = vadd.f32 %v1504, %v1640
        %v1771 = vadd.f32 %v1505, %v1645
        %v1772 = vadd.f32 %v1506, %v1650
        %v1773 = vadd.f32 %v1507, %v1655
        %v1774 = vadd.f32 %v1508, %v1660
        %v1775 = vadd.f32 %v1509, %v1665
        %v1776 = vadd.f32 %v1510, %v1670
        %v1777 = vadd.f32 %v1511, %v1675
        %v1778 = vadd.f32 %v1512, %v1680
        %v1779 = vadd.f32 %v1513, %v1685
        %v1780 = vadd.f32 %v1514, %v1690
        %v1781 = vadd.f32 %v1515, %v1695
        %v1782 = vadd.f32 %v1516, %v1700
        %v1783 = vadd.f32 %v1517, %v1705
        %v1784 = vadd.f32 %v1518, %v1710
        %v1785 = vadd.f32 %v1519, %v1715
        %v1786 = vadd.f32 %v1520, %v1720
        %v1787 = vadd.f32 %v1521, %v1725
        %v1788 = vadd.f32 %v1522, %v1730
        %v1789 = vadd.f32 %v1523, %v1735
        %v1790 = vadd.f32 %v1524, %v1740
        %v1791 = vadd.f32 %v1525, %v1745
        %v1792 = vadd.f32 %v1526, %v1750
        %v1793 = vadd.f32 %v1527, %v1755
        %v1794 = vadd.f32 %v1528, %v1760
        %v1796 = vrot.slane %v394, 1
        %v1797 = vrot.slane %v395, 1
        %v1798 = vsel %vm457, %v1796, %v1797
        %v1799 = vrot.slane %v396, 1
        %v1800 = vsel %vm457, %v1797, %v1799
        %v1801 = vsel %vm538, %v1798, 0
        %v1803 = vsel %vm538, %v1800, 0
        %v1806 = vsel %vm603, %v404, 0
        %1808 = vmatprep.subr.mxu0 0.0
        %1809 = vmatpush1.msra.mxu0 0.0
        %1810 = vmatprep.subr.mxu0 0.0
        %1811 = vmatpush1.msra.mxu0 0.0
        %1812 = vmatprep.subr.mxu0 0.0
        %1813 = vmatpush1.msra.mxu0 0.0
        %1814 = vmatprep.subr.mxu0 0.0
        %1815 = vmatpush1.msra.mxu0 0.0
        %1816 = vmatprep.subr.mxu0 0.0
        %1817 = vmatpush1.msra.mxu0 0.0
        %1818 = vmatprep.subr.mxu0 0.0
        %1819 = vmatpush1.msra.mxu0 0.0
        %1820 = vmatprep.subr.mxu0 0.0
        %1821 = vmatpush1.msra.mxu0 0.0
        %1822 = vmatprep.subr.mxu0 0.0
        %1823 = vmatpush1.msra.mxu0 0.0
        %1824 = vmatprep.subr.mxu0 0.0
        %1825 = vmatpush1.msra.mxu0 0.0
        %1826 = vmatprep.subr.mxu0 0.0
        %1827 = vmatpush1.msra.mxu0 0.0
        %1828 = vmatprep.subr.mxu0 0.0
        %1829 = vmatpush1.msra.mxu0 0.0
        %1830 = vmatprep.subr.mxu0 0.0
        %1831 = vmatpush1.msra.mxu0 0.0
        %1832 = vmatprep.subr.mxu0 0.0
        %1833 = vmatpush1.msra.mxu0 0.0
        %1834 = vmatprep.subr.mxu0 0.0
        %1835 = vmatpush1.msra.mxu0 0.0
        %1836 = vmatprep.subr.mxu0 0.0
        %1837 = vmatpush1.msra.mxu0 0.0
        %1838 = vmatprep.subr.mxu0 0.0
        %1839 = vmatpush1.msra.mxu0 %v1806
        %1840 = vmatprep.subr.mxu0 0.0
        %1841 = vmatpush2.msra.mxu0 0.0
        %1842 = vmatprep.subr.mxu0 0.0
        %1843 = vmatpush2.msra.mxu0 0.0
        %1844 = vmatprep.subr.mxu0 0.0
        %1845 = vmatpush2.msra.mxu0 0.0
        %1846 = vmatprep.subr.mxu0 0.0
        %1847 = vmatpush2.msra.mxu0 0.0
        %1848 = vmatprep.subr.mxu0 0.0
        %1849 = vmatpush2.msra.mxu0 0.0
        %1850 = vmatprep.subr.mxu0 0.0
        %1851 = vmatpush2.msra.mxu0 0.0
        %1852 = vmatprep.subr.mxu0 0.0
        %1853 = vmatpush2.msra.mxu0 0.0
        %1854 = vmatprep.subr.mxu0 0.0
        %1855 = vmatpush2.msra.mxu0 0.0
        %1856 = vmatprep.subr.mxu0 0.0
        %1857 = vmatpush2.msra.mxu0 0.0
        %1858 = vmatprep.subr.mxu0 0.0
        %1859 = vmatpush2.msra.mxu0 0.0
        %1860 = vmatprep.subr.mxu0 0.0
        %1861 = vmatpush2.msra.mxu0 0.0
        %1862 = vmatprep.subr.mxu0 0.0
        %1863 = vmatpush2.msra.mxu0 0.0
        %1864 = vmatprep.subr.mxu0 0.0
        %1865 = vmatpush2.msra.mxu0 0.0
        %1866 = vmatprep.subr.mxu0 0.0
        %1867 = vmatpush2.msra.mxu0 0.0
        %1868 = vmatprep.subr.mxu0 0.0
        %1869 = vmatpush2.msra.mxu0 0.0
        %1870 = vmatprep.subr.mxu0 0.0
        %1871 = vmatpush2.msra.mxu0 0.0
        %1872 = vmatprep.mubr.f32.mxu0 0.0
        %1873 = vmatmul.mubr.f32.gmra.mxu0 %v543
        %v1874 = vpop.f32.mrf.mxu0
        %v1875 = vadd.f32 0.0, %v1874
        %v1876 = vpop.f32.mrf.mxu0
        %1877 = vmatprep.mubr.f32.mxu0 0.0
        %1878 = vmatmul.mubr.f32.gmra.mxu0 %v545
        %v1879 = vpop.f32.mrf.mxu0
        %v1880 = vadd.f32 0.0, %v1879
        %v1881 = vpop.f32.mrf.mxu0
        %1882 = vmatprep.mubr.f32.mxu0 0.0
        %1883 = vmatmul.mubr.f32.gmra.mxu0 %v547
        %v1884 = vpop.f32.mrf.mxu0
        %v1885 = vadd.f32 0.0, %v1884
        %v1886 = vpop.f32.mrf.mxu0
        %1887 = vmatprep.mubr.f32.mxu0 0.0
        %1888 = vmatmul.mubr.f32.gmra.mxu0 %v549
        %v1889 = vpop.f32.mrf.mxu0
        %v1890 = vadd.f32 0.0, %v1889
        %v1891 = vpop.f32.mrf.mxu0
        %1892 = vmatprep.mubr.f32.mxu0 0.0
        %1893 = vmatmul.mubr.f32.gmra.mxu0 %v551
        %v1894 = vpop.f32.mrf.mxu0
        %v1895 = vadd.f32 0.0, %v1894
        %v1896 = vpop.f32.mrf.mxu0
        %1897 = vmatprep.mubr.f32.mxu0 0.0
        %1898 = vmatmul.mubr.f32.gmra.mxu0 %v553
        %v1899 = vpop.f32.mrf.mxu0
        %v1900 = vadd.f32 0.0, %v1899
        %v1901 = vpop.f32.mrf.mxu0
        %1902 = vmatprep.mubr.f32.mxu0 0.0
        %1903 = vmatmul.mubr.f32.gmra.mxu0 %v555
        %v1904 = vpop.f32.mrf.mxu0
        %v1905 = vadd.f32 0.0, %v1904
        %v1906 = vpop.f32.mrf.mxu0
        %1907 = vmatprep.mubr.f32.mxu0 0.0
        %1908 = vmatmul.mubr.f32.gmra.mxu0 %v557
        %v1909 = vpop.f32.mrf.mxu0
        %v1910 = vadd.f32 0.0, %v1909
        %v1911 = vpop.f32.mrf.mxu0
        %1912 = vmatprep.mubr.f32.mxu0 0.0
        %1913 = vmatmul.mubr.f32.gmra.mxu0 %v559
        %v1914 = vpop.f32.mrf.mxu0
        %v1915 = vadd.f32 0.0, %v1914
        %v1916 = vpop.f32.mrf.mxu0
        %1917 = vmatprep.mubr.f32.mxu0 0.0
        %1918 = vmatmul.mubr.f32.gmra.mxu0 %v561
        %v1919 = vpop.f32.mrf.mxu0
        %v1920 = vadd.f32 0.0, %v1919
        %v1921 = vpop.f32.mrf.mxu0
        %1922 = vmatprep.mubr.f32.mxu0 0.0
        %1923 = vmatmul.mubr.f32.gmra.mxu0 %v563
        %v1924 = vpop.f32.mrf.mxu0
        %v1925 = vadd.f32 0.0, %v1924
        %v1926 = vpop.f32.mrf.mxu0
        %1927 = vmatprep.mubr.f32.mxu0 0.0
        %1928 = vmatmul.mubr.f32.gmra.mxu0 %v565
        %v1929 = vpop.f32.mrf.mxu0
        %v1930 = vadd.f32 0.0, %v1929
        %v1931 = vpop.f32.mrf.mxu0
        %1932 = vmatprep.mubr.f32.mxu0 0.0
        %1933 = vmatmul.mubr.f32.gmra.mxu0 %v567
        %v1934 = vpop.f32.mrf.mxu0
        %v1935 = vadd.f32 0.0, %v1934
        %v1936 = vpop.f32.mrf.mxu0
        %1937 = vmatprep.mubr.f32.mxu0 0.0
        %1938 = vmatmul.mubr.f32.gmra.mxu0 %v569
        %v1939 = vpop.f32.mrf.mxu0
        %v1940 = vadd.f32 0.0, %v1939
        %v1941 = vpop.f32.mrf.mxu0
        %1942 = vmatprep.mubr.f32.mxu0 0.0
        %1943 = vmatmul.mubr.f32.gmra.mxu0 %v571
        %v1944 = vpop.f32.mrf.mxu0
        %v1945 = vadd.f32 0.0, %v1944
        %v1946 = vpop.f32.mrf.mxu0
        %1947 = vmatprep.mubr.f32.mxu0 0.0
        %1948 = vmatmul.mubr.f32.gmra.mxu0 %v573
        %v1949 = vpop.f32.mrf.mxu0
        %v1950 = vadd.f32 0.0, %v1949
        %v1951 = vpop.f32.mrf.mxu0
        %1952 = vmatprep.mubr.f32.mxu0 0.0
        %1953 = vmatmul.mubr.f32.gmra.mxu0 %v575
        %v1954 = vpop.f32.mrf.mxu0
        %v1955 = vadd.f32 0.0, %v1954
        %v1956 = vpop.f32.mrf.mxu0
        %1957 = vmatprep.mubr.f32.mxu0 0.0
        %1958 = vmatmul.mubr.f32.gmra.mxu0 %v577
        %v1959 = vpop.f32.mrf.mxu0
        %v1960 = vadd.f32 0.0, %v1959
        %v1961 = vpop.f32.mrf.mxu0
        %1962 = vmatprep.mubr.f32.mxu0 0.0
        %1963 = vmatmul.mubr.f32.gmra.mxu0 %v579
        %v1964 = vpop.f32.mrf.mxu0
        %v1965 = vadd.f32 0.0, %v1964
        %v1966 = vpop.f32.mrf.mxu0
        %1967 = vmatprep.mubr.f32.mxu0 0.0
        %1968 = vmatmul.mubr.f32.gmra.mxu0 %v581
        %v1969 = vpop.f32.mrf.mxu0
        %v1970 = vadd.f32 0.0, %v1969
        %v1971 = vpop.f32.mrf.mxu0
        %1972 = vmatprep.mubr.f32.mxu0 0.0
        %1973 = vmatmul.mubr.f32.gmra.mxu0 %v583
        %v1974 = vpop.f32.mrf.mxu0
        %v1975 = vadd.f32 0.0, %v1974
        %v1976 = vpop.f32.mrf.mxu0
        %1977 = vmatprep.mubr.f32.mxu0 0.0
        %1978 = vmatmul.mubr.f32.gmra.mxu0 %v585
        %v1979 = vpop.f32.mrf.mxu0
        %v1980 = vadd.f32 0.0, %v1979
        %v1981 = vpop.f32.mrf.mxu0
        %1982 = vmatprep.mubr.f32.mxu0 0.0
        %1983 = vmatmul.mubr.f32.gmra.mxu0 %v587
        %v1984 = vpop.f32.mrf.mxu0
        %v1985 = vadd.f32 0.0, %v1984
        %v1986 = vpop.f32.mrf.mxu0
        %1987 = vmatprep.mubr.f32.mxu0 0.0
        %1988 = vmatmul.mubr.f32.gmra.mxu0 %v589
        %v1989 = vpop.f32.mrf.mxu0
        %v1990 = vadd.f32 0.0, %v1989
        %v1991 = vpop.f32.mrf.mxu0
        %1992 = vmatprep.mubr.f32.mxu0 0.0
        %1993 = vmatmul.mubr.f32.gmra.mxu0 %v591
        %v1994 = vpop.f32.mrf.mxu0
        %v1995 = vadd.f32 0.0, %v1994
        %v1996 = vpop.f32.mrf.mxu0
        %1997 = vmatprep.mubr.f32.mxu0 0.0
        %1998 = vmatmul.mubr.f32.gmra.mxu0 %v593
        %v1999 = vpop.f32.mrf.mxu0
        %v2000 = vadd.f32 0.0, %v1999
        %v2001 = vpop.f32.mrf.mxu0
        %2002 = vmatprep.mubr.f32.mxu0 0.0
        %2003 = vmatmul.mubr.f32.gmra.mxu0 %v595
        %v2004 = vpop.f32.mrf.mxu0
        %v2005 = vadd.f32 0.0, %v2004
        %v2006 = vpop.f32.mrf.mxu0
        %2007 = vmatprep.mubr.f32.mxu0 0.0
        %2008 = vmatmul.mubr.f32.gmra.mxu0 %v597
        %v2009 = vpop.f32.mrf.mxu0
        %v2010 = vadd.f32 0.0, %v2009
        %v2011 = vpop.f32.mrf.mxu0
        %2012 = vmatprep.mubr.f32.mxu0 0.0
        %2013 = vmatmul.mubr.f32.gmra.mxu0 %v599
        %v2014 = vpop.f32.mrf.mxu0
        %v2015 = vadd.f32 0.0, %v2014
        %v2016 = vpop.f32.mrf.mxu0
        %2017 = vmatprep.mubr.f32.mxu0 0.0
        %2018 = vmatmul.mubr.f32.gmra.mxu0 %v601
        %v2019 = vpop.f32.mrf.mxu0
        %v2020 = vadd.f32 0.0, %v2019
        %v2021 = vpop.f32.mrf.mxu0
        %2022 = vmatprep.mubr.f32.mxu0 0.0
        %2023 = vmatmul.mubr.f32.gmra.mxu0 %v1801
        %v2024 = vpop.f32.mrf.mxu0
        %v2025 = vadd.f32 0.0, %v2024
        %v2026 = vpop.f32.mrf.mxu0
        %2027 = vmatprep.mubr.f32.mxu0 0.0
        %2028 = vmatmul.mubr.f32.gmra.mxu0 %v1803
        %v2029 = vpop.f32.mrf.mxu0
        %v2030 = vadd.f32 0.0, %v2029
        %v2031 = vpop.f32.mrf.mxu0
        %2032 = vdwg.mxu0
        %v2033 = vadd.f32 %v1763, %v1875
        %v2034 = vadd.f32 %v1764, %v1880
        %v2035 = vadd.f32 %v1765, %v1885
        %v2036 = vadd.f32 %v1766, %v1890
        %v2037 = vadd.f32 %v1767, %v1895
        %v2038 = vadd.f32 %v1768, %v1900
        %v2039 = vadd.f32 %v1769, %v1905
        %v2040 = vadd.f32 %v1770, %v1910
        %v2041 = vadd.f32 %v1771, %v1915
        %v2042 = vadd.f32 %v1772, %v1920
        %v2043 = vadd.f32 %v1773, %v1925
        %v2044 = vadd.f32 %v1774, %v1930
        %v2045 = vadd.f32 %v1775, %v1935
        %v2046 = vadd.f32 %v1776, %v1940
        %v2047 = vadd.f32 %v1777, %v1945
        %v2048 = vadd.f32 %v1778, %v1950
        %v2049 = vadd.f32 %v1779, %v1955
        %v2050 = vadd.f32 %v1780, %v1960
        %v2051 = vadd.f32 %v1781, %v1965
        %v2052 = vadd.f32 %v1782, %v1970
        %v2053 = vadd.f32 %v1783, %v1975
        %v2054 = vadd.f32 %v1784, %v1980
        %v2055 = vadd.f32 %v1785, %v1985
        %v2056 = vadd.f32 %v1786, %v1990
        %v2057 = vadd.f32 %v1787, %v1995
        %v2058 = vadd.f32 %v1788, %v2000
        %v2059 = vadd.f32 %v1789, %v2005
        %v2060 = vadd.f32 %v1790, %v2010
        %v2061 = vadd.f32 %v1791, %v2015
        %v2062 = vadd.f32 %v1792, %v2020
        %v2063 = vadd.f32 %v1793, %v2025
        %v2064 = vadd.f32 %v1794, %v2030
        %v2065 = vrot.slane %v394, 2
        %v2066 = vrot.slane %v395, 2
        %v2067 = vsel %vm1124, %v2065, %v2066
        %v2068 = vrot.slane %v396, 2
        %v2069 = vsel %vm1124, %v2066, %v2068
        %v2070 = vsel %vm538, %v2067, 0
        %v2072 = vsel %vm538, %v2069, 0
        %v2075 = vsel %vm603, %v405, 0
        %2077 = vmatprep.subr.mxu0 0.0
        %2078 = vmatpush1.msra.mxu0 0.0
        %2079 = vmatprep.subr.mxu0 0.0
        %2080 = vmatpush1.msra.mxu0 0.0
        %2081 = vmatprep.subr.mxu0 0.0
        %2082 = vmatpush1.msra.mxu0 0.0
        %2083 = vmatprep.subr.mxu0 0.0
        %2084 = vmatpush1.msra.mxu0 0.0
        %2085 = vmatprep.subr.mxu0 0.0
        %2086 = vmatpush1.msra.mxu0 0.0
        %2087 = vmatprep.subr.mxu0 0.0
        %2088 = vmatpush1.msra.mxu0 0.0
        %2089 = vmatprep.subr.mxu0 0.0
        %2090 = vmatpush1.msra.mxu0 0.0
        %2091 = vmatprep.subr.mxu0 0.0
        %2092 = vmatpush1.msra.mxu0 0.0
        %2093 = vmatprep.subr.mxu0 0.0
        %2094 = vmatpush1.msra.mxu0 0.0
        %2095 = vmatprep.subr.mxu0 0.0
        %2096 = vmatpush1.msra.mxu0 0.0
        %2097 = vmatprep.subr.mxu0 0.0
        %2098 = vmatpush1.msra.mxu0 0.0
        %2099 = vmatprep.subr.mxu0 0.0
        %2100 = vmatpush1.msra.mxu0 0.0
        %2101 = vmatprep.subr.mxu0 0.0
        %2102 = vmatpush1.msra.mxu0 0.0
        %2103 = vmatprep.subr.mxu0 0.0
        %2104 = vmatpush1.msra.mxu0 0.0
        %2105 = vmatprep.subr.mxu0 0.0
        %2106 = vmatpush1.msra.mxu0 0.0
        %2107 = vmatprep.subr.mxu0 0.0
        %2108 = vmatpush1.msra.mxu0 %v2075
        %2109 = vmatprep.subr.mxu0 0.0
        %2110 = vmatpush2.msra.mxu0 0.0
        %2111 = vmatprep.subr.mxu0 0.0
        %2112 = vmatpush2.msra.mxu0 0.0
        %2113 = vmatprep.subr.mxu0 0.0
        %2114 = vmatpush2.msra.mxu0 0.0
        %2115 = vmatprep.subr.mxu0 0.0
        %2116 = vmatpush2.msra.mxu0 0.0
        %2117 = vmatprep.subr.mxu0 0.0
        %2118 = vmatpush2.msra.mxu0 0.0
        %2119 = vmatprep.subr.mxu0 0.0
        %2120 = vmatpush2.msra.mxu0 0.0
        %2121 = vmatprep.subr.mxu0 0.0
        %2122 = vmatpush2.msra.mxu0 0.0
        %2123 = vmatprep.subr.mxu0 0.0
        %2124 = vmatpush2.msra.mxu0 0.0
        %2125 = vmatprep.subr.mxu0 0.0
        %2126 = vmatpush2.msra.mxu0 0.0
        %2127 = vmatprep.subr.mxu0 0.0
        %2128 = vmatpush2.msra.mxu0 0.0
        %2129 = vmatprep.subr.mxu0 0.0
        %2130 = vmatpush2.msra.mxu0 0.0
        %2131 = vmatprep.subr.mxu0 0.0
        %2132 = vmatpush2.msra.mxu0 0.0
        %2133 = vmatprep.subr.mxu0 0.0
        %2134 = vmatpush2.msra.mxu0 0.0
        %2135 = vmatprep.subr.mxu0 0.0
        %2136 = vmatpush2.msra.mxu0 0.0
        %2137 = vmatprep.subr.mxu0 0.0
        %2138 = vmatpush2.msra.mxu0 0.0
        %2139 = vmatprep.subr.mxu0 0.0
        %2140 = vmatpush2.msra.mxu0 0.0
        %2141 = vmatprep.mubr.f32.mxu0 0.0
        %2142 = vmatmul.mubr.f32.gmra.mxu0 %v1209
        %v2143 = vpop.f32.mrf.mxu0
        %v2144 = vadd.f32 0.0, %v2143
        %v2145 = vpop.f32.mrf.mxu0
        %2146 = vmatprep.mubr.f32.mxu0 0.0
        %2147 = vmatmul.mubr.f32.gmra.mxu0 %v1211
        %v2148 = vpop.f32.mrf.mxu0
        %v2149 = vadd.f32 0.0, %v2148
        %v2150 = vpop.f32.mrf.mxu0
        %2151 = vmatprep.mubr.f32.mxu0 0.0
        %2152 = vmatmul.mubr.f32.gmra.mxu0 %v1213
        %v2153 = vpop.f32.mrf.mxu0
        %v2154 = vadd.f32 0.0, %v2153
        %v2155 = vpop.f32.mrf.mxu0
        %2156 = vmatprep.mubr.f32.mxu0 0.0
        %2157 = vmatmul.mubr.f32.gmra.mxu0 %v1215
        %v2158 = vpop.f32.mrf.mxu0
        %v2159 = vadd.f32 0.0, %v2158
        %v2160 = vpop.f32.mrf.mxu0
        %2161 = vmatprep.mubr.f32.mxu0 0.0
        %2162 = vmatmul.mubr.f32.gmra.mxu0 %v1217
        %v2163 = vpop.f32.mrf.mxu0
        %v2164 = vadd.f32 0.0, %v2163
        %v2165 = vpop.f32.mrf.mxu0
        %2166 = vmatprep.mubr.f32.mxu0 0.0
        %2167 = vmatmul.mubr.f32.gmra.mxu0 %v1219
        %v2168 = vpop.f32.mrf.mxu0
        %v2169 = vadd.f32 0.0, %v2168
        %v2170 = vpop.f32.mrf.mxu0
        %2171 = vmatprep.mubr.f32.mxu0 0.0
        %2172 = vmatmul.mubr.f32.gmra.mxu0 %v1221
        %v2173 = vpop.f32.mrf.mxu0
        %v2174 = vadd.f32 0.0, %v2173
        %v2175 = vpop.f32.mrf.mxu0
        %2176 = vmatprep.mubr.f32.mxu0 0.0
        %2177 = vmatmul.mubr.f32.gmra.mxu0 %v1223
        %v2178 = vpop.f32.mrf.mxu0
        %v2179 = vadd.f32 0.0, %v2178
        %v2180 = vpop.f32.mrf.mxu0
        %2181 = vmatprep.mubr.f32.mxu0 0.0
        %2182 = vmatmul.mubr.f32.gmra.mxu0 %v1225
        %v2183 = vpop.f32.mrf.mxu0
        %v2184 = vadd.f32 0.0, %v2183
        %v2185 = vpop.f32.mrf.mxu0
        %2186 = vmatprep.mubr.f32.mxu0 0.0
        %2187 = vmatmul.mubr.f32.gmra.mxu0 %v1227
        %v2188 = vpop.f32.mrf.mxu0
        %v2189 = vadd.f32 0.0, %v2188
        %v2190 = vpop.f32.mrf.mxu0
        %2191 = vmatprep.mubr.f32.mxu0 0.0
        %2192 = vmatmul.mubr.f32.gmra.mxu0 %v1229
        %v2193 = vpop.f32.mrf.mxu0
        %v2194 = vadd.f32 0.0, %v2193
        %v2195 = vpop.f32.mrf.mxu0
        %2196 = vmatprep.mubr.f32.mxu0 0.0
        %2197 = vmatmul.mubr.f32.gmra.mxu0 %v1231
        %v2198 = vpop.f32.mrf.mxu0
        %v2199 = vadd.f32 0.0, %v2198
        %v2200 = vpop.f32.mrf.mxu0
        %2201 = vmatprep.mubr.f32.mxu0 0.0
        %2202 = vmatmul.mubr.f32.gmra.mxu0 %v1233
        %v2203 = vpop.f32.mrf.mxu0
        %v2204 = vadd.f32 0.0, %v2203
        %v2205 = vpop.f32.mrf.mxu0
        %2206 = vmatprep.mubr.f32.mxu0 0.0
        %2207 = vmatmul.mubr.f32.gmra.mxu0 %v1235
        %v2208 = vpop.f32.mrf.mxu0
        %v2209 = vadd.f32 0.0, %v2208
        %v2210 = vpop.f32.mrf.mxu0
        %2211 = vmatprep.mubr.f32.mxu0 0.0
        %2212 = vmatmul.mubr.f32.gmra.mxu0 %v1237
        %v2213 = vpop.f32.mrf.mxu0
        %v2214 = vadd.f32 0.0, %v2213
        %v2215 = vpop.f32.mrf.mxu0
        %2216 = vmatprep.mubr.f32.mxu0 0.0
        %2217 = vmatmul.mubr.f32.gmra.mxu0 %v1239
        %v2218 = vpop.f32.mrf.mxu0
        %v2219 = vadd.f32 0.0, %v2218
        %v2220 = vpop.f32.mrf.mxu0
        %2221 = vmatprep.mubr.f32.mxu0 0.0
        %2222 = vmatmul.mubr.f32.gmra.mxu0 %v1241
        %v2223 = vpop.f32.mrf.mxu0
        %v2224 = vadd.f32 0.0, %v2223
        %v2225 = vpop.f32.mrf.mxu0
        %2226 = vmatprep.mubr.f32.mxu0 0.0
        %2227 = vmatmul.mubr.f32.gmra.mxu0 %v1243
        %v2228 = vpop.f32.mrf.mxu0
        %v2229 = vadd.f32 0.0, %v2228
        %v2230 = vpop.f32.mrf.mxu0
        %2231 = vmatprep.mubr.f32.mxu0 0.0
        %2232 = vmatmul.mubr.f32.gmra.mxu0 %v1245
        %v2233 = vpop.f32.mrf.mxu0
        %v2234 = vadd.f32 0.0, %v2233
        %v2235 = vpop.f32.mrf.mxu0
        %2236 = vmatprep.mubr.f32.mxu0 0.0
        %2237 = vmatmul.mubr.f32.gmra.mxu0 %v1247
        %v2238 = vpop.f32.mrf.mxu0
        %v2239 = vadd.f32 0.0, %v2238
        %v2240 = vpop.f32.mrf.mxu0
        %2241 = vmatprep.mubr.f32.mxu0 0.0
        %2242 = vmatmul.mubr.f32.gmra.mxu0 %v1249
        %v2243 = vpop.f32.mrf.mxu0
        %v2244 = vadd.f32 0.0, %v2243
        %v2245 = vpop.f32.mrf.mxu0
        %2246 = vmatprep.mubr.f32.mxu0 0.0
        %2247 = vmatmul.mubr.f32.gmra.mxu0 %v1251
        %v2248 = vpop.f32.mrf.mxu0
        %v2249 = vadd.f32 0.0, %v2248
        %v2250 = vpop.f32.mrf.mxu0
        %2251 = vmatprep.mubr.f32.mxu0 0.0
        %2252 = vmatmul.mubr.f32.gmra.mxu0 %v1253
        %v2253 = vpop.f32.mrf.mxu0
        %v2254 = vadd.f32 0.0, %v2253
        %v2255 = vpop.f32.mrf.mxu0
        %2256 = vmatprep.mubr.f32.mxu0 0.0
        %2257 = vmatmul.mubr.f32.gmra.mxu0 %v1255
        %v2258 = vpop.f32.mrf.mxu0
        %v2259 = vadd.f32 0.0, %v2258
        %v2260 = vpop.f32.mrf.mxu0
        %2261 = vmatprep.mubr.f32.mxu0 0.0
        %2262 = vmatmul.mubr.f32.gmra.mxu0 %v1257
        %v2263 = vpop.f32.mrf.mxu0
        %v2264 = vadd.f32 0.0, %v2263
        %v2265 = vpop.f32.mrf.mxu0
        %2266 = vmatprep.mubr.f32.mxu0 0.0
        %2267 = vmatmul.mubr.f32.gmra.mxu0 %v1259
        %v2268 = vpop.f32.mrf.mxu0
        %v2269 = vadd.f32 0.0, %v2268
        %v2270 = vpop.f32.mrf.mxu0
        %2271 = vmatprep.mubr.f32.mxu0 0.0
        %2272 = vmatmul.mubr.f32.gmra.mxu0 %v1261
        %v2273 = vpop.f32.mrf.mxu0
        %v2274 = vadd.f32 0.0, %v2273
        %v2275 = vpop.f32.mrf.mxu0
        %2276 = vmatprep.mubr.f32.mxu0 0.0
        %2277 = vmatmul.mubr.f32.gmra.mxu0 %v1263
        %v2278 = vpop.f32.mrf.mxu0
        %v2279 = vadd.f32 0.0, %v2278
        %v2280 = vpop.f32.mrf.mxu0
        %2281 = vmatprep.mubr.f32.mxu0 0.0
        %2282 = vmatmul.mubr.f32.gmra.mxu0 %v1265
        %v2283 = vpop.f32.mrf.mxu0
        %v2284 = vadd.f32 0.0, %v2283
        %v2285 = vpop.f32.mrf.mxu0
        %2286 = vmatprep.mubr.f32.mxu0 0.0
        %2287 = vmatmul.mubr.f32.gmra.mxu0 %v1267
        %v2288 = vpop.f32.mrf.mxu0
        %v2289 = vadd.f32 0.0, %v2288
        %v2290 = vpop.f32.mrf.mxu0
        %2291 = vmatprep.mubr.f32.mxu0 0.0
        %2292 = vmatmul.mubr.f32.gmra.mxu0 %v2070
        %v2293 = vpop.f32.mrf.mxu0
        %v2294 = vadd.f32 0.0, %v2293
        %v2295 = vpop.f32.mrf.mxu0
        %2296 = vmatprep.mubr.f32.mxu0 0.0
        %2297 = vmatmul.mubr.f32.gmra.mxu0 %v2072
        %v2298 = vpop.f32.mrf.mxu0
        %v2299 = vadd.f32 0.0, %v2298
        %v2300 = vpop.f32.mrf.mxu0
        %2301 = vdwg.mxu0
        %v2302 = vadd.f32 %v2033, %v2144
        %v2303 = vadd.f32 %v2034, %v2149
        %v2304 = vadd.f32 %v2035, %v2154
        %v2305 = vadd.f32 %v2036, %v2159
        %v2306 = vadd.f32 %v2037, %v2164
        %v2307 = vadd.f32 %v2038, %v2169
        %v2308 = vadd.f32 %v2039, %v2174
        %v2309 = vadd.f32 %v2040, %v2179
        %v2310 = vadd.f32 %v2041, %v2184
        %v2311 = vadd.f32 %v2042, %v2189
        %v2312 = vadd.f32 %v2043, %v2194
        %v2313 = vadd.f32 %v2044, %v2199
        %v2314 = vadd.f32 %v2045, %v2204
        %v2315 = vadd.f32 %v2046, %v2209
        %v2316 = vadd.f32 %v2047, %v2214
        %v2317 = vadd.f32 %v2048, %v2219
        %v2318 = vadd.f32 %v2049, %v2224
        %v2319 = vadd.f32 %v2050, %v2229
        %v2320 = vadd.f32 %v2051, %v2234
        %v2321 = vadd.f32 %v2052, %v2239
        %v2322 = vadd.f32 %v2053, %v2244
        %v2323 = vadd.f32 %v2054, %v2249
        %v2324 = vadd.f32 %v2055, %v2254
        %v2325 = vadd.f32 %v2056, %v2259
        %v2326 = vadd.f32 %v2057, %v2264
        %v2327 = vadd.f32 %v2058, %v2269
        %v2328 = vadd.f32 %v2059, %v2274
        %v2329 = vadd.f32 %v2060, %v2279
        %v2330 = vadd.f32 %v2061, %v2284
        %v2331 = vadd.f32 %v2062, %v2289
        %v2332 = vadd.f32 %v2063, %v2294
        %v2333 = vadd.f32 %v2064, %v2299
        %v2335 = vsel %vm538, %v397, 0
        %v2338 = vsel %vm538, %v398, 0
        %v2341 = vsel %vm603, %v406, 0
        %2343 = vmatprep.subr.mxu0 0.0
        %2344 = vmatpush1.msra.mxu0 0.0
        %2345 = vmatprep.subr.mxu0 0.0
        %2346 = vmatpush1.msra.mxu0 0.0
        %2347 = vmatprep.subr.mxu0 0.0
        %2348 = vmatpush1.msra.mxu0 0.0
        %2349 = vmatprep.subr.mxu0 0.0
        %2350 = vmatpush1.msra.mxu0 0.0
        %2351 = vmatprep.subr.mxu0 0.0
        %2352 = vmatpush1.msra.mxu0 0.0
        %2353 = vmatprep.subr.mxu0 0.0
        %2354 = vmatpush1.msra.mxu0 0.0
        %2355 = vmatprep.subr.mxu0 0.0
        %2356 = vmatpush1.msra.mxu0 0.0
        %2357 = vmatprep.subr.mxu0 0.0
        %2358 = vmatpush1.msra.mxu0 0.0
        %2359 = vmatprep.subr.mxu0 0.0
        %2360 = vmatpush1.msra.mxu0 0.0
        %2361 = vmatprep.subr.mxu0 0.0
        %2362 = vmatpush1.msra.mxu0 0.0
        %2363 = vmatprep.subr.mxu0 0.0
        %2364 = vmatpush1.msra.mxu0 0.0
        %2365 = vmatprep.subr.mxu0 0.0
        %2366 = vmatpush1.msra.mxu0 0.0
        %2367 = vmatprep.subr.mxu0 0.0
        %2368 = vmatpush1.msra.mxu0 0.0
        %2369 = vmatprep.subr.mxu0 0.0
        %2370 = vmatpush1.msra.mxu0 0.0
        %2371 = vmatprep.subr.mxu0 0.0
        %2372 = vmatpush1.msra.mxu0 0.0
        %2373 = vmatprep.subr.mxu0 0.0
        %2374 = vmatpush1.msra.mxu0 %v2341
        %2375 = vmatprep.subr.mxu0 0.0
        %2376 = vmatpush2.msra.mxu0 0.0
        %2377 = vmatprep.subr.mxu0 0.0
        %2378 = vmatpush2.msra.mxu0 0.0
        %2379 = vmatprep.subr.mxu0 0.0
        %2380 = vmatpush2.msra.mxu0 0.0
        %2381 = vmatprep.subr.mxu0 0.0
        %2382 = vmatpush2.msra.mxu0 0.0
        %2383 = vmatprep.subr.mxu0 0.0
        %2384 = vmatpush2.msra.mxu0 0.0
        %2385 = vmatprep.subr.mxu0 0.0
        %2386 = vmatpush2.msra.mxu0 0.0
        %2387 = vmatprep.subr.mxu0 0.0
        %2388 = vmatpush2.msra.mxu0 0.0
        %2389 = vmatprep.subr.mxu0 0.0
        %2390 = vmatpush2.msra.mxu0 0.0
        %2391 = vmatprep.subr.mxu0 0.0
        %2392 = vmatpush2.msra.mxu0 0.0
        %2393 = vmatprep.subr.mxu0 0.0
        %2394 = vmatpush2.msra.mxu0 0.0
        %2395 = vmatprep.subr.mxu0 0.0
        %2396 = vmatpush2.msra.mxu0 0.0
        %2397 = vmatprep.subr.mxu0 0.0
        %2398 = vmatpush2.msra.mxu0 0.0
        %2399 = vmatprep.subr.mxu0 0.0
        %2400 = vmatpush2.msra.mxu0 0.0
        %2401 = vmatprep.subr.mxu0 0.0
        %2402 = vmatpush2.msra.mxu0 0.0
        %2403 = vmatprep.subr.mxu0 0.0
        %2404 = vmatpush2.msra.mxu0 0.0
        %2405 = vmatprep.subr.mxu0 0.0
        %2406 = vmatpush2.msra.mxu0 0.0
        %2407 = vmatprep.mubr.f32.mxu0 0.0
        %2408 = vmatmul.mubr.f32.gmra.mxu0 %v840
        %v2409 = vpop.f32.mrf.mxu0
        %v2410 = vadd.f32 0.0, %v2409
        %v2411 = vpop.f32.mrf.mxu0
        %2412 = vmatprep.mubr.f32.mxu0 0.0
        %2413 = vmatmul.mubr.f32.gmra.mxu0 %v842
        %v2414 = vpop.f32.mrf.mxu0
        %v2415 = vadd.f32 0.0, %v2414
        %v2416 = vpop.f32.mrf.mxu0
        %2417 = vmatprep.mubr.f32.mxu0 0.0
        %2418 = vmatmul.mubr.f32.gmra.mxu0 %v844
        %v2419 = vpop.f32.mrf.mxu0
        %v2420 = vadd.f32 0.0, %v2419
        %v2421 = vpop.f32.mrf.mxu0
        %2422 = vmatprep.mubr.f32.mxu0 0.0
        %2423 = vmatmul.mubr.f32.gmra.mxu0 %v846
        %v2424 = vpop.f32.mrf.mxu0
        %v2425 = vadd.f32 0.0, %v2424
        %v2426 = vpop.f32.mrf.mxu0
        %2427 = vmatprep.mubr.f32.mxu0 0.0
        %2428 = vmatmul.mubr.f32.gmra.mxu0 %v848
        %v2429 = vpop.f32.mrf.mxu0
        %v2430 = vadd.f32 0.0, %v2429
        %v2431 = vpop.f32.mrf.mxu0
        %2432 = vmatprep.mubr.f32.mxu0 0.0
        %2433 = vmatmul.mubr.f32.gmra.mxu0 %v850
        %v2434 = vpop.f32.mrf.mxu0
        %v2435 = vadd.f32 0.0, %v2434
        %v2436 = vpop.f32.mrf.mxu0
        %2437 = vmatprep.mubr.f32.mxu0 0.0
        %2438 = vmatmul.mubr.f32.gmra.mxu0 %v852
        %v2439 = vpop.f32.mrf.mxu0
        %v2440 = vadd.f32 0.0, %v2439
        %v2441 = vpop.f32.mrf.mxu0
        %2442 = vmatprep.mubr.f32.mxu0 0.0
        %2443 = vmatmul.mubr.f32.gmra.mxu0 %v854
        %v2444 = vpop.f32.mrf.mxu0
        %v2445 = vadd.f32 0.0, %v2444
        %v2446 = vpop.f32.mrf.mxu0
        %2447 = vmatprep.mubr.f32.mxu0 0.0
        %2448 = vmatmul.mubr.f32.gmra.mxu0 %v856
        %v2449 = vpop.f32.mrf.mxu0
        %v2450 = vadd.f32 0.0, %v2449
        %v2451 = vpop.f32.mrf.mxu0
        %2452 = vmatprep.mubr.f32.mxu0 0.0
        %2453 = vmatmul.mubr.f32.gmra.mxu0 %v858
        %v2454 = vpop.f32.mrf.mxu0
        %v2455 = vadd.f32 0.0, %v2454
        %v2456 = vpop.f32.mrf.mxu0
        %2457 = vmatprep.mubr.f32.mxu0 0.0
        %2458 = vmatmul.mubr.f32.gmra.mxu0 %v860
        %v2459 = vpop.f32.mrf.mxu0
        %v2460 = vadd.f32 0.0, %v2459
        %v2461 = vpop.f32.mrf.mxu0
        %2462 = vmatprep.mubr.f32.mxu0 0.0
        %2463 = vmatmul.mubr.f32.gmra.mxu0 %v862
        %v2464 = vpop.f32.mrf.mxu0
        %v2465 = vadd.f32 0.0, %v2464
        %v2466 = vpop.f32.mrf.mxu0
        %2467 = vmatprep.mubr.f32.mxu0 0.0
        %2468 = vmatmul.mubr.f32.gmra.mxu0 %v864
        %v2469 = vpop.f32.mrf.mxu0
        %v2470 = vadd.f32 0.0, %v2469
        %v2471 = vpop.f32.mrf.mxu0
        %2472 = vmatprep.mubr.f32.mxu0 0.0
        %2473 = vmatmul.mubr.f32.gmra.mxu0 %v866
        %v2474 = vpop.f32.mrf.mxu0
        %v2475 = vadd.f32 0.0, %v2474
        %v2476 = vpop.f32.mrf.mxu0
        %2477 = vmatprep.mubr.f32.mxu0 0.0
        %2478 = vmatmul.mubr.f32.gmra.mxu0 %v868
        %v2479 = vpop.f32.mrf.mxu0
        %v2480 = vadd.f32 0.0, %v2479
        %v2481 = vpop.f32.mrf.mxu0
        %2482 = vmatprep.mubr.f32.mxu0 0.0
        %2483 = vmatmul.mubr.f32.gmra.mxu0 %v870
        %v2484 = vpop.f32.mrf.mxu0
        %v2485 = vadd.f32 0.0, %v2484
        %v2486 = vpop.f32.mrf.mxu0
        %2487 = vmatprep.mubr.f32.mxu0 0.0
        %2488 = vmatmul.mubr.f32.gmra.mxu0 %v872
        %v2489 = vpop.f32.mrf.mxu0
        %v2490 = vadd.f32 0.0, %v2489
        %v2491 = vpop.f32.mrf.mxu0
        %2492 = vmatprep.mubr.f32.mxu0 0.0
        %2493 = vmatmul.mubr.f32.gmra.mxu0 %v874
        %v2494 = vpop.f32.mrf.mxu0
        %v2495 = vadd.f32 0.0, %v2494
        %v2496 = vpop.f32.mrf.mxu0
        %2497 = vmatprep.mubr.f32.mxu0 0.0
        %2498 = vmatmul.mubr.f32.gmra.mxu0 %v876
        %v2499 = vpop.f32.mrf.mxu0
        %v2500 = vadd.f32 0.0, %v2499
        %v2501 = vpop.f32.mrf.mxu0
        %2502 = vmatprep.mubr.f32.mxu0 0.0
        %2503 = vmatmul.mubr.f32.gmra.mxu0 %v878
        %v2504 = vpop.f32.mrf.mxu0
        %v2505 = vadd.f32 0.0, %v2504
        %v2506 = vpop.f32.mrf.mxu0
        %2507 = vmatprep.mubr.f32.mxu0 0.0
        %2508 = vmatmul.mubr.f32.gmra.mxu0 %v880
        %v2509 = vpop.f32.mrf.mxu0
        %v2510 = vadd.f32 0.0, %v2509
        %v2511 = vpop.f32.mrf.mxu0
        %2512 = vmatprep.mubr.f32.mxu0 0.0
        %2513 = vmatmul.mubr.f32.gmra.mxu0 %v882
        %v2514 = vpop.f32.mrf.mxu0
        %v2515 = vadd.f32 0.0, %v2514
        %v2516 = vpop.f32.mrf.mxu0
        %2517 = vmatprep.mubr.f32.mxu0 0.0
        %2518 = vmatmul.mubr.f32.gmra.mxu0 %v884
        %v2519 = vpop.f32.mrf.mxu0
        %v2520 = vadd.f32 0.0, %v2519
        %v2521 = vpop.f32.mrf.mxu0
        %2522 = vmatprep.mubr.f32.mxu0 0.0
        %2523 = vmatmul.mubr.f32.gmra.mxu0 %v886
        %v2524 = vpop.f32.mrf.mxu0
        %v2525 = vadd.f32 0.0, %v2524
        %v2526 = vpop.f32.mrf.mxu0
        %2527 = vmatprep.mubr.f32.mxu0 0.0
        %2528 = vmatmul.mubr.f32.gmra.mxu0 %v888
        %v2529 = vpop.f32.mrf.mxu0
        %v2530 = vadd.f32 0.0, %v2529
        %v2531 = vpop.f32.mrf.mxu0
        %2532 = vmatprep.mubr.f32.mxu0 0.0
        %2533 = vmatmul.mubr.f32.gmra.mxu0 %v890
        %v2534 = vpop.f32.mrf.mxu0
        %v2535 = vadd.f32 0.0, %v2534
        %v2536 = vpop.f32.mrf.mxu0
        %2537 = vmatprep.mubr.f32.mxu0 0.0
        %2538 = vmatmul.mubr.f32.gmra.mxu0 %v892
        %v2539 = vpop.f32.mrf.mxu0
        %v2540 = vadd.f32 0.0, %v2539
        %v2541 = vpop.f32.mrf.mxu0
        %2542 = vmatprep.mubr.f32.mxu0 0.0
        %2543 = vmatmul.mubr.f32.gmra.mxu0 %v894
        %v2544 = vpop.f32.mrf.mxu0
        %v2545 = vadd.f32 0.0, %v2544
        %v2546 = vpop.f32.mrf.mxu0
        %2547 = vmatprep.mubr.f32.mxu0 0.0
        %2548 = vmatmul.mubr.f32.gmra.mxu0 %v1530
        %v2549 = vpop.f32.mrf.mxu0
        %v2550 = vadd.f32 0.0, %v2549
        %v2551 = vpop.f32.mrf.mxu0
        %2552 = vmatprep.mubr.f32.mxu0 0.0
        %2553 = vmatmul.mubr.f32.gmra.mxu0 %v1533
        %v2554 = vpop.f32.mrf.mxu0
        %v2555 = vadd.f32 0.0, %v2554
        %v2556 = vpop.f32.mrf.mxu0
        %2557 = vmatprep.mubr.f32.mxu0 0.0
        %2558 = vmatmul.mubr.f32.gmra.mxu0 %v2335
        %v2559 = vpop.f32.mrf.mxu0
        %v2560 = vadd.f32 0.0, %v2559
        %v2561 = vpop.f32.mrf.mxu0
        %2562 = vmatprep.mubr.f32.mxu0 0.0
        %2563 = vmatmul.mubr.f32.gmra.mxu0 %v2338
        %v2564 = vpop.f32.mrf.mxu0
        %v2565 = vadd.f32 0.0, %v2564
        %v2566 = vpop.f32.mrf.mxu0
        %2567 = vdwg.mxu0
        %v2568 = vadd.f32 %v2302, %v2410
        %v2569 = vadd.f32 %v2303, %v2415
        %v2570 = vadd.f32 %v2304, %v2420
        %v2571 = vadd.f32 %v2305, %v2425
        %v2572 = vadd.f32 %v2306, %v2430
        %v2573 = vadd.f32 %v2307, %v2435
        %v2574 = vadd.f32 %v2308, %v2440
        %v2575 = vadd.f32 %v2309, %v2445
        %v2576 = vadd.f32 %v2310, %v2450
        %v2577 = vadd.f32 %v2311, %v2455
        %v2578 = vadd.f32 %v2312, %v2460
        %v2579 = vadd.f32 %v2313, %v2465
        %v2580 = vadd.f32 %v2314, %v2470
        %v2581 = vadd.f32 %v2315, %v2475
        %v2582 = vadd.f32 %v2316, %v2480
        %v2583 = vadd.f32 %v2317, %v2485
        %v2584 = vadd.f32 %v2318, %v2490
        %v2585 = vadd.f32 %v2319, %v2495
        %v2586 = vadd.f32 %v2320, %v2500
        %v2587 = vadd.f32 %v2321, %v2505
        %v2588 = vadd.f32 %v2322, %v2510
        %v2589 = vadd.f32 %v2323, %v2515
        %v2590 = vadd.f32 %v2324, %v2520
        %v2591 = vadd.f32 %v2325, %v2525
        %v2592 = vadd.f32 %v2326, %v2530
        %v2593 = vadd.f32 %v2327, %v2535
        %v2594 = vadd.f32 %v2328, %v2540
        %v2595 = vadd.f32 %v2329, %v2545
        %v2596 = vadd.f32 %v2330, %v2550
        %v2597 = vadd.f32 %v2331, %v2555
        %v2598 = vadd.f32 %v2332, %v2560
        %v2599 = vadd.f32 %v2333, %v2565
        %v2601 = vrot.slane %v397, 1
        %v2602 = vrot.slane %v398, 1
        %v2603 = vsel %vm457, %v2601, %v2602
        %v2604 = vrot.slane %v399, 1
        %v2605 = vsel %vm457, %v2602, %v2604
        %v2606 = vsel %vm538, %v2603, 0
        %v2608 = vsel %vm538, %v2605, 0
        %v2611 = vsel %vm603, %v407, 0
        %2613 = vmatprep.subr.mxu0 0.0
        %2614 = vmatpush1.msra.mxu0 0.0
        %2615 = vmatprep.subr.mxu0 0.0
        %2616 = vmatpush1.msra.mxu0 0.0
        %2617 = vmatprep.subr.mxu0 0.0
        %2618 = vmatpush1.msra.mxu0 0.0
        %2619 = vmatprep.subr.mxu0 0.0
        %2620 = vmatpush1.msra.mxu0 0.0
        %2621 = vmatprep.subr.mxu0 0.0
        %2622 = vmatpush1.msra.mxu0 0.0
        %2623 = vmatprep.subr.mxu0 0.0
        %2624 = vmatpush1.msra.mxu0 0.0
        %2625 = vmatprep.subr.mxu0 0.0
        %2626 = vmatpush1.msra.mxu0 0.0
        %2627 = vmatprep.subr.mxu0 0.0
        %2628 = vmatpush1.msra.mxu0 0.0
        %2629 = vmatprep.subr.mxu0 0.0
        %2630 = vmatpush1.msra.mxu0 0.0
        %2631 = vmatprep.subr.mxu0 0.0
        %2632 = vmatpush1.msra.mxu0 0.0
        %2633 = vmatprep.subr.mxu0 0.0
        %2634 = vmatpush1.msra.mxu0 0.0
        %2635 = vmatprep.subr.mxu0 0.0
        %2636 = vmatpush1.msra.mxu0 0.0
        %2637 = vmatprep.subr.mxu0 0.0
        %2638 = vmatpush1.msra.mxu0 0.0
        %2639 = vmatprep.subr.mxu0 0.0
        %2640 = vmatpush1.msra.mxu0 0.0
        %2641 = vmatprep.subr.mxu0 0.0
        %2642 = vmatpush1.msra.mxu0 0.0
        %2643 = vmatprep.subr.mxu0 0.0
        %2644 = vmatpush1.msra.mxu0 %v2611
        %2645 = vmatprep.subr.mxu0 0.0
        %2646 = vmatpush2.msra.mxu0 0.0
        %2647 = vmatprep.subr.mxu0 0.0
        %2648 = vmatpush2.msra.mxu0 0.0
        %2649 = vmatprep.subr.mxu0 0.0
        %2650 = vmatpush2.msra.mxu0 0.0
        %2651 = vmatprep.subr.mxu0 0.0
        %2652 = vmatpush2.msra.mxu0 0.0
        %2653 = vmatprep.subr.mxu0 0.0
        %2654 = vmatpush2.msra.mxu0 0.0
        %2655 = vmatprep.subr.mxu0 0.0
        %2656 = vmatpush2.msra.mxu0 0.0
        %2657 = vmatprep.subr.mxu0 0.0
        %2658 = vmatpush2.msra.mxu0 0.0
        %2659 = vmatprep.subr.mxu0 0.0
        %2660 = vmatpush2.msra.mxu0 0.0
        %2661 = vmatprep.subr.mxu0 0.0
        %2662 = vmatpush2.msra.mxu0 0.0
        %2663 = vmatprep.subr.mxu0 0.0
        %2664 = vmatpush2.msra.mxu0 0.0
        %2665 = vmatprep.subr.mxu0 0.0
        %2666 = vmatpush2.msra.mxu0 0.0
        %2667 = vmatprep.subr.mxu0 0.0
        %2668 = vmatpush2.msra.mxu0 0.0
        %2669 = vmatprep.subr.mxu0 0.0
        %2670 = vmatpush2.msra.mxu0 0.0
        %2671 = vmatprep.subr.mxu0 0.0
        %2672 = vmatpush2.msra.mxu0 0.0
        %2673 = vmatprep.subr.mxu0 0.0
        %2674 = vmatpush2.msra.mxu0 0.0
        %2675 = vmatprep.subr.mxu0 0.0
        %2676 = vmatpush2.msra.mxu0 0.0
        %2677 = vmatprep.mubr.f32.mxu0 0.0
        %2678 = vmatmul.mubr.f32.gmra.mxu0 %v547
        %v2679 = vpop.f32.mrf.mxu0
        %v2680 = vadd.f32 0.0, %v2679
        %v2681 = vpop.f32.mrf.mxu0
        %2682 = vmatprep.mubr.f32.mxu0 0.0
        %2683 = vmatmul.mubr.f32.gmra.mxu0 %v549
        %v2684 = vpop.f32.mrf.mxu0
        %v2685 = vadd.f32 0.0, %v2684
        %v2686 = vpop.f32.mrf.mxu0
        %2687 = vmatprep.mubr.f32.mxu0 0.0
        %2688 = vmatmul.mubr.f32.gmra.mxu0 %v551
        %v2689 = vpop.f32.mrf.mxu0
        %v2690 = vadd.f32 0.0, %v2689
        %v2691 = vpop.f32.mrf.mxu0
        %2692 = vmatprep.mubr.f32.mxu0 0.0
        %2693 = vmatmul.mubr.f32.gmra.mxu0 %v553
        %v2694 = vpop.f32.mrf.mxu0
        %v2695 = vadd.f32 0.0, %v2694
        %v2696 = vpop.f32.mrf.mxu0
        %2697 = vmatprep.mubr.f32.mxu0 0.0
        %2698 = vmatmul.mubr.f32.gmra.mxu0 %v555
        %v2699 = vpop.f32.mrf.mxu0
        %v2700 = vadd.f32 0.0, %v2699
        %v2701 = vpop.f32.mrf.mxu0
        %2702 = vmatprep.mubr.f32.mxu0 0.0
        %2703 = vmatmul.mubr.f32.gmra.mxu0 %v557
        %v2704 = vpop.f32.mrf.mxu0
        %v2705 = vadd.f32 0.0, %v2704
        %v2706 = vpop.f32.mrf.mxu0
        %2707 = vmatprep.mubr.f32.mxu0 0.0
        %2708 = vmatmul.mubr.f32.gmra.mxu0 %v559
        %v2709 = vpop.f32.mrf.mxu0
        %v2710 = vadd.f32 0.0, %v2709
        %v2711 = vpop.f32.mrf.mxu0
        %2712 = vmatprep.mubr.f32.mxu0 0.0
        %2713 = vmatmul.mubr.f32.gmra.mxu0 %v561
        %v2714 = vpop.f32.mrf.mxu0
        %v2715 = vadd.f32 0.0, %v2714
        %v2716 = vpop.f32.mrf.mxu0
        %2717 = vmatprep.mubr.f32.mxu0 0.0
        %2718 = vmatmul.mubr.f32.gmra.mxu0 %v563
        %v2719 = vpop.f32.mrf.mxu0
        %v2720 = vadd.f32 0.0, %v2719
        %v2721 = vpop.f32.mrf.mxu0
        %2722 = vmatprep.mubr.f32.mxu0 0.0
        %2723 = vmatmul.mubr.f32.gmra.mxu0 %v565
        %v2724 = vpop.f32.mrf.mxu0
        %v2725 = vadd.f32 0.0, %v2724
        %v2726 = vpop.f32.mrf.mxu0
        %2727 = vmatprep.mubr.f32.mxu0 0.0
        %2728 = vmatmul.mubr.f32.gmra.mxu0 %v567
        %v2729 = vpop.f32.mrf.mxu0
        %v2730 = vadd.f32 0.0, %v2729
        %v2731 = vpop.f32.mrf.mxu0
        %2732 = vmatprep.mubr.f32.mxu0 0.0
        %2733 = vmatmul.mubr.f32.gmra.mxu0 %v569
        %v2734 = vpop.f32.mrf.mxu0
        %v2735 = vadd.f32 0.0, %v2734
        %v2736 = vpop.f32.mrf.mxu0
        %2737 = vmatprep.mubr.f32.mxu0 0.0
        %2738 = vmatmul.mubr.f32.gmra.mxu0 %v571
        %v2739 = vpop.f32.mrf.mxu0
        %v2740 = vadd.f32 0.0, %v2739
        %v2741 = vpop.f32.mrf.mxu0
        %2742 = vmatprep.mubr.f32.mxu0 0.0
        %2743 = vmatmul.mubr.f32.gmra.mxu0 %v573
        %v2744 = vpop.f32.mrf.mxu0
        %v2745 = vadd.f32 0.0, %v2744
        %v2746 = vpop.f32.mrf.mxu0
        %2747 = vmatprep.mubr.f32.mxu0 0.0
        %2748 = vmatmul.mubr.f32.gmra.mxu0 %v575
        %v2749 = vpop.f32.mrf.mxu0
        %v2750 = vadd.f32 0.0, %v2749
        %v2751 = vpop.f32.mrf.mxu0
        %2752 = vmatprep.mubr.f32.mxu0 0.0
        %2753 = vmatmul.mubr.f32.gmra.mxu0 %v577
        %v2754 = vpop.f32.mrf.mxu0
        %v2755 = vadd.f32 0.0, %v2754
        %v2756 = vpop.f32.mrf.mxu0
        %2757 = vmatprep.mubr.f32.mxu0 0.0
        %2758 = vmatmul.mubr.f32.gmra.mxu0 %v579
        %v2759 = vpop.f32.mrf.mxu0
        %v2760 = vadd.f32 0.0, %v2759
        %v2761 = vpop.f32.mrf.mxu0
        %2762 = vmatprep.mubr.f32.mxu0 0.0
        %2763 = vmatmul.mubr.f32.gmra.mxu0 %v581
        %v2764 = vpop.f32.mrf.mxu0
        %v2765 = vadd.f32 0.0, %v2764
        %v2766 = vpop.f32.mrf.mxu0
        %2767 = vmatprep.mubr.f32.mxu0 0.0
        %2768 = vmatmul.mubr.f32.gmra.mxu0 %v583
        %v2769 = vpop.f32.mrf.mxu0
        %v2770 = vadd.f32 0.0, %v2769
        %v2771 = vpop.f32.mrf.mxu0
        %2772 = vmatprep.mubr.f32.mxu0 0.0
        %2773 = vmatmul.mubr.f32.gmra.mxu0 %v585
        %v2774 = vpop.f32.mrf.mxu0
        %v2775 = vadd.f32 0.0, %v2774
        %v2776 = vpop.f32.mrf.mxu0
        %2777 = vmatprep.mubr.f32.mxu0 0.0
        %2778 = vmatmul.mubr.f32.gmra.mxu0 %v587
        %v2779 = vpop.f32.mrf.mxu0
        %v2780 = vadd.f32 0.0, %v2779
        %v2781 = vpop.f32.mrf.mxu0
        %2782 = vmatprep.mubr.f32.mxu0 0.0
        %2783 = vmatmul.mubr.f32.gmra.mxu0 %v589
        %v2784 = vpop.f32.mrf.mxu0
        %v2785 = vadd.f32 0.0, %v2784
        %v2786 = vpop.f32.mrf.mxu0
        %2787 = vmatprep.mubr.f32.mxu0 0.0
        %2788 = vmatmul.mubr.f32.gmra.mxu0 %v591
        %v2789 = vpop.f32.mrf.mxu0
        %v2790 = vadd.f32 0.0, %v2789
        %v2791 = vpop.f32.mrf.mxu0
        %2792 = vmatprep.mubr.f32.mxu0 0.0
        %2793 = vmatmul.mubr.f32.gmra.mxu0 %v593
        %v2794 = vpop.f32.mrf.mxu0
        %v2795 = vadd.f32 0.0, %v2794
        %v2796 = vpop.f32.mrf.mxu0
        %2797 = vmatprep.mubr.f32.mxu0 0.0
        %2798 = vmatmul.mubr.f32.gmra.mxu0 %v595
        %v2799 = vpop.f32.mrf.mxu0
        %v2800 = vadd.f32 0.0, %v2799
        %v2801 = vpop.f32.mrf.mxu0
        %2802 = vmatprep.mubr.f32.mxu0 0.0
        %2803 = vmatmul.mubr.f32.gmra.mxu0 %v597
        %v2804 = vpop.f32.mrf.mxu0
        %v2805 = vadd.f32 0.0, %v2804
        %v2806 = vpop.f32.mrf.mxu0
        %2807 = vmatprep.mubr.f32.mxu0 0.0
        %2808 = vmatmul.mubr.f32.gmra.mxu0 %v599
        %v2809 = vpop.f32.mrf.mxu0
        %v2810 = vadd.f32 0.0, %v2809
        %v2811 = vpop.f32.mrf.mxu0
        %2812 = vmatprep.mubr.f32.mxu0 0.0
        %2813 = vmatmul.mubr.f32.gmra.mxu0 %v601
        %v2814 = vpop.f32.mrf.mxu0
        %v2815 = vadd.f32 0.0, %v2814
        %v2816 = vpop.f32.mrf.mxu0
        %2817 = vmatprep.mubr.f32.mxu0 0.0
        %2818 = vmatmul.mubr.f32.gmra.mxu0 %v1801
        %v2819 = vpop.f32.mrf.mxu0
        %v2820 = vadd.f32 0.0, %v2819
        %v2821 = vpop.f32.mrf.mxu0
        %2822 = vmatprep.mubr.f32.mxu0 0.0
        %2823 = vmatmul.mubr.f32.gmra.mxu0 %v1803
        %v2824 = vpop.f32.mrf.mxu0
        %v2825 = vadd.f32 0.0, %v2824
        %v2826 = vpop.f32.mrf.mxu0
        %2827 = vmatprep.mubr.f32.mxu0 0.0
        %2828 = vmatmul.mubr.f32.gmra.mxu0 %v2606
        %v2829 = vpop.f32.mrf.mxu0
        %v2830 = vadd.f32 0.0, %v2829
        %v2831 = vpop.f32.mrf.mxu0
        %2832 = vmatprep.mubr.f32.mxu0 0.0
        %2833 = vmatmul.mubr.f32.gmra.mxu0 %v2608
        %v2834 = vpop.f32.mrf.mxu0
        %v2835 = vadd.f32 0.0, %v2834
        %v2836 = vpop.f32.mrf.mxu0
        %2837 = vdwg.mxu0
        %v2838 = vadd.f32 %v2568, %v2680
        %v2839 = vadd.f32 %v2569, %v2685
        %v2840 = vadd.f32 %v2570, %v2690
        %v2841 = vadd.f32 %v2571, %v2695
        %v2842 = vadd.f32 %v2572, %v2700
        %v2843 = vadd.f32 %v2573, %v2705
        %v2844 = vadd.f32 %v2574, %v2710
        %v2845 = vadd.f32 %v2575, %v2715
        %v2846 = vadd.f32 %v2576, %v2720
        %v2847 = vadd.f32 %v2577, %v2725
        %v2848 = vadd.f32 %v2578, %v2730
        %v2849 = vadd.f32 %v2579, %v2735
        %v2850 = vadd.f32 %v2580, %v2740
        %v2851 = vadd.f32 %v2581, %v2745
        %v2852 = vadd.f32 %v2582, %v2750
        %v2853 = vadd.f32 %v2583, %v2755
        %v2854 = vadd.f32 %v2584, %v2760
        %v2855 = vadd.f32 %v2585, %v2765
        %v2856 = vadd.f32 %v2586, %v2770
        %v2857 = vadd.f32 %v2587, %v2775
        %v2858 = vadd.f32 %v2588, %v2780
        %v2859 = vadd.f32 %v2589, %v2785
        %v2860 = vadd.f32 %v2590, %v2790
        %v2861 = vadd.f32 %v2591, %v2795
        %v2862 = vadd.f32 %v2592, %v2800
        %v2863 = vadd.f32 %v2593, %v2805
        %v2864 = vadd.f32 %v2594, %v2810
        %v2865 = vadd.f32 %v2595, %v2815
        %v2866 = vadd.f32 %v2596, %v2820
        %v2867 = vadd.f32 %v2597, %v2825
        %v2868 = vadd.f32 %v2598, %v2830
        %v2869 = vadd.f32 %v2599, %v2835
        %v2870 = vrot.slane %v397, 2
        %v2871 = vrot.slane %v398, 2
        %v2872 = vsel %vm1124, %v2870, %v2871
        %v2873 = vrot.slane %v399, 2
        %v2874 = vsel %vm1124, %v2871, %v2873
        %v2875 = vsel %vm538, %v2872, 0
        %v2877 = vsel %vm538, %v2874, 0
        %v2880 = vsel %vm603, %v408, 0
        %2882 = vmatprep.subr.mxu0 0.0
        %2883 = vmatpush1.msra.mxu0 0.0
        %2884 = vmatprep.subr.mxu0 0.0
        %2885 = vmatpush1.msra.mxu0 0.0
        %2886 = vmatprep.subr.mxu0 0.0
        %2887 = vmatpush1.msra.mxu0 0.0
        %2888 = vmatprep.subr.mxu0 0.0
        %2889 = vmatpush1.msra.mxu0 0.0
        %2890 = vmatprep.subr.mxu0 0.0
        %2891 = vmatpush1.msra.mxu0 0.0
        %2892 = vmatprep.subr.mxu0 0.0
        %2893 = vmatpush1.msra.mxu0 0.0
        %2894 = vmatprep.subr.mxu0 0.0
        %2895 = vmatpush1.msra.mxu0 0.0
        %2896 = vmatprep.subr.mxu0 0.0
        %2897 = vmatpush1.msra.mxu0 0.0
        %2898 = vmatprep.subr.mxu0 0.0
        %2899 = vmatpush1.msra.mxu0 0.0
        %2900 = vmatprep.subr.mxu0 0.0
        %2901 = vmatpush1.msra.mxu0 0.0
        %2902 = vmatprep.subr.mxu0 0.0
        %2903 = vmatpush1.msra.mxu0 0.0
        %2904 = vmatprep.subr.mxu0 0.0
        %2905 = vmatpush1.msra.mxu0 0.0
        %2906 = vmatprep.subr.mxu0 0.0
        %2907 = vmatpush1.msra.mxu0 0.0
        %2908 = vmatprep.subr.mxu0 0.0
        %2909 = vmatpush1.msra.mxu0 0.0
        %2910 = vmatprep.subr.mxu0 0.0
        %2911 = vmatpush1.msra.mxu0 0.0
        %2912 = vmatprep.subr.mxu0 0.0
        %2913 = vmatpush1.msra.mxu0 %v2880
        %2914 = vmatprep.subr.mxu0 0.0
        %2915 = vmatpush2.msra.mxu0 0.0
        %2916 = vmatprep.subr.mxu0 0.0
        %2917 = vmatpush2.msra.mxu0 0.0
        %2918 = vmatprep.subr.mxu0 0.0
        %2919 = vmatpush2.msra.mxu0 0.0
        %2920 = vmatprep.subr.mxu0 0.0
        %2921 = vmatpush2.msra.mxu0 0.0
        %2922 = vmatprep.subr.mxu0 0.0
        %2923 = vmatpush2.msra.mxu0 0.0
        %2924 = vmatprep.subr.mxu0 0.0
        %2925 = vmatpush2.msra.mxu0 0.0
        %2926 = vmatprep.subr.mxu0 0.0
        %2927 = vmatpush2.msra.mxu0 0.0
        %2928 = vmatprep.subr.mxu0 0.0
        %2929 = vmatpush2.msra.mxu0 0.0
        %2930 = vmatprep.subr.mxu0 0.0
        %2931 = vmatpush2.msra.mxu0 0.0
        %2932 = vmatprep.subr.mxu0 0.0
        %2933 = vmatpush2.msra.mxu0 0.0
        %2934 = vmatprep.subr.mxu0 0.0
        %2935 = vmatpush2.msra.mxu0 0.0
        %2936 = vmatprep.subr.mxu0 0.0
        %2937 = vmatpush2.msra.mxu0 0.0
        %2938 = vmatprep.subr.mxu0 0.0
        %2939 = vmatpush2.msra.mxu0 0.0
        %2940 = vmatprep.subr.mxu0 0.0
        %2941 = vmatpush2.msra.mxu0 0.0
        %2942 = vmatprep.subr.mxu0 0.0
        %2943 = vmatpush2.msra.mxu0 0.0
        %2944 = vmatprep.subr.mxu0 0.0
        %2945 = vmatpush2.msra.mxu0 0.0
        %2946 = vmatprep.mubr.f32.mxu0 0.0
        %2947 = vmatmul.mubr.f32.gmra.mxu0 %v1213
        %v2948 = vpop.f32.mrf.mxu0
        %v2949 = vadd.f32 0.0, %v2948
        %v2950 = vpop.f32.mrf.mxu0
        %2951 = vmatprep.mubr.f32.mxu0 0.0
        %2952 = vmatmul.mubr.f32.gmra.mxu0 %v1215
        %v2953 = vpop.f32.mrf.mxu0
        %v2954 = vadd.f32 0.0, %v2953
        %v2955 = vpop.f32.mrf.mxu0
        %2956 = vmatprep.mubr.f32.mxu0 0.0
        %2957 = vmatmul.mubr.f32.gmra.mxu0 %v1217
        %v2958 = vpop.f32.mrf.mxu0
        %v2959 = vadd.f32 0.0, %v2958
        %v2960 = vpop.f32.mrf.mxu0
        %2961 = vmatprep.mubr.f32.mxu0 0.0
        %2962 = vmatmul.mubr.f32.gmra.mxu0 %v1219
        %v2963 = vpop.f32.mrf.mxu0
        %v2964 = vadd.f32 0.0, %v2963
        %v2965 = vpop.f32.mrf.mxu0
        %2966 = vmatprep.mubr.f32.mxu0 0.0
        %2967 = vmatmul.mubr.f32.gmra.mxu0 %v1221
        %v2968 = vpop.f32.mrf.mxu0
        %v2969 = vadd.f32 0.0, %v2968
        %v2970 = vpop.f32.mrf.mxu0
        %2971 = vmatprep.mubr.f32.mxu0 0.0
        %2972 = vmatmul.mubr.f32.gmra.mxu0 %v1223
        %v2973 = vpop.f32.mrf.mxu0
        %v2974 = vadd.f32 0.0, %v2973
        %v2975 = vpop.f32.mrf.mxu0
        %2976 = vmatprep.mubr.f32.mxu0 0.0
        %2977 = vmatmul.mubr.f32.gmra.mxu0 %v1225
        %v2978 = vpop.f32.mrf.mxu0
        %v2979 = vadd.f32 0.0, %v2978
        %v2980 = vpop.f32.mrf.mxu0
        %2981 = vmatprep.mubr.f32.mxu0 0.0
        %2982 = vmatmul.mubr.f32.gmra.mxu0 %v1227
        %v2983 = vpop.f32.mrf.mxu0
        %v2984 = vadd.f32 0.0, %v2983
        %v2985 = vpop.f32.mrf.mxu0
        %2986 = vmatprep.mubr.f32.mxu0 0.0
        %2987 = vmatmul.mubr.f32.gmra.mxu0 %v1229
        %v2988 = vpop.f32.mrf.mxu0
        %v2989 = vadd.f32 0.0, %v2988
        %v2990 = vpop.f32.mrf.mxu0
        %2991 = vmatprep.mubr.f32.mxu0 0.0
        %2992 = vmatmul.mubr.f32.gmra.mxu0 %v1231
        %v2993 = vpop.f32.mrf.mxu0
        %v2994 = vadd.f32 0.0, %v2993
        %v2995 = vpop.f32.mrf.mxu0
        %2996 = vmatprep.mubr.f32.mxu0 0.0
        %2997 = vmatmul.mubr.f32.gmra.mxu0 %v1233
        %v2998 = vpop.f32.mrf.mxu0
        %v2999 = vadd.f32 0.0, %v2998
        %v3000 = vpop.f32.mrf.mxu0
        %3001 = vmatprep.mubr.f32.mxu0 0.0
        %3002 = vmatmul.mubr.f32.gmra.mxu0 %v1235
        %v3003 = vpop.f32.mrf.mxu0
        %v3004 = vadd.f32 0.0, %v3003
        %v3005 = vpop.f32.mrf.mxu0
        %3006 = vmatprep.mubr.f32.mxu0 0.0
        %3007 = vmatmul.mubr.f32.gmra.mxu0 %v1237
        %v3008 = vpop.f32.mrf.mxu0
        %v3009 = vadd.f32 0.0, %v3008
        %v3010 = vpop.f32.mrf.mxu0
        %3011 = vmatprep.mubr.f32.mxu0 0.0
        %3012 = vmatmul.mubr.f32.gmra.mxu0 %v1239
        %v3013 = vpop.f32.mrf.mxu0
        %v3014 = vadd.f32 0.0, %v3013
        %v3015 = vpop.f32.mrf.mxu0
        %3016 = vmatprep.mubr.f32.mxu0 0.0
        %3017 = vmatmul.mubr.f32.gmra.mxu0 %v1241
        %v3018 = vpop.f32.mrf.mxu0
        %v3019 = vadd.f32 0.0, %v3018
        %v3020 = vpop.f32.mrf.mxu0
        %3021 = vmatprep.mubr.f32.mxu0 0.0
        %3022 = vmatmul.mubr.f32.gmra.mxu0 %v1243
        %v3023 = vpop.f32.mrf.mxu0
        %v3024 = vadd.f32 0.0, %v3023
        %v3025 = vpop.f32.mrf.mxu0
        %3026 = vmatprep.mubr.f32.mxu0 0.0
        %3027 = vmatmul.mubr.f32.gmra.mxu0 %v1245
        %v3028 = vpop.f32.mrf.mxu0
        %v3029 = vadd.f32 0.0, %v3028
        %v3030 = vpop.f32.mrf.mxu0
        %3031 = vmatprep.mubr.f32.mxu0 0.0
        %3032 = vmatmul.mubr.f32.gmra.mxu0 %v1247
        %v3033 = vpop.f32.mrf.mxu0
        %v3034 = vadd.f32 0.0, %v3033
        %v3035 = vpop.f32.mrf.mxu0
        %3036 = vmatprep.mubr.f32.mxu0 0.0
        %3037 = vmatmul.mubr.f32.gmra.mxu0 %v1249
        %v3038 = vpop.f32.mrf.mxu0
        %v3039 = vadd.f32 0.0, %v3038
        %v3040 = vpop.f32.mrf.mxu0
        %3041 = vmatprep.mubr.f32.mxu0 0.0
        %3042 = vmatmul.mubr.f32.gmra.mxu0 %v1251
        %v3043 = vpop.f32.mrf.mxu0
        %v3044 = vadd.f32 0.0, %v3043
        %v3045 = vpop.f32.mrf.mxu0
        %3046 = vmatprep.mubr.f32.mxu0 0.0
        %3047 = vmatmul.mubr.f32.gmra.mxu0 %v1253
        %v3048 = vpop.f32.mrf.mxu0
        %v3049 = vadd.f32 0.0, %v3048
        %v3050 = vpop.f32.mrf.mxu0
        %3051 = vmatprep.mubr.f32.mxu0 0.0
        %3052 = vmatmul.mubr.f32.gmra.mxu0 %v1255
        %v3053 = vpop.f32.mrf.mxu0
        %v3054 = vadd.f32 0.0, %v3053
        %v3055 = vpop.f32.mrf.mxu0
        %3056 = vmatprep.mubr.f32.mxu0 0.0
        %3057 = vmatmul.mubr.f32.gmra.mxu0 %v1257
        %v3058 = vpop.f32.mrf.mxu0
        %v3059 = vadd.f32 0.0, %v3058
        %v3060 = vpop.f32.mrf.mxu0
        %3061 = vmatprep.mubr.f32.mxu0 0.0
        %3062 = vmatmul.mubr.f32.gmra.mxu0 %v1259
        %v3063 = vpop.f32.mrf.mxu0
        %v3064 = vadd.f32 0.0, %v3063
        %v3065 = vpop.f32.mrf.mxu0
        %3066 = vmatprep.mubr.f32.mxu0 0.0
        %3067 = vmatmul.mubr.f32.gmra.mxu0 %v1261
        %v3068 = vpop.f32.mrf.mxu0
        %v3069 = vadd.f32 0.0, %v3068
        %v3070 = vpop.f32.mrf.mxu0
        %3071 = vmatprep.mubr.f32.mxu0 0.0
        %3072 = vmatmul.mubr.f32.gmra.mxu0 %v1263
        %v3073 = vpop.f32.mrf.mxu0
        %v3074 = vadd.f32 0.0, %v3073
        %v3075 = vpop.f32.mrf.mxu0
        %3076 = vmatprep.mubr.f32.mxu0 0.0
        %3077 = vmatmul.mubr.f32.gmra.mxu0 %v1265
        %v3078 = vpop.f32.mrf.mxu0
        %v3079 = vadd.f32 0.0, %v3078
        %v3080 = vpop.f32.mrf.mxu0
        %3081 = vmatprep.mubr.f32.mxu0 0.0
        %3082 = vmatmul.mubr.f32.gmra.mxu0 %v1267
        %v3083 = vpop.f32.mrf.mxu0
        %v3084 = vadd.f32 0.0, %v3083
        %v3085 = vpop.f32.mrf.mxu0
        %3086 = vmatprep.mubr.f32.mxu0 0.0
        %3087 = vmatmul.mubr.f32.gmra.mxu0 %v2070
        %v3088 = vpop.f32.mrf.mxu0
        %v3089 = vadd.f32 0.0, %v3088
        %v3090 = vpop.f32.mrf.mxu0
        %3091 = vmatprep.mubr.f32.mxu0 0.0
        %3092 = vmatmul.mubr.f32.gmra.mxu0 %v2072
        %v3093 = vpop.f32.mrf.mxu0
        %v3094 = vadd.f32 0.0, %v3093
        %v3095 = vpop.f32.mrf.mxu0
        %3096 = vmatprep.mubr.f32.mxu0 0.0
        %3097 = vmatmul.mubr.f32.gmra.mxu0 %v2875
        %v3098 = vpop.f32.mrf.mxu0
        %v3099 = vadd.f32 0.0, %v3098
        %v3100 = vpop.f32.mrf.mxu0
        %3101 = vmatprep.mubr.f32.mxu0 0.0
        %3102 = vmatmul.mubr.f32.gmra.mxu0 %v2877
        %v3103 = vpop.f32.mrf.mxu0
        %v3104 = vadd.f32 0.0, %v3103
        %v3105 = vpop.f32.mrf.mxu0
        %3106 = vdwg.mxu0
        %v3107 = vadd.f32 %v2838, %v2949
        %v3108 = vadd.f32 %v2839, %v2954
        %v3109 = vadd.f32 %v2840, %v2959
        %v3110 = vadd.f32 %v2841, %v2964
        %v3111 = vadd.f32 %v2842, %v2969
        %v3112 = vadd.f32 %v2843, %v2974
        %v3113 = vadd.f32 %v2844, %v2979
        %v3114 = vadd.f32 %v2845, %v2984
        %v3115 = vadd.f32 %v2846, %v2989
        %v3116 = vadd.f32 %v2847, %v2994
        %v3117 = vadd.f32 %v2848, %v2999
        %v3118 = vadd.f32 %v2849, %v3004
        %v3119 = vadd.f32 %v2850, %v3009
        %v3120 = vadd.f32 %v2851, %v3014
        %v3121 = vadd.f32 %v2852, %v3019
        %v3122 = vadd.f32 %v2853, %v3024
        %v3123 = vadd.f32 %v2854, %v3029
        %v3124 = vadd.f32 %v2855, %v3034
        %v3125 = vadd.f32 %v2856, %v3039
        %v3126 = vadd.f32 %v2857, %v3044
        %v3127 = vadd.f32 %v2858, %v3049
        %v3128 = vadd.f32 %v2859, %v3054
        %v3129 = vadd.f32 %v2860, %v3059
        %v3130 = vadd.f32 %v2861, %v3064
        %v3131 = vadd.f32 %v2862, %v3069
        %v3132 = vadd.f32 %v2863, %v3074
        %v3133 = vadd.f32 %v2864, %v3079
        %v3134 = vadd.f32 %v2865, %v3084
        %v3135 = vadd.f32 %v2866, %v3089
        %v3136 = vadd.f32 %v2867, %v3094
        %v3137 = vadd.f32 %v2868, %v3099
        %v3138 = vadd.f32 %v2869, %v3104
        %v3139 = vld [vmem:[#allocation4] sm:$0x1]
        %v3141 = vlaneseq
        %v3142 = vshrl.u32 %v3141, 7
        %v3143 = vsub.s32 0, %v3142
        %v3144 = vrot.slane %v3139, %v3143
        %v3146 = vadd.f32 %v3107, %v3144
        %v3147 = vadd.f32 %v3108, %v3144
        %v3148 = vadd.f32 %v3109, %v3144
        %v3149 = vadd.f32 %v3110, %v3144
        %v3150 = vadd.f32 %v3111, %v3144
        %v3151 = vadd.f32 %v3112, %v3144
        %v3152 = vadd.f32 %v3113, %v3144
        %v3153 = vadd.f32 %v3114, %v3144
        %v3154 = vadd.f32 %v3115, %v3144
        %v3155 = vadd.f32 %v3116, %v3144
        %v3156 = vadd.f32 %v3117, %v3144
        %v3157 = vadd.f32 %v3118, %v3144
        %v3158 = vadd.f32 %v3119, %v3144
        %v3159 = vadd.f32 %v3120, %v3144
        %v3160 = vadd.f32 %v3121, %v3144
        %v3161 = vadd.f32 %v3122, %v3144
        %v3162 = vadd.f32 %v3123, %v3144
        %v3163 = vadd.f32 %v3124, %v3144
        %v3164 = vadd.f32 %v3125, %v3144
        %v3165 = vadd.f32 %v3126, %v3144
        %v3166 = vadd.f32 %v3127, %v3144
        %v3167 = vadd.f32 %v3128, %v3144
        %v3168 = vadd.f32 %v3129, %v3144
        %v3169 = vadd.f32 %v3130, %v3144
        %v3170 = vadd.f32 %v3131, %v3144
        %v3171 = vadd.f32 %v3132, %v3144
        %v3172 = vadd.f32 %v3133, %v3144
        %v3173 = vadd.f32 %v3134, %v3144
        %v3174 = vadd.f32 %v3135, %v3144
        %v3175 = vadd.f32 %v3136, %v3144
        %v3176 = vadd.f32 %v3137, %v3144
        %v3177 = vadd.f32 %v3138, %v3144
        %v3178 = vmax.f32 %v3146, 0.0
        %v3179 = vmax.f32 %v3147, 0.0
        %v3180 = vmax.f32 %v3148, 0.0
        %v3181 = vmax.f32 %v3149, 0.0
        %v3182 = vmax.f32 %v3150, 0.0
        %v3183 = vmax.f32 %v3151, 0.0
        %v3184 = vmax.f32 %v3152, 0.0
        %v3185 = vmax.f32 %v3153, 0.0
        %v3186 = vmax.f32 %v3154, 0.0
        %v3187 = vmax.f32 %v3155, 0.0
        %v3188 = vmax.f32 %v3156, 0.0
        %v3189 = vmax.f32 %v3157, 0.0
        %v3190 = vmax.f32 %v3158, 0.0
        %v3191 = vmax.f32 %v3159, 0.0
        %v3192 = vmax.f32 %v3160, 0.0
        %v3193 = vmax.f32 %v3161, 0.0
        %v3194 = vmax.f32 %v3162, 0.0
        %v3195 = vmax.f32 %v3163, 0.0
        %v3196 = vmax.f32 %v3164, 0.0
        %v3197 = vmax.f32 %v3165, 0.0
        %v3198 = vmax.f32 %v3166, 0.0
        %v3199 = vmax.f32 %v3167, 0.0
        %v3200 = vmax.f32 %v3168, 0.0
        %v3201 = vmax.f32 %v3169, 0.0
        %v3202 = vmax.f32 %v3170, 0.0
        %v3203 = vmax.f32 %v3171, 0.0
        %v3204 = vmax.f32 %v3172, 0.0
        %v3205 = vmax.f32 %v3173, 0.0
        %v3206 = vmax.f32 %v3174, 0.0
        %v3207 = vmax.f32 %v3175, 0.0
        %v3208 = vmax.f32 %v3176, 0.0
        %v3209 = vmax.f32 %v3177, 0.0
        %v3242 = vcombine.high %v3178, %v3178
        %v3244 = vunpack.c.l.s4 1983009808
        %v3245 = vunpack.c.0.s8 %v3244
        %v3246 = vlaneseq
        %v3247 = vshrl.u32 %v3246, 7
        %v3248 = vsub.s32 %v3245, %v3247
        %v3249 = vrot.slane %v3178, %v3248
        %v3251 = vunpack.c.l.s4 1983009808
        %v3252 = vunpack.c.0.s8 %v3251
        %v3253 = vlaneseq
        %v3254 = vshrl.u32 %v3253, 7
        %v3255 = vsub.s32 %v3252, %v3254
        %v3256 = vrot.slane %v3242, %v3255
        %v3257 = vcombine.high %v3249, %v3249
        %v3258 = vcombine.high %v3256, %v3256
        %v3259 = vcombine.high %v3179, %v3179
        %v3261 = vunpack.c.l.s4 1983009808
        %v3262 = vunpack.c.0.s8 %v3261
        %v3263 = vlaneseq
        %v3264 = vshrl.u32 %v3263, 7
        %v3265 = vsub.s32 %v3262, %v3264
        %v3266 = vrot.slane %v3179, %v3265
        %v3268 = vunpack.c.l.s4 1983009808
        %v3269 = vunpack.c.0.s8 %v3268
        %v3270 = vlaneseq
        %v3271 = vshrl.u32 %v3270, 7
        %v3272 = vsub.s32 %v3269, %v3271
        %v3273 = vrot.slane %v3259, %v3272
        %v3274 = vcombine.high %v3266, %v3266
        %v3275 = vcombine.high %v3273, %v3273
        %v3276 = vcombine.high %v3180, %v3180
        %v3278 = vunpack.c.l.s4 1983009808
        %v3279 = vunpack.c.0.s8 %v3278
        %v3280 = vlaneseq
        %v3281 = vshrl.u32 %v3280, 7
        %v3282 = vsub.s32 %v3279, %v3281
        %v3283 = vrot.slane %v3180, %v3282
        %v3285 = vunpack.c.l.s4 1983009808
        %v3286 = vunpack.c.0.s8 %v3285
        %v3287 = vlaneseq
        %v3288 = vshrl.u32 %v3287, 7
        %v3289 = vsub.s32 %v3286, %v3288
        %v3290 = vrot.slane %v3276, %v3289
        %v3291 = vcombine.high %v3283, %v3283
        %v3292 = vcombine.high %v3290, %v3290
        %v3293 = vcombine.high %v3181, %v3181
        %v3295 = vunpack.c.l.s4 1983009808
        %v3296 = vunpack.c.0.s8 %v3295
        %v3297 = vlaneseq
        %v3298 = vshrl.u32 %v3297, 7
        %v3299 = vsub.s32 %v3296, %v3298
        %v3300 = vrot.slane %v3181, %v3299
        %v3302 = vunpack.c.l.s4 1983009808
        %v3303 = vunpack.c.0.s8 %v3302
        %v3304 = vlaneseq
        %v3305 = vshrl.u32 %v3304, 7
        %v3306 = vsub.s32 %v3303, %v3305
        %v3307 = vrot.slane %v3293, %v3306
        %v3308 = vcombine.high %v3300, %v3300
        %v3309 = vcombine.high %v3307, %v3307
        %v3310 = vcombine.high %v3182, %v3182
        %v3312 = vunpack.c.l.s4 1983009808
        %v3313 = vunpack.c.0.s8 %v3312
        %v3314 = vlaneseq
        %v3315 = vshrl.u32 %v3314, 7
        %v3316 = vsub.s32 %v3313, %v3315
        %v3317 = vrot.slane %v3182, %v3316
        %v3319 = vunpack.c.l.s4 1983009808
        %v3320 = vunpack.c.0.s8 %v3319
        %v3321 = vlaneseq
        %v3322 = vshrl.u32 %v3321, 7
        %v3323 = vsub.s32 %v3320, %v3322
        %v3324 = vrot.slane %v3310, %v3323
        %v3325 = vcombine.high %v3317, %v3317
        %v3326 = vcombine.high %v3324, %v3324
        %v3327 = vcombine.high %v3183, %v3183
        %v3329 = vunpack.c.l.s4 1983009808
        %v3330 = vunpack.c.0.s8 %v3329
        %v3331 = vlaneseq
        %v3332 = vshrl.u32 %v3331, 7
        %v3333 = vsub.s32 %v3330, %v3332
        %v3334 = vrot.slane %v3183, %v3333
        %v3336 = vunpack.c.l.s4 1983009808
        %v3337 = vunpack.c.0.s8 %v3336
        %v3338 = vlaneseq
        %v3339 = vshrl.u32 %v3338, 7
        %v3340 = vsub.s32 %v3337, %v3339
        %v3341 = vrot.slane %v3327, %v3340
        %v3342 = vcombine.high %v3334, %v3334
        %v3343 = vcombine.high %v3341, %v3341
        %v3344 = vcombine.high %v3184, %v3184
        %v3346 = vunpack.c.l.s4 1983009808
        %v3347 = vunpack.c.0.s8 %v3346
        %v3348 = vlaneseq
        %v3349 = vshrl.u32 %v3348, 7
        %v3350 = vsub.s32 %v3347, %v3349
        %v3351 = vrot.slane %v3184, %v3350
        %v3353 = vunpack.c.l.s4 1983009808
        %v3354 = vunpack.c.0.s8 %v3353
        %v3355 = vlaneseq
        %v3356 = vshrl.u32 %v3355, 7
        %v3357 = vsub.s32 %v3354, %v3356
        %v3358 = vrot.slane %v3344, %v3357
        %v3359 = vcombine.high %v3351, %v3351
        %v3360 = vcombine.high %v3358, %v3358
        %v3361 = vcombine.high %v3185, %v3185
        %v3363 = vunpack.c.l.s4 1983009808
        %v3364 = vunpack.c.0.s8 %v3363
        %v3365 = vlaneseq
        %v3366 = vshrl.u32 %v3365, 7
        %v3367 = vsub.s32 %v3364, %v3366
        %v3368 = vrot.slane %v3185, %v3367
        %v3370 = vunpack.c.l.s4 1983009808
        %v3371 = vunpack.c.0.s8 %v3370
        %v3372 = vlaneseq
        %v3373 = vshrl.u32 %v3372, 7
        %v3374 = vsub.s32 %v3371, %v3373
        %v3375 = vrot.slane %v3361, %v3374
        %v3376 = vcombine.high %v3368, %v3368
        %v3377 = vcombine.high %v3375, %v3375
        %v3378 = vcombine.high %v3186, %v3186
        %v3380 = vunpack.c.l.s4 1983009808
        %v3381 = vunpack.c.0.s8 %v3380
        %v3382 = vlaneseq
        %v3383 = vshrl.u32 %v3382, 7
        %v3384 = vsub.s32 %v3381, %v3383
        %v3385 = vrot.slane %v3186, %v3384
        %v3387 = vunpack.c.l.s4 1983009808
        %v3388 = vunpack.c.0.s8 %v3387
        %v3389 = vlaneseq
        %v3390 = vshrl.u32 %v3389, 7
        %v3391 = vsub.s32 %v3388, %v3390
        %v3392 = vrot.slane %v3378, %v3391
        %v3393 = vcombine.high %v3385, %v3385
        %v3394 = vcombine.high %v3392, %v3392
        %v3395 = vcombine.high %v3187, %v3187
        %v3397 = vunpack.c.l.s4 1983009808
        %v3398 = vunpack.c.0.s8 %v3397
        %v3399 = vlaneseq
        %v3400 = vshrl.u32 %v3399, 7
        %v3401 = vsub.s32 %v3398, %v3400
        %v3402 = vrot.slane %v3187, %v3401
        %v3404 = vunpack.c.l.s4 1983009808
        %v3405 = vunpack.c.0.s8 %v3404
        %v3406 = vlaneseq
        %v3407 = vshrl.u32 %v3406, 7
        %v3408 = vsub.s32 %v3405, %v3407
        %v3409 = vrot.slane %v3395, %v3408
        %v3410 = vcombine.high %v3402, %v3402
        %v3411 = vcombine.high %v3409, %v3409
        %v3412 = vcombine.high %v3188, %v3188
        %v3414 = vunpack.c.l.s4 1983009808
        %v3415 = vunpack.c.0.s8 %v3414
        %v3416 = vlaneseq
        %v3417 = vshrl.u32 %v3416, 7
        %v3418 = vsub.s32 %v3415, %v3417
        %v3419 = vrot.slane %v3188, %v3418
        %v3421 = vunpack.c.l.s4 1983009808
        %v3422 = vunpack.c.0.s8 %v3421
        %v3423 = vlaneseq
        %v3424 = vshrl.u32 %v3423, 7
        %v3425 = vsub.s32 %v3422, %v3424
        %v3426 = vrot.slane %v3412, %v3425
        %v3427 = vcombine.high %v3419, %v3419
        %v3428 = vcombine.high %v3426, %v3426
        %v3429 = vcombine.high %v3189, %v3189
        %v3431 = vunpack.c.l.s4 1983009808
        %v3432 = vunpack.c.0.s8 %v3431
        %v3433 = vlaneseq
        %v3434 = vshrl.u32 %v3433, 7
        %v3435 = vsub.s32 %v3432, %v3434
        %v3436 = vrot.slane %v3189, %v3435
        %v3438 = vunpack.c.l.s4 1983009808
        %v3439 = vunpack.c.0.s8 %v3438
        %v3440 = vlaneseq
        %v3441 = vshrl.u32 %v3440, 7
        %v3442 = vsub.s32 %v3439, %v3441
        %v3443 = vrot.slane %v3429, %v3442
        %v3444 = vcombine.high %v3436, %v3436
        %v3445 = vcombine.high %v3443, %v3443
        %v3446 = vcombine.high %v3190, %v3190
        %v3448 = vunpack.c.l.s4 1983009808
        %v3449 = vunpack.c.0.s8 %v3448
        %v3450 = vlaneseq
        %v3451 = vshrl.u32 %v3450, 7
        %v3452 = vsub.s32 %v3449, %v3451
        %v3453 = vrot.slane %v3190, %v3452
        %v3455 = vunpack.c.l.s4 1983009808
        %v3456 = vunpack.c.0.s8 %v3455
        %v3457 = vlaneseq
        %v3458 = vshrl.u32 %v3457, 7
        %v3459 = vsub.s32 %v3456, %v3458
        %v3460 = vrot.slane %v3446, %v3459
        %v3461 = vcombine.high %v3453, %v3453
        %v3462 = vcombine.high %v3460, %v3460
        %v3463 = vcombine.high %v3191, %v3191
        %v3465 = vunpack.c.l.s4 1983009808
        %v3466 = vunpack.c.0.s8 %v3465
        %v3467 = vlaneseq
        %v3468 = vshrl.u32 %v3467, 7
        %v3469 = vsub.s32 %v3466, %v3468
        %v3470 = vrot.slane %v3191, %v3469
        %v3472 = vunpack.c.l.s4 1983009808
        %v3473 = vunpack.c.0.s8 %v3472
        %v3474 = vlaneseq
        %v3475 = vshrl.u32 %v3474, 7
        %v3476 = vsub.s32 %v3473, %v3475
        %v3477 = vrot.slane %v3463, %v3476
        %v3478 = vcombine.high %v3470, %v3470
        %v3479 = vcombine.high %v3477, %v3477
        %v3480 = vcombine.high %v3192, %v3192
        %v3482 = vunpack.c.l.s4 1983009808
        %v3483 = vunpack.c.0.s8 %v3482
        %v3484 = vlaneseq
        %v3485 = vshrl.u32 %v3484, 7
        %v3486 = vsub.s32 %v3483, %v3485
        %v3487 = vrot.slane %v3192, %v3486
        %v3489 = vunpack.c.l.s4 1983009808
        %v3490 = vunpack.c.0.s8 %v3489
        %v3491 = vlaneseq
        %v3492 = vshrl.u32 %v3491, 7
        %v3493 = vsub.s32 %v3490, %v3492
        %v3494 = vrot.slane %v3480, %v3493
        %v3495 = vcombine.high %v3487, %v3487
        %v3496 = vcombine.high %v3494, %v3494
        %v3497 = vcombine.high %v3193, %v3193
        %v3499 = vunpack.c.l.s4 1983009808
        %v3500 = vunpack.c.0.s8 %v3499
        %v3501 = vlaneseq
        %v3502 = vshrl.u32 %v3501, 7
        %v3503 = vsub.s32 %v3500, %v3502
        %v3504 = vrot.slane %v3193, %v3503
        %v3506 = vunpack.c.l.s4 1983009808
        %v3507 = vunpack.c.0.s8 %v3506
        %v3508 = vlaneseq
        %v3509 = vshrl.u32 %v3508, 7
        %v3510 = vsub.s32 %v3507, %v3509
        %v3511 = vrot.slane %v3497, %v3510
        %v3512 = vcombine.high %v3504, %v3504
        %v3513 = vcombine.high %v3511, %v3511
        %v3514 = vcombine.high %v3194, %v3194
        %v3516 = vunpack.c.l.s4 1983009808
        %v3517 = vunpack.c.0.s8 %v3516
        %v3518 = vlaneseq
        %v3519 = vshrl.u32 %v3518, 7
        %v3520 = vsub.s32 %v3517, %v3519
        %v3521 = vrot.slane %v3194, %v3520
        %v3523 = vunpack.c.l.s4 1983009808
        %v3524 = vunpack.c.0.s8 %v3523
        %v3525 = vlaneseq
        %v3526 = vshrl.u32 %v3525, 7
        %v3527 = vsub.s32 %v3524, %v3526
        %v3528 = vrot.slane %v3514, %v3527
        %v3529 = vcombine.high %v3521, %v3521
        %v3530 = vcombine.high %v3528, %v3528
        %v3531 = vcombine.high %v3195, %v3195
        %v3533 = vunpack.c.l.s4 1983009808
        %v3534 = vunpack.c.0.s8 %v3533
        %v3535 = vlaneseq
        %v3536 = vshrl.u32 %v3535, 7
        %v3537 = vsub.s32 %v3534, %v3536
        %v3538 = vrot.slane %v3195, %v3537
        %v3540 = vunpack.c.l.s4 1983009808
        %v3541 = vunpack.c.0.s8 %v3540
        %v3542 = vlaneseq
        %v3543 = vshrl.u32 %v3542, 7
        %v3544 = vsub.s32 %v3541, %v3543
        %v3545 = vrot.slane %v3531, %v3544
        %v3546 = vcombine.high %v3538, %v3538
        %v3547 = vcombine.high %v3545, %v3545
        %v3548 = vcombine.high %v3196, %v3196
        %v3550 = vunpack.c.l.s4 1983009808
        %v3551 = vunpack.c.0.s8 %v3550
        %v3552 = vlaneseq
        %v3553 = vshrl.u32 %v3552, 7
        %v3554 = vsub.s32 %v3551, %v3553
        %v3555 = vrot.slane %v3196, %v3554
        %v3557 = vunpack.c.l.s4 1983009808
        %v3558 = vunpack.c.0.s8 %v3557
        %v3559 = vlaneseq
        %v3560 = vshrl.u32 %v3559, 7
        %v3561 = vsub.s32 %v3558, %v3560
        %v3562 = vrot.slane %v3548, %v3561
        %v3563 = vcombine.high %v3555, %v3555
        %v3564 = vcombine.high %v3562, %v3562
        %v3565 = vcombine.high %v3197, %v3197
        %v3567 = vunpack.c.l.s4 1983009808
        %v3568 = vunpack.c.0.s8 %v3567
        %v3569 = vlaneseq
        %v3570 = vshrl.u32 %v3569, 7
        %v3571 = vsub.s32 %v3568, %v3570
        %v3572 = vrot.slane %v3197, %v3571
        %v3574 = vunpack.c.l.s4 1983009808
        %v3575 = vunpack.c.0.s8 %v3574
        %v3576 = vlaneseq
        %v3577 = vshrl.u32 %v3576, 7
        %v3578 = vsub.s32 %v3575, %v3577
        %v3579 = vrot.slane %v3565, %v3578
        %v3580 = vcombine.high %v3572, %v3572
        %v3581 = vcombine.high %v3579, %v3579
        %v3582 = vcombine.high %v3198, %v3198
        %v3584 = vunpack.c.l.s4 1983009808
        %v3585 = vunpack.c.0.s8 %v3584
        %v3586 = vlaneseq
        %v3587 = vshrl.u32 %v3586, 7
        %v3588 = vsub.s32 %v3585, %v3587
        %v3589 = vrot.slane %v3198, %v3588
        %v3591 = vunpack.c.l.s4 1983009808
        %v3592 = vunpack.c.0.s8 %v3591
        %v3593 = vlaneseq
        %v3594 = vshrl.u32 %v3593, 7
        %v3595 = vsub.s32 %v3592, %v3594
        %v3596 = vrot.slane %v3582, %v3595
        %v3597 = vcombine.high %v3589, %v3589
        %v3598 = vcombine.high %v3596, %v3596
        %v3599 = vcombine.high %v3199, %v3199
        %v3601 = vunpack.c.l.s4 1983009808
        %v3602 = vunpack.c.0.s8 %v3601
        %v3603 = vlaneseq
        %v3604 = vshrl.u32 %v3603, 7
        %v3605 = vsub.s32 %v3602, %v3604
        %v3606 = vrot.slane %v3199, %v3605
        %v3608 = vunpack.c.l.s4 1983009808
        %v3609 = vunpack.c.0.s8 %v3608
        %v3610 = vlaneseq
        %v3611 = vshrl.u32 %v3610, 7
        %v3612 = vsub.s32 %v3609, %v3611
        %v3613 = vrot.slane %v3599, %v3612
        %v3614 = vcombine.high %v3606, %v3606
        %v3615 = vcombine.high %v3613, %v3613
        %v3616 = vcombine.high %v3200, %v3200
        %v3618 = vunpack.c.l.s4 1983009808
        %v3619 = vunpack.c.0.s8 %v3618
        %v3620 = vlaneseq
        %v3621 = vshrl.u32 %v3620, 7
        %v3622 = vsub.s32 %v3619, %v3621
        %v3623 = vrot.slane %v3200, %v3622
        %v3625 = vunpack.c.l.s4 1983009808
        %v3626 = vunpack.c.0.s8 %v3625
        %v3627 = vlaneseq
        %v3628 = vshrl.u32 %v3627, 7
        %v3629 = vsub.s32 %v3626, %v3628
        %v3630 = vrot.slane %v3616, %v3629
        %v3631 = vcombine.high %v3623, %v3623
        %v3632 = vcombine.high %v3630, %v3630
        %v3633 = vcombine.high %v3201, %v3201
        %v3635 = vunpack.c.l.s4 1983009808
        %v3636 = vunpack.c.0.s8 %v3635
        %v3637 = vlaneseq
        %v3638 = vshrl.u32 %v3637, 7
        %v3639 = vsub.s32 %v3636, %v3638
        %v3640 = vrot.slane %v3201, %v3639
        %v3642 = vunpack.c.l.s4 1983009808
        %v3643 = vunpack.c.0.s8 %v3642
        %v3644 = vlaneseq
        %v3645 = vshrl.u32 %v3644, 7
        %v3646 = vsub.s32 %v3643, %v3645
        %v3647 = vrot.slane %v3633, %v3646
        %v3648 = vcombine.high %v3640, %v3640
        %v3649 = vcombine.high %v3647, %v3647
        %v3650 = vcombine.high %v3202, %v3202
        %v3652 = vunpack.c.l.s4 1983009808
        %v3653 = vunpack.c.0.s8 %v3652
        %v3654 = vlaneseq
        %v3655 = vshrl.u32 %v3654, 7
        %v3656 = vsub.s32 %v3653, %v3655
        %v3657 = vrot.slane %v3202, %v3656
        %v3659 = vunpack.c.l.s4 1983009808
        %v3660 = vunpack.c.0.s8 %v3659
        %v3661 = vlaneseq
        %v3662 = vshrl.u32 %v3661, 7
        %v3663 = vsub.s32 %v3660, %v3662
        %v3664 = vrot.slane %v3650, %v3663
        %v3665 = vcombine.high %v3657, %v3657
        %v3666 = vcombine.high %v3664, %v3664
        %v3667 = vcombine.high %v3203, %v3203
        %v3669 = vunpack.c.l.s4 1983009808
        %v3670 = vunpack.c.0.s8 %v3669
        %v3671 = vlaneseq
        %v3672 = vshrl.u32 %v3671, 7
        %v3673 = vsub.s32 %v3670, %v3672
        %v3674 = vrot.slane %v3203, %v3673
        %v3676 = vunpack.c.l.s4 1983009808
        %v3677 = vunpack.c.0.s8 %v3676
        %v3678 = vlaneseq
        %v3679 = vshrl.u32 %v3678, 7
        %v3680 = vsub.s32 %v3677, %v3679
        %v3681 = vrot.slane %v3667, %v3680
        %v3682 = vcombine.high %v3674, %v3674
        %v3683 = vcombine.high %v3681, %v3681
        %v3684 = vcombine.high %v3204, %v3204
        %v3686 = vunpack.c.l.s4 1983009808
        %v3687 = vunpack.c.0.s8 %v3686
        %v3688 = vlaneseq
        %v3689 = vshrl.u32 %v3688, 7
        %v3690 = vsub.s32 %v3687, %v3689
        %v3691 = vrot.slane %v3204, %v3690
        %v3693 = vunpack.c.l.s4 1983009808
        %v3694 = vunpack.c.0.s8 %v3693
        %v3695 = vlaneseq
        %v3696 = vshrl.u32 %v3695, 7
        %v3697 = vsub.s32 %v3694, %v3696
        %v3698 = vrot.slane %v3684, %v3697
        %v3699 = vcombine.high %v3691, %v3691
        %v3700 = vcombine.high %v3698, %v3698
        %v3701 = vcombine.high %v3205, %v3205
        %v3703 = vunpack.c.l.s4 1983009808
        %v3704 = vunpack.c.0.s8 %v3703
        %v3705 = vlaneseq
        %v3706 = vshrl.u32 %v3705, 7
        %v3707 = vsub.s32 %v3704, %v3706
        %v3708 = vrot.slane %v3205, %v3707
        %v3710 = vunpack.c.l.s4 1983009808
        %v3711 = vunpack.c.0.s8 %v3710
        %v3712 = vlaneseq
        %v3713 = vshrl.u32 %v3712, 7
        %v3714 = vsub.s32 %v3711, %v3713
        %v3715 = vrot.slane %v3701, %v3714
        %v3716 = vcombine.high %v3708, %v3708
        %v3717 = vcombine.high %v3715, %v3715
        %v3718 = vcombine.high %v3206, %v3206
        %v3720 = vunpack.c.l.s4 1983009808
        %v3721 = vunpack.c.0.s8 %v3720
        %v3722 = vlaneseq
        %v3723 = vshrl.u32 %v3722, 7
        %v3724 = vsub.s32 %v3721, %v3723
        %v3725 = vrot.slane %v3206, %v3724
        %v3727 = vunpack.c.l.s4 1983009808
        %v3728 = vunpack.c.0.s8 %v3727
        %v3729 = vlaneseq
        %v3730 = vshrl.u32 %v3729, 7
        %v3731 = vsub.s32 %v3728, %v3730
        %v3732 = vrot.slane %v3718, %v3731
        %v3733 = vcombine.high %v3725, %v3725
        %v3734 = vcombine.high %v3732, %v3732
        %v3735 = vcombine.high %v3207, %v3207
        %v3737 = vunpack.c.l.s4 1983009808
        %v3738 = vunpack.c.0.s8 %v3737
        %v3739 = vlaneseq
        %v3740 = vshrl.u32 %v3739, 7
        %v3741 = vsub.s32 %v3738, %v3740
        %v3742 = vrot.slane %v3207, %v3741
        %v3744 = vunpack.c.l.s4 1983009808
        %v3745 = vunpack.c.0.s8 %v3744
        %v3746 = vlaneseq
        %v3747 = vshrl.u32 %v3746, 7
        %v3748 = vsub.s32 %v3745, %v3747
        %v3749 = vrot.slane %v3735, %v3748
        %v3750 = vcombine.high %v3742, %v3742
        %v3751 = vcombine.high %v3749, %v3749
        %v3752 = vcombine.high %v3208, %v3208
        %v3754 = vunpack.c.l.s4 1983009808
        %v3755 = vunpack.c.0.s8 %v3754
        %v3756 = vlaneseq
        %v3757 = vshrl.u32 %v3756, 7
        %v3758 = vsub.s32 %v3755, %v3757
        %v3759 = vrot.slane %v3208, %v3758
        %v3761 = vunpack.c.l.s4 1983009808
        %v3762 = vunpack.c.0.s8 %v3761
        %v3763 = vlaneseq
        %v3764 = vshrl.u32 %v3763, 7
        %v3765 = vsub.s32 %v3762, %v3764
        %v3766 = vrot.slane %v3752, %v3765
        %v3767 = vcombine.high %v3759, %v3759
        %v3768 = vcombine.high %v3766, %v3766
        %v3769 = vcombine.high %v3209, %v3209
        %v3771 = vunpack.c.l.s4 1983009808
        %v3772 = vunpack.c.0.s8 %v3771
        %v3773 = vlaneseq
        %v3774 = vshrl.u32 %v3773, 7
        %v3775 = vsub.s32 %v3772, %v3774
        %v3776 = vrot.slane %v3209, %v3775
        %v3778 = vunpack.c.l.s4 1983009808
        %v3779 = vunpack.c.0.s8 %v3778
        %v3780 = vlaneseq
        %v3781 = vshrl.u32 %v3780, 7
        %v3782 = vsub.s32 %v3779, %v3781
        %v3783 = vrot.slane %v3769, %v3782
        %v3784 = vcombine.high %v3776, %v3776
        %v3785 = vcombine.high %v3783, %v3783
        %v3914 = vrot.slane %v3249, 7
        %v3915 = vrot.slane %v3914, 2
        %v3916 = vrot.slane %v3257, 7
        %v3917 = vrot.slane %v3916, 2
        %v3918 = vrot.slane %v3256, 7
        %v3919 = vrot.slane %v3918, 2
        %v3920 = vrot.slane %v3258, 7
        %v3921 = vrot.slane %v3920, 2
        %v3922 = vrot.slane %v3266, 7
        %v3923 = vrot.slane %v3922, 2
        %v3924 = vrot.slane %v3274, 7
        %v3925 = vrot.slane %v3924, 2
        %v3926 = vrot.slane %v3273, 7
        %v3927 = vrot.slane %v3926, 2
        %v3928 = vrot.slane %v3275, 7
        %v3929 = vrot.slane %v3928, 2
        %v3930 = vrot.slane %v3283, 7
        %v3931 = vrot.slane %v3930, 2
        %v3932 = vrot.slane %v3291, 7
        %v3933 = vrot.slane %v3932, 2
        %v3934 = vrot.slane %v3290, 7
        %v3935 = vrot.slane %v3934, 2
        %v3936 = vrot.slane %v3292, 7
        %v3937 = vrot.slane %v3936, 2
        %v3938 = vrot.slane %v3300, 7
        %v3939 = vrot.slane %v3938, 2
        %v3940 = vrot.slane %v3308, 7
        %v3941 = vrot.slane %v3940, 2
        %v3942 = vrot.slane %v3307, 7
        %v3943 = vrot.slane %v3942, 2
        %v3944 = vrot.slane %v3309, 7
        %v3945 = vrot.slane %v3944, 2
        %v3946 = vrot.slane %v3317, 7
        %v3947 = vrot.slane %v3946, 2
        %v3948 = vrot.slane %v3325, 7
        %v3949 = vrot.slane %v3948, 2
        %v3950 = vrot.slane %v3324, 7
        %v3951 = vrot.slane %v3950, 2
        %v3952 = vrot.slane %v3326, 7
        %v3953 = vrot.slane %v3952, 2
        %v3954 = vrot.slane %v3334, 7
        %v3955 = vrot.slane %v3954, 2
        %v3956 = vrot.slane %v3342, 7
        %v3957 = vrot.slane %v3956, 2
        %v3958 = vrot.slane %v3341, 7
        %v3959 = vrot.slane %v3958, 2
        %v3960 = vrot.slane %v3343, 7
        %v3961 = vrot.slane %v3960, 2
        %v3962 = vrot.slane %v3351, 7
        %v3963 = vrot.slane %v3962, 2
        %v3964 = vrot.slane %v3359, 7
        %v3965 = vrot.slane %v3964, 2
        %v3966 = vrot.slane %v3358, 7
        %v3967 = vrot.slane %v3966, 2
        %v3968 = vrot.slane %v3360, 7
        %v3969 = vrot.slane %v3968, 2
        %v3970 = vrot.slane %v3368, 7
        %v3971 = vrot.slane %v3970, 2
        %v3972 = vrot.slane %v3376, 7
        %v3973 = vrot.slane %v3972, 2
        %v3974 = vrot.slane %v3375, 7
        %v3975 = vrot.slane %v3974, 2
        %v3976 = vrot.slane %v3377, 7
        %v3977 = vrot.slane %v3976, 2
        %v3978 = vrot.slane %v3385, 7
        %v3979 = vrot.slane %v3978, 2
        %v3980 = vrot.slane %v3393, 7
        %v3981 = vrot.slane %v3980, 2
        %v3982 = vrot.slane %v3392, 7
        %v3983 = vrot.slane %v3982, 2
        %v3984 = vrot.slane %v3394, 7
        %v3985 = vrot.slane %v3984, 2
        %v3986 = vrot.slane %v3402, 7
        %v3987 = vrot.slane %v3986, 2
        %v3988 = vrot.slane %v3410, 7
        %v3989 = vrot.slane %v3988, 2
        %v3990 = vrot.slane %v3409, 7
        %v3991 = vrot.slane %v3990, 2
        %v3992 = vrot.slane %v3411, 7
        %v3993 = vrot.slane %v3992, 2
        %v3994 = vrot.slane %v3419, 7
        %v3995 = vrot.slane %v3994, 2
        %v3996 = vrot.slane %v3427, 7
        %v3997 = vrot.slane %v3996, 2
        %v3998 = vrot.slane %v3426, 7
        %v3999 = vrot.slane %v3998, 2
        %v4000 = vrot.slane %v3428, 7
        %v4001 = vrot.slane %v4000, 2
        %v4002 = vrot.slane %v3436, 7
        %v4003 = vrot.slane %v4002, 2
        %v4004 = vrot.slane %v3444, 7
        %v4005 = vrot.slane %v4004, 2
        %v4006 = vrot.slane %v3443, 7
        %v4007 = vrot.slane %v4006, 2
        %v4008 = vrot.slane %v3445, 7
        %v4009 = vrot.slane %v4008, 2
        %v4010 = vrot.slane %v3453, 7
        %v4011 = vrot.slane %v4010, 2
        %v4012 = vrot.slane %v3461, 7
        %v4013 = vrot.slane %v4012, 2
        %v4014 = vrot.slane %v3460, 7
        %v4015 = vrot.slane %v4014, 2
        %v4016 = vrot.slane %v3462, 7
        %v4017 = vrot.slane %v4016, 2
        %v4018 = vrot.slane %v3470, 7
        %v4019 = vrot.slane %v4018, 2
        %v4020 = vrot.slane %v3478, 7
        %v4021 = vrot.slane %v4020, 2
        %v4022 = vrot.slane %v3477, 7
        %v4023 = vrot.slane %v4022, 2
        %v4024 = vrot.slane %v3479, 7
        %v4025 = vrot.slane %v4024, 2
        %v4026 = vrot.slane %v3487, 7
        %v4027 = vrot.slane %v4026, 2
        %v4028 = vrot.slane %v3495, 7
        %v4029 = vrot.slane %v4028, 2
        %v4030 = vrot.slane %v3494, 7
        %v4031 = vrot.slane %v4030, 2
        %v4032 = vrot.slane %v3496, 7
        %v4033 = vrot.slane %v4032, 2
        %v4034 = vrot.slane %v3504, 7
        %v4035 = vrot.slane %v4034, 2
        %v4036 = vrot.slane %v3512, 7
        %v4037 = vrot.slane %v4036, 2
        %v4038 = vrot.slane %v3511, 7
        %v4039 = vrot.slane %v4038, 2
        %v4040 = vrot.slane %v3513, 7
        %v4041 = vrot.slane %v4040, 2
        %v4042 = vrot.slane %v3521, 7
        %v4043 = vrot.slane %v4042, 2
        %v4044 = vrot.slane %v3529, 7
        %v4045 = vrot.slane %v4044, 2
        %v4046 = vrot.slane %v3528, 7
        %v4047 = vrot.slane %v4046, 2
        %v4048 = vrot.slane %v3530, 7
        %v4049 = vrot.slane %v4048, 2
        %v4050 = vrot.slane %v3538, 7
        %v4051 = vrot.slane %v4050, 2
        %v4052 = vrot.slane %v3546, 7
        %v4053 = vrot.slane %v4052, 2
        %v4054 = vrot.slane %v3545, 7
        %v4055 = vrot.slane %v4054, 2
        %v4056 = vrot.slane %v3547, 7
        %v4057 = vrot.slane %v4056, 2
        %v4058 = vrot.slane %v3555, 7
        %v4059 = vrot.slane %v4058, 2
        %v4060 = vrot.slane %v3563, 7
        %v4061 = vrot.slane %v4060, 2
        %v4062 = vrot.slane %v3562, 7
        %v4063 = vrot.slane %v4062, 2
        %v4064 = vrot.slane %v3564, 7
        %v4065 = vrot.slane %v4064, 2
        %v4066 = vrot.slane %v3572, 7
        %v4067 = vrot.slane %v4066, 2
        %v4068 = vrot.slane %v3580, 7
        %v4069 = vrot.slane %v4068, 2
        %v4070 = vrot.slane %v3579, 7
        %v4071 = vrot.slane %v4070, 2
        %v4072 = vrot.slane %v3581, 7
        %v4073 = vrot.slane %v4072, 2
        %v4074 = vrot.slane %v3589, 7
        %v4075 = vrot.slane %v4074, 2
        %v4076 = vrot.slane %v3597, 7
        %v4077 = vrot.slane %v4076, 2
        %v4078 = vrot.slane %v3596, 7
        %v4079 = vrot.slane %v4078, 2
        %v4080 = vrot.slane %v3598, 7
        %v4081 = vrot.slane %v4080, 2
        %v4082 = vrot.slane %v3606, 7
        %v4083 = vrot.slane %v4082, 2
        %v4084 = vrot.slane %v3614, 7
        %v4085 = vrot.slane %v4084, 2
        %v4086 = vrot.slane %v3613, 7
        %v4087 = vrot.slane %v4086, 2
        %v4088 = vrot.slane %v3615, 7
        %v4089 = vrot.slane %v4088, 2
        %v4090 = vrot.slane %v3623, 7
        %v4091 = vrot.slane %v4090, 2
        %v4092 = vrot.slane %v3631, 7
        %v4093 = vrot.slane %v4092, 2
        %v4094 = vrot.slane %v3630, 7
        %v4095 = vrot.slane %v4094, 2
        %v4096 = vrot.slane %v3632, 7
        %v4097 = vrot.slane %v4096, 2
        %v4098 = vrot.slane %v3640, 7
        %v4099 = vrot.slane %v4098, 2
        %v4100 = vrot.slane %v3648, 7
        %v4101 = vrot.slane %v4100, 2
        %v4102 = vrot.slane %v3647, 7
        %v4103 = vrot.slane %v4102, 2
        %v4104 = vrot.slane %v3649, 7
        %v4105 = vrot.slane %v4104, 2
        %v4106 = vrot.slane %v3657, 7
        %v4107 = vrot.slane %v4106, 2
        %v4108 = vrot.slane %v3665, 7
        %v4109 = vrot.slane %v4108, 2
        %v4110 = vrot.slane %v3664, 7
        %v4111 = vrot.slane %v4110, 2
        %v4112 = vrot.slane %v3666, 7
        %v4113 = vrot.slane %v4112, 2
        %v4114 = vrot.slane %v3674, 7
        %v4115 = vrot.slane %v4114, 2
        %v4116 = vrot.slane %v3682, 7
        %v4117 = vrot.slane %v4116, 2
        %v4118 = vrot.slane %v3681, 7
        %v4119 = vrot.slane %v4118, 2
        %v4120 = vrot.slane %v3683, 7
        %v4121 = vrot.slane %v4120, 2
        %v4122 = vrot.slane %v3691, 7
        %v4123 = vrot.slane %v4122, 2
        %v4124 = vrot.slane %v3699, 7
        %v4125 = vrot.slane %v4124, 2
        %v4126 = vrot.slane %v3698, 7
        %v4127 = vrot.slane %v4126, 2
        %v4128 = vrot.slane %v3700, 7
        %v4129 = vrot.slane %v4128, 2
        %v4130 = vrot.slane %v3708, 7
        %v4131 = vrot.slane %v4130, 2
        %v4132 = vrot.slane %v3716, 7
        %v4133 = vrot.slane %v4132, 2
        %v4134 = vrot.slane %v3715, 7
        %v4135 = vrot.slane %v4134, 2
        %v4136 = vrot.slane %v3717, 7
        %v4137 = vrot.slane %v4136, 2
        %v4138 = vrot.slane %v3725, 7
        %v4139 = vrot.slane %v4138, 2
        %v4140 = vrot.slane %v3733, 7
        %v4141 = vrot.slane %v4140, 2
        %v4142 = vrot.slane %v3732, 7
        %v4143 = vrot.slane %v4142, 2
        %v4144 = vrot.slane %v3734, 7
        %v4145 = vrot.slane %v4144, 2
        %v4146 = vrot.slane %v3742, 7
        %v4147 = vrot.slane %v4146, 2
        %v4148 = vrot.slane %v3750, 7
        %v4149 = vrot.slane %v4148, 2
        %v4150 = vrot.slane %v3749, 7
        %v4151 = vrot.slane %v4150, 2
        %v4152 = vrot.slane %v3751, 7
        %v4153 = vrot.slane %v4152, 2
        %v4154 = vrot.slane %v3759, 7
        %v4155 = vrot.slane %v4154, 2
        %v4156 = vrot.slane %v3767, 7
        %v4157 = vrot.slane %v4156, 2
        %v4158 = vrot.slane %v3766, 7
        %v4159 = vrot.slane %v4158, 2
        %v4160 = vrot.slane %v3768, 7
        %v4161 = vrot.slane %v4160, 2
        %v4162 = vrot.slane %v3776, 7
        %v4163 = vrot.slane %v4162, 2
        %v4164 = vrot.slane %v3784, 7
        %v4165 = vrot.slane %v4164, 2
        %v4166 = vrot.slane %v3783, 7
        %v4167 = vrot.slane %v4166, 2
        %v4168 = vrot.slane %v3785, 7
        %v4169 = vrot.slane %v4168, 2
        %v4298 = vmax.f32 %v3249, %v3915
        %v4299 = vmax.f32 %v3257, %v3917
        %v4300 = vmax.f32 %v3256, %v3919
        %v4301 = vmax.f32 %v3258, %v3921
        %v4302 = vmax.f32 %v3266, %v3923
        %v4303 = vmax.f32 %v3274, %v3925
        %v4304 = vmax.f32 %v3273, %v3927
        %v4305 = vmax.f32 %v3275, %v3929
        %v4306 = vmax.f32 %v3283, %v3931
        %v4307 = vmax.f32 %v3291, %v3933
        %v4308 = vmax.f32 %v3290, %v3935
        %v4309 = vmax.f32 %v3292, %v3937
        %v4310 = vmax.f32 %v3300, %v3939
        %v4311 = vmax.f32 %v3308, %v3941
        %v4312 = vmax.f32 %v3307, %v3943
        %v4313 = vmax.f32 %v3309, %v3945
        %v4314 = vmax.f32 %v3317, %v3947
        %v4315 = vmax.f32 %v3325, %v3949
        %v4316 = vmax.f32 %v3324, %v3951
        %v4317 = vmax.f32 %v3326, %v3953
        %v4318 = vmax.f32 %v3334, %v3955
        %v4319 = vmax.f32 %v3342, %v3957
        %v4320 = vmax.f32 %v3341, %v3959
        %v4321 = vmax.f32 %v3343, %v3961
        %v4322 = vmax.f32 %v3351, %v3963
        %v4323 = vmax.f32 %v3359, %v3965
        %v4324 = vmax.f32 %v3358, %v3967
        %v4325 = vmax.f32 %v3360, %v3969
        %v4326 = vmax.f32 %v3368, %v3971
        %v4327 = vmax.f32 %v3376, %v3973
        %v4328 = vmax.f32 %v3375, %v3975
        %v4329 = vmax.f32 %v3377, %v3977
        %v4330 = vmax.f32 %v3385, %v3979
        %v4331 = vmax.f32 %v3393, %v3981
        %v4332 = vmax.f32 %v3392, %v3983
        %v4333 = vmax.f32 %v3394, %v3985
        %v4334 = vmax.f32 %v3402, %v3987
        %v4335 = vmax.f32 %v3410, %v3989
        %v4336 = vmax.f32 %v3409, %v3991
        %v4337 = vmax.f32 %v3411, %v3993
        %v4338 = vmax.f32 %v3419, %v3995
        %v4339 = vmax.f32 %v3427, %v3997
        %v4340 = vmax.f32 %v3426, %v3999
        %v4341 = vmax.f32 %v3428, %v4001
        %v4342 = vmax.f32 %v3436, %v4003
        %v4343 = vmax.f32 %v3444, %v4005
        %v4344 = vmax.f32 %v3443, %v4007
        %v4345 = vmax.f32 %v3445, %v4009
        %v4346 = vmax.f32 %v3453, %v4011
        %v4347 = vmax.f32 %v3461, %v4013
        %v4348 = vmax.f32 %v3460, %v4015
        %v4349 = vmax.f32 %v3462, %v4017
        %v4350 = vmax.f32 %v3470, %v4019
        %v4351 = vmax.f32 %v3478, %v4021
        %v4352 = vmax.f32 %v3477, %v4023
        %v4353 = vmax.f32 %v3479, %v4025
        %v4354 = vmax.f32 %v3487, %v4027
        %v4355 = vmax.f32 %v3495, %v4029
        %v4356 = vmax.f32 %v3494, %v4031
        %v4357 = vmax.f32 %v3496, %v4033
        %v4358 = vmax.f32 %v3504, %v4035
        %v4359 = vmax.f32 %v3512, %v4037
        %v4360 = vmax.f32 %v3511, %v4039
        %v4361 = vmax.f32 %v3513, %v4041
        %v4362 = vmax.f32 %v3521, %v4043
        %v4363 = vmax.f32 %v3529, %v4045
        %v4364 = vmax.f32 %v3528, %v4047
        %v4365 = vmax.f32 %v3530, %v4049
        %v4366 = vmax.f32 %v3538, %v4051
        %v4367 = vmax.f32 %v3546, %v4053
        %v4368 = vmax.f32 %v3545, %v4055
        %v4369 = vmax.f32 %v3547, %v4057
        %v4370 = vmax.f32 %v3555, %v4059
        %v4371 = vmax.f32 %v3563, %v4061
        %v4372 = vmax.f32 %v3562, %v4063
        %v4373 = vmax.f32 %v3564, %v4065
        %v4374 = vmax.f32 %v3572, %v4067
        %v4375 = vmax.f32 %v3580, %v4069
        %v4376 = vmax.f32 %v3579, %v4071
        %v4377 = vmax.f32 %v3581, %v4073
        %v4378 = vmax.f32 %v3589, %v4075
        %v4379 = vmax.f32 %v3597, %v4077
        %v4380 = vmax.f32 %v3596, %v4079
        %v4381 = vmax.f32 %v3598, %v4081
        %v4382 = vmax.f32 %v3606, %v4083
        %v4383 = vmax.f32 %v3614, %v4085
        %v4384 = vmax.f32 %v3613, %v4087
        %v4385 = vmax.f32 %v3615, %v4089
        %v4386 = vmax.f32 %v3623, %v4091
        %v4387 = vmax.f32 %v3631, %v4093
        %v4388 = vmax.f32 %v3630, %v4095
        %v4389 = vmax.f32 %v3632, %v4097
        %v4390 = vmax.f32 %v3640, %v4099
        %v4391 = vmax.f32 %v3648, %v4101
        %v4392 = vmax.f32 %v3647, %v4103
        %v4393 = vmax.f32 %v3649, %v4105
        %v4394 = vmax.f32 %v3657, %v4107
        %v4395 = vmax.f32 %v3665, %v4109
        %v4396 = vmax.f32 %v3664, %v4111
        %v4397 = vmax.f32 %v3666, %v4113
        %v4398 = vmax.f32 %v3674, %v4115
        %v4399 = vmax.f32 %v3682, %v4117
        %v4400 = vmax.f32 %v3681, %v4119
        %v4401 = vmax.f32 %v3683, %v4121
        %v4402 = vmax.f32 %v3691, %v4123
        %v4403 = vmax.f32 %v3699, %v4125
        %v4404 = vmax.f32 %v3698, %v4127
        %v4405 = vmax.f32 %v3700, %v4129
        %v4406 = vmax.f32 %v3708, %v4131
        %v4407 = vmax.f32 %v3716, %v4133
        %v4408 = vmax.f32 %v3715, %v4135
        %v4409 = vmax.f32 %v3717, %v4137
        %v4410 = vmax.f32 %v3725, %v4139
        %v4411 = vmax.f32 %v3733, %v4141
        %v4412 = vmax.f32 %v3732, %v4143
        %v4413 = vmax.f32 %v3734, %v4145
        %v4414 = vmax.f32 %v3742, %v4147
        %v4415 = vmax.f32 %v3750, %v4149
        %v4416 = vmax.f32 %v3749, %v4151
        %v4417 = vmax.f32 %v3751, %v4153
        %v4418 = vmax.f32 %v3759, %v4155
        %v4419 = vmax.f32 %v3767, %v4157
        %v4420 = vmax.f32 %v3766, %v4159
        %v4421 = vmax.f32 %v3768, %v4161
        %v4422 = vmax.f32 %v3776, %v4163
        %v4423 = vmax.f32 %v3784, %v4165
        %v4424 = vmax.f32 %v3783, %v4167
        %v4425 = vmax.f32 %v3785, %v4169
        %v4426 = vmax.f32 %v4298, %v4306
        %v4427 = vmax.f32 %v4299, %v4307
        %v4428 = vmax.f32 %v4300, %v4308
        %v4429 = vmax.f32 %v4301, %v4309
        %v4430 = vmax.f32 %v4302, %v4310
        %v4431 = vmax.f32 %v4303, %v4311
        %v4432 = vmax.f32 %v4304, %v4312
        %v4433 = vmax.f32 %v4305, %v4313
        %v4434 = vmax.f32 %v4314, %v4322
        %v4435 = vmax.f32 %v4315, %v4323
        %v4436 = vmax.f32 %v4316, %v4324
        %v4437 = vmax.f32 %v4317, %v4325
        %v4438 = vmax.f32 %v4318, %v4326
        %v4439 = vmax.f32 %v4319, %v4327
        %v4440 = vmax.f32 %v4320, %v4328
        %v4441 = vmax.f32 %v4321, %v4329
        %v4442 = vmax.f32 %v4330, %v4338
        %v4443 = vmax.f32 %v4331, %v4339
        %v4444 = vmax.f32 %v4332, %v4340
        %v4445 = vmax.f32 %v4333, %v4341
        %v4446 = vmax.f32 %v4334, %v4342
        %v4447 = vmax.f32 %v4335, %v4343
        %v4448 = vmax.f32 %v4336, %v4344
        %v4449 = vmax.f32 %v4337, %v4345
        %v4450 = vmax.f32 %v4346, %v4354
        %v4451 = vmax.f32 %v4347, %v4355
        %v4452 = vmax.f32 %v4348, %v4356
        %v4453 = vmax.f32 %v4349, %v4357
        %v4454 = vmax.f32 %v4350, %v4358
        %v4455 = vmax.f32 %v4351, %v4359
        %v4456 = vmax.f32 %v4352, %v4360
        %v4457 = vmax.f32 %v4353, %v4361
        %v4458 = vmax.f32 %v4362, %v4370
        %v4459 = vmax.f32 %v4363, %v4371
        %v4460 = vmax.f32 %v4364, %v4372
        %v4461 = vmax.f32 %v4365, %v4373
        %v4462 = vmax.f32 %v4366, %v4374
        %v4463 = vmax.f32 %v4367, %v4375
        %v4464 = vmax.f32 %v4368, %v4376
        %v4465 = vmax.f32 %v4369, %v4377
        %v4466 = vmax.f32 %v4378, %v4386
        %v4467 = vmax.f32 %v4379, %v4387
        %v4468 = vmax.f32 %v4380, %v4388
        %v4469 = vmax.f32 %v4381, %v4389
        %v4470 = vmax.f32 %v4382, %v4390
        %v4471 = vmax.f32 %v4383, %v4391
        %v4472 = vmax.f32 %v4384, %v4392
        %v4473 = vmax.f32 %v4385, %v4393
        %v4474 = vmax.f32 %v4394, %v4402
        %v4475 = vmax.f32 %v4395, %v4403
        %v4476 = vmax.f32 %v4396, %v4404
        %v4477 = vmax.f32 %v4397, %v4405
        %v4478 = vmax.f32 %v4398, %v4406
        %v4479 = vmax.f32 %v4399, %v4407
        %v4480 = vmax.f32 %v4400, %v4408
        %v4481 = vmax.f32 %v4401, %v4409
        %v4482 = vmax.f32 %v4410, %v4418
        %v4483 = vmax.f32 %v4411, %v4419
        %v4484 = vmax.f32 %v4412, %v4420
        %v4485 = vmax.f32 %v4413, %v4421
        %v4486 = vmax.f32 %v4414, %v4422
        %v4487 = vmax.f32 %v4415, %v4423
        %v4488 = vmax.f32 %v4416, %v4424
        %v4489 = vmax.f32 %v4417, %v4425
        %v4554 = vlaneseq
        %v4555 = vshrl.u32 %v4554, 7
        %v4556 = vsub.s32 0, %v4555
        %v4557 = vrot.slane %v4426, %v4556
        %v4558 = vlaneseq
        %v4559 = vshrl.u32 %v4558, 7
        %v4560 = vsub.s32 0, %v4559
        %v4561 = vrot.slane %v4427, %v4560
        %v4562 = vlaneseq
        %v4563 = vshrl.u32 %v4562, 7
        %v4564 = vsub.s32 0, %v4563
        %v4565 = vrot.slane %v4428, %v4564
        %v4566 = vlaneseq
        %v4567 = vshrl.u32 %v4566, 7
        %v4568 = vsub.s32 0, %v4567
        %v4569 = vrot.slane %v4429, %v4568
        %v4570 = vlaneseq
        %v4571 = vshrl.u32 %v4570, 7
        %v4572 = vsub.s32 0, %v4571
        %v4573 = vrot.slane %v4430, %v4572
        %v4574 = vlaneseq
        %v4575 = vshrl.u32 %v4574, 7
        %v4576 = vsub.s32 0, %v4575
        %v4577 = vrot.slane %v4431, %v4576
        %v4578 = vlaneseq
        %v4579 = vshrl.u32 %v4578, 7
        %v4580 = vsub.s32 0, %v4579
        %v4581 = vrot.slane %v4432, %v4580
        %v4582 = vlaneseq
        %v4583 = vshrl.u32 %v4582, 7
        %v4584 = vsub.s32 0, %v4583
        %v4585 = vrot.slane %v4433, %v4584
        %v4586 = vlaneseq
        %v4587 = vshrl.u32 %v4586, 7
        %v4588 = vsub.s32 0, %v4587
        %v4589 = vrot.slane %v4434, %v4588
        %v4590 = vlaneseq
        %v4591 = vshrl.u32 %v4590, 7
        %v4592 = vsub.s32 0, %v4591
        %v4593 = vrot.slane %v4435, %v4592
        %v4594 = vlaneseq
        %v4595 = vshrl.u32 %v4594, 7
        %v4596 = vsub.s32 0, %v4595
        %v4597 = vrot.slane %v4436, %v4596
        %v4598 = vlaneseq
        %v4599 = vshrl.u32 %v4598, 7
        %v4600 = vsub.s32 0, %v4599
        %v4601 = vrot.slane %v4437, %v4600
        %v4602 = vlaneseq
        %v4603 = vshrl.u32 %v4602, 7
        %v4604 = vsub.s32 0, %v4603
        %v4605 = vrot.slane %v4438, %v4604
        %v4606 = vlaneseq
        %v4607 = vshrl.u32 %v4606, 7
        %v4608 = vsub.s32 0, %v4607
        %v4609 = vrot.slane %v4439, %v4608
        %v4610 = vlaneseq
        %v4611 = vshrl.u32 %v4610, 7
        %v4612 = vsub.s32 0, %v4611
        %v4613 = vrot.slane %v4440, %v4612
        %v4614 = vlaneseq
        %v4615 = vshrl.u32 %v4614, 7
        %v4616 = vsub.s32 0, %v4615
        %v4617 = vrot.slane %v4441, %v4616
        %v4618 = vlaneseq
        %v4619 = vshrl.u32 %v4618, 7
        %v4620 = vsub.s32 0, %v4619
        %v4621 = vrot.slane %v4442, %v4620
        %v4622 = vlaneseq
        %v4623 = vshrl.u32 %v4622, 7
        %v4624 = vsub.s32 0, %v4623
        %v4625 = vrot.slane %v4443, %v4624
        %v4626 = vlaneseq
        %v4627 = vshrl.u32 %v4626, 7
        %v4628 = vsub.s32 0, %v4627
        %v4629 = vrot.slane %v4444, %v4628
        %v4630 = vlaneseq
        %v4631 = vshrl.u32 %v4630, 7
        %v4632 = vsub.s32 0, %v4631
        %v4633 = vrot.slane %v4445, %v4632
        %v4634 = vlaneseq
        %v4635 = vshrl.u32 %v4634, 7
        %v4636 = vsub.s32 0, %v4635
        %v4637 = vrot.slane %v4446, %v4636
        %v4638 = vlaneseq
        %v4639 = vshrl.u32 %v4638, 7
        %v4640 = vsub.s32 0, %v4639
        %v4641 = vrot.slane %v4447, %v4640
        %v4642 = vlaneseq
        %v4643 = vshrl.u32 %v4642, 7
        %v4644 = vsub.s32 0, %v4643
        %v4645 = vrot.slane %v4448, %v4644
        %v4646 = vlaneseq
        %v4647 = vshrl.u32 %v4646, 7
        %v4648 = vsub.s32 0, %v4647
        %v4649 = vrot.slane %v4449, %v4648
        %v4650 = vlaneseq
        %v4651 = vshrl.u32 %v4650, 7
        %v4652 = vsub.s32 0, %v4651
        %v4653 = vrot.slane %v4450, %v4652
        %v4654 = vlaneseq
        %v4655 = vshrl.u32 %v4654, 7
        %v4656 = vsub.s32 0, %v4655
        %v4657 = vrot.slane %v4451, %v4656
        %v4658 = vlaneseq
        %v4659 = vshrl.u32 %v4658, 7
        %v4660 = vsub.s32 0, %v4659
        %v4661 = vrot.slane %v4452, %v4660
        %v4662 = vlaneseq
        %v4663 = vshrl.u32 %v4662, 7
        %v4664 = vsub.s32 0, %v4663
        %v4665 = vrot.slane %v4453, %v4664
        %v4666 = vlaneseq
        %v4667 = vshrl.u32 %v4666, 7
        %v4668 = vsub.s32 0, %v4667
        %v4669 = vrot.slane %v4454, %v4668
        %v4670 = vlaneseq
        %v4671 = vshrl.u32 %v4670, 7
        %v4672 = vsub.s32 0, %v4671
        %v4673 = vrot.slane %v4455, %v4672
        %v4674 = vlaneseq
        %v4675 = vshrl.u32 %v4674, 7
        %v4676 = vsub.s32 0, %v4675
        %v4677 = vrot.slane %v4456, %v4676
        %v4678 = vlaneseq
        %v4679 = vshrl.u32 %v4678, 7
        %v4680 = vsub.s32 0, %v4679
        %v4681 = vrot.slane %v4457, %v4680
        %v4682 = vlaneseq
        %v4683 = vshrl.u32 %v4682, 7
        %v4684 = vsub.s32 0, %v4683
        %v4685 = vrot.slane %v4458, %v4684
        %v4686 = vlaneseq
        %v4687 = vshrl.u32 %v4686, 7
        %v4688 = vsub.s32 0, %v4687
        %v4689 = vrot.slane %v4459, %v4688
        %v4690 = vlaneseq
        %v4691 = vshrl.u32 %v4690, 7
        %v4692 = vsub.s32 0, %v4691
        %v4693 = vrot.slane %v4460, %v4692
        %v4694 = vlaneseq
        %v4695 = vshrl.u32 %v4694, 7
        %v4696 = vsub.s32 0, %v4695
        %v4697 = vrot.slane %v4461, %v4696
        %v4698 = vlaneseq
        %v4699 = vshrl.u32 %v4698, 7
        %v4700 = vsub.s32 0, %v4699
        %v4701 = vrot.slane %v4462, %v4700
        %v4702 = vlaneseq
        %v4703 = vshrl.u32 %v4702, 7
        %v4704 = vsub.s32 0, %v4703
        %v4705 = vrot.slane %v4463, %v4704
        %v4706 = vlaneseq
        %v4707 = vshrl.u32 %v4706, 7
        %v4708 = vsub.s32 0, %v4707
        %v4709 = vrot.slane %v4464, %v4708
        %v4710 = vlaneseq
        %v4711 = vshrl.u32 %v4710, 7
        %v4712 = vsub.s32 0, %v4711
        %v4713 = vrot.slane %v4465, %v4712
        %v4714 = vlaneseq
        %v4715 = vshrl.u32 %v4714, 7
        %v4716 = vsub.s32 0, %v4715
        %v4717 = vrot.slane %v4466, %v4716
        %v4718 = vlaneseq
        %v4719 = vshrl.u32 %v4718, 7
        %v4720 = vsub.s32 0, %v4719
        %v4721 = vrot.slane %v4467, %v4720
        %v4722 = vlaneseq
        %v4723 = vshrl.u32 %v4722, 7
        %v4724 = vsub.s32 0, %v4723
        %v4725 = vrot.slane %v4468, %v4724
        %v4726 = vlaneseq
        %v4727 = vshrl.u32 %v4726, 7
        %v4728 = vsub.s32 0, %v4727
        %v4729 = vrot.slane %v4469, %v4728
        %v4730 = vlaneseq
        %v4731 = vshrl.u32 %v4730, 7
        %v4732 = vsub.s32 0, %v4731
        %v4733 = vrot.slane %v4470, %v4732
        %v4734 = vlaneseq
        %v4735 = vshrl.u32 %v4734, 7
        %v4736 = vsub.s32 0, %v4735
        %v4737 = vrot.slane %v4471, %v4736
        %v4738 = vlaneseq
        %v4739 = vshrl.u32 %v4738, 7
        %v4740 = vsub.s32 0, %v4739
        %v4741 = vrot.slane %v4472, %v4740
        %v4742 = vlaneseq
        %v4743 = vshrl.u32 %v4742, 7
        %v4744 = vsub.s32 0, %v4743
        %v4745 = vrot.slane %v4473, %v4744
        %v4746 = vlaneseq
        %v4747 = vshrl.u32 %v4746, 7
        %v4748 = vsub.s32 0, %v4747
        %v4749 = vrot.slane %v4474, %v4748
        %v4750 = vlaneseq
        %v4751 = vshrl.u32 %v4750, 7
        %v4752 = vsub.s32 0, %v4751
        %v4753 = vrot.slane %v4475, %v4752
        %v4754 = vlaneseq
        %v4755 = vshrl.u32 %v4754, 7
        %v4756 = vsub.s32 0, %v4755
        %v4757 = vrot.slane %v4476, %v4756
        %v4758 = vlaneseq
        %v4759 = vshrl.u32 %v4758, 7
        %v4760 = vsub.s32 0, %v4759
        %v4761 = vrot.slane %v4477, %v4760
        %v4762 = vlaneseq
        %v4763 = vshrl.u32 %v4762, 7
        %v4764 = vsub.s32 0, %v4763
        %v4765 = vrot.slane %v4478, %v4764
        %v4766 = vlaneseq
        %v4767 = vshrl.u32 %v4766, 7
        %v4768 = vsub.s32 0, %v4767
        %v4769 = vrot.slane %v4479, %v4768
        %v4770 = vlaneseq
        %v4771 = vshrl.u32 %v4770, 7
        %v4772 = vsub.s32 0, %v4771
        %v4773 = vrot.slane %v4480, %v4772
        %v4774 = vlaneseq
        %v4775 = vshrl.u32 %v4774, 7
        %v4776 = vsub.s32 0, %v4775
        %v4777 = vrot.slane %v4481, %v4776
        %v4778 = vlaneseq
        %v4779 = vshrl.u32 %v4778, 7
        %v4780 = vsub.s32 0, %v4779
        %v4781 = vrot.slane %v4482, %v4780
        %v4782 = vlaneseq
        %v4783 = vshrl.u32 %v4782, 7
        %v4784 = vsub.s32 0, %v4783
        %v4785 = vrot.slane %v4483, %v4784
        %v4786 = vlaneseq
        %v4787 = vshrl.u32 %v4786, 7
        %v4788 = vsub.s32 0, %v4787
        %v4789 = vrot.slane %v4484, %v4788
        %v4790 = vlaneseq
        %v4791 = vshrl.u32 %v4790, 7
        %v4792 = vsub.s32 0, %v4791
        %v4793 = vrot.slane %v4485, %v4792
        %v4794 = vlaneseq
        %v4795 = vshrl.u32 %v4794, 7
        %v4796 = vsub.s32 0, %v4795
        %v4797 = vrot.slane %v4486, %v4796
        %v4798 = vlaneseq
        %v4799 = vshrl.u32 %v4798, 7
        %v4800 = vsub.s32 0, %v4799
        %v4801 = vrot.slane %v4487, %v4800
        %v4802 = vlaneseq
        %v4803 = vshrl.u32 %v4802, 7
        %v4804 = vsub.s32 0, %v4803
        %v4805 = vrot.slane %v4488, %v4804
        %v4806 = vlaneseq
        %v4807 = vshrl.u32 %v4806, 7
        %v4808 = vsub.s32 0, %v4807
        %v4809 = vrot.slane %v4489, %v4808
        %vm4810 = vcmask 1041409
        %v4811 = vsel %vm4810, %v4561, %v4557
        %vm4812 = vcmask 1042434
        %v4813 = vsel %vm4812, %v4565, %v4811
        %vm4814 = vcmask 1043459
        %v4815 = vsel %vm4814, %v4569, %v4813
        %vm4816 = vcmask 1044484
        %v4817 = vsel %vm4816, %v4573, %v4815
        %vm4818 = vcmask 1045509
        %v4819 = vsel %vm4818, %v4577, %v4817
        %vm4820 = vcmask 1046534
        %v4821 = vsel %vm4820, %v4581, %v4819
        %vm4822 = vcmask 1047559
        %v4823 = vsel %vm4822, %v4585, %v4821
        %v4824 = vsel %vm4810, %v4593, %v4589
        %v4825 = vsel %vm4812, %v4597, %v4824
        %v4826 = vsel %vm4814, %v4601, %v4825
        %v4827 = vsel %vm4816, %v4605, %v4826
        %v4828 = vsel %vm4818, %v4609, %v4827
        %v4829 = vsel %vm4820, %v4613, %v4828
        %v4830 = vsel %vm4822, %v4617, %v4829
        %v4831 = vsel %vm4810, %v4625, %v4621
        %v4832 = vsel %vm4812, %v4629, %v4831
        %v4833 = vsel %vm4814, %v4633, %v4832
        %v4834 = vsel %vm4816, %v4637, %v4833
        %v4835 = vsel %vm4818, %v4641, %v4834
        %v4836 = vsel %vm4820, %v4645, %v4835
        %v4837 = vsel %vm4822, %v4649, %v4836
        %v4838 = vsel %vm4810, %v4657, %v4653
        %v4839 = vsel %vm4812, %v4661, %v4838
        %v4840 = vsel %vm4814, %v4665, %v4839
        %v4841 = vsel %vm4816, %v4669, %v4840
        %v4842 = vsel %vm4818, %v4673, %v4841
        %v4843 = vsel %vm4820, %v4677, %v4842
        %v4844 = vsel %vm4822, %v4681, %v4843
        %v4845 = vsel %vm4810, %v4689, %v4685
        %v4846 = vsel %vm4812, %v4693, %v4845
        %v4847 = vsel %vm4814, %v4697, %v4846
        %v4848 = vsel %vm4816, %v4701, %v4847
        %v4849 = vsel %vm4818, %v4705, %v4848
        %v4850 = vsel %vm4820, %v4709, %v4849
        %v4851 = vsel %vm4822, %v4713, %v4850
        %v4852 = vsel %vm4810, %v4721, %v4717
        %v4853 = vsel %vm4812, %v4725, %v4852
        %v4854 = vsel %vm4814, %v4729, %v4853
        %v4855 = vsel %vm4816, %v4733, %v4854
        %v4856 = vsel %vm4818, %v4737, %v4855
        %v4857 = vsel %vm4820, %v4741, %v4856
        %v4858 = vsel %vm4822, %v4745, %v4857
        %v4859 = vsel %vm4810, %v4753, %v4749
        %v4860 = vsel %vm4812, %v4757, %v4859
        %v4861 = vsel %vm4814, %v4761, %v4860
        %v4862 = vsel %vm4816, %v4765, %v4861
        %v4863 = vsel %vm4818, %v4769, %v4862
        %v4864 = vsel %vm4820, %v4773, %v4863
        %v4865 = vsel %vm4822, %v4777, %v4864
        %v4866 = vsel %vm4810, %v4785, %v4781
        %v4867 = vsel %vm4812, %v4789, %v4866
        %v4868 = vsel %vm4814, %v4793, %v4867
        %v4869 = vsel %vm4816, %v4797, %v4868
        %v4870 = vsel %vm4818, %v4801, %v4869
        %v4871 = vsel %vm4820, %v4805, %v4870
        %v4872 = vsel %vm4822, %v4809, %v4871
        %vm4881 = vcmask 523264
        %4882 = vst.msk [vmem:[%s344] sm:$0xff] %vm4881, %v4823
        %4883 = vst.msk [vmem:[%s344 + $0x8] sm:$0xff] %vm4881, %v4830
        %4884 = vst.msk [vmem:[%s344 + $0x10] sm:$0xff] %vm4881, %v4837
        %4885 = vst.msk [vmem:[%s344 + $0x18] sm:$0xff] %vm4881, %v4844
        %4886 = vst.msk [vmem:[%s344 + $0x20] sm:$0xff] %vm4881, %v4851
        %4887 = vst.msk [vmem:[%s344 + $0x28] sm:$0xff] %vm4881, %v4858
        %4888 = vst.msk [vmem:[%s344 + $0x30] sm:$0xff] %vm4881, %v4865
        %4889 = vst.msk [vmem:[%s344 + $0x38] sm:$0xff] %vm4881, %v4872
        %s4890 = smul.u32 8, %s22
        %p4891 = scmp.lt.s32.totalorder %s21, 1
        %s4892 = scalar_select %p4891, %s21, 1
        %p4893 = scmp.lt.s32.totalorder %s4890, 7
        %s4894 = scalar_select %p4893, %s4890, 7
        %s4895 = smul.addr %s4892, 8
        %s4896 = sadd.s32 %s4894, %s4895
        %s4897 = smul.addr %s4896, 8
        %s4898 = scalar_lea.vmem %s4, %s4897
        // Predicated region
        $region45: #{simple_fcn_forward.6} parent=35 // pred_check
          %p4899 = pneg %p151
        $region46: #{simple_fcn_forward.6} parent=35 // pred_check_branch
          %4901 = sbr.rel (%p4899) target = $region48
        $region47: #{simple_fcn_forward.6} parent=35 // pred_region
          %s4902 = smul.u32 8, %s22
        $region48: #{simple_fcn_forward.6} parent=35 // pred_fallthru
          _
      $region36: #{simple_fcn_forward.6} parent=5 // pred_fallthru
        _
      %p4903 = scmp.le.s32.totalorder 2, %s12
      // Predicated region
      $region49: #{simple_fcn_forward.6} parent=5 // pred_check
        %p4904 = pneg %p4903
      $region50: #{simple_fcn_forward.6} parent=5 // pred_check_branch
        %4906 = sbr.rel (%p4904) target = $region52
      $region51: #{simple_fcn_forward.6} parent=5 // pred_region
        %s4907 = ssub.s32 %s12, 2
        // Predicated region
        $region53: #{simple_fcn_forward.6} parent=51 // pred_check
          %p4908 = pneg %p157
        $region54: #{simple_fcn_forward.6} parent=51 // pred_check_branch
          %4910 = sbr.rel (%p4908) target = $region56
        $region55: #{simple_fcn_forward.6} parent=51 // pred_region
          %s4911 = smul.u32 8, %s24
          %p4912 = scmp.lt.s32.totalorder %s23, 1
          %s4913 = scalar_select %p4912, %s23, 1
          %p4914 = scmp.lt.s32.totalorder %s4911, 7
          %s4915 = scalar_select %p4914, %s4911, 7
          %s4916 = smul.addr %s4913, 8
          %s4917 = sadd.s32 %s4915, %s4916
          %s4918 = smul.addr %s4917, 8
          %s4919 = scalar_lea.vmem %s4, %s4918
        $region56: #{simple_fcn_forward.6} parent=51 // pred_fallthru
          _
      $region52: #{simple_fcn_forward.6} parent=5 // pred_fallthru
        _
    $region6: #{simple_fcn_forward.6} parent=1 // loop_footer
      %s16 = sadd.s32 1, %s12
    $region7: #{simple_fcn_forward.6} parent=1 // loop_footer_branch
      %11 = sbr.rel target = $region3
    $region8: #{simple_fcn_forward.6} parent=1 // loop_exit
      _
    %4920 = vsyncpa [#allocation3], 1
    %s4921 = scalar_lea.sflag [#allocation3], 1
    %4922 = vsyncpa %s4921, 1
    %4923 = vsyncpa [#allocation5], 1

// kernel: tile.18
$region0: #{tile.18}
  #allocation0 [shape = 's32[1]{0}', space=sflag, size = 0x4, scoped, tag = 'scoped memory for tile.18']
  %s0 = inlined_call_operand.vmem [shape: f32[128], index: 0, kind: input, shape index: {}]
  %s1 = inlined_call_operand.vmem [shape: f32[2,128], index: 1, kind: output, shape index: {}]
  // Predicated region
  $region2: #{tile.18} parent=0 // pred_check
    _
  $region3: #{tile.18} parent=0 // pred_check_branch
    %3 = sbr.rel (0) target = $region5
  $region4: #{tile.18} parent=0 // pred_region
    _
  $region5: #{tile.18} parent=0 // pred_fallthru
    _
  %v4 = vld [vmem:[%s0] ss:$0 sm:$0xff]
  %5 = vst [vmem:[%s1] sm:$0x3] %v4

// kernel: tile.23
$region0: #{tile.23}
  #allocation0 [shape = 's32[1]{0}', space=sflag, size = 0x4, scoped, tag = 'scoped memory for tile.23']
  %s0 = inlined_call_operand.vmem [shape: f32[64], index: 0, kind: input, shape index: {}]
  %s1 = inlined_call_operand.vmem [shape: f32[2,64], index: 1, kind: output, shape index: {}]
  // Predicated region
  $region2: #{tile.23} parent=0 // pred_check
    _
  $region3: #{tile.23} parent=0 // pred_check_branch
    %3 = sbr.rel (0) target = $region5
  $region4: #{tile.23} parent=0 // pred_region
    _
  $region5: #{tile.23} parent=0 // pred_fallthru
    _
  %v4 = vld [vmem:[%s0] ss:$0 sm:$0xff]
  %5 = vst [vmem:[%s1] sm:$0x3] %v4

// kernel: tile.24
$region0: #{tile.24}
  %s0 = inlined_call_operand.vmem [shape: f32[2,64], index: 0, kind: input, shape index: {}]
  %s1 = inlined_call_operand.vmem [shape: f32[1,128], index: 1, kind: output, shape index: {}]
  $region1: #{tile.24} parent=0
    #allocation0 [shape = 'u8[4096]{0}', space=vmem, size = 0x1000, scoped, tag = 'scoped mem for output reshape']
    #allocation1 [shape = 'u8[4096]{0}', space=vmem, size = 0x1000, scoped, tag = 'scoped mem for input reshape']
    %s3 = sshll.u32 1, 2
    %s4 = ssub.s32 %s3, 1
    %v5 = vld [vmem:[%s0] sm:%s4]
    %6 = vst [vmem:[#allocation1] sm:%s4] %v5
    %v7 = vld [vmem:[#allocation1] sm:$0x1]
    %vm8 = vcmask 523264
    %9 = vst.msk [vmem:[#allocation0] sm:$0x1] %vm8, %v7
    %s10 = scalar_lea.vmem [#allocation1], 1
    %v11 = vld [vmem:[%s10] sm:$0x1]
    %12 = vrot.lane.b32.xlu0 %v11, 64
    %v13 = vpop.permute.xlu0 %12
    %vm14 = vcmask 1048064
    %15 = vst.msk [vmem:[#allocation0] sm:$0x1] %vm14, %v13
    %s17 = sshll.u32 1, 1
    %s18 = ssub.s32 %s17, 1
    %v20 = vld [vmem:[#allocation0] sm:%s18]
    %s21 = sshll.u32 1, 1
    %s22 = ssub.s32 %s21, 1
    %23 = vst [vmem:[%s1] sm:%s22] %v20

// kernel: simple_fcn_forward.9
$region0: #{simple_fcn_forward.9}
  #allocation0 [shape = 'u32[]', space=smem, size = 0x4, offset = 0x4, fixed_abs, tag = 'smem constant byte address 0x4 - core index']
  #allocation1 [shape = 'u32[144,128]{1,0:T(1,128)}', space=vmem, size = 0x12000, scoped, tag = 'internal scratch']
  %s0 = inlined_call_operand.vmem [shape: f32[2,2,2,256], index: 0, kind: input, shape index: {}]
  %s1 = inlined_call_operand.vmem [shape: f32[2,256,256], index: 1, kind: input, shape index: {}]
  %s2 = inlined_call_operand.vmem [shape: f32[1,256], index: 2, kind: input, shape index: {}]
  %s3 = inlined_call_operand.vmem [shape: f32[2,2,2,2,256], index: 3, kind: output, shape index: {}]
  %s4 = sld [smem:[#allocation0]]
  $region82: #{simple_fcn_forward.9} parent=0
    _
  %s6 = ssub.s32 1, %s4
  %s7 = scalar_select 0, %s6, %s4
  $region1: #{simple_fcn_forward.9} parent=0
    #allocation2 [shape = 'u8[8192]{0}', space=vmem, size = 0x2000, scoped, tag = 'output window, operand 0']
    loop: start=0, step=1, limit=6
    $region2: #{simple_fcn_forward.9} parent=1 // loop_pre_header
      _
    $region3: #{simple_fcn_forward.9} parent=1 // loop_header
      %s9 = sphi 0, %s13
      %p10 = scmp.ge.s32.totalorder %s9, 6
      %s16 = sphi 0, %s28
      %s17 = sphi 0, %s24
      %s18 = sphi 0, %s16
      %s19 = sphi 0, %s17
      %s20 = sphi 0, %s18
      %s21 = sphi 0, %s19
      %s31 = sphi 0, %s33
      %s34 = sphi 0, %s31
      %s35 = sphi 0, %s34
      %s51 = sphi 0, %s35
      %s57 = sphi 0, %s59
      %s60 = sphi 0, %s57
      %s61 = sphi 0, %s60
      %s77 = sphi 0, %s61
      %s81 = sphi 0, %s81
      %s83 = sphi 0, %s81
      %s84 = sphi 0, %s83
      %s98 = sphi 0, %s84
      %s106 = sphi 0, %s108
      %s109 = sphi 0, %s106
      %s110 = sphi 0, %s109
      %s126 = sphi 0, %s110
    $region4: #{simple_fcn_forward.9} parent=1 // loop_header_branch
      %12 = sbr.rel (%p10) target = $region8
    $region5: #{simple_fcn_forward.9} parent=1 // loop_body
      %s14 = ssub.s32 %s9, 1
      %s15 = ssub.s32 %s9, 2
      %s22 = sadd.s32 1, %s17
      %p23 = scmp.ge.s32.totalorder %s22, 2
      %s24 = scalar_select %p23, 0, %s22
      %s25 = sadd.s32 1, %s16
      %s26 = scalar_select %p23, %s25, %s16
      %p27 = scmp.ge.s32.totalorder %s26, 2
      %s28 = scalar_select %p27, 0, %s26
      %s29 = ssub.s32 %s16, %s28
      %p30 = scmp.eq.s32.totalorder %s29, 0
      %s32 = sadd.s32 %s31, 1
      %s33 = scalar_select %p30, %s31, %s32
      %p36 = pneg %p30
      %p37 = scmp.eq.s32.totalorder %s9, 3
      %p38 = por %p36, %p37
      %p39 = scmp.ne.s32.totalorder %s31, %s34
      %p40 = scmp.eq.s32.totalorder %s9, 0
      %p41 = por %p39, %p40
      %p42 = scmp.ne.s32.totalorder %s31, %s34
      %p43 = scmp.eq.s32.totalorder %s14, 3
      %p44 = por %p42, %p43
      %p45 = scmp.ne.s32.totalorder %s34, %s35
      %p46 = scmp.eq.s32.totalorder %s14, 0
      %p47 = por %p45, %p46
      %p48 = scmp.ne.s32.totalorder %s34, %s35
      %p49 = scmp.eq.s32.totalorder %s15, 3
      %p50 = por %p48, %p49
      %p52 = scmp.ne.s32.totalorder %s35, %s51
      %p53 = scmp.eq.s32.totalorder %s15, 0
      %p54 = por %p52, %p53
      %s55 = ssub.s32 %s17, %s24
      %p56 = scmp.eq.s32.totalorder %s55, 0
      %s58 = sadd.s32 %s57, 1
      %s59 = scalar_select %p56, %s57, %s58
      %p62 = pneg %p56
      %p63 = scmp.eq.s32.totalorder %s9, 3
      %p64 = por %p62, %p63
      %p65 = scmp.ne.s32.totalorder %s57, %s60
      %p66 = scmp.eq.s32.totalorder %s9, 0
      %p67 = por %p65, %p66
      %p68 = scmp.ne.s32.totalorder %s57, %s60
      %p69 = scmp.eq.s32.totalorder %s14, 3
      %p70 = por %p68, %p69
      %p71 = scmp.ne.s32.totalorder %s60, %s61
      %p72 = scmp.eq.s32.totalorder %s14, 0
      %p73 = por %p71, %p72
      %p74 = scmp.ne.s32.totalorder %s60, %s61
      %p75 = scmp.eq.s32.totalorder %s15, 3
      %p76 = por %p74, %p75
      %p78 = scmp.ne.s32.totalorder %s61, %s77
      %p79 = scmp.eq.s32.totalorder %s15, 0
      %p80 = por %p78, %p79
      %s82 = sadd.s32 %s81, 1
      %p85 = scmp.eq.s32.totalorder %s9, 3
      %p86 = scmp.ne.s32.totalorder %s81, %s83
      %p87 = scmp.eq.s32.totalorder %s9, 0
      %p88 = por %p86, %p87
      %p89 = scmp.ne.s32.totalorder %s81, %s83
      %p90 = scmp.eq.s32.totalorder %s14, 3
      %p91 = por %p89, %p90
      %p92 = scmp.ne.s32.totalorder %s83, %s84
      %p93 = scmp.eq.s32.totalorder %s14, 0
      %p94 = por %p92, %p93
      %p95 = scmp.ne.s32.totalorder %s83, %s84
      %p96 = scmp.eq.s32.totalorder %s15, 3
      %p97 = por %p95, %p96
      %p99 = scmp.ne.s32.totalorder %s84, %s98
      %p100 = scmp.eq.s32.totalorder %s15, 0
      %p101 = por %p99, %p100
      %s102 = ssub.s32 %s16, %s28
      %s103 = ssub.s32 %s17, %s24
      %s104 = sor.u32 %s102, %s103
      %p105 = scmp.eq.s32.totalorder %s104, 0
      %s107 = sadd.s32 %s106, 1
      %s108 = scalar_select %p105, %s106, %s107
      %p111 = pneg %p105
      %p112 = scmp.eq.s32.totalorder %s9, 3
      %p113 = por %p111, %p112
      %p114 = scmp.ne.s32.totalorder %s106, %s109
      %p115 = scmp.eq.s32.totalorder %s9, 0
      %p116 = por %p114, %p115
      %p117 = scmp.ne.s32.totalorder %s106, %s109
      %p118 = scmp.eq.s32.totalorder %s14, 3
      %p119 = por %p117, %p118
      %p120 = scmp.ne.s32.totalorder %s109, %s110
      %p121 = scmp.eq.s32.totalorder %s14, 0
      %p122 = por %p120, %p121
      %p123 = scmp.ne.s32.totalorder %s109, %s110
      %p124 = scmp.eq.s32.totalorder %s15, 3
      %p125 = por %p123, %p124
      %p127 = scmp.ne.s32.totalorder %s110, %s126
      %p128 = scmp.eq.s32.totalorder %s15, 0
      %p129 = por %p127, %p128
      %p130 = scmp.le.s32.totalorder 1, %s9
      %p131 = scmp.lt.s32.totalorder %s9, 5
      %p132 = pnand %p130, %p131
      %p133 = pneg %p132
      // Predicated region
      $region9: #{simple_fcn_forward.9} parent=5 // pred_check
        _
      $region10: #{simple_fcn_forward.9} parent=5 // pred_check_branch
        %135 = sbr.rel (%p132) target = $region12
      $region11: #{simple_fcn_forward.9} parent=5 // pred_region
        %s136 = ssub.s32 %s9, 1
        // Predicated region
        $region13: #{simple_fcn_forward.9} parent=11 // pred_check
          %p137 = pneg %p94
        $region14: #{simple_fcn_forward.9} parent=11 // pred_check_branch
          %139 = sbr.rel (%p137) target = $region16
        $region15: #{simple_fcn_forward.9} parent=11 // pred_region
          _
        $region16: #{simple_fcn_forward.9} parent=11 // pred_fallthru
          _
      $region12: #{simple_fcn_forward.9} parent=5 // pred_fallthru
        _
      %p140 = scmp.lt.s32.totalorder %s9, 4
      // Predicated region
      $region17: #{simple_fcn_forward.9} parent=5 // pred_check
        %p141 = pneg %p140
      $region18: #{simple_fcn_forward.9} parent=5 // pred_check_branch
        %143 = sbr.rel (%p141) target = $region20
      $region19: #{simple_fcn_forward.9} parent=5 // pred_region
        // Predicated region
        $region21: #{simple_fcn_forward.9} parent=19 // pred_check
          %p144 = pneg %p41
        $region22: #{simple_fcn_forward.9} parent=19 // pred_check_branch
          %146 = sbr.rel (%p144) target = $region24
        $region23: #{simple_fcn_forward.9} parent=19 // pred_region
          %p147 = scmp.lt.s32.totalorder %s16, 1
          %s148 = scalar_select %p147, %s16, 1
          %s149 = smul.addr %s148, 4
          %s150 = smul.addr %s149, 2
          %s151 = scalar_lea.vmem %s0, %s150
        $region24: #{simple_fcn_forward.9} parent=19 // pred_fallthru
          _
        // Predicated region
        $region25: #{simple_fcn_forward.9} parent=19 // pred_check
          %p152 = pneg %p67
        $region26: #{simple_fcn_forward.9} parent=19 // pred_check_branch
          %154 = sbr.rel (%p152) target = $region28
        $region27: #{simple_fcn_forward.9} parent=19 // pred_region
          %p155 = scmp.lt.s32.totalorder %s17, 1
          %s156 = scalar_select %p155, %s17, 1
          %s157 = smul.addr %s156, 64
          %s158 = smul.addr %s157, 8
          %s159 = scalar_lea.vmem %s1, %s158
        $region28: #{simple_fcn_forward.9} parent=19 // pred_fallthru
          _
      $region20: #{simple_fcn_forward.9} parent=5 // pred_fallthru
        _
      %p160 = scmp.le.s32.totalorder 1, %s9
      %p161 = scmp.lt.s32.totalorder %s9, 5
      %p162 = pnand %p160, %p161
      %p163 = pneg %p162
      // Predicated region
      $region29: #{simple_fcn_forward.9} parent=5 // pred_check
        _
      $region30: #{simple_fcn_forward.9} parent=5 // pred_check_branch
        %165 = sbr.rel (%p162) target = $region32
      $region31: #{simple_fcn_forward.9} parent=5 // pred_region
        %s166 = ssub.s32 %s9, 1
        %p167 = scmp.lt.s32.totalorder %s18, 1
        %s168 = scalar_select %p167, %s18, 1
        %s169 = smul.addr %s168, 4
        %s170 = smul.addr %s169, 2
        %s171 = scalar_lea.vmem %s0, %s170
        %p172 = pneg %p47
        %p173 = pneg %p44
        %p174 = scmp.lt.s32.totalorder %s19, 1
        %s175 = scalar_select %p174, %s19, 1
        %s176 = smul.addr %s175, 64
        %s177 = smul.addr %s176, 8
        %s178 = scalar_lea.vmem %s1, %s177
        %p179 = pneg %p73
        %p180 = pneg %p70
        %p181 = pneg %p94
        %p182 = pneg %p91
        %p183 = pneg %p122
        %p184 = pneg %p119
        %s185 = sand.u32 %s109, 1
        %s186 = sand.u32 %s109, 1
        %s187 = smul.addr %s186, 8
        %s188 = scalar_lea.vmem [#allocation2], %s187
        %p189 = scmp.lt.s32.totalorder %s18, 1
        %s190 = scalar_select %p189, %s18, 1
        %s191 = smul.addr %s190, 4
        %s192 = smul.addr %s191, 2
        %s193 = scalar_lea.vmem %s0, %s192
        %p194 = scmp.lt.s32.totalorder %s19, 1
        %s195 = scalar_select %p194, %s19, 1
        %s196 = smul.addr %s195, 64
        %s197 = smul.addr %s196, 8
        %s198 = scalar_lea.vmem %s1, %s197
        %v199 = vld [vmem:[%s193] sm:$0xf]
        %v200 = vld [vmem:[%s193 + $0x4] sm:$0xf]
        %v201 = vld [vmem:[%s198] sm:$0xff]
        %v202 = vld [vmem:[%s198 + $0x8] sm:$0xff]
        %v203 = vld [vmem:[%s198 + $0x10] sm:$0xff]
        %v204 = vld [vmem:[%s198 + $0x18] sm:$0xff]
        %v205 = vld [vmem:[%s198 + $0x20] sm:$0xff]
        %v206 = vld [vmem:[%s198 + $0x28] sm:$0xff]
        %v207 = vld [vmem:[%s198 + $0x30] sm:$0xff]
        %v208 = vld [vmem:[%s198 + $0x38] sm:$0xff]
        %v209 = vld [vmem:[%s198 + $0x40] sm:$0xff]
        %v210 = vld [vmem:[%s198 + $0x48] sm:$0xff]
        %v211 = vld [vmem:[%s198 + $0x50] sm:$0xff]
        %v212 = vld [vmem:[%s198 + $0x58] sm:$0xff]
        %v213 = vld [vmem:[%s198 + $0x60] sm:$0xff]
        %v214 = vld [vmem:[%s198 + $0x68] sm:$0xff]
        %v215 = vld [vmem:[%s198 + $0x70] sm:$0xff]
        %v216 = vld [vmem:[%s198 + $0x78] sm:$0xff]
        %v217 = vld [vmem:[%s198 + $0x80] sm:$0xff]
        %v218 = vld [vmem:[%s198 + $0x88] sm:$0xff]
        %v219 = vld [vmem:[%s198 + $0x90] sm:$0xff]
        %v220 = vld [vmem:[%s198 + $0x98] sm:$0xff]
        %v221 = vld [vmem:[%s198 + $0xa0] sm:$0xff]
        %v222 = vld [vmem:[%s198 + $0xa8] sm:$0xff]
        %v223 = vld [vmem:[%s198 + $0xb0] sm:$0xff]
        %v224 = vld [vmem:[%s198 + $0xb8] sm:$0xff]
        %v225 = vld [vmem:[%s198 + $0xc0] sm:$0xff]
        %v226 = vld [vmem:[%s198 + $0xc8] sm:$0xff]
        %v227 = vld [vmem:[%s198 + $0xd0] sm:$0xff]
        %v228 = vld [vmem:[%s198 + $0xd8] sm:$0xff]
        %v229 = vld [vmem:[%s198 + $0xe0] sm:$0xff]
        %v230 = vld [vmem:[%s198 + $0xe8] sm:$0xff]
        %v231 = vld [vmem:[%s198 + $0xf0] sm:$0xff]
        %v232 = vld [vmem:[%s198 + $0xf8] sm:$0xff]
        %v233 = vld [vmem:[%s198 + $0x100] sm:$0xff]
        %v234 = vld [vmem:[%s198 + $0x108] sm:$0xff]
        %v235 = vld [vmem:[%s198 + $0x110] sm:$0xff]
        %v236 = vld [vmem:[%s198 + $0x118] sm:$0xff]
        %v237 = vld [vmem:[%s198 + $0x120] sm:$0xff]
        %v238 = vld [vmem:[%s198 + $0x128] sm:$0xff]
        %v239 = vld [vmem:[%s198 + $0x130] sm:$0xff]
        %v240 = vld [vmem:[%s198 + $0x138] sm:$0xff]
        %v241 = vld [vmem:[%s198 + $0x140] sm:$0xff]
        %v242 = vld [vmem:[%s198 + $0x148] sm:$0xff]
        %v243 = vld [vmem:[%s198 + $0x150] sm:$0xff]
        %v244 = vld [vmem:[%s198 + $0x158] sm:$0xff]
        %v245 = vld [vmem:[%s198 + $0x160] sm:$0xff]
        %v246 = vld [vmem:[%s198 + $0x168] sm:$0xff]
        %v247 = vld [vmem:[%s198 + $0x170] sm:$0xff]
        %v248 = vld [vmem:[%s198 + $0x178] sm:$0xff]
        %v249 = vld [vmem:[%s198 + $0x180] sm:$0xff]
        %v250 = vld [vmem:[%s198 + $0x188] sm:$0xff]
        %v251 = vld [vmem:[%s198 + $0x190] sm:$0xff]
        %v252 = vld [vmem:[%s198 + $0x198] sm:$0xff]
        %v253 = vld [vmem:[%s198 + $0x1a0] sm:$0xff]
        %v254 = vld [vmem:[%s198 + $0x1a8] sm:$0xff]
        %v255 = vld [vmem:[%s198 + $0x1b0] sm:$0xff]
        %v256 = vld [vmem:[%s198 + $0x1b8] sm:$0xff]
        %v257 = vld [vmem:[%s198 + $0x1c0] sm:$0xff]
        %v258 = vld [vmem:[%s198 + $0x1c8] sm:$0xff]
        %v259 = vld [vmem:[%s198 + $0x1d0] sm:$0xff]
        %v260 = vld [vmem:[%s198 + $0x1d8] sm:$0xff]
        %v261 = vld [vmem:[%s198 + $0x1e0] sm:$0xff]
        %v262 = vld [vmem:[%s198 + $0x1e8] sm:$0xff]
        %v263 = vld [vmem:[%s198 + $0x1f0] sm:$0xff]
        %v264 = vld [vmem:[%s198 + $0x1f8] sm:$0xff]
        %v265 = vld [vmem:[%s2] sm:$0x3]
        %v267 = vlaneseq
        %v268 = vshrl.u32 %v267, 7
        %v269 = vsub.s32 0, %v268
        %v270 = vrot.slane %v265, %v269
        %v271 = vlaneseq
        %v272 = vshrl.u32 %v271, 7
        %v273 = vsub.s32 1, %v272
        %v274 = vrot.slane %v265, %v273
        %v279 = vcombine.low %v199, %v200
        %v281 = vunpack.c.l.s4 1983009808
        %v282 = vunpack.c.0.s8 %v281
        %v283 = vlaneseq
        %v284 = vshrl.u32 %v283, 7
        %v285 = vsub.s32 %v282, %v284
        %v286 = vrot.slane %v279, %v285
        %v287 = vcombine.high %v286, %v286
        %290 = vmatprep.subr.mxu0 %v232
        %291 = vmatpush1.msra.mxu0 %v231
        %292 = vmatprep.subr.mxu0 %v230
        %293 = vmatpush1.msra.mxu0 %v229
        %294 = vmatprep.subr.mxu0 %v228
        %295 = vmatpush1.msra.mxu0 %v227
        %296 = vmatprep.subr.mxu0 %v226
        %297 = vmatpush1.msra.mxu0 %v225
        %298 = vmatprep.subr.mxu0 %v224
        %299 = vmatpush1.msra.mxu0 %v223
        %300 = vmatprep.subr.mxu0 %v222
        %301 = vmatpush1.msra.mxu0 %v221
        %302 = vmatprep.subr.mxu0 %v220
        %303 = vmatpush1.msra.mxu0 %v219
        %304 = vmatprep.subr.mxu0 %v218
        %305 = vmatpush1.msra.mxu0 %v217
        %306 = vmatprep.subr.mxu0 %v216
        %307 = vmatpush1.msra.mxu0 %v215
        %308 = vmatprep.subr.mxu0 %v214
        %309 = vmatpush1.msra.mxu0 %v213
        %310 = vmatprep.subr.mxu0 %v212
        %311 = vmatpush1.msra.mxu0 %v211
        %312 = vmatprep.subr.mxu0 %v210
        %313 = vmatpush1.msra.mxu0 %v209
        %314 = vmatprep.subr.mxu0 %v208
        %315 = vmatpush1.msra.mxu0 %v207
        %316 = vmatprep.subr.mxu0 %v206
        %317 = vmatpush1.msra.mxu0 %v205
        %318 = vmatprep.subr.mxu0 %v204
        %319 = vmatpush1.msra.mxu0 %v203
        %320 = vmatprep.subr.mxu0 %v202
        %321 = vmatpush1.msra.mxu0 %v201
        %322 = vmatprep.subr.mxu0 %v264
        %323 = vmatpush2.msra.mxu0 %v263
        %324 = vmatprep.subr.mxu0 %v262
        %325 = vmatpush2.msra.mxu0 %v261
        %326 = vmatprep.subr.mxu0 %v260
        %327 = vmatpush2.msra.mxu0 %v259
        %328 = vmatprep.subr.mxu0 %v258
        %329 = vmatpush2.msra.mxu0 %v257
        %330 = vmatprep.subr.mxu0 %v256
        %331 = vmatpush2.msra.mxu0 %v255
        %332 = vmatprep.subr.mxu0 %v254
        %333 = vmatpush2.msra.mxu0 %v253
        %334 = vmatprep.subr.mxu0 %v252
        %335 = vmatpush2.msra.mxu0 %v251
        %336 = vmatprep.subr.mxu0 %v250
        %337 = vmatpush2.msra.mxu0 %v249
        %338 = vmatprep.subr.mxu0 %v248
        %339 = vmatpush2.msra.mxu0 %v247
        %340 = vmatprep.subr.mxu0 %v246
        %341 = vmatpush2.msra.mxu0 %v245
        %342 = vmatprep.subr.mxu0 %v244
        %343 = vmatpush2.msra.mxu0 %v243
        %344 = vmatprep.subr.mxu0 %v242
        %345 = vmatpush2.msra.mxu0 %v241
        %346 = vmatprep.subr.mxu0 %v240
        %347 = vmatpush2.msra.mxu0 %v239
        %348 = vmatprep.subr.mxu0 %v238
        %349 = vmatpush2.msra.mxu0 %v237
        %350 = vmatprep.subr.mxu0 %v236
        %351 = vmatpush2.msra.mxu0 %v235
        %352 = vmatprep.subr.mxu0 %v234
        %353 = vmatpush2.msra.mxu0 %v233
        %354 = vmatprep.mubr.f32.mxu0 %v287
        %355 = vmatmul.mubr.f32.gmra.mxu0 %v286
        %v356 = vpop.f32.mrf.mxu0
        %v357 = vadd.f32 %v270, %v356
        %v358 = vpop.f32.mrf.mxu0
        %v359 = vadd.f32 %v274, %v358
        %360 = vdwg.mxu0
        %v363 = vcombine.low %v357, %v359
        %v365 = vunpack.c.l.s4 1983009808
        %v366 = vunpack.c.0.s8 %v365
        %v367 = vlaneseq
        %v368 = vshrl.u32 %v367, 7
        %v369 = vsub.s32 %v366, %v368
        %v370 = vrot.slane %v363, %v369
        %v371 = vcombine.high %v370, %v370
        %374 = vst [vmem:[%s188] sm:$0xf] %v370
        %375 = vst [vmem:[%s188 + $0x4] sm:$0xf] %v371
        %s376 = sand.u32 %s109, 1
        %s377 = sand.u32 %s109, 1
        %s378 = smul.addr %s377, 8
        %s379 = scalar_lea.vmem [#allocation2], %s378
        // Predicated region
        $region33: #{simple_fcn_forward.9} parent=31 // pred_check
          %p380 = pneg %p119
        $region34: #{simple_fcn_forward.9} parent=31 // pred_check_branch
          %382 = sbr.rel (%p380) target = $region36
        $region35: #{simple_fcn_forward.9} parent=31 // pred_region
          %s383 = smul.addr %s19, 2
          %s384 = smul.addr %s18, 8
          %s385 = sadd.s32 %s383, %s384
          %s386 = smul.addr %s385, 2
          %s387 = scalar_lea.vmem %s3, %s386
          // Predicated region
          $region37: #{simple_fcn_forward.9} parent=35 // pred_check
            _
          $region38: #{simple_fcn_forward.9} parent=35 // pred_check_branch
            %389 = sbr.rel (0) target = $region40
          $region39: #{simple_fcn_forward.9} parent=35 // pred_region
            // Predicated region
            $region41: #{simple_fcn_forward.9} parent=39 // pred_check
              _
            $region42: #{simple_fcn_forward.9} parent=39 // pred_check_branch
              %391 = sbr.rel target = $region44
            $region43: #{simple_fcn_forward.9} parent=39 // pred_region
              // Predicated region
              $region56: #{simple_fcn_forward.9} parent=43 // pred_check
                _
              $region57: #{simple_fcn_forward.9} parent=43 // pred_check_branch
                %409 = sbr.rel (0) target = $region59
              $region58: #{simple_fcn_forward.9} parent=43 // pred_region
                loop: start=0, step=1, limit=1
                $region60: #{simple_fcn_forward.9} parent=58 // loop_pre_header
                  _
                $region61: #{simple_fcn_forward.9} parent=58 // loop_header
                  %s411 = sphi 0, %s415
                  %p412 = scmp.ge.s32.totalorder %s411, 1
                  %s416 = sphi %s379, %s379
                  %s417 = sphi %s387, %s387
                $region62: #{simple_fcn_forward.9} parent=58 // loop_header_branch
                  %414 = sbr.rel (%p412) target = $region66
                $region63: #{simple_fcn_forward.9} parent=58 // loop_body
                  _
                $region64: #{simple_fcn_forward.9} parent=58 // loop_footer
                  %s415 = sadd.s32 1, %s411
                $region65: #{simple_fcn_forward.9} parent=58 // loop_footer_branch
                  %410 = sbr.rel target = $region61
                $region66: #{simple_fcn_forward.9} parent=58 // loop_exit
                  _
                %s419 = ssub.s32 16, 1
                loop: start=0, step=1, limit=1
                $region67: #{simple_fcn_forward.9} parent=58 // loop_pre_header
                  _
                $region68: #{simple_fcn_forward.9} parent=58 // loop_header
                  %s421 = sphi 0, %s425
                  %p422 = scmp.ge.s32.totalorder %s421, 1
                  %s426 = sphi %s379, %s379
                  %s427 = sphi %s387, %s387
                $region69: #{simple_fcn_forward.9} parent=58 // loop_header_branch
                  %424 = sbr.rel (%p422) target = $region73
                $region70: #{simple_fcn_forward.9} parent=58 // loop_body
                  %v428 = vld [vmem:[%s426] sm:%s419]
                  %429 = vst [vmem:[%s427] sm:%s419] %v428
                  %v430 = vld [vmem:[%s426 + $0x4] sm:%s419]
                  %431 = vst [vmem:[%s427 + $0x8] sm:%s419] %v430
                $region71: #{simple_fcn_forward.9} parent=58 // loop_footer
                  %s425 = sadd.s32 1, %s421
                $region72: #{simple_fcn_forward.9} parent=58 // loop_footer_branch
                  %420 = sbr.rel target = $region68
                $region73: #{simple_fcn_forward.9} parent=58 // loop_exit
                  _
              $region59: #{simple_fcn_forward.9} parent=43 // pred_fallthru
                _
            $region44: #{simple_fcn_forward.9} parent=39 // pred_fallthru
              _
            // Predicated region
            $region45: #{simple_fcn_forward.9} parent=39 // pred_check
              _
            $region46: #{simple_fcn_forward.9} parent=39 // pred_check_branch
              %393 = sbr.rel (0) target = $region48
            $region47: #{simple_fcn_forward.9} parent=39 // pred_region
              %s395 = ssub.s32 16, 1
              loop: start=0, step=1, limit=1
              $region49: #{simple_fcn_forward.9} parent=47 // loop_pre_header
                _
              $region50: #{simple_fcn_forward.9} parent=47 // loop_header
                %s397 = sphi 0, %s401
                %p398 = scmp.ge.s32.totalorder %s397, 1
                %s402 = sphi %s379, %s379
                %s403 = sphi %s387, %s387
              $region51: #{simple_fcn_forward.9} parent=47 // loop_header_branch
                %400 = sbr.rel (%p398) target = $region55
              $region52: #{simple_fcn_forward.9} parent=47 // loop_body
                %v404 = vld [vmem:[%s402] sm:%s395]
                %405 = vst [vmem:[%s403] sm:%s395] %v404
                %v406 = vld [vmem:[%s402 + $0x4] sm:%s395]
                %407 = vst [vmem:[%s403 + $0x8] sm:%s395] %v406
              $region53: #{simple_fcn_forward.9} parent=47 // loop_footer
                %s401 = sadd.s32 1, %s397
              $region54: #{simple_fcn_forward.9} parent=47 // loop_footer_branch
                %396 = sbr.rel target = $region50
              $region55: #{simple_fcn_forward.9} parent=47 // loop_exit
                _
            $region48: #{simple_fcn_forward.9} parent=39 // pred_fallthru
              _
          $region40: #{simple_fcn_forward.9} parent=35 // pred_fallthru
            _
          %432 = vnop
        $region36: #{simple_fcn_forward.9} parent=31 // pred_fallthru
          _
      $region32: #{simple_fcn_forward.9} parent=5 // pred_fallthru
        _
      %p433 = scmp.le.s32.totalorder 2, %s9
      // Predicated region
      $region74: #{simple_fcn_forward.9} parent=5 // pred_check
        %p434 = pneg %p433
      $region75: #{simple_fcn_forward.9} parent=5 // pred_check_branch
        %436 = sbr.rel (%p434) target = $region77
      $region76: #{simple_fcn_forward.9} parent=5 // pred_region
        %s437 = ssub.s32 %s9, 2
        // Predicated region
        $region78: #{simple_fcn_forward.9} parent=76 // pred_check
          %p438 = pneg %p125
        $region79: #{simple_fcn_forward.9} parent=76 // pred_check_branch
          %440 = sbr.rel (%p438) target = $region81
        $region80: #{simple_fcn_forward.9} parent=76 // pred_region
          %s441 = sand.u32 %s110, 1
          %s442 = sand.u32 %s110, 1
          %s443 = smul.addr %s442, 8
          %s444 = scalar_lea.vmem [#allocation2], %s443
        $region81: #{simple_fcn_forward.9} parent=76 // pred_fallthru
          _
      $region77: #{simple_fcn_forward.9} parent=5 // pred_fallthru
        _
    $region6: #{simple_fcn_forward.9} parent=1 // loop_footer
      %s13 = sadd.s32 1, %s9
    $region7: #{simple_fcn_forward.9} parent=1 // loop_footer_branch
      %8 = sbr.rel target = $region3
    $region8: #{simple_fcn_forward.9} parent=1 // loop_exit
      _

// kernel: tile.28
$region0: #{tile.28}
  #allocation0 [shape = 's32[1]{0}', space=sflag, size = 0x4, scoped, tag = 'scoped memory for tile.28']
  %s0 = inlined_call_operand.vmem [shape: f32[3], index: 0, kind: input, shape index: {}]
  %s1 = inlined_call_operand.vmem [shape: f32[2,3], index: 1, kind: output, shape index: {}]
  // Predicated region
  $region2: #{tile.28} parent=0 // pred_check
    _
  $region3: #{tile.28} parent=0 // pred_check_branch
    %3 = sbr.rel (0) target = $region5
  $region4: #{tile.28} parent=0 // pred_region
    _
  $region5: #{tile.28} parent=0 // pred_fallthru
    _
  %v4 = vld [vmem:[%s0] ss:$0 sm:$0xff]
  %5 = vst [vmem:[%s1] sm:$0x3] %v4

// kernel: tile.29
$region0: #{tile.29}
  %s0 = inlined_call_operand.vmem [shape: f32[2,3], index: 0, kind: input, shape index: {}]
  %s1 = inlined_call_operand.vmem [shape: f32[1,6], index: 1, kind: output, shape index: {}]
  $region1: #{tile.29} parent=0
    #allocation0 [shape = 'u8[4096]{0}', space=vmem, size = 0x1000, scoped, tag = 'scoped mem for output reshape']
    #allocation1 [shape = 'u8[4096]{0}', space=vmem, size = 0x1000, scoped, tag = 'scoped mem for input reshape']
    %s3 = sshll.u32 1, 2
    %s4 = ssub.s32 %s3, 1
    %v5 = vld [vmem:[%s0] sm:%s4]
    %6 = vst [vmem:[#allocation1] sm:%s4] %v5
    %v7 = vld [vmem:[#allocation1] sm:$0x1]
    %vm8 = vcmask 23552
    %9 = vst.msk [vmem:[#allocation0] sm:$0x1] %vm8, %v7
    %s10 = scalar_lea.vmem [#allocation1], 1
    %v11 = vld [vmem:[%s10] sm:$0x1]
    %12 = vrot.lane.b32.xlu0 %v11, 3
    %v13 = vpop.permute.xlu0 %12
    %vm14 = vcmask 48152
    %15 = vst.msk [vmem:[#allocation0] sm:$0x1] %vm14, %v13
    %s17 = sshll.u32 1, 1
    %s18 = ssub.s32 %s17, 1
    %v20 = vld [vmem:[#allocation0] sm:%s18]
    %s21 = sshll.u32 1, 1
    %s22 = ssub.s32 %s21, 1
    %23 = vst [vmem:[%s1] sm:%s22] %v20

// kernel: simple_fcn_forward.10
$region0: #{simple_fcn_forward.10}
  #allocation0 [shape = 'u32[]', space=smem, size = 0x4, offset = 0x4, fixed_abs, tag = 'smem constant byte address 0x4 - core index']
  #allocation1 [shape = 'u32[144,128]{1,0:T(1,128)}', space=vmem, size = 0x12000, scoped, tag = 'internal scratch']
  %s0 = inlined_call_operand.vmem [shape: f32[2,4,4,128], index: 0, kind: input, shape index: {}]
  %s1 = inlined_call_operand.vmem [shape: f32[2,128,128], index: 1, kind: input, shape index: {}]
  %s2 = inlined_call_operand.vmem [shape: f32[1,128], index: 2, kind: input, shape index: {}]
  %s3 = inlined_call_operand.vmem [shape: f32[2,4,2,4,128], index: 3, kind: output, shape index: {}]
  %s4 = sld [smem:[#allocation0]]
  $region82: #{simple_fcn_forward.10} parent=0
    _
  %s6 = ssub.s32 1, %s4
  %s7 = scalar_select 0, %s6, %s4
  $region1: #{simple_fcn_forward.10} parent=0
    #allocation2 [shape = 'u8[16384]{0}', space=vmem, size = 0x4000, scoped, tag = 'output window, operand 0']
    loop: start=0, step=1, limit=6
    $region2: #{simple_fcn_forward.10} parent=1 // loop_pre_header
      _
    $region3: #{simple_fcn_forward.10} parent=1 // loop_header
      %s9 = sphi 0, %s13
      %p10 = scmp.ge.s32.totalorder %s9, 6
      %s16 = sphi 0, %s28
      %s17 = sphi 0, %s24
      %s18 = sphi 0, %s16
      %s19 = sphi 0, %s17
      %s20 = sphi 0, %s18
      %s21 = sphi 0, %s19
      %s31 = sphi 0, %s33
      %s34 = sphi 0, %s31
      %s35 = sphi 0, %s34
      %s51 = sphi 0, %s35
      %s57 = sphi 0, %s59
      %s60 = sphi 0, %s57
      %s61 = sphi 0, %s60
      %s77 = sphi 0, %s61
      %s81 = sphi 0, %s81
      %s83 = sphi 0, %s81
      %s84 = sphi 0, %s83
      %s98 = sphi 0, %s84
      %s106 = sphi 0, %s108
      %s109 = sphi 0, %s106
      %s110 = sphi 0, %s109
      %s126 = sphi 0, %s110
    $region4: #{simple_fcn_forward.10} parent=1 // loop_header_branch
      %12 = sbr.rel (%p10) target = $region8
    $region5: #{simple_fcn_forward.10} parent=1 // loop_body
      %s14 = ssub.s32 %s9, 1
      %s15 = ssub.s32 %s9, 2
      %s22 = sadd.s32 1, %s17
      %p23 = scmp.ge.s32.totalorder %s22, 2
      %s24 = scalar_select %p23, 0, %s22
      %s25 = sadd.s32 1, %s16
      %s26 = scalar_select %p23, %s25, %s16
      %p27 = scmp.ge.s32.totalorder %s26, 2
      %s28 = scalar_select %p27, 0, %s26
      %s29 = ssub.s32 %s16, %s28
      %p30 = scmp.eq.s32.totalorder %s29, 0
      %s32 = sadd.s32 %s31, 1
      %s33 = scalar_select %p30, %s31, %s32
      %p36 = pneg %p30
      %p37 = scmp.eq.s32.totalorder %s9, 3
      %p38 = por %p36, %p37
      %p39 = scmp.ne.s32.totalorder %s31, %s34
      %p40 = scmp.eq.s32.totalorder %s9, 0
      %p41 = por %p39, %p40
      %p42 = scmp.ne.s32.totalorder %s31, %s34
      %p43 = scmp.eq.s32.totalorder %s14, 3
      %p44 = por %p42, %p43
      %p45 = scmp.ne.s32.totalorder %s34, %s35
      %p46 = scmp.eq.s32.totalorder %s14, 0
      %p47 = por %p45, %p46
      %p48 = scmp.ne.s32.totalorder %s34, %s35
      %p49 = scmp.eq.s32.totalorder %s15, 3
      %p50 = por %p48, %p49
      %p52 = scmp.ne.s32.totalorder %s35, %s51
      %p53 = scmp.eq.s32.totalorder %s15, 0
      %p54 = por %p52, %p53
      %s55 = ssub.s32 %s17, %s24
      %p56 = scmp.eq.s32.totalorder %s55, 0
      %s58 = sadd.s32 %s57, 1
      %s59 = scalar_select %p56, %s57, %s58
      %p62 = pneg %p56
      %p63 = scmp.eq.s32.totalorder %s9, 3
      %p64 = por %p62, %p63
      %p65 = scmp.ne.s32.totalorder %s57, %s60
      %p66 = scmp.eq.s32.totalorder %s9, 0
      %p67 = por %p65, %p66
      %p68 = scmp.ne.s32.totalorder %s57, %s60
      %p69 = scmp.eq.s32.totalorder %s14, 3
      %p70 = por %p68, %p69
      %p71 = scmp.ne.s32.totalorder %s60, %s61
      %p72 = scmp.eq.s32.totalorder %s14, 0
      %p73 = por %p71, %p72
      %p74 = scmp.ne.s32.totalorder %s60, %s61
      %p75 = scmp.eq.s32.totalorder %s15, 3
      %p76 = por %p74, %p75
      %p78 = scmp.ne.s32.totalorder %s61, %s77
      %p79 = scmp.eq.s32.totalorder %s15, 0
      %p80 = por %p78, %p79
      %s82 = sadd.s32 %s81, 1
      %p85 = scmp.eq.s32.totalorder %s9, 3
      %p86 = scmp.ne.s32.totalorder %s81, %s83
      %p87 = scmp.eq.s32.totalorder %s9, 0
      %p88 = por %p86, %p87
      %p89 = scmp.ne.s32.totalorder %s81, %s83
      %p90 = scmp.eq.s32.totalorder %s14, 3
      %p91 = por %p89, %p90
      %p92 = scmp.ne.s32.totalorder %s83, %s84
      %p93 = scmp.eq.s32.totalorder %s14, 0
      %p94 = por %p92, %p93
      %p95 = scmp.ne.s32.totalorder %s83, %s84
      %p96 = scmp.eq.s32.totalorder %s15, 3
      %p97 = por %p95, %p96
      %p99 = scmp.ne.s32.totalorder %s84, %s98
      %p100 = scmp.eq.s32.totalorder %s15, 0
      %p101 = por %p99, %p100
      %s102 = ssub.s32 %s16, %s28
      %s103 = ssub.s32 %s17, %s24
      %s104 = sor.u32 %s102, %s103
      %p105 = scmp.eq.s32.totalorder %s104, 0
      %s107 = sadd.s32 %s106, 1
      %s108 = scalar_select %p105, %s106, %s107
      %p111 = pneg %p105
      %p112 = scmp.eq.s32.totalorder %s9, 3
      %p113 = por %p111, %p112
      %p114 = scmp.ne.s32.totalorder %s106, %s109
      %p115 = scmp.eq.s32.totalorder %s9, 0
      %p116 = por %p114, %p115
      %p117 = scmp.ne.s32.totalorder %s106, %s109
      %p118 = scmp.eq.s32.totalorder %s14, 3
      %p119 = por %p117, %p118
      %p120 = scmp.ne.s32.totalorder %s109, %s110
      %p121 = scmp.eq.s32.totalorder %s14, 0
      %p122 = por %p120, %p121
      %p123 = scmp.ne.s32.totalorder %s109, %s110
      %p124 = scmp.eq.s32.totalorder %s15, 3
      %p125 = por %p123, %p124
      %p127 = scmp.ne.s32.totalorder %s110, %s126
      %p128 = scmp.eq.s32.totalorder %s15, 0
      %p129 = por %p127, %p128
      %p130 = scmp.le.s32.totalorder 1, %s9
      %p131 = scmp.lt.s32.totalorder %s9, 5
      %p132 = pnand %p130, %p131
      %p133 = pneg %p132
      // Predicated region
      $region9: #{simple_fcn_forward.10} parent=5 // pred_check
        _
      $region10: #{simple_fcn_forward.10} parent=5 // pred_check_branch
        %135 = sbr.rel (%p132) target = $region12
      $region11: #{simple_fcn_forward.10} parent=5 // pred_region
        %s136 = ssub.s32 %s9, 1
        // Predicated region
        $region13: #{simple_fcn_forward.10} parent=11 // pred_check
          %p137 = pneg %p94
        $region14: #{simple_fcn_forward.10} parent=11 // pred_check_branch
          %139 = sbr.rel (%p137) target = $region16
        $region15: #{simple_fcn_forward.10} parent=11 // pred_region
          _
        $region16: #{simple_fcn_forward.10} parent=11 // pred_fallthru
          _
      $region12: #{simple_fcn_forward.10} parent=5 // pred_fallthru
        _
      %p140 = scmp.lt.s32.totalorder %s9, 4
      // Predicated region
      $region17: #{simple_fcn_forward.10} parent=5 // pred_check
        %p141 = pneg %p140
      $region18: #{simple_fcn_forward.10} parent=5 // pred_check_branch
        %143 = sbr.rel (%p141) target = $region20
      $region19: #{simple_fcn_forward.10} parent=5 // pred_region
        // Predicated region
        $region21: #{simple_fcn_forward.10} parent=19 // pred_check
          %p144 = pneg %p41
        $region22: #{simple_fcn_forward.10} parent=19 // pred_check_branch
          %146 = sbr.rel (%p144) target = $region24
        $region23: #{simple_fcn_forward.10} parent=19 // pred_region
          %p147 = scmp.lt.s32.totalorder %s16, 1
          %s148 = scalar_select %p147, %s16, 1
          %s149 = smul.addr %s148, 4
          %s150 = smul.addr %s149, 4
          %s151 = scalar_lea.vmem %s0, %s150
        $region24: #{simple_fcn_forward.10} parent=19 // pred_fallthru
          _
        // Predicated region
        $region25: #{simple_fcn_forward.10} parent=19 // pred_check
          %p152 = pneg %p67
        $region26: #{simple_fcn_forward.10} parent=19 // pred_check_branch
          %154 = sbr.rel (%p152) target = $region28
        $region27: #{simple_fcn_forward.10} parent=19 // pred_region
          %p155 = scmp.lt.s32.totalorder %s17, 1
          %s156 = scalar_select %p155, %s17, 1
          %s157 = smul.addr %s156, 16
          %s158 = smul.addr %s157, 8
          %s159 = scalar_lea.vmem %s1, %s158
        $region28: #{simple_fcn_forward.10} parent=19 // pred_fallthru
          _
      $region20: #{simple_fcn_forward.10} parent=5 // pred_fallthru
        _
      %p160 = scmp.le.s32.totalorder 1, %s9
      %p161 = scmp.lt.s32.totalorder %s9, 5
      %p162 = pnand %p160, %p161
      %p163 = pneg %p162
      // Predicated region
      $region29: #{simple_fcn_forward.10} parent=5 // pred_check
        _
      $region30: #{simple_fcn_forward.10} parent=5 // pred_check_branch
        %165 = sbr.rel (%p162) target = $region32
      $region31: #{simple_fcn_forward.10} parent=5 // pred_region
        %s166 = ssub.s32 %s9, 1
        %p167 = scmp.lt.s32.totalorder %s18, 1
        %s168 = scalar_select %p167, %s18, 1
        %s169 = smul.addr %s168, 4
        %s170 = smul.addr %s169, 4
        %s171 = scalar_lea.vmem %s0, %s170
        %p172 = pneg %p47
        %p173 = pneg %p44
        %p174 = scmp.lt.s32.totalorder %s19, 1
        %s175 = scalar_select %p174, %s19, 1
        %s176 = smul.addr %s175, 16
        %s177 = smul.addr %s176, 8
        %s178 = scalar_lea.vmem %s1, %s177
        %p179 = pneg %p73
        %p180 = pneg %p70
        %p181 = pneg %p94
        %p182 = pneg %p91
        %p183 = pneg %p122
        %p184 = pneg %p119
        %s185 = sand.u32 %s109, 1
        %s186 = sand.u32 %s109, 1
        %s187 = smul.addr %s186, 16
        %s188 = scalar_lea.vmem [#allocation2], %s187
        %p189 = scmp.lt.s32.totalorder %s18, 1
        %s190 = scalar_select %p189, %s18, 1
        %s191 = smul.addr %s190, 4
        %s192 = smul.addr %s191, 4
        %s193 = scalar_lea.vmem %s0, %s192
        %p194 = scmp.lt.s32.totalorder %s19, 1
        %s195 = scalar_select %p194, %s19, 1
        %s196 = smul.addr %s195, 16
        %s197 = smul.addr %s196, 8
        %s198 = scalar_lea.vmem %s1, %s197
        %v199 = vld [vmem:[%s193] sm:$0xf]
        %v200 = vld [vmem:[%s193 + $0x4] sm:$0xf]
        %v201 = vld [vmem:[%s193 + $0x8] sm:$0xf]
        %v202 = vld [vmem:[%s193 + $0xc] sm:$0xf]
        %v203 = vld [vmem:[%s198] sm:$0xff]
        %v204 = vld [vmem:[%s198 + $0x8] sm:$0xff]
        %v205 = vld [vmem:[%s198 + $0x10] sm:$0xff]
        %v206 = vld [vmem:[%s198 + $0x18] sm:$0xff]
        %v207 = vld [vmem:[%s198 + $0x20] sm:$0xff]
        %v208 = vld [vmem:[%s198 + $0x28] sm:$0xff]
        %v209 = vld [vmem:[%s198 + $0x30] sm:$0xff]
        %v210 = vld [vmem:[%s198 + $0x38] sm:$0xff]
        %v211 = vld [vmem:[%s198 + $0x40] sm:$0xff]
        %v212 = vld [vmem:[%s198 + $0x48] sm:$0xff]
        %v213 = vld [vmem:[%s198 + $0x50] sm:$0xff]
        %v214 = vld [vmem:[%s198 + $0x58] sm:$0xff]
        %v215 = vld [vmem:[%s198 + $0x60] sm:$0xff]
        %v216 = vld [vmem:[%s198 + $0x68] sm:$0xff]
        %v217 = vld [vmem:[%s198 + $0x70] sm:$0xff]
        %v218 = vld [vmem:[%s198 + $0x78] sm:$0xff]
        %v219 = vld [vmem:[%s2] sm:$0x1]
        %v221 = vlaneseq
        %v222 = vshrl.u32 %v221, 7
        %v223 = vsub.s32 0, %v222
        %v224 = vrot.slane %v219, %v223
        %v230 = vcombine.low %v199, %v200
        %v231 = vcombine.low %v201, %v202
        %234 = vmatprep.subr.mxu0 0.0
        %235 = vmatpush1.msra.mxu0 %v218
        %236 = vmatprep.subr.mxu0 0.0
        %237 = vmatpush1.msra.mxu0 %v217
        %238 = vmatprep.subr.mxu0 0.0
        %239 = vmatpush1.msra.mxu0 %v216
        %240 = vmatprep.subr.mxu0 0.0
        %241 = vmatpush1.msra.mxu0 %v215
        %242 = vmatprep.subr.mxu0 0.0
        %243 = vmatpush1.msra.mxu0 %v214
        %244 = vmatprep.subr.mxu0 0.0
        %245 = vmatpush1.msra.mxu0 %v213
        %246 = vmatprep.subr.mxu0 0.0
        %247 = vmatpush1.msra.mxu0 %v212
        %248 = vmatprep.subr.mxu0 0.0
        %249 = vmatpush1.msra.mxu0 %v211
        %250 = vmatprep.subr.mxu0 0.0
        %251 = vmatpush1.msra.mxu0 %v210
        %252 = vmatprep.subr.mxu0 0.0
        %253 = vmatpush1.msra.mxu0 %v209
        %254 = vmatprep.subr.mxu0 0.0
        %255 = vmatpush1.msra.mxu0 %v208
        %256 = vmatprep.subr.mxu0 0.0
        %257 = vmatpush1.msra.mxu0 %v207
        %258 = vmatprep.subr.mxu0 0.0
        %259 = vmatpush1.msra.mxu0 %v206
        %260 = vmatprep.subr.mxu0 0.0
        %261 = vmatpush1.msra.mxu0 %v205
        %262 = vmatprep.subr.mxu0 0.0
        %263 = vmatpush1.msra.mxu0 %v204
        %264 = vmatprep.subr.mxu0 0.0
        %265 = vmatpush1.msra.mxu0 %v203
        %266 = vmatprep.subr.mxu0 0.0
        %267 = vmatpush2.msra.mxu0 0.0
        %268 = vmatprep.subr.mxu0 0.0
        %269 = vmatpush2.msra.mxu0 0.0
        %270 = vmatprep.subr.mxu0 0.0
        %271 = vmatpush2.msra.mxu0 0.0
        %272 = vmatprep.subr.mxu0 0.0
        %273 = vmatpush2.msra.mxu0 0.0
        %274 = vmatprep.subr.mxu0 0.0
        %275 = vmatpush2.msra.mxu0 0.0
        %276 = vmatprep.subr.mxu0 0.0
        %277 = vmatpush2.msra.mxu0 0.0
        %278 = vmatprep.subr.mxu0 0.0
        %279 = vmatpush2.msra.mxu0 0.0
        %280 = vmatprep.subr.mxu0 0.0
        %281 = vmatpush2.msra.mxu0 0.0
        %282 = vmatprep.subr.mxu0 0.0
        %283 = vmatpush2.msra.mxu0 0.0
        %284 = vmatprep.subr.mxu0 0.0
        %285 = vmatpush2.msra.mxu0 0.0
        %286 = vmatprep.subr.mxu0 0.0
        %287 = vmatpush2.msra.mxu0 0.0
        %288 = vmatprep.subr.mxu0 0.0
        %289 = vmatpush2.msra.mxu0 0.0
        %290 = vmatprep.subr.mxu0 0.0
        %291 = vmatpush2.msra.mxu0 0.0
        %292 = vmatprep.subr.mxu0 0.0
        %293 = vmatpush2.msra.mxu0 0.0
        %294 = vmatprep.subr.mxu0 0.0
        %295 = vmatpush2.msra.mxu0 0.0
        %296 = vmatprep.subr.mxu0 0.0
        %297 = vmatpush2.msra.mxu0 0.0
        %298 = vmatprep.mubr.f32.mxu0 0.0
        %299 = vmatmul.mubr.f32.gmra.mxu0 %v230
        %v300 = vpop.f32.mrf.mxu0
        %v301 = vadd.f32 %v224, %v300
        %v302 = vpop.f32.mrf.mxu0
        %303 = vmatprep.mubr.f32.mxu0 0.0
        %304 = vmatmul.mubr.f32.gmra.mxu0 %v231
        %v305 = vpop.f32.mrf.mxu0
        %v306 = vadd.f32 %v224, %v305
        %v307 = vpop.f32.mrf.mxu0
        %308 = vdwg.mxu0
        %v311 = vcombine.high %v301, %v301
        %v312 = vcombine.high %v306, %v306
        %315 = vst [vmem:[%s188] sm:$0xf] %v301
        %316 = vst [vmem:[%s188 + $0x4] sm:$0xf] %v311
        %317 = vst [vmem:[%s188 + $0x8] sm:$0xf] %v306
        %318 = vst [vmem:[%s188 + $0xc] sm:$0xf] %v312
        %s319 = sand.u32 %s109, 1
        %s320 = sand.u32 %s109, 1
        %s321 = smul.addr %s320, 16
        %s322 = scalar_lea.vmem [#allocation2], %s321
        // Predicated region
        $region33: #{simple_fcn_forward.10} parent=31 // pred_check
          %p323 = pneg %p119
        $region34: #{simple_fcn_forward.10} parent=31 // pred_check_branch
          %325 = sbr.rel (%p323) target = $region36
        $region35: #{simple_fcn_forward.10} parent=31 // pred_region
          %s326 = smul.addr %s18, 8
          %s327 = sadd.s32 %s19, %s326
          %s328 = smul.addr %s327, 4
          %s329 = scalar_lea.vmem %s3, %s328
          // Predicated region
          $region37: #{simple_fcn_forward.10} parent=35 // pred_check
            _
          $region38: #{simple_fcn_forward.10} parent=35 // pred_check_branch
            %331 = sbr.rel (0) target = $region40
          $region39: #{simple_fcn_forward.10} parent=35 // pred_region
            // Predicated region
            $region41: #{simple_fcn_forward.10} parent=39 // pred_check
              _
            $region42: #{simple_fcn_forward.10} parent=39 // pred_check_branch
              %333 = sbr.rel target = $region44
            $region43: #{simple_fcn_forward.10} parent=39 // pred_region
              // Predicated region
              $region56: #{simple_fcn_forward.10} parent=43 // pred_check
                _
              $region57: #{simple_fcn_forward.10} parent=43 // pred_check_branch
                %355 = sbr.rel (0) target = $region59
              $region58: #{simple_fcn_forward.10} parent=43 // pred_region
                loop: start=0, step=1, limit=1
                $region60: #{simple_fcn_forward.10} parent=58 // loop_pre_header
                  _
                $region61: #{simple_fcn_forward.10} parent=58 // loop_header
                  %s357 = sphi 0, %s361
                  %p358 = scmp.ge.s32.totalorder %s357, 1
                  %s362 = sphi %s322, %s322
                  %s363 = sphi %s329, %s329
                $region62: #{simple_fcn_forward.10} parent=58 // loop_header_branch
                  %360 = sbr.rel (%p358) target = $region66
                $region63: #{simple_fcn_forward.10} parent=58 // loop_body
                  _
                $region64: #{simple_fcn_forward.10} parent=58 // loop_footer
                  %s361 = sadd.s32 1, %s357
                $region65: #{simple_fcn_forward.10} parent=58 // loop_footer_branch
                  %356 = sbr.rel target = $region61
                $region66: #{simple_fcn_forward.10} parent=58 // loop_exit
                  _
                %s365 = ssub.s32 16, 1
                loop: start=0, step=1, limit=1
                $region67: #{simple_fcn_forward.10} parent=58 // loop_pre_header
                  _
                $region68: #{simple_fcn_forward.10} parent=58 // loop_header
                  %s367 = sphi 0, %s371
                  %p368 = scmp.ge.s32.totalorder %s367, 1
                  %s372 = sphi %s322, %s322
                  %s373 = sphi %s329, %s329
                $region69: #{simple_fcn_forward.10} parent=58 // loop_header_branch
                  %370 = sbr.rel (%p368) target = $region73
                $region70: #{simple_fcn_forward.10} parent=58 // loop_body
                  %v374 = vld [vmem:[%s372] sm:%s365]
                  %375 = vst [vmem:[%s373] sm:%s365] %v374
                  %v376 = vld [vmem:[%s372 + $0x4] sm:%s365]
                  %377 = vst [vmem:[%s373 + $0x8] sm:%s365] %v376
                  %v378 = vld [vmem:[%s372 + $0x8] sm:%s365]
                  %379 = vst [vmem:[%s373 + $0x10] sm:%s365] %v378
                  %v380 = vld [vmem:[%s372 + $0xc] sm:%s365]
                  %381 = vst [vmem:[%s373 + $0x18] sm:%s365] %v380
                $region71: #{simple_fcn_forward.10} parent=58 // loop_footer
                  %s371 = sadd.s32 1, %s367
                $region72: #{simple_fcn_forward.10} parent=58 // loop_footer_branch
                  %366 = sbr.rel target = $region68
                $region73: #{simple_fcn_forward.10} parent=58 // loop_exit
                  _
              $region59: #{simple_fcn_forward.10} parent=43 // pred_fallthru
                _
            $region44: #{simple_fcn_forward.10} parent=39 // pred_fallthru
              _
            // Predicated region
            $region45: #{simple_fcn_forward.10} parent=39 // pred_check
              _
            $region46: #{simple_fcn_forward.10} parent=39 // pred_check_branch
              %335 = sbr.rel (0) target = $region48
            $region47: #{simple_fcn_forward.10} parent=39 // pred_region
              %s337 = ssub.s32 16, 1
              loop: start=0, step=1, limit=1
              $region49: #{simple_fcn_forward.10} parent=47 // loop_pre_header
                _
              $region50: #{simple_fcn_forward.10} parent=47 // loop_header
                %s339 = sphi 0, %s343
                %p340 = scmp.ge.s32.totalorder %s339, 1
                %s344 = sphi %s322, %s322
                %s345 = sphi %s329, %s329
              $region51: #{simple_fcn_forward.10} parent=47 // loop_header_branch
                %342 = sbr.rel (%p340) target = $region55
              $region52: #{simple_fcn_forward.10} parent=47 // loop_body
                %v346 = vld [vmem:[%s344] sm:%s337]
                %347 = vst [vmem:[%s345] sm:%s337] %v346
                %v348 = vld [vmem:[%s344 + $0x4] sm:%s337]
                %349 = vst [vmem:[%s345 + $0x8] sm:%s337] %v348
                %v350 = vld [vmem:[%s344 + $0x8] sm:%s337]
                %351 = vst [vmem:[%s345 + $0x10] sm:%s337] %v350
                %v352 = vld [vmem:[%s344 + $0xc] sm:%s337]
                %353 = vst [vmem:[%s345 + $0x18] sm:%s337] %v352
              $region53: #{simple_fcn_forward.10} parent=47 // loop_footer
                %s343 = sadd.s32 1, %s339
              $region54: #{simple_fcn_forward.10} parent=47 // loop_footer_branch
                %338 = sbr.rel target = $region50
              $region55: #{simple_fcn_forward.10} parent=47 // loop_exit
                _
            $region48: #{simple_fcn_forward.10} parent=39 // pred_fallthru
              _
          $region40: #{simple_fcn_forward.10} parent=35 // pred_fallthru
            _
          %382 = vnop
        $region36: #{simple_fcn_forward.10} parent=31 // pred_fallthru
          _
      $region32: #{simple_fcn_forward.10} parent=5 // pred_fallthru
        _
      %p383 = scmp.le.s32.totalorder 2, %s9
      // Predicated region
      $region74: #{simple_fcn_forward.10} parent=5 // pred_check
        %p384 = pneg %p383
      $region75: #{simple_fcn_forward.10} parent=5 // pred_check_branch
        %386 = sbr.rel (%p384) target = $region77
      $region76: #{simple_fcn_forward.10} parent=5 // pred_region
        %s387 = ssub.s32 %s9, 2
        // Predicated region
        $region78: #{simple_fcn_forward.10} parent=76 // pred_check
          %p388 = pneg %p125
        $region79: #{simple_fcn_forward.10} parent=76 // pred_check_branch
          %390 = sbr.rel (%p388) target = $region81
        $region80: #{simple_fcn_forward.10} parent=76 // pred_region
          %s391 = sand.u32 %s110, 1
          %s392 = sand.u32 %s110, 1
          %s393 = smul.addr %s392, 16
          %s394 = scalar_lea.vmem [#allocation2], %s393
        $region81: #{simple_fcn_forward.10} parent=76 // pred_fallthru
          _
      $region77: #{simple_fcn_forward.10} parent=5 // pred_fallthru
        _
    $region6: #{simple_fcn_forward.10} parent=1 // loop_footer
      %s13 = sadd.s32 1, %s9
    $region7: #{simple_fcn_forward.10} parent=1 // loop_footer_branch
      %8 = sbr.rel target = $region3
    $region8: #{simple_fcn_forward.10} parent=1 // loop_exit
      _

// kernel: simple_fcn_forward.11
$region0: #{simple_fcn_forward.11}
  #allocation0 [shape = 'u32[]', space=smem, size = 0x4, offset = 0x4, fixed_abs, tag = 'smem constant byte address 0x4 - core index']
  #allocation1 [shape = 'u32[144,128]{1,0:T(1,128)}', space=vmem, size = 0x12000, scoped, tag = 'internal scratch']
  %s0 = inlined_call_operand.vmem [shape: f32[2,8,8,64], index: 0, kind: input, shape index: {}]
  %s1 = inlined_call_operand.vmem [shape: f32[2,64,6], index: 1, kind: input, shape index: {}]
  %s2 = inlined_call_operand.vmem [shape: f32[1,6], index: 2, kind: input, shape index: {}]
  %s3 = inlined_call_operand.vmem [shape: f32[2,8,2,8,6], index: 3, kind: output, shape index: {}]
  %s4 = sld [smem:[#allocation0]]
  $region79: #{simple_fcn_forward.11} parent=0
    _
  %s6 = ssub.s32 1, %s4
  %s7 = scalar_select 0, %s6, %s4
  $region1: #{simple_fcn_forward.11} parent=0
    #allocation2 [shape = 'u8[65536]{0}', space=vmem, size = 0x10000, scoped, tag = 'output window, operand 0']
    loop: start=0, step=1, limit=6
    $region2: #{simple_fcn_forward.11} parent=1 // loop_pre_header
      _
    $region3: #{simple_fcn_forward.11} parent=1 // loop_header
      %s9 = sphi 0, %s13
      %p10 = scmp.ge.s32.totalorder %s9, 6
      %s16 = sphi 0, %s28
      %s17 = sphi 0, %s24
      %s18 = sphi 0, %s16
      %s19 = sphi 0, %s17
      %s20 = sphi 0, %s18
      %s21 = sphi 0, %s19
      %s31 = sphi 0, %s33
      %s34 = sphi 0, %s31
      %s35 = sphi 0, %s34
      %s51 = sphi 0, %s35
      %s57 = sphi 0, %s59
      %s60 = sphi 0, %s57
      %s61 = sphi 0, %s60
      %s77 = sphi 0, %s61
      %s81 = sphi 0, %s81
      %s83 = sphi 0, %s81
      %s84 = sphi 0, %s83
      %s98 = sphi 0, %s84
      %s106 = sphi 0, %s108
      %s109 = sphi 0, %s106
      %s110 = sphi 0, %s109
      %s126 = sphi 0, %s110
    $region4: #{simple_fcn_forward.11} parent=1 // loop_header_branch
      %12 = sbr.rel (%p10) target = $region8
    $region5: #{simple_fcn_forward.11} parent=1 // loop_body
      %s14 = ssub.s32 %s9, 1
      %s15 = ssub.s32 %s9, 2
      %s22 = sadd.s32 1, %s17
      %p23 = scmp.ge.s32.totalorder %s22, 2
      %s24 = scalar_select %p23, 0, %s22
      %s25 = sadd.s32 1, %s16
      %s26 = scalar_select %p23, %s25, %s16
      %p27 = scmp.ge.s32.totalorder %s26, 2
      %s28 = scalar_select %p27, 0, %s26
      %s29 = ssub.s32 %s16, %s28
      %p30 = scmp.eq.s32.totalorder %s29, 0
      %s32 = sadd.s32 %s31, 1
      %s33 = scalar_select %p30, %s31, %s32
      %p36 = pneg %p30
      %p37 = scmp.eq.s32.totalorder %s9, 3
      %p38 = por %p36, %p37
      %p39 = scmp.ne.s32.totalorder %s31, %s34
      %p40 = scmp.eq.s32.totalorder %s9, 0
      %p41 = por %p39, %p40
      %p42 = scmp.ne.s32.totalorder %s31, %s34
      %p43 = scmp.eq.s32.totalorder %s14, 3
      %p44 = por %p42, %p43
      %p45 = scmp.ne.s32.totalorder %s34, %s35
      %p46 = scmp.eq.s32.totalorder %s14, 0
      %p47 = por %p45, %p46
      %p48 = scmp.ne.s32.totalorder %s34, %s35
      %p49 = scmp.eq.s32.totalorder %s15, 3
      %p50 = por %p48, %p49
      %p52 = scmp.ne.s32.totalorder %s35, %s51
      %p53 = scmp.eq.s32.totalorder %s15, 0
      %p54 = por %p52, %p53
      %s55 = ssub.s32 %s17, %s24
      %p56 = scmp.eq.s32.totalorder %s55, 0
      %s58 = sadd.s32 %s57, 1
      %s59 = scalar_select %p56, %s57, %s58
      %p62 = pneg %p56
      %p63 = scmp.eq.s32.totalorder %s9, 3
      %p64 = por %p62, %p63
      %p65 = scmp.ne.s32.totalorder %s57, %s60
      %p66 = scmp.eq.s32.totalorder %s9, 0
      %p67 = por %p65, %p66
      %p68 = scmp.ne.s32.totalorder %s57, %s60
      %p69 = scmp.eq.s32.totalorder %s14, 3
      %p70 = por %p68, %p69
      %p71 = scmp.ne.s32.totalorder %s60, %s61
      %p72 = scmp.eq.s32.totalorder %s14, 0
      %p73 = por %p71, %p72
      %p74 = scmp.ne.s32.totalorder %s60, %s61
      %p75 = scmp.eq.s32.totalorder %s15, 3
      %p76 = por %p74, %p75
      %p78 = scmp.ne.s32.totalorder %s61, %s77
      %p79 = scmp.eq.s32.totalorder %s15, 0
      %p80 = por %p78, %p79
      %s82 = sadd.s32 %s81, 1
      %p85 = scmp.eq.s32.totalorder %s9, 3
      %p86 = scmp.ne.s32.totalorder %s81, %s83
      %p87 = scmp.eq.s32.totalorder %s9, 0
      %p88 = por %p86, %p87
      %p89 = scmp.ne.s32.totalorder %s81, %s83
      %p90 = scmp.eq.s32.totalorder %s14, 3
      %p91 = por %p89, %p90
      %p92 = scmp.ne.s32.totalorder %s83, %s84
      %p93 = scmp.eq.s32.totalorder %s14, 0
      %p94 = por %p92, %p93
      %p95 = scmp.ne.s32.totalorder %s83, %s84
      %p96 = scmp.eq.s32.totalorder %s15, 3
      %p97 = por %p95, %p96
      %p99 = scmp.ne.s32.totalorder %s84, %s98
      %p100 = scmp.eq.s32.totalorder %s15, 0
      %p101 = por %p99, %p100
      %s102 = ssub.s32 %s16, %s28
      %s103 = ssub.s32 %s17, %s24
      %s104 = sor.u32 %s102, %s103
      %p105 = scmp.eq.s32.totalorder %s104, 0
      %s107 = sadd.s32 %s106, 1
      %s108 = scalar_select %p105, %s106, %s107
      %p111 = pneg %p105
      %p112 = scmp.eq.s32.totalorder %s9, 3
      %p113 = por %p111, %p112
      %p114 = scmp.ne.s32.totalorder %s106, %s109
      %p115 = scmp.eq.s32.totalorder %s9, 0
      %p116 = por %p114, %p115
      %p117 = scmp.ne.s32.totalorder %s106, %s109
      %p118 = scmp.eq.s32.totalorder %s14, 3
      %p119 = por %p117, %p118
      %p120 = scmp.ne.s32.totalorder %s109, %s110
      %p121 = scmp.eq.s32.totalorder %s14, 0
      %p122 = por %p120, %p121
      %p123 = scmp.ne.s32.totalorder %s109, %s110
      %p124 = scmp.eq.s32.totalorder %s15, 3
      %p125 = por %p123, %p124
      %p127 = scmp.ne.s32.totalorder %s110, %s126
      %p128 = scmp.eq.s32.totalorder %s15, 0
      %p129 = por %p127, %p128
      %p130 = scmp.le.s32.totalorder 1, %s9
      %p131 = scmp.lt.s32.totalorder %s9, 5
      %p132 = pnand %p130, %p131
      %p133 = pneg %p132
      // Predicated region
      $region9: #{simple_fcn_forward.11} parent=5 // pred_check
        _
      $region10: #{simple_fcn_forward.11} parent=5 // pred_check_branch
        %135 = sbr.rel (%p132) target = $region12
      $region11: #{simple_fcn_forward.11} parent=5 // pred_region
        %s136 = ssub.s32 %s9, 1
        // Predicated region
        $region13: #{simple_fcn_forward.11} parent=11 // pred_check
          %p137 = pneg %p94
        $region14: #{simple_fcn_forward.11} parent=11 // pred_check_branch
          %139 = sbr.rel (%p137) target = $region16
        $region15: #{simple_fcn_forward.11} parent=11 // pred_region
          _
        $region16: #{simple_fcn_forward.11} parent=11 // pred_fallthru
          _
      $region12: #{simple_fcn_forward.11} parent=5 // pred_fallthru
        _
      %p140 = scmp.lt.s32.totalorder %s9, 4
      // Predicated region
      $region17: #{simple_fcn_forward.11} parent=5 // pred_check
        %p141 = pneg %p140
      $region18: #{simple_fcn_forward.11} parent=5 // pred_check_branch
        %143 = sbr.rel (%p141) target = $region20
      $region19: #{simple_fcn_forward.11} parent=5 // pred_region
        // Predicated region
        $region21: #{simple_fcn_forward.11} parent=19 // pred_check
          %p144 = pneg %p41
        $region22: #{simple_fcn_forward.11} parent=19 // pred_check_branch
          %146 = sbr.rel (%p144) target = $region24
        $region23: #{simple_fcn_forward.11} parent=19 // pred_region
          %p147 = scmp.lt.s32.totalorder %s16, 1
          %s148 = scalar_select %p147, %s16, 1
          %s149 = smul.addr %s148, 8
          %s150 = smul.addr %s149, 8
          %s151 = scalar_lea.vmem %s0, %s150
        $region24: #{simple_fcn_forward.11} parent=19 // pred_fallthru
          _
        // Predicated region
        $region25: #{simple_fcn_forward.11} parent=19 // pred_check
          %p152 = pneg %p67
        $region26: #{simple_fcn_forward.11} parent=19 // pred_check_branch
          %154 = sbr.rel (%p152) target = $region28
        $region27: #{simple_fcn_forward.11} parent=19 // pred_region
          %p155 = scmp.lt.s32.totalorder %s17, 1
          %s156 = scalar_select %p155, %s17, 1
          %s157 = smul.addr %s156, 8
          %s158 = smul.addr %s157, 8
          %s159 = scalar_lea.vmem %s1, %s158
        $region28: #{simple_fcn_forward.11} parent=19 // pred_fallthru
          _
      $region20: #{simple_fcn_forward.11} parent=5 // pred_fallthru
        _
      %p160 = scmp.le.s32.totalorder 1, %s9
      %p161 = scmp.lt.s32.totalorder %s9, 5
      %p162 = pnand %p160, %p161
      %p163 = pneg %p162
      // Predicated region
      $region29: #{simple_fcn_forward.11} parent=5 // pred_check
        _
      $region30: #{simple_fcn_forward.11} parent=5 // pred_check_branch
        %165 = sbr.rel (%p162) target = $region32
      $region31: #{simple_fcn_forward.11} parent=5 // pred_region
        %s166 = ssub.s32 %s9, 1
        %p167 = scmp.lt.s32.totalorder %s18, 1
        %s168 = scalar_select %p167, %s18, 1
        %s169 = smul.addr %s168, 8
        %s170 = smul.addr %s169, 8
        %s171 = scalar_lea.vmem %s0, %s170
        %p172 = pneg %p47
        %p173 = pneg %p44
        %p174 = scmp.lt.s32.totalorder %s19, 1
        %s175 = scalar_select %p174, %s19, 1
        %s176 = smul.addr %s175, 8
        %s177 = smul.addr %s176, 8
        %s178 = scalar_lea.vmem %s1, %s177
        %p179 = pneg %p73
        %p180 = pneg %p70
        %p181 = pneg %p94
        %p182 = pneg %p91
        %p183 = pneg %p122
        %p184 = pneg %p119
        %s185 = sand.u32 %s109, 1
        %s186 = sand.u32 %s109, 1
        %s187 = smul.addr %s186, 64
        %s188 = scalar_lea.vmem [#allocation2], %s187
        %p189 = scmp.lt.s32.totalorder %s18, 1
        %s190 = scalar_select %p189, %s18, 1
        %s191 = smul.addr %s190, 8
        %s192 = smul.addr %s191, 8
        %s193 = scalar_lea.vmem %s0, %s192
        %p194 = scmp.lt.s32.totalorder %s19, 1
        %s195 = scalar_select %p194, %s19, 1
        %s196 = smul.addr %s195, 8
        %s197 = smul.addr %s196, 8
        %s198 = scalar_lea.vmem %s1, %s197
        %v199 = vld [vmem:[%s193] sm:$0xff]
        %v200 = vld [vmem:[%s193 + $0x8] sm:$0xff]
        %v201 = vld [vmem:[%s193 + $0x10] sm:$0xff]
        %v202 = vld [vmem:[%s193 + $0x18] sm:$0xff]
        %v203 = vld [vmem:[%s193 + $0x20] sm:$0xff]
        %v204 = vld [vmem:[%s193 + $0x28] sm:$0xff]
        %v205 = vld [vmem:[%s193 + $0x30] sm:$0xff]
        %v206 = vld [vmem:[%s193 + $0x38] sm:$0xff]
        %v207 = vld [vmem:[%s198] sm:$0xff]
        %v208 = vld [vmem:[%s198 + $0x8] sm:$0xff]
        %v209 = vld [vmem:[%s198 + $0x10] sm:$0xff]
        %v210 = vld [vmem:[%s198 + $0x18] sm:$0xff]
        %v211 = vld [vmem:[%s198 + $0x20] sm:$0xff]
        %v212 = vld [vmem:[%s198 + $0x28] sm:$0xff]
        %v213 = vld [vmem:[%s198 + $0x30] sm:$0xff]
        %v214 = vld [vmem:[%s198 + $0x38] sm:$0xff]
        %v215 = vld [vmem:[%s2] sm:$0x1]
        %v217 = vlaneseq
        %v218 = vshrl.u32 %v217, 7
        %v219 = vsub.s32 0, %v218
        %v220 = vrot.slane %v215, %v219
        %vm222 = vcmask 523264
        %v224 = vsel %vm222, %v199, 0
        %v227 = vsel %vm222, %v200, 0
        %v230 = vsel %vm222, %v201, 0
        %v233 = vsel %vm222, %v202, 0
        %v236 = vsel %vm222, %v203, 0
        %v239 = vsel %vm222, %v204, 0
        %v242 = vsel %vm222, %v205, 0
        %v245 = vsel %vm222, %v206, 0
        %247 = vmatprep.subr.mxu0 0.0
        %248 = vmatpush1.msra.mxu0 0.0
        %249 = vmatprep.subr.mxu0 0.0
        %250 = vmatpush1.msra.mxu0 0.0
        %251 = vmatprep.subr.mxu0 0.0
        %252 = vmatpush1.msra.mxu0 0.0
        %253 = vmatprep.subr.mxu0 0.0
        %254 = vmatpush1.msra.mxu0 0.0
        %255 = vmatprep.subr.mxu0 0.0
        %256 = vmatpush1.msra.mxu0 0.0
        %257 = vmatprep.subr.mxu0 0.0
        %258 = vmatpush1.msra.mxu0 0.0
        %259 = vmatprep.subr.mxu0 0.0
        %260 = vmatpush1.msra.mxu0 0.0
        %261 = vmatprep.subr.mxu0 0.0
        %262 = vmatpush1.msra.mxu0 0.0
        %263 = vmatprep.subr.mxu0 0.0
        %264 = vmatpush1.msra.mxu0 %v214
        %265 = vmatprep.subr.mxu0 0.0
        %266 = vmatpush1.msra.mxu0 %v213
        %267 = vmatprep.subr.mxu0 0.0
        %268 = vmatpush1.msra.mxu0 %v212
        %269 = vmatprep.subr.mxu0 0.0
        %270 = vmatpush1.msra.mxu0 %v211
        %271 = vmatprep.subr.mxu0 0.0
        %272 = vmatpush1.msra.mxu0 %v210
        %273 = vmatprep.subr.mxu0 0.0
        %274 = vmatpush1.msra.mxu0 %v209
        %275 = vmatprep.subr.mxu0 0.0
        %276 = vmatpush1.msra.mxu0 %v208
        %277 = vmatprep.subr.mxu0 0.0
        %278 = vmatpush1.msra.mxu0 %v207
        %279 = vmatprep.subr.mxu0 0.0
        %280 = vmatpush2.msra.mxu0 0.0
        %281 = vmatprep.subr.mxu0 0.0
        %282 = vmatpush2.msra.mxu0 0.0
        %283 = vmatprep.subr.mxu0 0.0
        %284 = vmatpush2.msra.mxu0 0.0
        %285 = vmatprep.subr.mxu0 0.0
        %286 = vmatpush2.msra.mxu0 0.0
        %287 = vmatprep.subr.mxu0 0.0
        %288 = vmatpush2.msra.mxu0 0.0
        %289 = vmatprep.subr.mxu0 0.0
        %290 = vmatpush2.msra.mxu0 0.0
        %291 = vmatprep.subr.mxu0 0.0
        %292 = vmatpush2.msra.mxu0 0.0
        %293 = vmatprep.subr.mxu0 0.0
        %294 = vmatpush2.msra.mxu0 0.0
        %295 = vmatprep.subr.mxu0 0.0
        %296 = vmatpush2.msra.mxu0 0.0
        %297 = vmatprep.subr.mxu0 0.0
        %298 = vmatpush2.msra.mxu0 0.0
        %299 = vmatprep.subr.mxu0 0.0
        %300 = vmatpush2.msra.mxu0 0.0
        %301 = vmatprep.subr.mxu0 0.0
        %302 = vmatpush2.msra.mxu0 0.0
        %303 = vmatprep.subr.mxu0 0.0
        %304 = vmatpush2.msra.mxu0 0.0
        %305 = vmatprep.subr.mxu0 0.0
        %306 = vmatpush2.msra.mxu0 0.0
        %307 = vmatprep.subr.mxu0 0.0
        %308 = vmatpush2.msra.mxu0 0.0
        %309 = vmatprep.subr.mxu0 0.0
        %310 = vmatpush2.msra.mxu0 0.0
        %311 = vmatprep.mubr.f32.mxu0 0.0
        %312 = vmatmul.mubr.f32.gmra.mxu0 %v224
        %v313 = vpop.f32.mrf.mxu0
        %v314 = vadd.f32 %v220, %v313
        %v315 = vpop.f32.mrf.mxu0
        %316 = vmatprep.mubr.f32.mxu0 0.0
        %317 = vmatmul.mubr.f32.gmra.mxu0 %v227
        %v318 = vpop.f32.mrf.mxu0
        %v319 = vadd.f32 %v220, %v318
        %v320 = vpop.f32.mrf.mxu0
        %321 = vmatprep.mubr.f32.mxu0 0.0
        %322 = vmatmul.mubr.f32.gmra.mxu0 %v230
        %v323 = vpop.f32.mrf.mxu0
        %v324 = vadd.f32 %v220, %v323
        %v325 = vpop.f32.mrf.mxu0
        %326 = vmatprep.mubr.f32.mxu0 0.0
        %327 = vmatmul.mubr.f32.gmra.mxu0 %v233
        %v328 = vpop.f32.mrf.mxu0
        %v329 = vadd.f32 %v220, %v328
        %v330 = vpop.f32.mrf.mxu0
        %331 = vmatprep.mubr.f32.mxu0 0.0
        %332 = vmatmul.mubr.f32.gmra.mxu0 %v236
        %v333 = vpop.f32.mrf.mxu0
        %v334 = vadd.f32 %v220, %v333
        %v335 = vpop.f32.mrf.mxu0
        %336 = vmatprep.mubr.f32.mxu0 0.0
        %337 = vmatmul.mubr.f32.gmra.mxu0 %v239
        %v338 = vpop.f32.mrf.mxu0
        %v339 = vadd.f32 %v220, %v338
        %v340 = vpop.f32.mrf.mxu0
        %341 = vmatprep.mubr.f32.mxu0 0.0
        %342 = vmatmul.mubr.f32.gmra.mxu0 %v242
        %v343 = vpop.f32.mrf.mxu0
        %v344 = vadd.f32 %v220, %v343
        %v345 = vpop.f32.mrf.mxu0
        %346 = vmatprep.mubr.f32.mxu0 0.0
        %347 = vmatmul.mubr.f32.gmra.mxu0 %v245
        %v348 = vpop.f32.mrf.mxu0
        %v349 = vadd.f32 %v220, %v348
        %v350 = vpop.f32.mrf.mxu0
        %351 = vdwg.mxu0
        %vm352 = vcmask 48128
        %353 = vst.msk [vmem:[%s188] sm:$0xff] %vm352, %v314
        %354 = vst.msk [vmem:[%s188 + $0x8] sm:$0xff] %vm352, %v319
        %355 = vst.msk [vmem:[%s188 + $0x10] sm:$0xff] %vm352, %v324
        %356 = vst.msk [vmem:[%s188 + $0x18] sm:$0xff] %vm352, %v329
        %357 = vst.msk [vmem:[%s188 + $0x20] sm:$0xff] %vm352, %v334
        %358 = vst.msk [vmem:[%s188 + $0x28] sm:$0xff] %vm352, %v339
        %359 = vst.msk [vmem:[%s188 + $0x30] sm:$0xff] %vm352, %v344
        %360 = vst.msk [vmem:[%s188 + $0x38] sm:$0xff] %vm352, %v349
        %s361 = sand.u32 %s109, 1
        %s362 = sand.u32 %s109, 1
        %s363 = smul.addr %s362, 64
        %s364 = scalar_lea.vmem [#allocation2], %s363
        // Predicated region
        $region33: #{simple_fcn_forward.11} parent=31 // pred_check
          %p365 = pneg %p119
        $region34: #{simple_fcn_forward.11} parent=31 // pred_check_branch
          %367 = sbr.rel (%p365) target = $region36
        $region35: #{simple_fcn_forward.11} parent=31 // pred_region
          %s368 = smul.addr %s18, 16
          %s369 = sadd.s32 %s19, %s368
          %s370 = smul.addr %s369, 8
          %s371 = scalar_lea.vmem %s3, %s370
          // Predicated region
          $region37: #{simple_fcn_forward.11} parent=35 // pred_check
            _
          $region38: #{simple_fcn_forward.11} parent=35 // pred_check_branch
            %373 = sbr.rel (0) target = $region40
          $region39: #{simple_fcn_forward.11} parent=35 // pred_region
            // Predicated region
            $region41: #{simple_fcn_forward.11} parent=39 // pred_check
              _
            $region42: #{simple_fcn_forward.11} parent=39 // pred_check_branch
              %375 = sbr.rel (0) target = $region44
            $region43: #{simple_fcn_forward.11} parent=39 // pred_region
              // Predicated region
              $region56: #{simple_fcn_forward.11} parent=43 // pred_check
                _
              $region57: #{simple_fcn_forward.11} parent=43 // pred_check_branch
                %405 = sbr.rel (0) target = $region59
              $region58: #{simple_fcn_forward.11} parent=43 // pred_region
                loop: start=0, step=1, limit=1
                $region60: #{simple_fcn_forward.11} parent=58 // loop_pre_header
                  _
                $region61: #{simple_fcn_forward.11} parent=58 // loop_header
                  %s407 = sphi 0, %s411
                  %p408 = scmp.ge.s32.totalorder %s407, 1
                  %s412 = sphi %s364, %s364
                  %s413 = sphi %s371, %s371
                $region62: #{simple_fcn_forward.11} parent=58 // loop_header_branch
                  %410 = sbr.rel (%p408) target = $region66
                $region63: #{simple_fcn_forward.11} parent=58 // loop_body
                  %v414 = vld [vmem:[%s412] sm:$0xff]
                  %415 = vst [vmem:[%s413] sm:$0xff] %v414
                  %v416 = vld [vmem:[%s412 + $0x8] sm:$0xff]
                  %417 = vst [vmem:[%s413 + $0x10] sm:$0xff] %v416
                  %v418 = vld [vmem:[%s412 + $0x10] sm:$0xff]
                  %419 = vst [vmem:[%s413 + $0x20] sm:$0xff] %v418
                  %v420 = vld [vmem:[%s412 + $0x18] sm:$0xff]
                  %421 = vst [vmem:[%s413 + $0x30] sm:$0xff] %v420
                  %v422 = vld [vmem:[%s412 + $0x20] sm:$0xff]
                  %423 = vst [vmem:[%s413 + $0x40] sm:$0xff] %v422
                  %v424 = vld [vmem:[%s412 + $0x28] sm:$0xff]
                  %425 = vst [vmem:[%s413 + $0x50] sm:$0xff] %v424
                  %v426 = vld [vmem:[%s412 + $0x30] sm:$0xff]
                  %427 = vst [vmem:[%s413 + $0x60] sm:$0xff] %v426
                  %v428 = vld [vmem:[%s412 + $0x38] sm:$0xff]
                  %429 = vst [vmem:[%s413 + $0x70] sm:$0xff] %v428
                $region64: #{simple_fcn_forward.11} parent=58 // loop_footer
                  %s411 = sadd.s32 1, %s407
                $region65: #{simple_fcn_forward.11} parent=58 // loop_footer_branch
                  %406 = sbr.rel target = $region61
                $region66: #{simple_fcn_forward.11} parent=58 // loop_exit
                  _
              $region59: #{simple_fcn_forward.11} parent=43 // pred_fallthru
                _
              // Predicated region
              $region67: #{simple_fcn_forward.11} parent=43 // pred_check
                _
              $region68: #{simple_fcn_forward.11} parent=43 // pred_check_branch
                %431 = sbr.rel target = $region70
              $region69: #{simple_fcn_forward.11} parent=43 // pred_region
                _
              $region70: #{simple_fcn_forward.11} parent=43 // pred_fallthru
                _
            $region44: #{simple_fcn_forward.11} parent=39 // pred_fallthru
              _
            // Predicated region
            $region45: #{simple_fcn_forward.11} parent=39 // pred_check
              _
            $region46: #{simple_fcn_forward.11} parent=39 // pred_check_branch
              %377 = sbr.rel target = $region48
            $region47: #{simple_fcn_forward.11} parent=39 // pred_region
              %s379 = ssub.s32 256, 1
              loop: start=0, step=1, limit=1
              $region49: #{simple_fcn_forward.11} parent=47 // loop_pre_header
                _
              $region50: #{simple_fcn_forward.11} parent=47 // loop_header
                %s381 = sphi 0, %s385
                %p382 = scmp.ge.s32.totalorder %s381, 1
                %s386 = sphi %s364, %s364
                %s387 = sphi %s371, %s371
              $region51: #{simple_fcn_forward.11} parent=47 // loop_header_branch
                %384 = sbr.rel (%p382) target = $region55
              $region52: #{simple_fcn_forward.11} parent=47 // loop_body
                %v388 = vld [vmem:[%s386] sm:%s379]
                %389 = vst [vmem:[%s387] sm:%s379] %v388
                %v390 = vld [vmem:[%s386 + $0x8] sm:%s379]
                %391 = vst [vmem:[%s387 + $0x10] sm:%s379] %v390
                %v392 = vld [vmem:[%s386 + $0x10] sm:%s379]
                %393 = vst [vmem:[%s387 + $0x20] sm:%s379] %v392
                %v394 = vld [vmem:[%s386 + $0x18] sm:%s379]
                %395 = vst [vmem:[%s387 + $0x30] sm:%s379] %v394
                %v396 = vld [vmem:[%s386 + $0x20] sm:%s379]
                %397 = vst [vmem:[%s387 + $0x40] sm:%s379] %v396
                %v398 = vld [vmem:[%s386 + $0x28] sm:%s379]
                %399 = vst [vmem:[%s387 + $0x50] sm:%s379] %v398
                %v400 = vld [vmem:[%s386 + $0x30] sm:%s379]
                %401 = vst [vmem:[%s387 + $0x60] sm:%s379] %v400
                %v402 = vld [vmem:[%s386 + $0x38] sm:%s379]
                %403 = vst [vmem:[%s387 + $0x70] sm:%s379] %v402
              $region53: #{simple_fcn_forward.11} parent=47 // loop_footer
                %s385 = sadd.s32 1, %s381
              $region54: #{simple_fcn_forward.11} parent=47 // loop_footer_branch
                %380 = sbr.rel target = $region50
              $region55: #{simple_fcn_forward.11} parent=47 // loop_exit
                _
            $region48: #{simple_fcn_forward.11} parent=39 // pred_fallthru
              _
          $region40: #{simple_fcn_forward.11} parent=35 // pred_fallthru
            _
          %432 = vnop
        $region36: #{simple_fcn_forward.11} parent=31 // pred_fallthru
          _
      $region32: #{simple_fcn_forward.11} parent=5 // pred_fallthru
        _
      %p433 = scmp.le.s32.totalorder 2, %s9
      // Predicated region
      $region71: #{simple_fcn_forward.11} parent=5 // pred_check
        %p434 = pneg %p433
      $region72: #{simple_fcn_forward.11} parent=5 // pred_check_branch
        %436 = sbr.rel (%p434) target = $region74
      $region73: #{simple_fcn_forward.11} parent=5 // pred_region
        %s437 = ssub.s32 %s9, 2
        // Predicated region
        $region75: #{simple_fcn_forward.11} parent=73 // pred_check
          %p438 = pneg %p125
        $region76: #{simple_fcn_forward.11} parent=73 // pred_check_branch
          %440 = sbr.rel (%p438) target = $region78
        $region77: #{simple_fcn_forward.11} parent=73 // pred_region
          %s441 = sand.u32 %s110, 1
          %s442 = sand.u32 %s110, 1
          %s443 = smul.addr %s442, 64
          %s444 = scalar_lea.vmem [#allocation2], %s443
        $region78: #{simple_fcn_forward.11} parent=73 // pred_fallthru
          _
      $region74: #{simple_fcn_forward.11} parent=5 // pred_fallthru
        _
    $region6: #{simple_fcn_forward.11} parent=1 // loop_footer
      %s13 = sadd.s32 1, %s9
    $region7: #{simple_fcn_forward.11} parent=1 // loop_footer_branch
      %8 = sbr.rel target = $region3
    $region8: #{simple_fcn_forward.11} parent=1 // loop_exit
      _

</llo_original>
